<compile_context>
chip_gen: v6e
topology: v6e:2x2x1
jax: 0.10.0
libtpu: 0.0.40
codegen_flags: <defaults>
</compile_context>

<pallas_src>
import numpy as np
import jax
import jax.numpy as jnp
from jax.experimental import pallas as pl
from jax.experimental.pallas import tpu as pltpu

# ---------------- module hyperparameters ----------------
NUM_CLASSES = 10
NUM_CLASSES_PAD = 128   # lane-dense output (sliced to 10 in the wrapper)
N_MELS = 64             # n_mel_bins
HIDDEN = 32             # hidden_dim
N_FFT = 400
HOP = 160
SR = 16000
N_FREQ = N_FFT // 2 + 1     # 201 (onesided)
N_FREQ_PAD = 256            # zero-pad freq axis to a lane multiple
AMIN = 1e-10                # torchaudio AmplitudeToDB amin (power, ref=1)
TB = 8                      # batch tile per grid step (sublane-aligned)


# =====================================================================
# Single fused kernel: one grid step == TB batch samples.
# =====================================================================
def _fused_kernel(wav_ref, dftw_ref, mel_ref,
                  w1_ref, b1_ref, w2_ref, b2_ref,
                  wir_ref, wiz_ref, win_ref, bir_ref, biz_ref, bin_ref,
                  whr_ref, whz_ref, whn_ref, bhr_ref, bhz_ref, bhn_ref,
                  we_ref, be_ref,
                  wa_ref, ba_ref, va_ref,
                  wf_ref, bf_ref,
                  out_ref):
    tb = wav_ref.shape[0]
    L = wav_ref.shape[1]
    F = 1 + (L - N_FFT) // HOP
    H = HIDDEN

    # ---- in-kernel framing: static (tb, N_FFT) slices of the padded waveform,
    #      stacked time-major -> flattened row index == t*tb + b.
    frames = jnp.concatenate(
        [wav_ref[:, t * HOP: t * HOP + N_FFT] for t in range(F)], axis=0)
    frames = frames.astype(jnp.bfloat16)                               # (F*tb, 400)

    # ---- mel spectrogram: periodic-Hann window folded into one bf16 DFT matmul
    spec = jnp.dot(frames, dftw_ref[...],
                   preferred_element_type=jnp.float32)                 # (F*tb, 512)
    re = spec[:, :N_FREQ_PAD]
    im = spec[:, N_FREQ_PAD:]
    power = re * re + im * im                                          # f32, cols 201.. are 0
    mel = jnp.dot(power.astype(jnp.bfloat16), mel_ref[...],
                  preferred_element_type=jnp.float32)                  # (F*tb, 64) f32
    db = 10.0 * jnp.log10(jnp.maximum(mel, AMIN))                      # AmplitudeToDB (power)
    # TODO(synk): no top_db clamp (torchaudio default top_db=None assumed).

    # ---- per-sample mean / unbiased-std normalization (torch .mean / .std)
    db3 = db.reshape(F, tb, N_MELS)
    n_elem = F * N_MELS
    mean = jnp.mean(jnp.mean(db3, axis=2, keepdims=True), axis=0, keepdims=True)
    sq = (db3 - mean) ** 2
    var = jnp.sum(jnp.sum(sq, axis=2, keepdims=True), axis=0, keepdims=True) / (n_elem - 1)
    inv_std = 1.0 / (jnp.sqrt(var) + 1e-5)
    feats = ((db3 - mean) * inv_std).reshape(F * tb, N_MELS)           # (F*tb, 64) f32

    # ---- phi: MatchboxNetSkip simplified to a pointwise residual block
    # TODO(synk): exact MatchboxNetSkip (depthwise-separable convs + BN) not provided.
    feats_bf = feats.astype(jnp.bfloat16)
    h1 = jnp.maximum(jnp.dot(feats_bf, w1_ref[...],
                             preferred_element_type=jnp.float32) + b1_ref[...], 0.0)
    y = jnp.maximum(jnp.dot(h1.astype(jnp.bfloat16), w2_ref[...],
                            preferred_element_type=jnp.float32)
                    + b2_ref[...] + feats, 0.0)                        # (F*tb, 64) f32

    # ---- StatefulGRU: per-gate input projections hoisted out of the recurrence
    # TODO(synk): StatefulGRU definition not provided; PyTorch GRU cell assumed,
    #             hidden state re-zeroed every call (no cross-call persistence).
    xr = jnp.dot(y, wir_ref[...], preferred_element_type=jnp.float32) + bir_ref[...]
    xz = jnp.dot(y, wiz_ref[...], preferred_element_type=jnp.float32) + biz_ref[...]
    xn = jnp.dot(y, win_ref[...], preferred_element_type=jnp.float32) + bin_ref[...]
    whr = whr_ref[...]; whz = whz_ref[...]; whn = whn_ref[...]
    bhr = bhr_ref[...]; bhz = bhz_ref[...]; bhn = bhn_ref[...]

    h = jnp.zeros((tb, H), jnp.float32)
    hs = []
    for t in range(F):                      # static unroll; slices are sublane-aligned (tb=8)
        lo = t * tb
        xr_t = xr[lo:lo + tb]
        xz_t = xz[lo:lo + tb]
        xn_t = xn[lo:lo + tb]
        hr = jnp.dot(h, whr, preferred_element_type=jnp.float32) + bhr
        hz = jnp.dot(h, whz, preferred_element_type=jnp.float32) + bhz
        hn = jnp.dot(h, whn, preferred_element_type=jnp.float32) + bhn
        r = jax.nn.sigmoid(xr_t + hr)
        z = jax.nn.sigmoid(xz_t + hz)
        cand = jnp.tanh(xn_t + r * hn)
        h = (1.0 - z) * cand + z * h
        hs.append(h)
    hseq = jnp.concatenate(hs, axis=0)                                 # (F*tb, 32) time-major

    # ---- LightConsonantEnhancer: residual pointwise block
    # TODO(synk): LightConsonantEnhancer definition not provided; residual MLP assumed.
    enh = hseq + jnp.maximum(jnp.dot(hseq, we_ref[...],
                                     preferred_element_type=jnp.float32) + be_ref[...], 0.0)

    # ---- FocusedAttention (additive tanh attention pooling) + dropout(identity) + fc2
    # TODO(synk): FocusedAttention definition not provided; additive attention assumed.
    e = jnp.tanh(jnp.dot(enh, wa_ref[...],
                         preferred_element_type=jnp.float32) + ba_ref[...])   # (F*tb, 32)
    e3 = e.reshape(F, tb, H)
    enh3 = enh.reshape(F, tb, H)
    s3 = jnp.sum(e3 * va_ref[...], axis=-1, keepdims=True)             # (F, tb, 1)
    s3 = s3 - jnp.max(s3, axis=0, keepdims=True)
    w3 = jnp.exp(s3)
    w3 = w3 / jnp.sum(w3, axis=0, keepdims=True)
    ctx = jnp.sum(w3 * enh3, axis=0)                                   # (tb, 32)

    out_ref[...] = jnp.dot(ctx, wf_ref[...],
                           preferred_element_type=jnp.float32) + bf_ref[...]  # (tb, 128)


def _replicated_spec(arr):
    zeros = (0,) * arr.ndim
    return pl.BlockSpec(arr.shape, lambda b, z=zeros: z)


# =====================================================================
# Host-side constants (torchaudio MelSpectrogram defaults: center=True reflect
# pad, periodic Hann, power=2, HTK mel, norm=None).  Stored in bf16 for the MXU.
# =====================================================================
def windowed_dft_matrix():
    """diag(hann) @ [cos | -sin], freq axis zero-padded 201 -> 256, bf16."""
    n = np.arange(N_FFT)[:, None]
    k = np.arange(N_FREQ)[None, :]
    ang = 2.0 * np.pi * n * k / N_FFT
    window = 0.5 * (1.0 - np.cos(2.0 * np.pi * np.arange(N_FFT) / N_FFT))  # periodic Hann
    m = np.zeros((N_FFT, 2 * N_FREQ_PAD), np.float32)
    m[:, :N_FREQ] = np.cos(ang) * window[:, None]
    m[:, N_FREQ_PAD:N_FREQ_PAD + N_FREQ] = -np.sin(ang) * window[:, None]
    return jnp.asarray(m).astype(jnp.bfloat16)


def mel_filterbank_padded():
    all_freqs = np.linspace(0.0, SR / 2.0, N_FREQ)

    def hz_to_mel(f): return 2595.0 * np.log10(1.0 + f / 700.0)
    def mel_to_hz(m): return 700.0 * (10.0 ** (m / 2595.0) - 1.0)

    m_pts = np.linspace(hz_to_mel(0.0), hz_to_mel(SR / 2.0), N_MELS + 2)
    f_pts = mel_to_hz(m_pts)
    f_diff = f_pts[1:] - f_pts[:-1]
    slopes = f_pts[None, :] - all_freqs[:, None]
    down = -slopes[:, :-2] / f_diff[:-1]
    up = slopes[:, 2:] / f_diff[1:]
    fb = np.maximum(0.0, np.minimum(down, up)).astype(np.float32)      # (N_FREQ, N_MELS)
    fb_pad = np.zeros((N_FREQ_PAD, N_MELS), np.float32)
    fb_pad[:N_FREQ] = fb
    return jnp.asarray(fb_pad).astype(jnp.bfloat16)


# =====================================================================
# Forward wrapper: one fused pallas_call over grid=(ceil(B/TB),).
# =====================================================================
def phi_fc_recurrent_forward(wav, params):
    B, _ = wav.shape
    pad = N_FFT // 2
    wav_p = jnp.pad(wav.astype(jnp.float32), ((0, 0), (pad, pad)), mode="reflect")
    L = wav_p.shape[1]

    Bp = ((B + TB - 1) // TB) * TB
    if Bp != B:
        wav_p = jnp.pad(wav_p, ((0, Bp - B), (0, 0)))                  # zero-pad batch tile

    dftw = windowed_dft_matrix()                                       # (400, 512) bf16
    mel_fb = mel_filterbank_padded()                                   # (256, 64) bf16

    wf_pad = jnp.zeros((HIDDEN, NUM_CLASSES_PAD), jnp.float32).at[:, :NUM_CLASSES].set(params["wf"])
    bf_pad = jnp.zeros((1, NUM_CLASSES_PAD), jnp.float32).at[:, :NUM_CLASSES].set(params["bf"])

    weights = (dftw, mel_fb,
               params["w1"].astype(jnp.bfloat16), params["b1"],
               params["w2"].astype(jnp.bfloat16), params["b2"],
               params["wi_r"], params["wi_z"], params["wi_n"],
               params["bi_r"], params["bi_z"], params["bi_n"],
               params["wh_r"], params["wh_z"], params["wh_n"],
               params["bh_r"], params["bh_z"], params["bh_n"],
               params["we"], params["be"],
               params["wa"], params["ba"], params["va"],
               wf_pad, bf_pad)

    in_specs = [pl.BlockSpec((TB, L), lambda b: (b, 0))]
    in_specs += [_replicated_spec(w) for w in weights]

    out = pl.pallas_call(
        _fused_kernel,
        out_shape=jax.ShapeDtypeStruct((Bp, NUM_CLASSES_PAD), jnp.float32),
        grid=(Bp // TB,),
        in_specs=in_specs,
        out_specs=pl.BlockSpec((TB, NUM_CLASSES_PAD), lambda b: (b, 0)),
        compiler_params=pltpu.CompilerParams(
            dimension_semantics=("parallel",)),
    )(wav_p, *weights)
    return out[:B, :NUM_CLASSES]                                       # (B, NUM_CLASSES)


if __name__ == "__main__":
    key = jax.random.PRNGKey(0)
    ks = jax.random.split(key, 16)

    B, T_SAMPLES = 2, 3200                                             # 0.2 s @ 16 kHz -> 21 frames
    wav = jax.random.normal(ks[0], (B, T_SAMPLES), jnp.float32)

    sc = 0.1
    params = dict(
        # phi (pointwise residual block, 64 -> 64)
        w1=sc * jax.random.normal(ks[1], (N_MELS, N_MELS), jnp.float32),
        b1=jnp.zeros((1, N_MELS), jnp.float32),
        w2=sc * jax.random.normal(ks[2], (N_MELS, N_MELS), jnp.float32),
        b2=jnp.zeros((1, N_MELS), jnp.float32),
        # GRU input / hidden weights, stored per gate (r, z, n)
        wi_r=sc * jax.random.normal(ks[3], (N_MELS, HIDDEN), jnp.float32),
        wi_z=sc * jax.random.normal(ks[4], (N_MELS, HIDDEN), jnp.float32),
        wi_n=sc * jax.random.normal(ks[5], (N_MELS, HIDDEN), jnp.float32),
        bi_r=jnp.zeros((1, HIDDEN), jnp.float32),
        bi_z=jnp.zeros((1, HIDDEN), jnp.float32),
        bi_n=jnp.zeros((1, HIDDEN), jnp.float32),
        wh_r=sc * jax.random.normal(ks[6], (HIDDEN, HIDDEN), jnp.float32),
        wh_z=sc * jax.random.normal(ks[7], (HIDDEN, HIDDEN), jnp.float32),
        wh_n=sc * jax.random.normal(ks[8], (HIDDEN, HIDDEN), jnp.float32),
        bh_r=jnp.zeros((1, HIDDEN), jnp.float32),
        bh_z=jnp.zeros((1, HIDDEN), jnp.float32),
        bh_n=jnp.zeros((1, HIDDEN), jnp.float32),
        # consonant enhancer
        we=sc * jax.random.normal(ks[9], (HIDDEN, HIDDEN), jnp.float32),
        be=jnp.zeros((1, HIDDEN), jnp.float32),
        # attention
        wa=sc * jax.random.normal(ks[10], (HIDDEN, HIDDEN), jnp.float32),
        ba=jnp.zeros((1, HIDDEN), jnp.float32),
        va=sc * jax.random.normal(ks[11], (1, HIDDEN), jnp.float32),
        # fc2
        wf=sc * jax.random.normal(ks[12], (HIDDEN, NUM_CLASSES), jnp.float32),
        bf=jnp.zeros((1, NUM_CLASSES), jnp.float32),
    )

    out = jax.jit(phi_fc_recurrent_forward)(wav, params)
    out = jax.block_until_ready(out)
    assert out.shape == (B, NUM_CLASSES) and out.dtype == jnp.float32
    assert bool(jnp.all(jnp.isfinite(out)))
    print("KERNEL_OK")
</pallas_src>

<mosaic_0001>
module attributes {stable_mosaic.version = 11 : i64} {
  func.func @_fused_kernel(%arg0: i32, %arg1: memref<8x3600xf32, #tpu.memory_space<vmem>>, %arg2: memref<400x512xbf16, #tpu.memory_space<vmem>>, %arg3: memref<256x64xbf16, #tpu.memory_space<vmem>>, %arg4: memref<64x64xbf16, #tpu.memory_space<vmem>>, %arg5: memref<1x64xf32, #tpu.memory_space<vmem>>, %arg6: memref<64x64xbf16, #tpu.memory_space<vmem>>, %arg7: memref<1x64xf32, #tpu.memory_space<vmem>>, %arg8: memref<64x32xf32, #tpu.memory_space<vmem>>, %arg9: memref<64x32xf32, #tpu.memory_space<vmem>>, %arg10: memref<64x32xf32, #tpu.memory_space<vmem>>, %arg11: memref<1x32xf32, #tpu.memory_space<vmem>>, %arg12: memref<1x32xf32, #tpu.memory_space<vmem>>, %arg13: memref<1x32xf32, #tpu.memory_space<vmem>>, %arg14: memref<32x32xf32, #tpu.memory_space<vmem>>, %arg15: memref<32x32xf32, #tpu.memory_space<vmem>>, %arg16: memref<32x32xf32, #tpu.memory_space<vmem>>, %arg17: memref<1x32xf32, #tpu.memory_space<vmem>>, %arg18: memref<1x32xf32, #tpu.memory_space<vmem>>, %arg19: memref<1x32xf32, #tpu.memory_space<vmem>>, %arg20: memref<32x32xf32, #tpu.memory_space<vmem>>, %arg21: memref<1x32xf32, #tpu.memory_space<vmem>>, %arg22: memref<32x32xf32, #tpu.memory_space<vmem>>, %arg23: memref<1x32xf32, #tpu.memory_space<vmem>>, %arg24: memref<1x32xf32, #tpu.memory_space<vmem>>, %arg25: memref<32x128xf32, #tpu.memory_space<vmem>>, %arg26: memref<1x128xf32, #tpu.memory_space<vmem>>, %arg27: memref<8x128xf32, #tpu.memory_space<vmem>>) attributes {dimension_semantics = [#tpu.dimension_semantics<parallel>], iteration_bounds = array<i64: 1>, scalar_prefetch = 0 : i64, scratch_operands = 0 : i64, tpu.core_type = #tpu.core_type<tc>, window_params = [{transform_indices = @transform_0, window_bounds = array<i64: 8, 3600>}, {pipeline_mode = #tpu.pipeline_mode<synchronous>, transform_indices = @transform_1, window_bounds = array<i64: 400, 512>}, {pipeline_mode = #tpu.pipeline_mode<synchronous>, transform_indices = @transform_2, window_bounds = array<i64: 256, 64>}, {pipeline_mode = #tpu.pipeline_mode<synchronous>, transform_indices = @transform_3, window_bounds = array<i64: 64, 64>}, {pipeline_mode = #tpu.pipeline_mode<synchronous>, transform_indices = @transform_4, window_bounds = array<i64: 1, 64>}, {pipeline_mode = #tpu.pipeline_mode<synchronous>, transform_indices = @transform_5, window_bounds = array<i64: 64, 64>}, {pipeline_mode = #tpu.pipeline_mode<synchronous>, transform_indices = @transform_6, window_bounds = array<i64: 1, 64>}, {pipeline_mode = #tpu.pipeline_mode<synchronous>, transform_indices = @transform_7, window_bounds = array<i64: 64, 32>}, {pipeline_mode = #tpu.pipeline_mode<synchronous>, transform_indices = @transform_8, window_bounds = array<i64: 64, 32>}, {pipeline_mode = #tpu.pipeline_mode<synchronous>, transform_indices = @transform_9, window_bounds = array<i64: 64, 32>}, {pipeline_mode = #tpu.pipeline_mode<synchronous>, transform_indices = @transform_10, window_bounds = array<i64: 1, 32>}, {pipeline_mode = #tpu.pipeline_mode<synchronous>, transform_indices = @transform_11, window_bounds = array<i64: 1, 32>}, {pipeline_mode = #tpu.pipeline_mode<synchronous>, transform_indices = @transform_12, window_bounds = array<i64: 1, 32>}, {pipeline_mode = #tpu.pipeline_mode<synchronous>, transform_indices = @transform_13, window_bounds = array<i64: 32, 32>}, {pipeline_mode = #tpu.pipeline_mode<synchronous>, transform_indices = @transform_14, window_bounds = array<i64: 32, 32>}, {pipeline_mode = #tpu.pipeline_mode<synchronous>, transform_indices = @transform_15, window_bounds = array<i64: 32, 32>}, {pipeline_mode = #tpu.pipeline_mode<synchronous>, transform_indices = @transform_16, window_bounds = array<i64: 1, 32>}, {pipeline_mode = #tpu.pipeline_mode<synchronous>, transform_indices = @transform_17, window_bounds = array<i64: 1, 32>}, {pipeline_mode = #tpu.pipeline_mode<synchronous>, transform_indices = @transform_18, window_bounds = array<i64: 1, 32>}, {pipeline_mode = #tpu.pipeline_mode<synchronous>, transform_indices = @transform_19, window_bounds = array<i64: 32, 32>}, {pipeline_mode = #tpu.pipeline_mode<synchronous>, transform_indices = @transform_20, window_bounds = array<i64: 1, 32>}, {pipeline_mode = #tpu.pipeline_mode<synchronous>, transform_indices = @transform_21, window_bounds = array<i64: 32, 32>}, {pipeline_mode = #tpu.pipeline_mode<synchronous>, transform_indices = @transform_22, window_bounds = array<i64: 1, 32>}, {pipeline_mode = #tpu.pipeline_mode<synchronous>, transform_indices = @transform_23, window_bounds = array<i64: 1, 32>}, {pipeline_mode = #tpu.pipeline_mode<synchronous>, transform_indices = @transform_24, window_bounds = array<i64: 32, 128>}, {pipeline_mode = #tpu.pipeline_mode<synchronous>, transform_indices = @transform_25, window_bounds = array<i64: 1, 128>}, {transform_indices = @transform_26, window_bounds = array<i64: 8, 128>}]} {
    %c0 = arith.constant 0 : index
    %c0_0 = arith.constant 0 : index
    %0 = vector.load %arg1[%c0, %c0_0] : memref<8x3600xf32, #tpu.memory_space<vmem>>, vector<8x400xf32>
    %c0_1 = arith.constant 0 : index
    %c160 = arith.constant 160 : index
    %1 = vector.load %arg1[%c0_1, %c160] : memref<8x3600xf32, #tpu.memory_space<vmem>>, vector<8x400xf32>
    %c0_2 = arith.constant 0 : index
    %c320 = arith.constant 320 : index
    %2 = vector.load %arg1[%c0_2, %c320] : memref<8x3600xf32, #tpu.memory_space<vmem>>, vector<8x400xf32>
    %c0_3 = arith.constant 0 : index
    %c480 = arith.constant 480 : index
    %3 = vector.load %arg1[%c0_3, %c480] : memref<8x3600xf32, #tpu.memory_space<vmem>>, vector<8x400xf32>
    %c0_4 = arith.constant 0 : index
    %c640 = arith.constant 640 : index
    %4 = vector.load %arg1[%c0_4, %c640] : memref<8x3600xf32, #tpu.memory_space<vmem>>, vector<8x400xf32>
    %c0_5 = arith.constant 0 : index
    %c800 = arith.constant 800 : index
    %5 = vector.load %arg1[%c0_5, %c800] : memref<8x3600xf32, #tpu.memory_space<vmem>>, vector<8x400xf32>
    %c0_6 = arith.constant 0 : index
    %c960 = arith.constant 960 : index
    %6 = vector.load %arg1[%c0_6, %c960] : memref<8x3600xf32, #tpu.memory_space<vmem>>, vector<8x400xf32>
    %c0_7 = arith.constant 0 : index
    %c1120 = arith.constant 1120 : index
    %7 = vector.load %arg1[%c0_7, %c1120] : memref<8x3600xf32, #tpu.memory_space<vmem>>, vector<8x400xf32>
    %c0_8 = arith.constant 0 : index
    %c1280 = arith.constant 1280 : index
    %8 = vector.load %arg1[%c0_8, %c1280] : memref<8x3600xf32, #tpu.memory_space<vmem>>, vector<8x400xf32>
    %c0_9 = arith.constant 0 : index
    %c1440 = arith.constant 1440 : index
    %9 = vector.load %arg1[%c0_9, %c1440] : memref<8x3600xf32, #tpu.memory_space<vmem>>, vector<8x400xf32>
    %c0_10 = arith.constant 0 : index
    %c1600 = arith.constant 1600 : index
    %10 = vector.load %arg1[%c0_10, %c1600] : memref<8x3600xf32, #tpu.memory_space<vmem>>, vector<8x400xf32>
    %c0_11 = arith.constant 0 : index
    %c1760 = arith.constant 1760 : index
    %11 = vector.load %arg1[%c0_11, %c1760] : memref<8x3600xf32, #tpu.memory_space<vmem>>, vector<8x400xf32>
    %c0_12 = arith.constant 0 : index
    %c1920 = arith.constant 1920 : index
    %12 = vector.load %arg1[%c0_12, %c1920] : memref<8x3600xf32, #tpu.memory_space<vmem>>, vector<8x400xf32>
    %c0_13 = arith.constant 0 : index
    %c2080 = arith.constant 2080 : index
    %13 = vector.load %arg1[%c0_13, %c2080] : memref<8x3600xf32, #tpu.memory_space<vmem>>, vector<8x400xf32>
    %c0_14 = arith.constant 0 : index
    %c2240 = arith.constant 2240 : index
    %14 = vector.load %arg1[%c0_14, %c2240] : memref<8x3600xf32, #tpu.memory_space<vmem>>, vector<8x400xf32>
    %c0_15 = arith.constant 0 : index
    %c2400 = arith.constant 2400 : index
    %15 = vector.load %arg1[%c0_15, %c2400] : memref<8x3600xf32, #tpu.memory_space<vmem>>, vector<8x400xf32>
    %c0_16 = arith.constant 0 : index
    %c2560 = arith.constant 2560 : index
    %16 = vector.load %arg1[%c0_16, %c2560] : memref<8x3600xf32, #tpu.memory_space<vmem>>, vector<8x400xf32>
    %c0_17 = arith.constant 0 : index
    %c2720 = arith.constant 2720 : index
    %17 = vector.load %arg1[%c0_17, %c2720] : memref<8x3600xf32, #tpu.memory_space<vmem>>, vector<8x400xf32>
    %c0_18 = arith.constant 0 : index
    %c2880 = arith.constant 2880 : index
    %18 = vector.load %arg1[%c0_18, %c2880] : memref<8x3600xf32, #tpu.memory_space<vmem>>, vector<8x400xf32>
    %c0_19 = arith.constant 0 : index
    %c3040 = arith.constant 3040 : index
    %19 = vector.load %arg1[%c0_19, %c3040] : memref<8x3600xf32, #tpu.memory_space<vmem>>, vector<8x400xf32>
    %c0_20 = arith.constant 0 : index
    %c3200 = arith.constant 3200 : index
    %20 = vector.load %arg1[%c0_20, %c3200] : memref<8x3600xf32, #tpu.memory_space<vmem>>, vector<8x400xf32>
    %21 = tpu.concatenate %0, %1, %2, %3, %4, %5, %6, %7, %8, %9, %10, %11, %12, %13, %14, %15 in 0 : vector<8x400xf32>, vector<8x400xf32>, vector<8x400xf32>, vector<8x400xf32>, vector<8x400xf32>, vector<8x400xf32>, vector<8x400xf32>, vector<8x400xf32>, vector<8x400xf32>, vector<8x400xf32>, vector<8x400xf32>, vector<8x400xf32>, vector<8x400xf32>, vector<8x400xf32>, vector<8x400xf32>, vector<8x400xf32> -> vector<128x400xf32>
    %22 = tpu.concatenate %16, %17, %18, %19, %20 in 0 : vector<8x400xf32>, vector<8x400xf32>, vector<8x400xf32>, vector<8x400xf32>, vector<8x400xf32> -> vector<40x400xf32>
    %23 = tpu.concatenate %21, %22 in 0 : vector<128x400xf32>, vector<40x400xf32> -> vector<168x400xf32>
    %24 = arith.truncf %23 : vector<168x400xf32> to vector<168x400xbf16>
    %c0_21 = arith.constant 0 : index
    %c0_22 = arith.constant 0 : index
    %25 = vector.load %arg2[%c0_21, %c0_22] : memref<400x512xbf16, #tpu.memory_space<vmem>>, vector<400x512xbf16>
    %cst = arith.constant dense<0.000000e+00> : vector<168x512xf32>
    %26 = tpu.matmul %24, %25, %cst {dimension_numbers = #tpu.dot_dimension_numbers<[1], [0], [0], [1], [0, 0, 1, 1], [], []>} : vector<168x400xbf16>, vector<400x512xbf16>, vector<168x512xf32> -> vector<168x512xf32>
    %27 = vector.extract_strided_slice %26 {offsets = [0, 0], sizes = [168, 256], strides = [1, 1]} : vector<168x512xf32> to vector<168x256xf32>
    %28 = vector.extract_strided_slice %26 {offsets = [0, 256], sizes = [168, 256], strides = [1, 1]} : vector<168x512xf32> to vector<168x256xf32>
    %29 = arith.mulf %27, %27 : vector<168x256xf32>
    %30 = arith.mulf %28, %28 : vector<168x256xf32>
    %31 = arith.addf %29, %30 : vector<168x256xf32>
    %32 = arith.truncf %31 : vector<168x256xf32> to vector<168x256xbf16>
    %c0_23 = arith.constant 0 : index
    %c0_24 = arith.constant 0 : index
    %33 = vector.load %arg3[%c0_23, %c0_24] : memref<256x64xbf16, #tpu.memory_space<vmem>>, vector<256x64xbf16>
    %cst_25 = arith.constant dense<0.000000e+00> : vector<168x64xf32>
    %34 = tpu.matmul %32, %33, %cst_25 {dimension_numbers = #tpu.dot_dimension_numbers<[1], [0], [0], [1], [0, 0, 1, 1], [], []>} : vector<168x256xbf16>, vector<256x64xbf16>, vector<168x64xf32> -> vector<168x64xf32>
    %cst_26 = arith.constant 1.000000e-10 : f32
    %35 = vector.broadcast %cst_26 : f32 to vector<168x64xf32>
    %36 = arith.maximumf %34, %35 : vector<168x64xf32>
    %37 = math.log %36 : vector<168x64xf32>
    %cst_27 = arith.constant 0.434294492 : f32
    %38 = vector.broadcast %cst_27 : f32 to vector<168x64xf32>
    %39 = arith.mulf %37, %38 : vector<168x64xf32>
    %cst_28 = arith.constant 1.000000e+01 : f32
    %40 = vector.broadcast %cst_28 : f32 to vector<168x64xf32>
    %41 = arith.mulf %40, %39 : vector<168x64xf32>
    %42 = vector.shape_cast %41 : vector<168x64xf32> to vector<21x8x64xf32>
    %cst_29 = arith.constant dense<0.000000e+00> : vector<21x8xf32>
    %43 = vector.multi_reduction <add>, %42, %cst_29 [2] : vector<21x8x64xf32> to vector<21x8xf32>
    %44 = vector.shape_cast %43 : vector<21x8xf32> to vector<21x8x1xf32>
    %cst_30 = arith.constant 6.400000e+01 : f32
    %45 = vector.broadcast %cst_30 : f32 to vector<21x8x1xf32>
    %46 = arith.divf %44, %45 : vector<21x8x1xf32>
    %cst_31 = arith.constant dense<0.000000e+00> : vector<8x1xf32>
    %47 = vector.multi_reduction <add>, %46, %cst_31 [0] : vector<21x8x1xf32> to vector<8x1xf32>
    %48 = vector.shape_cast %47 : vector<8x1xf32> to vector<1x8x1xf32>
    %cst_32 = arith.constant 2.100000e+01 : f32
    %49 = vector.broadcast %cst_32 : f32 to vector<1x8x1xf32>
    %50 = arith.divf %48, %49 : vector<1x8x1xf32>
    %51 = vector.broadcast %50 : vector<1x8x1xf32> to vector<21x8x64xf32>
    %52 = arith.subf %42, %51 : vector<21x8x64xf32>
    %53 = arith.mulf %52, %52 : vector<21x8x64xf32>
    %cst_33 = arith.constant dense<0.000000e+00> : vector<21x8xf32>
    %54 = vector.multi_reduction <add>, %53, %cst_33 [2] : vector<21x8x64xf32> to vector<21x8xf32>
    %55 = vector.shape_cast %54 : vector<21x8xf32> to vector<21x8x1xf32>
    %cst_34 = arith.constant dense<0.000000e+00> : vector<8x1xf32>
    %56 = vector.multi_reduction <add>, %55, %cst_34 [0] : vector<21x8x1xf32> to vector<8x1xf32>
    %57 = vector.shape_cast %56 : vector<8x1xf32> to vector<1x8x1xf32>
    %cst_35 = arith.constant 1.343000e+03 : f32
    %58 = vector.broadcast %cst_35 : f32 to vector<1x8x1xf32>
    %59 = arith.divf %57, %58 : vector<1x8x1xf32>
    %60 = math.sqrt %59 : vector<1x8x1xf32>
    %cst_36 = arith.constant 9.99999974E-6 : f32
    %61 = vector.broadcast %cst_36 : f32 to vector<1x8x1xf32>
    %62 = arith.addf %60, %61 : vector<1x8x1xf32>
    %cst_37 = arith.constant 1.000000e+00 : f32
    %63 = vector.broadcast %cst_37 : f32 to vector<1x8x1xf32>
    %64 = arith.divf %63, %62 : vector<1x8x1xf32>
    %65 = vector.broadcast %50 : vector<1x8x1xf32> to vector<21x8x64xf32>
    %66 = arith.subf %42, %65 : vector<21x8x64xf32>
    %67 = vector.broadcast %64 : vector<1x8x1xf32> to vector<21x8x64xf32>
    %68 = arith.mulf %66, %67 : vector<21x8x64xf32>
    %69 = vector.shape_cast %68 : vector<21x8x64xf32> to vector<168x64xf32>
    %70 = arith.truncf %69 : vector<168x64xf32> to vector<168x64xbf16>
    %c0_38 = arith.constant 0 : index
    %c0_39 = arith.constant 0 : index
    %71 = vector.load %arg4[%c0_38, %c0_39] : memref<64x64xbf16, #tpu.memory_space<vmem>>, vector<64x64xbf16>
    %cst_40 = arith.constant dense<0.000000e+00> : vector<168x64xf32>
    %72 = tpu.matmul %70, %71, %cst_40 {dimension_numbers = #tpu.dot_dimension_numbers<[1], [0], [0], [1], [0, 0, 1, 1], [], []>} : vector<168x64xbf16>, vector<64x64xbf16>, vector<168x64xf32> -> vector<168x64xf32>
    %c0_41 = arith.constant 0 : index
    %c0_42 = arith.constant 0 : index
    %73 = vector.load %arg5[%c0_41, %c0_42] : memref<1x64xf32, #tpu.memory_space<vmem>>, vector<1x64xf32>
    %74 = vector.broadcast %73 : vector<1x64xf32> to vector<168x64xf32>
    %75 = arith.addf %72, %74 : vector<168x64xf32>
    %cst_43 = arith.constant 0.000000e+00 : f32
    %76 = vector.broadcast %cst_43 : f32 to vector<168x64xf32>
    %77 = arith.maximumf %75, %76 : vector<168x64xf32>
    %78 = arith.truncf %77 : vector<168x64xf32> to vector<168x64xbf16>
    %c0_44 = arith.constant 0 : index
    %c0_45 = arith.constant 0 : index
    %79 = vector.load %arg6[%c0_44, %c0_45] : memref<64x64xbf16, #tpu.memory_space<vmem>>, vector<64x64xbf16>
    %cst_46 = arith.constant dense<0.000000e+00> : vector<168x64xf32>
    %80 = tpu.matmul %78, %79, %cst_46 {dimension_numbers = #tpu.dot_dimension_numbers<[1], [0], [0], [1], [0, 0, 1, 1], [], []>} : vector<168x64xbf16>, vector<64x64xbf16>, vector<168x64xf32> -> vector<168x64xf32>
    %c0_47 = arith.constant 0 : index
    %c0_48 = arith.constant 0 : index
    %81 = vector.load %arg7[%c0_47, %c0_48] : memref<1x64xf32, #tpu.memory_space<vmem>>, vector<1x64xf32>
    %82 = vector.broadcast %81 : vector<1x64xf32> to vector<168x64xf32>
    %83 = arith.addf %80, %82 : vector<168x64xf32>
    %84 = arith.addf %83, %69 : vector<168x64xf32>
    %cst_49 = arith.constant 0.000000e+00 : f32
    %85 = vector.broadcast %cst_49 : f32 to vector<168x64xf32>
    %86 = arith.maximumf %84, %85 : vector<168x64xf32>
    %c0_50 = arith.constant 0 : index
    %c0_51 = arith.constant 0 : index
    %87 = vector.load %arg8[%c0_50, %c0_51] : memref<64x32xf32, #tpu.memory_space<vmem>>, vector<64x32xf32>
    %cst_52 = arith.constant dense<0.000000e+00> : vector<168x32xf32>
    %88 = tpu.matmul %86, %87, %cst_52 {dimension_numbers = #tpu.dot_dimension_numbers<[1], [0], [0], [1], [0, 0, 1, 1], [], []>} : vector<168x64xf32>, vector<64x32xf32>, vector<168x32xf32> -> vector<168x32xf32>
    %c0_53 = arith.constant 0 : index
    %c0_54 = arith.constant 0 : index
    %89 = vector.load %arg11[%c0_53, %c0_54] : memref<1x32xf32, #tpu.memory_space<vmem>>, vector<1x32xf32>
    %90 = vector.broadcast %89 : vector<1x32xf32> to vector<168x32xf32>
    %91 = arith.addf %88, %90 : vector<168x32xf32>
    %c0_55 = arith.constant 0 : index
    %c0_56 = arith.constant 0 : index
    %92 = vector.load %arg9[%c0_55, %c0_56] : memref<64x32xf32, #tpu.memory_space<vmem>>, vector<64x32xf32>
    %cst_57 = arith.constant dense<0.000000e+00> : vector<168x32xf32>
    %93 = tpu.matmul %86, %92, %cst_57 {dimension_numbers = #tpu.dot_dimension_numbers<[1], [0], [0], [1], [0, 0, 1, 1], [], []>} : vector<168x64xf32>, vector<64x32xf32>, vector<168x32xf32> -> vector<168x32xf32>
    %c0_58 = arith.constant 0 : index
    %c0_59 = arith.constant 0 : index
    %94 = vector.load %arg12[%c0_58, %c0_59] : memref<1x32xf32, #tpu.memory_space<vmem>>, vector<1x32xf32>
    %95 = vector.broadcast %94 : vector<1x32xf32> to vector<168x32xf32>
    %96 = arith.addf %93, %95 : vector<168x32xf32>
    %c0_60 = arith.constant 0 : index
    %c0_61 = arith.constant 0 : index
    %97 = vector.load %arg10[%c0_60, %c0_61] : memref<64x32xf32, #tpu.memory_space<vmem>>, vector<64x32xf32>
    %cst_62 = arith.constant dense<0.000000e+00> : vector<168x32xf32>
    %98 = tpu.matmul %86, %97, %cst_62 {dimension_numbers = #tpu.dot_dimension_numbers<[1], [0], [0], [1], [0, 0, 1, 1], [], []>} : vector<168x64xf32>, vector<64x32xf32>, vector<168x32xf32> -> vector<168x32xf32>
    %c0_63 = arith.constant 0 : index
    %c0_64 = arith.constant 0 : index
    %99 = vector.load %arg13[%c0_63, %c0_64] : memref<1x32xf32, #tpu.memory_space<vmem>>, vector<1x32xf32>
    %100 = vector.broadcast %99 : vector<1x32xf32> to vector<168x32xf32>
    %101 = arith.addf %98, %100 : vector<168x32xf32>
    %c0_65 = arith.constant 0 : index
    %c0_66 = arith.constant 0 : index
    %102 = vector.load %arg14[%c0_65, %c0_66] : memref<32x32xf32, #tpu.memory_space<vmem>>, vector<32x32xf32>
    %c0_67 = arith.constant 0 : index
    %c0_68 = arith.constant 0 : index
    %103 = vector.load %arg15[%c0_67, %c0_68] : memref<32x32xf32, #tpu.memory_space<vmem>>, vector<32x32xf32>
    %c0_69 = arith.constant 0 : index
    %c0_70 = arith.constant 0 : index
    %104 = vector.load %arg16[%c0_69, %c0_70] : memref<32x32xf32, #tpu.memory_space<vmem>>, vector<32x32xf32>
    %c0_71 = arith.constant 0 : index
    %c0_72 = arith.constant 0 : index
    %105 = vector.load %arg17[%c0_71, %c0_72] : memref<1x32xf32, #tpu.memory_space<vmem>>, vector<1x32xf32>
    %c0_73 = arith.constant 0 : index
    %c0_74 = arith.constant 0 : index
    %106 = vector.load %arg18[%c0_73, %c0_74] : memref<1x32xf32, #tpu.memory_space<vmem>>, vector<1x32xf32>
    %c0_75 = arith.constant 0 : index
    %c0_76 = arith.constant 0 : index
    %107 = vector.load %arg19[%c0_75, %c0_76] : memref<1x32xf32, #tpu.memory_space<vmem>>, vector<1x32xf32>
    %cst_77 = arith.constant 0.000000e+00 : f32
    %108 = vector.broadcast %cst_77 : f32 to vector<8x32xf32>
    %109 = vector.extract_strided_slice %91 {offsets = [0, 0], sizes = [8, 32], strides = [1, 1]} : vector<168x32xf32> to vector<8x32xf32>
    %110 = vector.extract_strided_slice %96 {offsets = [0, 0], sizes = [8, 32], strides = [1, 1]} : vector<168x32xf32> to vector<8x32xf32>
    %111 = vector.extract_strided_slice %101 {offsets = [0, 0], sizes = [8, 32], strides = [1, 1]} : vector<168x32xf32> to vector<8x32xf32>
    %cst_78 = arith.constant dense<0.000000e+00> : vector<8x32xf32>
    %112 = tpu.matmul %108, %102, %cst_78 {dimension_numbers = #tpu.dot_dimension_numbers<[1], [0], [0], [1], [0, 0, 1, 1], [], []>} : vector<8x32xf32>, vector<32x32xf32>, vector<8x32xf32> -> vector<8x32xf32>
    %113 = vector.broadcast %105 : vector<1x32xf32> to vector<8x32xf32>
    %114 = arith.addf %112, %113 : vector<8x32xf32>
    %cst_79 = arith.constant dense<0.000000e+00> : vector<8x32xf32>
    %115 = tpu.matmul %108, %103, %cst_79 {dimension_numbers = #tpu.dot_dimension_numbers<[1], [0], [0], [1], [0, 0, 1, 1], [], []>} : vector<8x32xf32>, vector<32x32xf32>, vector<8x32xf32> -> vector<8x32xf32>
    %116 = vector.broadcast %106 : vector<1x32xf32> to vector<8x32xf32>
    %117 = arith.addf %115, %116 : vector<8x32xf32>
    %cst_80 = arith.constant dense<0.000000e+00> : vector<8x32xf32>
    %118 = tpu.matmul %108, %104, %cst_80 {dimension_numbers = #tpu.dot_dimension_numbers<[1], [0], [0], [1], [0, 0, 1, 1], [], []>} : vector<8x32xf32>, vector<32x32xf32>, vector<8x32xf32> -> vector<8x32xf32>
    %119 = vector.broadcast %107 : vector<1x32xf32> to vector<8x32xf32>
    %120 = arith.addf %118, %119 : vector<8x32xf32>
    %121 = arith.addf %109, %114 : vector<8x32xf32>
    %122 = arith.negf %121 : vector<8x32xf32>
    %123 = math.exp %122 : vector<8x32xf32>
    %cst_81 = arith.constant 1.000000e+00 : f32
    %124 = vector.broadcast %cst_81 : f32 to vector<8x32xf32>
    %125 = arith.addf %124, %123 : vector<8x32xf32>
    %126 = arith.divf %124, %125 : vector<8x32xf32>
    %127 = arith.addf %110, %117 : vector<8x32xf32>
    %128 = arith.negf %127 : vector<8x32xf32>
    %129 = math.exp %128 : vector<8x32xf32>
    %cst_82 = arith.constant 1.000000e+00 : f32
    %130 = vector.broadcast %cst_82 : f32 to vector<8x32xf32>
    %131 = arith.addf %130, %129 : vector<8x32xf32>
    %132 = arith.divf %130, %131 : vector<8x32xf32>
    %133 = arith.mulf %126, %120 : vector<8x32xf32>
    %134 = arith.addf %111, %133 : vector<8x32xf32>
    %135 = math.tanh %134 : vector<8x32xf32>
    %cst_83 = arith.constant 1.000000e+00 : f32
    %136 = vector.broadcast %cst_83 : f32 to vector<8x32xf32>
    %137 = arith.subf %136, %132 : vector<8x32xf32>
    %138 = arith.mulf %137, %135 : vector<8x32xf32>
    %139 = arith.mulf %132, %108 : vector<8x32xf32>
    %140 = arith.addf %138, %139 : vector<8x32xf32>
    %141 = vector.extract_strided_slice %91 {offsets = [8, 0], sizes = [8, 32], strides = [1, 1]} : vector<168x32xf32> to vector<8x32xf32>
    %142 = vector.extract_strided_slice %96 {offsets = [8, 0], sizes = [8, 32], strides = [1, 1]} : vector<168x32xf32> to vector<8x32xf32>
    %143 = vector.extract_strided_slice %101 {offsets = [8, 0], sizes = [8, 32], strides = [1, 1]} : vector<168x32xf32> to vector<8x32xf32>
    %cst_84 = arith.constant dense<0.000000e+00> : vector<8x32xf32>
    %144 = tpu.matmul %140, %102, %cst_84 {dimension_numbers = #tpu.dot_dimension_numbers<[1], [0], [0], [1], [0, 0, 1, 1], [], []>} : vector<8x32xf32>, vector<32x32xf32>, vector<8x32xf32> -> vector<8x32xf32>
    %145 = vector.broadcast %105 : vector<1x32xf32> to vector<8x32xf32>
    %146 = arith.addf %144, %145 : vector<8x32xf32>
    %cst_85 = arith.constant dense<0.000000e+00> : vector<8x32xf32>
    %147 = tpu.matmul %140, %103, %cst_85 {dimension_numbers = #tpu.dot_dimension_numbers<[1], [0], [0], [1], [0, 0, 1, 1], [], []>} : vector<8x32xf32>, vector<32x32xf32>, vector<8x32xf32> -> vector<8x32xf32>
    %148 = vector.broadcast %106 : vector<1x32xf32> to vector<8x32xf32>
    %149 = arith.addf %147, %148 : vector<8x32xf32>
    %cst_86 = arith.constant dense<0.000000e+00> : vector<8x32xf32>
    %150 = tpu.matmul %140, %104, %cst_86 {dimension_numbers = #tpu.dot_dimension_numbers<[1], [0], [0], [1], [0, 0, 1, 1], [], []>} : vector<8x32xf32>, vector<32x32xf32>, vector<8x32xf32> -> vector<8x32xf32>
    %151 = vector.broadcast %107 : vector<1x32xf32> to vector<8x32xf32>
    %152 = arith.addf %150, %151 : vector<8x32xf32>
    %153 = arith.addf %141, %146 : vector<8x32xf32>
    %154 = arith.negf %153 : vector<8x32xf32>
    %155 = math.exp %154 : vector<8x32xf32>
    %cst_87 = arith.constant 1.000000e+00 : f32
    %156 = vector.broadcast %cst_87 : f32 to vector<8x32xf32>
    %157 = arith.addf %156, %155 : vector<8x32xf32>
    %158 = arith.divf %156, %157 : vector<8x32xf32>
    %159 = arith.addf %142, %149 : vector<8x32xf32>
    %160 = arith.negf %159 : vector<8x32xf32>
    %161 = math.exp %160 : vector<8x32xf32>
    %cst_88 = arith.constant 1.000000e+00 : f32
    %162 = vector.broadcast %cst_88 : f32 to vector<8x32xf32>
    %163 = arith.addf %162, %161 : vector<8x32xf32>
    %164 = arith.divf %162, %163 : vector<8x32xf32>
    %165 = arith.mulf %158, %152 : vector<8x32xf32>
    %166 = arith.addf %143, %165 : vector<8x32xf32>
    %167 = math.tanh %166 : vector<8x32xf32>
    %cst_89 = arith.constant 1.000000e+00 : f32
    %168 = vector.broadcast %cst_89 : f32 to vector<8x32xf32>
    %169 = arith.subf %168, %164 : vector<8x32xf32>
    %170 = arith.mulf %169, %167 : vector<8x32xf32>
    %171 = arith.mulf %164, %140 : vector<8x32xf32>
    %172 = arith.addf %170, %171 : vector<8x32xf32>
    %173 = vector.extract_strided_slice %91 {offsets = [16, 0], sizes = [8, 32], strides = [1, 1]} : vector<168x32xf32> to vector<8x32xf32>
    %174 = vector.extract_strided_slice %96 {offsets = [16, 0], sizes = [8, 32], strides = [1, 1]} : vector<168x32xf32> to vector<8x32xf32>
    %175 = vector.extract_strided_slice %101 {offsets = [16, 0], sizes = [8, 32], strides = [1, 1]} : vector<168x32xf32> to vector<8x32xf32>
    %cst_90 = arith.constant dense<0.000000e+00> : vector<8x32xf32>
    %176 = tpu.matmul %172, %102, %cst_90 {dimension_numbers = #tpu.dot_dimension_numbers<[1], [0], [0], [1], [0, 0, 1, 1], [], []>} : vector<8x32xf32>, vector<32x32xf32>, vector<8x32xf32> -> vector<8x32xf32>
    %177 = vector.broadcast %105 : vector<1x32xf32> to vector<8x32xf32>
    %178 = arith.addf %176, %177 : vector<8x32xf32>
    %cst_91 = arith.constant dense<0.000000e+00> : vector<8x32xf32>
    %179 = tpu.matmul %172, %103, %cst_91 {dimension_numbers = #tpu.dot_dimension_numbers<[1], [0], [0], [1], [0, 0, 1, 1], [], []>} : vector<8x32xf32>, vector<32x32xf32>, vector<8x32xf32> -> vector<8x32xf32>
    %180 = vector.broadcast %106 : vector<1x32xf32> to vector<8x32xf32>
    %181 = arith.addf %179, %180 : vector<8x32xf32>
    %cst_92 = arith.constant dense<0.000000e+00> : vector<8x32xf32>
    %182 = tpu.matmul %172, %104, %cst_92 {dimension_numbers = #tpu.dot_dimension_numbers<[1], [0], [0], [1], [0, 0, 1, 1], [], []>} : vector<8x32xf32>, vector<32x32xf32>, vector<8x32xf32> -> vector<8x32xf32>
    %183 = vector.broadcast %107 : vector<1x32xf32> to vector<8x32xf32>
    %184 = arith.addf %182, %183 : vector<8x32xf32>
    %185 = arith.addf %173, %178 : vector<8x32xf32>
    %186 = arith.negf %185 : vector<8x32xf32>
    %187 = math.exp %186 : vector<8x32xf32>
    %cst_93 = arith.constant 1.000000e+00 : f32
    %188 = vector.broadcast %cst_93 : f32 to vector<8x32xf32>
    %189 = arith.addf %188, %187 : vector<8x32xf32>
    %190 = arith.divf %188, %189 : vector<8x32xf32>
    %191 = arith.addf %174, %181 : vector<8x32xf32>
    %192 = arith.negf %191 : vector<8x32xf32>
    %193 = math.exp %192 : vector<8x32xf32>
    %cst_94 = arith.constant 1.000000e+00 : f32
    %194 = vector.broadcast %cst_94 : f32 to vector<8x32xf32>
    %195 = arith.addf %194, %193 : vector<8x32xf32>
    %196 = arith.divf %194, %195 : vector<8x32xf32>
    %197 = arith.mulf %190, %184 : vector<8x32xf32>
    %198 = arith.addf %175, %197 : vector<8x32xf32>
    %199 = math.tanh %198 : vector<8x32xf32>
    %cst_95 = arith.constant 1.000000e+00 : f32
    %200 = vector.broadcast %cst_95 : f32 to vector<8x32xf32>
    %201 = arith.subf %200, %196 : vector<8x32xf32>
    %202 = arith.mulf %201, %199 : vector<8x32xf32>
    %203 = arith.mulf %196, %172 : vector<8x32xf32>
    %204 = arith.addf %202, %203 : vector<8x32xf32>
    %205 = vector.extract_strided_slice %91 {offsets = [24, 0], sizes = [8, 32], strides = [1, 1]} : vector<168x32xf32> to vector<8x32xf32>
    %206 = vector.extract_strided_slice %96 {offsets = [24, 0], sizes = [8, 32], strides = [1, 1]} : vector<168x32xf32> to vector<8x32xf32>
    %207 = vector.extract_strided_slice %101 {offsets = [24, 0], sizes = [8, 32], strides = [1, 1]} : vector<168x32xf32> to vector<8x32xf32>
    %cst_96 = arith.constant dense<0.000000e+00> : vector<8x32xf32>
    %208 = tpu.matmul %204, %102, %cst_96 {dimension_numbers = #tpu.dot_dimension_numbers<[1], [0], [0], [1], [0, 0, 1, 1], [], []>} : vector<8x32xf32>, vector<32x32xf32>, vector<8x32xf32> -> vector<8x32xf32>
    %209 = vector.broadcast %105 : vector<1x32xf32> to vector<8x32xf32>
    %210 = arith.addf %208, %209 : vector<8x32xf32>
    %cst_97 = arith.constant dense<0.000000e+00> : vector<8x32xf32>
    %211 = tpu.matmul %204, %103, %cst_97 {dimension_numbers = #tpu.dot_dimension_numbers<[1], [0], [0], [1], [0, 0, 1, 1], [], []>} : vector<8x32xf32>, vector<32x32xf32>, vector<8x32xf32> -> vector<8x32xf32>
    %212 = vector.broadcast %106 : vector<1x32xf32> to vector<8x32xf32>
    %213 = arith.addf %211, %212 : vector<8x32xf32>
    %cst_98 = arith.constant dense<0.000000e+00> : vector<8x32xf32>
    %214 = tpu.matmul %204, %104, %cst_98 {dimension_numbers = #tpu.dot_dimension_numbers<[1], [0], [0], [1], [0, 0, 1, 1], [], []>} : vector<8x32xf32>, vector<32x32xf32>, vector<8x32xf32> -> vector<8x32xf32>
    %215 = vector.broadcast %107 : vector<1x32xf32> to vector<8x32xf32>
    %216 = arith.addf %214, %215 : vector<8x32xf32>
    %217 = arith.addf %205, %210 : vector<8x32xf32>
    %218 = arith.negf %217 : vector<8x32xf32>
    %219 = math.exp %218 : vector<8x32xf32>
    %cst_99 = arith.constant 1.000000e+00 : f32
    %220 = vector.broadcast %cst_99 : f32 to vector<8x32xf32>
    %221 = arith.addf %220, %219 : vector<8x32xf32>
    %222 = arith.divf %220, %221 : vector<8x32xf32>
    %223 = arith.addf %206, %213 : vector<8x32xf32>
    %224 = arith.negf %223 : vector<8x32xf32>
    %225 = math.exp %224 : vector<8x32xf32>
    %cst_100 = arith.constant 1.000000e+00 : f32
    %226 = vector.broadcast %cst_100 : f32 to vector<8x32xf32>
    %227 = arith.addf %226, %225 : vector<8x32xf32>
    %228 = arith.divf %226, %227 : vector<8x32xf32>
    %229 = arith.mulf %222, %216 : vector<8x32xf32>
    %230 = arith.addf %207, %229 : vector<8x32xf32>
    %231 = math.tanh %230 : vector<8x32xf32>
    %cst_101 = arith.constant 1.000000e+00 : f32
    %232 = vector.broadcast %cst_101 : f32 to vector<8x32xf32>
    %233 = arith.subf %232, %228 : vector<8x32xf32>
    %234 = arith.mulf %233, %231 : vector<8x32xf32>
    %235 = arith.mulf %228, %204 : vector<8x32xf32>
    %236 = arith.addf %234, %235 : vector<8x32xf32>
    %237 = vector.extract_strided_slice %91 {offsets = [32, 0], sizes = [8, 32], strides = [1, 1]} : vector<168x32xf32> to vector<8x32xf32>
    %238 = vector.extract_strided_slice %96 {offsets = [32, 0], sizes = [8, 32], strides = [1, 1]} : vector<168x32xf32> to vector<8x32xf32>
    %239 = vector.extract_strided_slice %101 {offsets = [32, 0], sizes = [8, 32], strides = [1, 1]} : vector<168x32xf32> to vector<8x32xf32>
    %cst_102 = arith.constant dense<0.000000e+00> : vector<8x32xf32>
    %240 = tpu.matmul %236, %102, %cst_102 {dimension_numbers = #tpu.dot_dimension_numbers<[1], [0], [0], [1], [0, 0, 1, 1], [], []>} : vector<8x32xf32>, vector<32x32xf32>, vector<8x32xf32> -> vector<8x32xf32>
    %241 = vector.broadcast %105 : vector<1x32xf32> to vector<8x32xf32>
    %242 = arith.addf %240, %241 : vector<8x32xf32>
    %cst_103 = arith.constant dense<0.000000e+00> : vector<8x32xf32>
    %243 = tpu.matmul %236, %103, %cst_103 {dimension_numbers = #tpu.dot_dimension_numbers<[1], [0], [0], [1], [0, 0, 1, 1], [], []>} : vector<8x32xf32>, vector<32x32xf32>, vector<8x32xf32> -> vector<8x32xf32>
    %244 = vector.broadcast %106 : vector<1x32xf32> to vector<8x32xf32>
    %245 = arith.addf %243, %244 : vector<8x32xf32>
    %cst_104 = arith.constant dense<0.000000e+00> : vector<8x32xf32>
    %246 = tpu.matmul %236, %104, %cst_104 {dimension_numbers = #tpu.dot_dimension_numbers<[1], [0], [0], [1], [0, 0, 1, 1], [], []>} : vector<8x32xf32>, vector<32x32xf32>, vector<8x32xf32> -> vector<8x32xf32>
    %247 = vector.broadcast %107 : vector<1x32xf32> to vector<8x32xf32>
    %248 = arith.addf %246, %247 : vector<8x32xf32>
    %249 = arith.addf %237, %242 : vector<8x32xf32>
    %250 = arith.negf %249 : vector<8x32xf32>
    %251 = math.exp %250 : vector<8x32xf32>
    %cst_105 = arith.constant 1.000000e+00 : f32
    %252 = vector.broadcast %cst_105 : f32 to vector<8x32xf32>
    %253 = arith.addf %252, %251 : vector<8x32xf32>
    %254 = arith.divf %252, %253 : vector<8x32xf32>
    %255 = arith.addf %238, %245 : vector<8x32xf32>
    %256 = arith.negf %255 : vector<8x32xf32>
    %257 = math.exp %256 : vector<8x32xf32>
    %cst_106 = arith.constant 1.000000e+00 : f32
    %258 = vector.broadcast %cst_106 : f32 to vector<8x32xf32>
    %259 = arith.addf %258, %257 : vector<8x32xf32>
    %260 = arith.divf %258, %259 : vector<8x32xf32>
    %261 = arith.mulf %254, %248 : vector<8x32xf32>
    %262 = arith.addf %239, %261 : vector<8x32xf32>
    %263 = math.tanh %262 : vector<8x32xf32>
    %cst_107 = arith.constant 1.000000e+00 : f32
    %264 = vector.broadcast %cst_107 : f32 to vector<8x32xf32>
    %265 = arith.subf %264, %260 : vector<8x32xf32>
    %266 = arith.mulf %265, %263 : vector<8x32xf32>
    %267 = arith.mulf %260, %236 : vector<8x32xf32>
    %268 = arith.addf %266, %267 : vector<8x32xf32>
    %269 = vector.extract_strided_slice %91 {offsets = [40, 0], sizes = [8, 32], strides = [1, 1]} : vector<168x32xf32> to vector<8x32xf32>
    %270 = vector.extract_strided_slice %96 {offsets = [40, 0], sizes = [8, 32], strides = [1, 1]} : vector<168x32xf32> to vector<8x32xf32>
    %271 = vector.extract_strided_slice %101 {offsets = [40, 0], sizes = [8, 32], strides = [1, 1]} : vector<168x32xf32> to vector<8x32xf32>
    %cst_108 = arith.constant dense<0.000000e+00> : vector<8x32xf32>
    %272 = tpu.matmul %268, %102, %cst_108 {dimension_numbers = #tpu.dot_dimension_numbers<[1], [0], [0], [1], [0, 0, 1, 1], [], []>} : vector<8x32xf32>, vector<32x32xf32>, vector<8x32xf32> -> vector<8x32xf32>
    %273 = vector.broadcast %105 : vector<1x32xf32> to vector<8x32xf32>
    %274 = arith.addf %272, %273 : vector<8x32xf32>
    %cst_109 = arith.constant dense<0.000000e+00> : vector<8x32xf32>
    %275 = tpu.matmul %268, %103, %cst_109 {dimension_numbers = #tpu.dot_dimension_numbers<[1], [0], [0], [1], [0, 0, 1, 1], [], []>} : vector<8x32xf32>, vector<32x32xf32>, vector<8x32xf32> -> vector<8x32xf32>
    %276 = vector.broadcast %106 : vector<1x32xf32> to vector<8x32xf32>
    %277 = arith.addf %275, %276 : vector<8x32xf32>
    %cst_110 = arith.constant dense<0.000000e+00> : vector<8x32xf32>
    %278 = tpu.matmul %268, %104, %cst_110 {dimension_numbers = #tpu.dot_dimension_numbers<[1], [0], [0], [1], [0, 0, 1, 1], [], []>} : vector<8x32xf32>, vector<32x32xf32>, vector<8x32xf32> -> vector<8x32xf32>
    %279 = vector.broadcast %107 : vector<1x32xf32> to vector<8x32xf32>
    %280 = arith.addf %278, %279 : vector<8x32xf32>
    %281 = arith.addf %269, %274 : vector<8x32xf32>
    %282 = arith.negf %281 : vector<8x32xf32>
    %283 = math.exp %282 : vector<8x32xf32>
    %cst_111 = arith.constant 1.000000e+00 : f32
    %284 = vector.broadcast %cst_111 : f32 to vector<8x32xf32>
    %285 = arith.addf %284, %283 : vector<8x32xf32>
    %286 = arith.divf %284, %285 : vector<8x32xf32>
    %287 = arith.addf %270, %277 : vector<8x32xf32>
    %288 = arith.negf %287 : vector<8x32xf32>
    %289 = math.exp %288 : vector<8x32xf32>
    %cst_112 = arith.constant 1.000000e+00 : f32
    %290 = vector.broadcast %cst_112 : f32 to vector<8x32xf32>
    %291 = arith.addf %290, %289 : vector<8x32xf32>
    %292 = arith.divf %290, %291 : vector<8x32xf32>
    %293 = arith.mulf %286, %280 : vector<8x32xf32>
    %294 = arith.addf %271, %293 : vector<8x32xf32>
    %295 = math.tanh %294 : vector<8x32xf32>
    %cst_113 = arith.constant 1.000000e+00 : f32
    %296 = vector.broadcast %cst_113 : f32 to vector<8x32xf32>
    %297 = arith.subf %296, %292 : vector<8x32xf32>
    %298 = arith.mulf %297, %295 : vector<8x32xf32>
    %299 = arith.mulf %292, %268 : vector<8x32xf32>
    %300 = arith.addf %298, %299 : vector<8x32xf32>
    %301 = vector.extract_strided_slice %91 {offsets = [48, 0], sizes = [8, 32], strides = [1, 1]} : vector<168x32xf32> to vector<8x32xf32>
    %302 = vector.extract_strided_slice %96 {offsets = [48, 0], sizes = [8, 32], strides = [1, 1]} : vector<168x32xf32> to vector<8x32xf32>
    %303 = vector.extract_strided_slice %101 {offsets = [48, 0], sizes = [8, 32], strides = [1, 1]} : vector<168x32xf32> to vector<8x32xf32>
    %cst_114 = arith.constant dense<0.000000e+00> : vector<8x32xf32>
    %304 = tpu.matmul %300, %102, %cst_114 {dimension_numbers = #tpu.dot_dimension_numbers<[1], [0], [0], [1], [0, 0, 1, 1], [], []>} : vector<8x32xf32>, vector<32x32xf32>, vector<8x32xf32> -> vector<8x32xf32>
    %305 = vector.broadcast %105 : vector<1x32xf32> to vector<8x32xf32>
    %306 = arith.addf %304, %305 : vector<8x32xf32>
    %cst_115 = arith.constant dense<0.000000e+00> : vector<8x32xf32>
    %307 = tpu.matmul %300, %103, %cst_115 {dimension_numbers = #tpu.dot_dimension_numbers<[1], [0], [0], [1], [0, 0, 1, 1], [], []>} : vector<8x32xf32>, vector<32x32xf32>, vector<8x32xf32> -> vector<8x32xf32>
    %308 = vector.broadcast %106 : vector<1x32xf32> to vector<8x32xf32>
    %309 = arith.addf %307, %308 : vector<8x32xf32>
    %cst_116 = arith.constant dense<0.000000e+00> : vector<8x32xf32>
    %310 = tpu.matmul %300, %104, %cst_116 {dimension_numbers = #tpu.dot_dimension_numbers<[1], [0], [0], [1], [0, 0, 1, 1], [], []>} : vector<8x32xf32>, vector<32x32xf32>, vector<8x32xf32> -> vector<8x32xf32>
    %311 = vector.broadcast %107 : vector<1x32xf32> to vector<8x32xf32>
    %312 = arith.addf %310, %311 : vector<8x32xf32>
    %313 = arith.addf %301, %306 : vector<8x32xf32>
    %314 = arith.negf %313 : vector<8x32xf32>
    %315 = math.exp %314 : vector<8x32xf32>
    %cst_117 = arith.constant 1.000000e+00 : f32
    %316 = vector.broadcast %cst_117 : f32 to vector<8x32xf32>
    %317 = arith.addf %316, %315 : vector<8x32xf32>
    %318 = arith.divf %316, %317 : vector<8x32xf32>
    %319 = arith.addf %302, %309 : vector<8x32xf32>
    %320 = arith.negf %319 : vector<8x32xf32>
    %321 = math.exp %320 : vector<8x32xf32>
    %cst_118 = arith.constant 1.000000e+00 : f32
    %322 = vector.broadcast %cst_118 : f32 to vector<8x32xf32>
    %323 = arith.addf %322, %321 : vector<8x32xf32>
    %324 = arith.divf %322, %323 : vector<8x32xf32>
    %325 = arith.mulf %318, %312 : vector<8x32xf32>
    %326 = arith.addf %303, %325 : vector<8x32xf32>
    %327 = math.tanh %326 : vector<8x32xf32>
    %cst_119 = arith.constant 1.000000e+00 : f32
    %328 = vector.broadcast %cst_119 : f32 to vector<8x32xf32>
    %329 = arith.subf %328, %324 : vector<8x32xf32>
    %330 = arith.mulf %329, %327 : vector<8x32xf32>
    %331 = arith.mulf %324, %300 : vector<8x32xf32>
    %332 = arith.addf %330, %331 : vector<8x32xf32>
    %333 = vector.extract_strided_slice %91 {offsets = [56, 0], sizes = [8, 32], strides = [1, 1]} : vector<168x32xf32> to vector<8x32xf32>
    %334 = vector.extract_strided_slice %96 {offsets = [56, 0], sizes = [8, 32], strides = [1, 1]} : vector<168x32xf32> to vector<8x32xf32>
    %335 = vector.extract_strided_slice %101 {offsets = [56, 0], sizes = [8, 32], strides = [1, 1]} : vector<168x32xf32> to vector<8x32xf32>
    %cst_120 = arith.constant dense<0.000000e+00> : vector<8x32xf32>
    %336 = tpu.matmul %332, %102, %cst_120 {dimension_numbers = #tpu.dot_dimension_numbers<[1], [0], [0], [1], [0, 0, 1, 1], [], []>} : vector<8x32xf32>, vector<32x32xf32>, vector<8x32xf32> -> vector<8x32xf32>
    %337 = vector.broadcast %105 : vector<1x32xf32> to vector<8x32xf32>
    %338 = arith.addf %336, %337 : vector<8x32xf32>
    %cst_121 = arith.constant dense<0.000000e+00> : vector<8x32xf32>
    %339 = tpu.matmul %332, %103, %cst_121 {dimension_numbers = #tpu.dot_dimension_numbers<[1], [0], [0], [1], [0, 0, 1, 1], [], []>} : vector<8x32xf32>, vector<32x32xf32>, vector<8x32xf32> -> vector<8x32xf32>
    %340 = vector.broadcast %106 : vector<1x32xf32> to vector<8x32xf32>
    %341 = arith.addf %339, %340 : vector<8x32xf32>
    %cst_122 = arith.constant dense<0.000000e+00> : vector<8x32xf32>
    %342 = tpu.matmul %332, %104, %cst_122 {dimension_numbers = #tpu.dot_dimension_numbers<[1], [0], [0], [1], [0, 0, 1, 1], [], []>} : vector<8x32xf32>, vector<32x32xf32>, vector<8x32xf32> -> vector<8x32xf32>
    %343 = vector.broadcast %107 : vector<1x32xf32> to vector<8x32xf32>
    %344 = arith.addf %342, %343 : vector<8x32xf32>
    %345 = arith.addf %333, %338 : vector<8x32xf32>
    %346 = arith.negf %345 : vector<8x32xf32>
    %347 = math.exp %346 : vector<8x32xf32>
    %cst_123 = arith.constant 1.000000e+00 : f32
    %348 = vector.broadcast %cst_123 : f32 to vector<8x32xf32>
    %349 = arith.addf %348, %347 : vector<8x32xf32>
    %350 = arith.divf %348, %349 : vector<8x32xf32>
    %351 = arith.addf %334, %341 : vector<8x32xf32>
    %352 = arith.negf %351 : vector<8x32xf32>
    %353 = math.exp %352 : vector<8x32xf32>
    %cst_124 = arith.constant 1.000000e+00 : f32
    %354 = vector.broadcast %cst_124 : f32 to vector<8x32xf32>
    %355 = arith.addf %354, %353 : vector<8x32xf32>
    %356 = arith.divf %354, %355 : vector<8x32xf32>
    %357 = arith.mulf %350, %344 : vector<8x32xf32>
    %358 = arith.addf %335, %357 : vector<8x32xf32>
    %359 = math.tanh %358 : vector<8x32xf32>
    %cst_125 = arith.constant 1.000000e+00 : f32
    %360 = vector.broadcast %cst_125 : f32 to vector<8x32xf32>
    %361 = arith.subf %360, %356 : vector<8x32xf32>
    %362 = arith.mulf %361, %359 : vector<8x32xf32>
    %363 = arith.mulf %356, %332 : vector<8x32xf32>
    %364 = arith.addf %362, %363 : vector<8x32xf32>
    %365 = vector.extract_strided_slice %91 {offsets = [64, 0], sizes = [8, 32], strides = [1, 1]} : vector<168x32xf32> to vector<8x32xf32>
    %366 = vector.extract_strided_slice %96 {offsets = [64, 0], sizes = [8, 32], strides = [1, 1]} : vector<168x32xf32> to vector<8x32xf32>
    %367 = vector.extract_strided_slice %101 {offsets = [64, 0], sizes = [8, 32], strides = [1, 1]} : vector<168x32xf32> to vector<8x32xf32>
    %cst_126 = arith.constant dense<0.000000e+00> : vector<8x32xf32>
    %368 = tpu.matmul %364, %102, %cst_126 {dimension_numbers = #tpu.dot_dimension_numbers<[1], [0], [0], [1], [0, 0, 1, 1], [], []>} : vector<8x32xf32>, vector<32x32xf32>, vector<8x32xf32> -> vector<8x32xf32>
    %369 = vector.broadcast %105 : vector<1x32xf32> to vector<8x32xf32>
    %370 = arith.addf %368, %369 : vector<8x32xf32>
    %cst_127 = arith.constant dense<0.000000e+00> : vector<8x32xf32>
    %371 = tpu.matmul %364, %103, %cst_127 {dimension_numbers = #tpu.dot_dimension_numbers<[1], [0], [0], [1], [0, 0, 1, 1], [], []>} : vector<8x32xf32>, vector<32x32xf32>, vector<8x32xf32> -> vector<8x32xf32>
    %372 = vector.broadcast %106 : vector<1x32xf32> to vector<8x32xf32>
    %373 = arith.addf %371, %372 : vector<8x32xf32>
    %cst_128 = arith.constant dense<0.000000e+00> : vector<8x32xf32>
    %374 = tpu.matmul %364, %104, %cst_128 {dimension_numbers = #tpu.dot_dimension_numbers<[1], [0], [0], [1], [0, 0, 1, 1], [], []>} : vector<8x32xf32>, vector<32x32xf32>, vector<8x32xf32> -> vector<8x32xf32>
    %375 = vector.broadcast %107 : vector<1x32xf32> to vector<8x32xf32>
    %376 = arith.addf %374, %375 : vector<8x32xf32>
    %377 = arith.addf %365, %370 : vector<8x32xf32>
    %378 = arith.negf %377 : vector<8x32xf32>
    %379 = math.exp %378 : vector<8x32xf32>
    %cst_129 = arith.constant 1.000000e+00 : f32
    %380 = vector.broadcast %cst_129 : f32 to vector<8x32xf32>
    %381 = arith.addf %380, %379 : vector<8x32xf32>
    %382 = arith.divf %380, %381 : vector<8x32xf32>
    %383 = arith.addf %366, %373 : vector<8x32xf32>
    %384 = arith.negf %383 : vector<8x32xf32>
    %385 = math.exp %384 : vector<8x32xf32>
    %cst_130 = arith.constant 1.000000e+00 : f32
    %386 = vector.broadcast %cst_130 : f32 to vector<8x32xf32>
    %387 = arith.addf %386, %385 : vector<8x32xf32>
    %388 = arith.divf %386, %387 : vector<8x32xf32>
    %389 = arith.mulf %382, %376 : vector<8x32xf32>
    %390 = arith.addf %367, %389 : vector<8x32xf32>
    %391 = math.tanh %390 : vector<8x32xf32>
    %cst_131 = arith.constant 1.000000e+00 : f32
    %392 = vector.broadcast %cst_131 : f32 to vector<8x32xf32>
    %393 = arith.subf %392, %388 : vector<8x32xf32>
    %394 = arith.mulf %393, %391 : vector<8x32xf32>
    %395 = arith.mulf %388, %364 : vector<8x32xf32>
    %396 = arith.addf %394, %395 : vector<8x32xf32>
    %397 = vector.extract_strided_slice %91 {offsets = [72, 0], sizes = [8, 32], strides = [1, 1]} : vector<168x32xf32> to vector<8x32xf32>
    %398 = vector.extract_strided_slice %96 {offsets = [72, 0], sizes = [8, 32], strides = [1, 1]} : vector<168x32xf32> to vector<8x32xf32>
    %399 = vector.extract_strided_slice %101 {offsets = [72, 0], sizes = [8, 32], strides = [1, 1]} : vector<168x32xf32> to vector<8x32xf32>
    %cst_132 = arith.constant dense<0.000000e+00> : vector<8x32xf32>
    %400 = tpu.matmul %396, %102, %cst_132 {dimension_numbers = #tpu.dot_dimension_numbers<[1], [0], [0], [1], [0, 0, 1, 1], [], []>} : vector<8x32xf32>, vector<32x32xf32>, vector<8x32xf32> -> vector<8x32xf32>
    %401 = vector.broadcast %105 : vector<1x32xf32> to vector<8x32xf32>
    %402 = arith.addf %400, %401 : vector<8x32xf32>
    %cst_133 = arith.constant dense<0.000000e+00> : vector<8x32xf32>
    %403 = tpu.matmul %396, %103, %cst_133 {dimension_numbers = #tpu.dot_dimension_numbers<[1], [0], [0], [1], [0, 0, 1, 1], [], []>} : vector<8x32xf32>, vector<32x32xf32>, vector<8x32xf32> -> vector<8x32xf32>
    %404 = vector.broadcast %106 : vector<1x32xf32> to vector<8x32xf32>
    %405 = arith.addf %403, %404 : vector<8x32xf32>
    %cst_134 = arith.constant dense<0.000000e+00> : vector<8x32xf32>
    %406 = tpu.matmul %396, %104, %cst_134 {dimension_numbers = #tpu.dot_dimension_numbers<[1], [0], [0], [1], [0, 0, 1, 1], [], []>} : vector<8x32xf32>, vector<32x32xf32>, vector<8x32xf32> -> vector<8x32xf32>
    %407 = vector.broadcast %107 : vector<1x32xf32> to vector<8x32xf32>
    %408 = arith.addf %406, %407 : vector<8x32xf32>
    %409 = arith.addf %397, %402 : vector<8x32xf32>
    %410 = arith.negf %409 : vector<8x32xf32>
    %411 = math.exp %410 : vector<8x32xf32>
    %cst_135 = arith.constant 1.000000e+00 : f32
    %412 = vector.broadcast %cst_135 : f32 to vector<8x32xf32>
    %413 = arith.addf %412, %411 : vector<8x32xf32>
    %414 = arith.divf %412, %413 : vector<8x32xf32>
    %415 = arith.addf %398, %405 : vector<8x32xf32>
    %416 = arith.negf %415 : vector<8x32xf32>
    %417 = math.exp %416 : vector<8x32xf32>
    %cst_136 = arith.constant 1.000000e+00 : f32
    %418 = vector.broadcast %cst_136 : f32 to vector<8x32xf32>
    %419 = arith.addf %418, %417 : vector<8x32xf32>
    %420 = arith.divf %418, %419 : vector<8x32xf32>
    %421 = arith.mulf %414, %408 : vector<8x32xf32>
    %422 = arith.addf %399, %421 : vector<8x32xf32>
    %423 = math.tanh %422 : vector<8x32xf32>
    %cst_137 = arith.constant 1.000000e+00 : f32
    %424 = vector.broadcast %cst_137 : f32 to vector<8x32xf32>
    %425 = arith.subf %424, %420 : vector<8x32xf32>
    %426 = arith.mulf %425, %423 : vector<8x32xf32>
    %427 = arith.mulf %420, %396 : vector<8x32xf32>
    %428 = arith.addf %426, %427 : vector<8x32xf32>
    %429 = vector.extract_strided_slice %91 {offsets = [80, 0], sizes = [8, 32], strides = [1, 1]} : vector<168x32xf32> to vector<8x32xf32>
    %430 = vector.extract_strided_slice %96 {offsets = [80, 0], sizes = [8, 32], strides = [1, 1]} : vector<168x32xf32> to vector<8x32xf32>
    %431 = vector.extract_strided_slice %101 {offsets = [80, 0], sizes = [8, 32], strides = [1, 1]} : vector<168x32xf32> to vector<8x32xf32>
    %cst_138 = arith.constant dense<0.000000e+00> : vector<8x32xf32>
    %432 = tpu.matmul %428, %102, %cst_138 {dimension_numbers = #tpu.dot_dimension_numbers<[1], [0], [0], [1], [0, 0, 1, 1], [], []>} : vector<8x32xf32>, vector<32x32xf32>, vector<8x32xf32> -> vector<8x32xf32>
    %433 = vector.broadcast %105 : vector<1x32xf32> to vector<8x32xf32>
    %434 = arith.addf %432, %433 : vector<8x32xf32>
    %cst_139 = arith.constant dense<0.000000e+00> : vector<8x32xf32>
    %435 = tpu.matmul %428, %103, %cst_139 {dimension_numbers = #tpu.dot_dimension_numbers<[1], [0], [0], [1], [0, 0, 1, 1], [], []>} : vector<8x32xf32>, vector<32x32xf32>, vector<8x32xf32> -> vector<8x32xf32>
    %436 = vector.broadcast %106 : vector<1x32xf32> to vector<8x32xf32>
    %437 = arith.addf %435, %436 : vector<8x32xf32>
    %cst_140 = arith.constant dense<0.000000e+00> : vector<8x32xf32>
    %438 = tpu.matmul %428, %104, %cst_140 {dimension_numbers = #tpu.dot_dimension_numbers<[1], [0], [0], [1], [0, 0, 1, 1], [], []>} : vector<8x32xf32>, vector<32x32xf32>, vector<8x32xf32> -> vector<8x32xf32>
    %439 = vector.broadcast %107 : vector<1x32xf32> to vector<8x32xf32>
    %440 = arith.addf %438, %439 : vector<8x32xf32>
    %441 = arith.addf %429, %434 : vector<8x32xf32>
    %442 = arith.negf %441 : vector<8x32xf32>
    %443 = math.exp %442 : vector<8x32xf32>
    %cst_141 = arith.constant 1.000000e+00 : f32
    %444 = vector.broadcast %cst_141 : f32 to vector<8x32xf32>
    %445 = arith.addf %444, %443 : vector<8x32xf32>
    %446 = arith.divf %444, %445 : vector<8x32xf32>
    %447 = arith.addf %430, %437 : vector<8x32xf32>
    %448 = arith.negf %447 : vector<8x32xf32>
    %449 = math.exp %448 : vector<8x32xf32>
    %cst_142 = arith.constant 1.000000e+00 : f32
    %450 = vector.broadcast %cst_142 : f32 to vector<8x32xf32>
    %451 = arith.addf %450, %449 : vector<8x32xf32>
    %452 = arith.divf %450, %451 : vector<8x32xf32>
    %453 = arith.mulf %446, %440 : vector<8x32xf32>
    %454 = arith.addf %431, %453 : vector<8x32xf32>
    %455 = math.tanh %454 : vector<8x32xf32>
    %cst_143 = arith.constant 1.000000e+00 : f32
    %456 = vector.broadcast %cst_143 : f32 to vector<8x32xf32>
    %457 = arith.subf %456, %452 : vector<8x32xf32>
    %458 = arith.mulf %457, %455 : vector<8x32xf32>
    %459 = arith.mulf %452, %428 : vector<8x32xf32>
    %460 = arith.addf %458, %459 : vector<8x32xf32>
    %461 = vector.extract_strided_slice %91 {offsets = [88, 0], sizes = [8, 32], strides = [1, 1]} : vector<168x32xf32> to vector<8x32xf32>
    %462 = vector.extract_strided_slice %96 {offsets = [88, 0], sizes = [8, 32], strides = [1, 1]} : vector<168x32xf32> to vector<8x32xf32>
    %463 = vector.extract_strided_slice %101 {offsets = [88, 0], sizes = [8, 32], strides = [1, 1]} : vector<168x32xf32> to vector<8x32xf32>
    %cst_144 = arith.constant dense<0.000000e+00> : vector<8x32xf32>
    %464 = tpu.matmul %460, %102, %cst_144 {dimension_numbers = #tpu.dot_dimension_numbers<[1], [0], [0], [1], [0, 0, 1, 1], [], []>} : vector<8x32xf32>, vector<32x32xf32>, vector<8x32xf32> -> vector<8x32xf32>
    %465 = vector.broadcast %105 : vector<1x32xf32> to vector<8x32xf32>
    %466 = arith.addf %464, %465 : vector<8x32xf32>
    %cst_145 = arith.constant dense<0.000000e+00> : vector<8x32xf32>
    %467 = tpu.matmul %460, %103, %cst_145 {dimension_numbers = #tpu.dot_dimension_numbers<[1], [0], [0], [1], [0, 0, 1, 1], [], []>} : vector<8x32xf32>, vector<32x32xf32>, vector<8x32xf32> -> vector<8x32xf32>
    %468 = vector.broadcast %106 : vector<1x32xf32> to vector<8x32xf32>
    %469 = arith.addf %467, %468 : vector<8x32xf32>
    %cst_146 = arith.constant dense<0.000000e+00> : vector<8x32xf32>
    %470 = tpu.matmul %460, %104, %cst_146 {dimension_numbers = #tpu.dot_dimension_numbers<[1], [0], [0], [1], [0, 0, 1, 1], [], []>} : vector<8x32xf32>, vector<32x32xf32>, vector<8x32xf32> -> vector<8x32xf32>
    %471 = vector.broadcast %107 : vector<1x32xf32> to vector<8x32xf32>
    %472 = arith.addf %470, %471 : vector<8x32xf32>
    %473 = arith.addf %461, %466 : vector<8x32xf32>
    %474 = arith.negf %473 : vector<8x32xf32>
    %475 = math.exp %474 : vector<8x32xf32>
    %cst_147 = arith.constant 1.000000e+00 : f32
    %476 = vector.broadcast %cst_147 : f32 to vector<8x32xf32>
    %477 = arith.addf %476, %475 : vector<8x32xf32>
    %478 = arith.divf %476, %477 : vector<8x32xf32>
    %479 = arith.addf %462, %469 : vector<8x32xf32>
    %480 = arith.negf %479 : vector<8x32xf32>
    %481 = math.exp %480 : vector<8x32xf32>
    %cst_148 = arith.constant 1.000000e+00 : f32
    %482 = vector.broadcast %cst_148 : f32 to vector<8x32xf32>
    %483 = arith.addf %482, %481 : vector<8x32xf32>
    %484 = arith.divf %482, %483 : vector<8x32xf32>
    %485 = arith.mulf %478, %472 : vector<8x32xf32>
    %486 = arith.addf %463, %485 : vector<8x32xf32>
    %487 = math.tanh %486 : vector<8x32xf32>
    %cst_149 = arith.constant 1.000000e+00 : f32
    %488 = vector.broadcast %cst_149 : f32 to vector<8x32xf32>
    %489 = arith.subf %488, %484 : vector<8x32xf32>
    %490 = arith.mulf %489, %487 : vector<8x32xf32>
    %491 = arith.mulf %484, %460 : vector<8x32xf32>
    %492 = arith.addf %490, %491 : vector<8x32xf32>
    %493 = vector.extract_strided_slice %91 {offsets = [96, 0], sizes = [8, 32], strides = [1, 1]} : vector<168x32xf32> to vector<8x32xf32>
    %494 = vector.extract_strided_slice %96 {offsets = [96, 0], sizes = [8, 32], strides = [1, 1]} : vector<168x32xf32> to vector<8x32xf32>
    %495 = vector.extract_strided_slice %101 {offsets = [96, 0], sizes = [8, 32], strides = [1, 1]} : vector<168x32xf32> to vector<8x32xf32>
    %cst_150 = arith.constant dense<0.000000e+00> : vector<8x32xf32>
    %496 = tpu.matmul %492, %102, %cst_150 {dimension_numbers = #tpu.dot_dimension_numbers<[1], [0], [0], [1], [0, 0, 1, 1], [], []>} : vector<8x32xf32>, vector<32x32xf32>, vector<8x32xf32> -> vector<8x32xf32>
    %497 = vector.broadcast %105 : vector<1x32xf32> to vector<8x32xf32>
    %498 = arith.addf %496, %497 : vector<8x32xf32>
    %cst_151 = arith.constant dense<0.000000e+00> : vector<8x32xf32>
    %499 = tpu.matmul %492, %103, %cst_151 {dimension_numbers = #tpu.dot_dimension_numbers<[1], [0], [0], [1], [0, 0, 1, 1], [], []>} : vector<8x32xf32>, vector<32x32xf32>, vector<8x32xf32> -> vector<8x32xf32>
    %500 = vector.broadcast %106 : vector<1x32xf32> to vector<8x32xf32>
    %501 = arith.addf %499, %500 : vector<8x32xf32>
    %cst_152 = arith.constant dense<0.000000e+00> : vector<8x32xf32>
    %502 = tpu.matmul %492, %104, %cst_152 {dimension_numbers = #tpu.dot_dimension_numbers<[1], [0], [0], [1], [0, 0, 1, 1], [], []>} : vector<8x32xf32>, vector<32x32xf32>, vector<8x32xf32> -> vector<8x32xf32>
    %503 = vector.broadcast %107 : vector<1x32xf32> to vector<8x32xf32>
    %504 = arith.addf %502, %503 : vector<8x32xf32>
    %505 = arith.addf %493, %498 : vector<8x32xf32>
    %506 = arith.negf %505 : vector<8x32xf32>
    %507 = math.exp %506 : vector<8x32xf32>
    %cst_153 = arith.constant 1.000000e+00 : f32
    %508 = vector.broadcast %cst_153 : f32 to vector<8x32xf32>
    %509 = arith.addf %508, %507 : vector<8x32xf32>
    %510 = arith.divf %508, %509 : vector<8x32xf32>
    %511 = arith.addf %494, %501 : vector<8x32xf32>
    %512 = arith.negf %511 : vector<8x32xf32>
    %513 = math.exp %512 : vector<8x32xf32>
    %cst_154 = arith.constant 1.000000e+00 : f32
    %514 = vector.broadcast %cst_154 : f32 to vector<8x32xf32>
    %515 = arith.addf %514, %513 : vector<8x32xf32>
    %516 = arith.divf %514, %515 : vector<8x32xf32>
    %517 = arith.mulf %510, %504 : vector<8x32xf32>
    %518 = arith.addf %495, %517 : vector<8x32xf32>
    %519 = math.tanh %518 : vector<8x32xf32>
    %cst_155 = arith.constant 1.000000e+00 : f32
    %520 = vector.broadcast %cst_155 : f32 to vector<8x32xf32>
    %521 = arith.subf %520, %516 : vector<8x32xf32>
    %522 = arith.mulf %521, %519 : vector<8x32xf32>
    %523 = arith.mulf %516, %492 : vector<8x32xf32>
    %524 = arith.addf %522, %523 : vector<8x32xf32>
    %525 = vector.extract_strided_slice %91 {offsets = [104, 0], sizes = [8, 32], strides = [1, 1]} : vector<168x32xf32> to vector<8x32xf32>
    %526 = vector.extract_strided_slice %96 {offsets = [104, 0], sizes = [8, 32], strides = [1, 1]} : vector<168x32xf32> to vector<8x32xf32>
    %527 = vector.extract_strided_slice %101 {offsets = [104, 0], sizes = [8, 32], strides = [1, 1]} : vector<168x32xf32> to vector<8x32xf32>
    %cst_156 = arith.constant dense<0.000000e+00> : vector<8x32xf32>
    %528 = tpu.matmul %524, %102, %cst_156 {dimension_numbers = #tpu.dot_dimension_numbers<[1], [0], [0], [1], [0, 0, 1, 1], [], []>} : vector<8x32xf32>, vector<32x32xf32>, vector<8x32xf32> -> vector<8x32xf32>
    %529 = vector.broadcast %105 : vector<1x32xf32> to vector<8x32xf32>
    %530 = arith.addf %528, %529 : vector<8x32xf32>
    %cst_157 = arith.constant dense<0.000000e+00> : vector<8x32xf32>
    %531 = tpu.matmul %524, %103, %cst_157 {dimension_numbers = #tpu.dot_dimension_numbers<[1], [0], [0], [1], [0, 0, 1, 1], [], []>} : vector<8x32xf32>, vector<32x32xf32>, vector<8x32xf32> -> vector<8x32xf32>
    %532 = vector.broadcast %106 : vector<1x32xf32> to vector<8x32xf32>
    %533 = arith.addf %531, %532 : vector<8x32xf32>
    %cst_158 = arith.constant dense<0.000000e+00> : vector<8x32xf32>
    %534 = tpu.matmul %524, %104, %cst_158 {dimension_numbers = #tpu.dot_dimension_numbers<[1], [0], [0], [1], [0, 0, 1, 1], [], []>} : vector<8x32xf32>, vector<32x32xf32>, vector<8x32xf32> -> vector<8x32xf32>
    %535 = vector.broadcast %107 : vector<1x32xf32> to vector<8x32xf32>
    %536 = arith.addf %534, %535 : vector<8x32xf32>
    %537 = arith.addf %525, %530 : vector<8x32xf32>
    %538 = arith.negf %537 : vector<8x32xf32>
    %539 = math.exp %538 : vector<8x32xf32>
    %cst_159 = arith.constant 1.000000e+00 : f32
    %540 = vector.broadcast %cst_159 : f32 to vector<8x32xf32>
    %541 = arith.addf %540, %539 : vector<8x32xf32>
    %542 = arith.divf %540, %541 : vector<8x32xf32>
    %543 = arith.addf %526, %533 : vector<8x32xf32>
    %544 = arith.negf %543 : vector<8x32xf32>
    %545 = math.exp %544 : vector<8x32xf32>
    %cst_160 = arith.constant 1.000000e+00 : f32
    %546 = vector.broadcast %cst_160 : f32 to vector<8x32xf32>
    %547 = arith.addf %546, %545 : vector<8x32xf32>
    %548 = arith.divf %546, %547 : vector<8x32xf32>
    %549 = arith.mulf %542, %536 : vector<8x32xf32>
    %550 = arith.addf %527, %549 : vector<8x32xf32>
    %551 = math.tanh %550 : vector<8x32xf32>
    %cst_161 = arith.constant 1.000000e+00 : f32
    %552 = vector.broadcast %cst_161 : f32 to vector<8x32xf32>
    %553 = arith.subf %552, %548 : vector<8x32xf32>
    %554 = arith.mulf %553, %551 : vector<8x32xf32>
    %555 = arith.mulf %548, %524 : vector<8x32xf32>
    %556 = arith.addf %554, %555 : vector<8x32xf32>
    %557 = vector.extract_strided_slice %91 {offsets = [112, 0], sizes = [8, 32], strides = [1, 1]} : vector<168x32xf32> to vector<8x32xf32>
    %558 = vector.extract_strided_slice %96 {offsets = [112, 0], sizes = [8, 32], strides = [1, 1]} : vector<168x32xf32> to vector<8x32xf32>
    %559 = vector.extract_strided_slice %101 {offsets = [112, 0], sizes = [8, 32], strides = [1, 1]} : vector<168x32xf32> to vector<8x32xf32>
    %cst_162 = arith.constant dense<0.000000e+00> : vector<8x32xf32>
    %560 = tpu.matmul %556, %102, %cst_162 {dimension_numbers = #tpu.dot_dimension_numbers<[1], [0], [0], [1], [0, 0, 1, 1], [], []>} : vector<8x32xf32>, vector<32x32xf32>, vector<8x32xf32> -> vector<8x32xf32>
    %561 = vector.broadcast %105 : vector<1x32xf32> to vector<8x32xf32>
    %562 = arith.addf %560, %561 : vector<8x32xf32>
    %cst_163 = arith.constant dense<0.000000e+00> : vector<8x32xf32>
    %563 = tpu.matmul %556, %103, %cst_163 {dimension_numbers = #tpu.dot_dimension_numbers<[1], [0], [0], [1], [0, 0, 1, 1], [], []>} : vector<8x32xf32>, vector<32x32xf32>, vector<8x32xf32> -> vector<8x32xf32>
    %564 = vector.broadcast %106 : vector<1x32xf32> to vector<8x32xf32>
    %565 = arith.addf %563, %564 : vector<8x32xf32>
    %cst_164 = arith.constant dense<0.000000e+00> : vector<8x32xf32>
    %566 = tpu.matmul %556, %104, %cst_164 {dimension_numbers = #tpu.dot_dimension_numbers<[1], [0], [0], [1], [0, 0, 1, 1], [], []>} : vector<8x32xf32>, vector<32x32xf32>, vector<8x32xf32> -> vector<8x32xf32>
    %567 = vector.broadcast %107 : vector<1x32xf32> to vector<8x32xf32>
    %568 = arith.addf %566, %567 : vector<8x32xf32>
    %569 = arith.addf %557, %562 : vector<8x32xf32>
    %570 = arith.negf %569 : vector<8x32xf32>
    %571 = math.exp %570 : vector<8x32xf32>
    %cst_165 = arith.constant 1.000000e+00 : f32
    %572 = vector.broadcast %cst_165 : f32 to vector<8x32xf32>
    %573 = arith.addf %572, %571 : vector<8x32xf32>
    %574 = arith.divf %572, %573 : vector<8x32xf32>
    %575 = arith.addf %558, %565 : vector<8x32xf32>
    %576 = arith.negf %575 : vector<8x32xf32>
    %577 = math.exp %576 : vector<8x32xf32>
    %cst_166 = arith.constant 1.000000e+00 : f32
    %578 = vector.broadcast %cst_166 : f32 to vector<8x32xf32>
    %579 = arith.addf %578, %577 : vector<8x32xf32>
    %580 = arith.divf %578, %579 : vector<8x32xf32>
    %581 = arith.mulf %574, %568 : vector<8x32xf32>
    %582 = arith.addf %559, %581 : vector<8x32xf32>
    %583 = math.tanh %582 : vector<8x32xf32>
    %cst_167 = arith.constant 1.000000e+00 : f32
    %584 = vector.broadcast %cst_167 : f32 to vector<8x32xf32>
    %585 = arith.subf %584, %580 : vector<8x32xf32>
    %586 = arith.mulf %585, %583 : vector<8x32xf32>
    %587 = arith.mulf %580, %556 : vector<8x32xf32>
    %588 = arith.addf %586, %587 : vector<8x32xf32>
    %589 = vector.extract_strided_slice %91 {offsets = [120, 0], sizes = [8, 32], strides = [1, 1]} : vector<168x32xf32> to vector<8x32xf32>
    %590 = vector.extract_strided_slice %96 {offsets = [120, 0], sizes = [8, 32], strides = [1, 1]} : vector<168x32xf32> to vector<8x32xf32>
    %591 = vector.extract_strided_slice %101 {offsets = [120, 0], sizes = [8, 32], strides = [1, 1]} : vector<168x32xf32> to vector<8x32xf32>
    %cst_168 = arith.constant dense<0.000000e+00> : vector<8x32xf32>
    %592 = tpu.matmul %588, %102, %cst_168 {dimension_numbers = #tpu.dot_dimension_numbers<[1], [0], [0], [1], [0, 0, 1, 1], [], []>} : vector<8x32xf32>, vector<32x32xf32>, vector<8x32xf32> -> vector<8x32xf32>
    %593 = vector.broadcast %105 : vector<1x32xf32> to vector<8x32xf32>
    %594 = arith.addf %592, %593 : vector<8x32xf32>
    %cst_169 = arith.constant dense<0.000000e+00> : vector<8x32xf32>
    %595 = tpu.matmul %588, %103, %cst_169 {dimension_numbers = #tpu.dot_dimension_numbers<[1], [0], [0], [1], [0, 0, 1, 1], [], []>} : vector<8x32xf32>, vector<32x32xf32>, vector<8x32xf32> -> vector<8x32xf32>
    %596 = vector.broadcast %106 : vector<1x32xf32> to vector<8x32xf32>
    %597 = arith.addf %595, %596 : vector<8x32xf32>
    %cst_170 = arith.constant dense<0.000000e+00> : vector<8x32xf32>
    %598 = tpu.matmul %588, %104, %cst_170 {dimension_numbers = #tpu.dot_dimension_numbers<[1], [0], [0], [1], [0, 0, 1, 1], [], []>} : vector<8x32xf32>, vector<32x32xf32>, vector<8x32xf32> -> vector<8x32xf32>
    %599 = vector.broadcast %107 : vector<1x32xf32> to vector<8x32xf32>
    %600 = arith.addf %598, %599 : vector<8x32xf32>
    %601 = arith.addf %589, %594 : vector<8x32xf32>
    %602 = arith.negf %601 : vector<8x32xf32>
    %603 = math.exp %602 : vector<8x32xf32>
    %cst_171 = arith.constant 1.000000e+00 : f32
    %604 = vector.broadcast %cst_171 : f32 to vector<8x32xf32>
    %605 = arith.addf %604, %603 : vector<8x32xf32>
    %606 = arith.divf %604, %605 : vector<8x32xf32>
    %607 = arith.addf %590, %597 : vector<8x32xf32>
    %608 = arith.negf %607 : vector<8x32xf32>
    %609 = math.exp %608 : vector<8x32xf32>
    %cst_172 = arith.constant 1.000000e+00 : f32
    %610 = vector.broadcast %cst_172 : f32 to vector<8x32xf32>
    %611 = arith.addf %610, %609 : vector<8x32xf32>
    %612 = arith.divf %610, %611 : vector<8x32xf32>
    %613 = arith.mulf %606, %600 : vector<8x32xf32>
    %614 = arith.addf %591, %613 : vector<8x32xf32>
    %615 = math.tanh %614 : vector<8x32xf32>
    %cst_173 = arith.constant 1.000000e+00 : f32
    %616 = vector.broadcast %cst_173 : f32 to vector<8x32xf32>
    %617 = arith.subf %616, %612 : vector<8x32xf32>
    %618 = arith.mulf %617, %615 : vector<8x32xf32>
    %619 = arith.mulf %612, %588 : vector<8x32xf32>
    %620 = arith.addf %618, %619 : vector<8x32xf32>
    %621 = vector.extract_strided_slice %91 {offsets = [128, 0], sizes = [8, 32], strides = [1, 1]} : vector<168x32xf32> to vector<8x32xf32>
    %622 = vector.extract_strided_slice %96 {offsets = [128, 0], sizes = [8, 32], strides = [1, 1]} : vector<168x32xf32> to vector<8x32xf32>
    %623 = vector.extract_strided_slice %101 {offsets = [128, 0], sizes = [8, 32], strides = [1, 1]} : vector<168x32xf32> to vector<8x32xf32>
    %cst_174 = arith.constant dense<0.000000e+00> : vector<8x32xf32>
    %624 = tpu.matmul %620, %102, %cst_174 {dimension_numbers = #tpu.dot_dimension_numbers<[1], [0], [0], [1], [0, 0, 1, 1], [], []>} : vector<8x32xf32>, vector<32x32xf32>, vector<8x32xf32> -> vector<8x32xf32>
    %625 = vector.broadcast %105 : vector<1x32xf32> to vector<8x32xf32>
    %626 = arith.addf %624, %625 : vector<8x32xf32>
    %cst_175 = arith.constant dense<0.000000e+00> : vector<8x32xf32>
    %627 = tpu.matmul %620, %103, %cst_175 {dimension_numbers = #tpu.dot_dimension_numbers<[1], [0], [0], [1], [0, 0, 1, 1], [], []>} : vector<8x32xf32>, vector<32x32xf32>, vector<8x32xf32> -> vector<8x32xf32>
    %628 = vector.broadcast %106 : vector<1x32xf32> to vector<8x32xf32>
    %629 = arith.addf %627, %628 : vector<8x32xf32>
    %cst_176 = arith.constant dense<0.000000e+00> : vector<8x32xf32>
    %630 = tpu.matmul %620, %104, %cst_176 {dimension_numbers = #tpu.dot_dimension_numbers<[1], [0], [0], [1], [0, 0, 1, 1], [], []>} : vector<8x32xf32>, vector<32x32xf32>, vector<8x32xf32> -> vector<8x32xf32>
    %631 = vector.broadcast %107 : vector<1x32xf32> to vector<8x32xf32>
    %632 = arith.addf %630, %631 : vector<8x32xf32>
    %633 = arith.addf %621, %626 : vector<8x32xf32>
    %634 = arith.negf %633 : vector<8x32xf32>
    %635 = math.exp %634 : vector<8x32xf32>
    %cst_177 = arith.constant 1.000000e+00 : f32
    %636 = vector.broadcast %cst_177 : f32 to vector<8x32xf32>
    %637 = arith.addf %636, %635 : vector<8x32xf32>
    %638 = arith.divf %636, %637 : vector<8x32xf32>
    %639 = arith.addf %622, %629 : vector<8x32xf32>
    %640 = arith.negf %639 : vector<8x32xf32>
    %641 = math.exp %640 : vector<8x32xf32>
    %cst_178 = arith.constant 1.000000e+00 : f32
    %642 = vector.broadcast %cst_178 : f32 to vector<8x32xf32>
    %643 = arith.addf %642, %641 : vector<8x32xf32>
    %644 = arith.divf %642, %643 : vector<8x32xf32>
    %645 = arith.mulf %638, %632 : vector<8x32xf32>
    %646 = arith.addf %623, %645 : vector<8x32xf32>
    %647 = math.tanh %646 : vector<8x32xf32>
    %cst_179 = arith.constant 1.000000e+00 : f32
    %648 = vector.broadcast %cst_179 : f32 to vector<8x32xf32>
    %649 = arith.subf %648, %644 : vector<8x32xf32>
    %650 = arith.mulf %649, %647 : vector<8x32xf32>
    %651 = arith.mulf %644, %620 : vector<8x32xf32>
    %652 = arith.addf %650, %651 : vector<8x32xf32>
    %653 = vector.extract_strided_slice %91 {offsets = [136, 0], sizes = [8, 32], strides = [1, 1]} : vector<168x32xf32> to vector<8x32xf32>
    %654 = vector.extract_strided_slice %96 {offsets = [136, 0], sizes = [8, 32], strides = [1, 1]} : vector<168x32xf32> to vector<8x32xf32>
    %655 = vector.extract_strided_slice %101 {offsets = [136, 0], sizes = [8, 32], strides = [1, 1]} : vector<168x32xf32> to vector<8x32xf32>
    %cst_180 = arith.constant dense<0.000000e+00> : vector<8x32xf32>
    %656 = tpu.matmul %652, %102, %cst_180 {dimension_numbers = #tpu.dot_dimension_numbers<[1], [0], [0], [1], [0, 0, 1, 1], [], []>} : vector<8x32xf32>, vector<32x32xf32>, vector<8x32xf32> -> vector<8x32xf32>
    %657 = vector.broadcast %105 : vector<1x32xf32> to vector<8x32xf32>
    %658 = arith.addf %656, %657 : vector<8x32xf32>
    %cst_181 = arith.constant dense<0.000000e+00> : vector<8x32xf32>
    %659 = tpu.matmul %652, %103, %cst_181 {dimension_numbers = #tpu.dot_dimension_numbers<[1], [0], [0], [1], [0, 0, 1, 1], [], []>} : vector<8x32xf32>, vector<32x32xf32>, vector<8x32xf32> -> vector<8x32xf32>
    %660 = vector.broadcast %106 : vector<1x32xf32> to vector<8x32xf32>
    %661 = arith.addf %659, %660 : vector<8x32xf32>
    %cst_182 = arith.constant dense<0.000000e+00> : vector<8x32xf32>
    %662 = tpu.matmul %652, %104, %cst_182 {dimension_numbers = #tpu.dot_dimension_numbers<[1], [0], [0], [1], [0, 0, 1, 1], [], []>} : vector<8x32xf32>, vector<32x32xf32>, vector<8x32xf32> -> vector<8x32xf32>
    %663 = vector.broadcast %107 : vector<1x32xf32> to vector<8x32xf32>
    %664 = arith.addf %662, %663 : vector<8x32xf32>
    %665 = arith.addf %653, %658 : vector<8x32xf32>
    %666 = arith.negf %665 : vector<8x32xf32>
    %667 = math.exp %666 : vector<8x32xf32>
    %cst_183 = arith.constant 1.000000e+00 : f32
    %668 = vector.broadcast %cst_183 : f32 to vector<8x32xf32>
    %669 = arith.addf %668, %667 : vector<8x32xf32>
    %670 = arith.divf %668, %669 : vector<8x32xf32>
    %671 = arith.addf %654, %661 : vector<8x32xf32>
    %672 = arith.negf %671 : vector<8x32xf32>
    %673 = math.exp %672 : vector<8x32xf32>
    %cst_184 = arith.constant 1.000000e+00 : f32
    %674 = vector.broadcast %cst_184 : f32 to vector<8x32xf32>
    %675 = arith.addf %674, %673 : vector<8x32xf32>
    %676 = arith.divf %674, %675 : vector<8x32xf32>
    %677 = arith.mulf %670, %664 : vector<8x32xf32>
    %678 = arith.addf %655, %677 : vector<8x32xf32>
    %679 = math.tanh %678 : vector<8x32xf32>
    %cst_185 = arith.constant 1.000000e+00 : f32
    %680 = vector.broadcast %cst_185 : f32 to vector<8x32xf32>
    %681 = arith.subf %680, %676 : vector<8x32xf32>
    %682 = arith.mulf %681, %679 : vector<8x32xf32>
    %683 = arith.mulf %676, %652 : vector<8x32xf32>
    %684 = arith.addf %682, %683 : vector<8x32xf32>
    %685 = vector.extract_strided_slice %91 {offsets = [144, 0], sizes = [8, 32], strides = [1, 1]} : vector<168x32xf32> to vector<8x32xf32>
    %686 = vector.extract_strided_slice %96 {offsets = [144, 0], sizes = [8, 32], strides = [1, 1]} : vector<168x32xf32> to vector<8x32xf32>
    %687 = vector.extract_strided_slice %101 {offsets = [144, 0], sizes = [8, 32], strides = [1, 1]} : vector<168x32xf32> to vector<8x32xf32>
    %cst_186 = arith.constant dense<0.000000e+00> : vector<8x32xf32>
    %688 = tpu.matmul %684, %102, %cst_186 {dimension_numbers = #tpu.dot_dimension_numbers<[1], [0], [0], [1], [0, 0, 1, 1], [], []>} : vector<8x32xf32>, vector<32x32xf32>, vector<8x32xf32> -> vector<8x32xf32>
    %689 = vector.broadcast %105 : vector<1x32xf32> to vector<8x32xf32>
    %690 = arith.addf %688, %689 : vector<8x32xf32>
    %cst_187 = arith.constant dense<0.000000e+00> : vector<8x32xf32>
    %691 = tpu.matmul %684, %103, %cst_187 {dimension_numbers = #tpu.dot_dimension_numbers<[1], [0], [0], [1], [0, 0, 1, 1], [], []>} : vector<8x32xf32>, vector<32x32xf32>, vector<8x32xf32> -> vector<8x32xf32>
    %692 = vector.broadcast %106 : vector<1x32xf32> to vector<8x32xf32>
    %693 = arith.addf %691, %692 : vector<8x32xf32>
    %cst_188 = arith.constant dense<0.000000e+00> : vector<8x32xf32>
    %694 = tpu.matmul %684, %104, %cst_188 {dimension_numbers = #tpu.dot_dimension_numbers<[1], [0], [0], [1], [0, 0, 1, 1], [], []>} : vector<8x32xf32>, vector<32x32xf32>, vector<8x32xf32> -> vector<8x32xf32>
    %695 = vector.broadcast %107 : vector<1x32xf32> to vector<8x32xf32>
    %696 = arith.addf %694, %695 : vector<8x32xf32>
    %697 = arith.addf %685, %690 : vector<8x32xf32>
    %698 = arith.negf %697 : vector<8x32xf32>
    %699 = math.exp %698 : vector<8x32xf32>
    %cst_189 = arith.constant 1.000000e+00 : f32
    %700 = vector.broadcast %cst_189 : f32 to vector<8x32xf32>
    %701 = arith.addf %700, %699 : vector<8x32xf32>
    %702 = arith.divf %700, %701 : vector<8x32xf32>
    %703 = arith.addf %686, %693 : vector<8x32xf32>
    %704 = arith.negf %703 : vector<8x32xf32>
    %705 = math.exp %704 : vector<8x32xf32>
    %cst_190 = arith.constant 1.000000e+00 : f32
    %706 = vector.broadcast %cst_190 : f32 to vector<8x32xf32>
    %707 = arith.addf %706, %705 : vector<8x32xf32>
    %708 = arith.divf %706, %707 : vector<8x32xf32>
    %709 = arith.mulf %702, %696 : vector<8x32xf32>
    %710 = arith.addf %687, %709 : vector<8x32xf32>
    %711 = math.tanh %710 : vector<8x32xf32>
    %cst_191 = arith.constant 1.000000e+00 : f32
    %712 = vector.broadcast %cst_191 : f32 to vector<8x32xf32>
    %713 = arith.subf %712, %708 : vector<8x32xf32>
    %714 = arith.mulf %713, %711 : vector<8x32xf32>
    %715 = arith.mulf %708, %684 : vector<8x32xf32>
    %716 = arith.addf %714, %715 : vector<8x32xf32>
    %717 = vector.extract_strided_slice %91 {offsets = [152, 0], sizes = [8, 32], strides = [1, 1]} : vector<168x32xf32> to vector<8x32xf32>
    %718 = vector.extract_strided_slice %96 {offsets = [152, 0], sizes = [8, 32], strides = [1, 1]} : vector<168x32xf32> to vector<8x32xf32>
    %719 = vector.extract_strided_slice %101 {offsets = [152, 0], sizes = [8, 32], strides = [1, 1]} : vector<168x32xf32> to vector<8x32xf32>
    %cst_192 = arith.constant dense<0.000000e+00> : vector<8x32xf32>
    %720 = tpu.matmul %716, %102, %cst_192 {dimension_numbers = #tpu.dot_dimension_numbers<[1], [0], [0], [1], [0, 0, 1, 1], [], []>} : vector<8x32xf32>, vector<32x32xf32>, vector<8x32xf32> -> vector<8x32xf32>
    %721 = vector.broadcast %105 : vector<1x32xf32> to vector<8x32xf32>
    %722 = arith.addf %720, %721 : vector<8x32xf32>
    %cst_193 = arith.constant dense<0.000000e+00> : vector<8x32xf32>
    %723 = tpu.matmul %716, %103, %cst_193 {dimension_numbers = #tpu.dot_dimension_numbers<[1], [0], [0], [1], [0, 0, 1, 1], [], []>} : vector<8x32xf32>, vector<32x32xf32>, vector<8x32xf32> -> vector<8x32xf32>
    %724 = vector.broadcast %106 : vector<1x32xf32> to vector<8x32xf32>
    %725 = arith.addf %723, %724 : vector<8x32xf32>
    %cst_194 = arith.constant dense<0.000000e+00> : vector<8x32xf32>
    %726 = tpu.matmul %716, %104, %cst_194 {dimension_numbers = #tpu.dot_dimension_numbers<[1], [0], [0], [1], [0, 0, 1, 1], [], []>} : vector<8x32xf32>, vector<32x32xf32>, vector<8x32xf32> -> vector<8x32xf32>
    %727 = vector.broadcast %107 : vector<1x32xf32> to vector<8x32xf32>
    %728 = arith.addf %726, %727 : vector<8x32xf32>
    %729 = arith.addf %717, %722 : vector<8x32xf32>
    %730 = arith.negf %729 : vector<8x32xf32>
    %731 = math.exp %730 : vector<8x32xf32>
    %cst_195 = arith.constant 1.000000e+00 : f32
    %732 = vector.broadcast %cst_195 : f32 to vector<8x32xf32>
    %733 = arith.addf %732, %731 : vector<8x32xf32>
    %734 = arith.divf %732, %733 : vector<8x32xf32>
    %735 = arith.addf %718, %725 : vector<8x32xf32>
    %736 = arith.negf %735 : vector<8x32xf32>
    %737 = math.exp %736 : vector<8x32xf32>
    %cst_196 = arith.constant 1.000000e+00 : f32
    %738 = vector.broadcast %cst_196 : f32 to vector<8x32xf32>
    %739 = arith.addf %738, %737 : vector<8x32xf32>
    %740 = arith.divf %738, %739 : vector<8x32xf32>
    %741 = arith.mulf %734, %728 : vector<8x32xf32>
    %742 = arith.addf %719, %741 : vector<8x32xf32>
    %743 = math.tanh %742 : vector<8x32xf32>
    %cst_197 = arith.constant 1.000000e+00 : f32
    %744 = vector.broadcast %cst_197 : f32 to vector<8x32xf32>
    %745 = arith.subf %744, %740 : vector<8x32xf32>
    %746 = arith.mulf %745, %743 : vector<8x32xf32>
    %747 = arith.mulf %740, %716 : vector<8x32xf32>
    %748 = arith.addf %746, %747 : vector<8x32xf32>
    %749 = vector.extract_strided_slice %91 {offsets = [160, 0], sizes = [8, 32], strides = [1, 1]} : vector<168x32xf32> to vector<8x32xf32>
    %750 = vector.extract_strided_slice %96 {offsets = [160, 0], sizes = [8, 32], strides = [1, 1]} : vector<168x32xf32> to vector<8x32xf32>
    %751 = vector.extract_strided_slice %101 {offsets = [160, 0], sizes = [8, 32], strides = [1, 1]} : vector<168x32xf32> to vector<8x32xf32>
    %cst_198 = arith.constant dense<0.000000e+00> : vector<8x32xf32>
    %752 = tpu.matmul %748, %102, %cst_198 {dimension_numbers = #tpu.dot_dimension_numbers<[1], [0], [0], [1], [0, 0, 1, 1], [], []>} : vector<8x32xf32>, vector<32x32xf32>, vector<8x32xf32> -> vector<8x32xf32>
    %753 = vector.broadcast %105 : vector<1x32xf32> to vector<8x32xf32>
    %754 = arith.addf %752, %753 : vector<8x32xf32>
    %cst_199 = arith.constant dense<0.000000e+00> : vector<8x32xf32>
    %755 = tpu.matmul %748, %103, %cst_199 {dimension_numbers = #tpu.dot_dimension_numbers<[1], [0], [0], [1], [0, 0, 1, 1], [], []>} : vector<8x32xf32>, vector<32x32xf32>, vector<8x32xf32> -> vector<8x32xf32>
    %756 = vector.broadcast %106 : vector<1x32xf32> to vector<8x32xf32>
    %757 = arith.addf %755, %756 : vector<8x32xf32>
    %cst_200 = arith.constant dense<0.000000e+00> : vector<8x32xf32>
    %758 = tpu.matmul %748, %104, %cst_200 {dimension_numbers = #tpu.dot_dimension_numbers<[1], [0], [0], [1], [0, 0, 1, 1], [], []>} : vector<8x32xf32>, vector<32x32xf32>, vector<8x32xf32> -> vector<8x32xf32>
    %759 = vector.broadcast %107 : vector<1x32xf32> to vector<8x32xf32>
    %760 = arith.addf %758, %759 : vector<8x32xf32>
    %761 = arith.addf %749, %754 : vector<8x32xf32>
    %762 = arith.negf %761 : vector<8x32xf32>
    %763 = math.exp %762 : vector<8x32xf32>
    %cst_201 = arith.constant 1.000000e+00 : f32
    %764 = vector.broadcast %cst_201 : f32 to vector<8x32xf32>
    %765 = arith.addf %764, %763 : vector<8x32xf32>
    %766 = arith.divf %764, %765 : vector<8x32xf32>
    %767 = arith.addf %750, %757 : vector<8x32xf32>
    %768 = arith.negf %767 : vector<8x32xf32>
    %769 = math.exp %768 : vector<8x32xf32>
    %cst_202 = arith.constant 1.000000e+00 : f32
    %770 = vector.broadcast %cst_202 : f32 to vector<8x32xf32>
    %771 = arith.addf %770, %769 : vector<8x32xf32>
    %772 = arith.divf %770, %771 : vector<8x32xf32>
    %773 = arith.mulf %766, %760 : vector<8x32xf32>
    %774 = arith.addf %751, %773 : vector<8x32xf32>
    %775 = math.tanh %774 : vector<8x32xf32>
    %cst_203 = arith.constant 1.000000e+00 : f32
    %776 = vector.broadcast %cst_203 : f32 to vector<8x32xf32>
    %777 = arith.subf %776, %772 : vector<8x32xf32>
    %778 = arith.mulf %777, %775 : vector<8x32xf32>
    %779 = arith.mulf %772, %748 : vector<8x32xf32>
    %780 = arith.addf %778, %779 : vector<8x32xf32>
    %781 = tpu.concatenate %140, %172, %204, %236, %268, %300, %332, %364, %396, %428, %460, %492, %524, %556, %588, %620 in 0 : vector<8x32xf32>, vector<8x32xf32>, vector<8x32xf32>, vector<8x32xf32>, vector<8x32xf32>, vector<8x32xf32>, vector<8x32xf32>, vector<8x32xf32>, vector<8x32xf32>, vector<8x32xf32>, vector<8x32xf32>, vector<8x32xf32>, vector<8x32xf32>, vector<8x32xf32>, vector<8x32xf32>, vector<8x32xf32> -> vector<128x32xf32>
    %782 = tpu.concatenate %652, %684, %716, %748, %780 in 0 : vector<8x32xf32>, vector<8x32xf32>, vector<8x32xf32>, vector<8x32xf32>, vector<8x32xf32> -> vector<40x32xf32>
    %783 = tpu.concatenate %781, %782 in 0 : vector<128x32xf32>, vector<40x32xf32> -> vector<168x32xf32>
    %c0_204 = arith.constant 0 : index
    %c0_205 = arith.constant 0 : index
    %784 = vector.load %arg20[%c0_204, %c0_205] : memref<32x32xf32, #tpu.memory_space<vmem>>, vector<32x32xf32>
    %cst_206 = arith.constant dense<0.000000e+00> : vector<168x32xf32>
    %785 = tpu.matmul %783, %784, %cst_206 {dimension_numbers = #tpu.dot_dimension_numbers<[1], [0], [0], [1], [0, 0, 1, 1], [], []>} : vector<168x32xf32>, vector<32x32xf32>, vector<168x32xf32> -> vector<168x32xf32>
    %c0_207 = arith.constant 0 : index
    %c0_208 = arith.constant 0 : index
    %786 = vector.load %arg21[%c0_207, %c0_208] : memref<1x32xf32, #tpu.memory_space<vmem>>, vector<1x32xf32>
    %787 = vector.broadcast %786 : vector<1x32xf32> to vector<168x32xf32>
    %788 = arith.addf %785, %787 : vector<168x32xf32>
    %cst_209 = arith.constant 0.000000e+00 : f32
    %789 = vector.broadcast %cst_209 : f32 to vector<168x32xf32>
    %790 = arith.maximumf %788, %789 : vector<168x32xf32>
    %791 = arith.addf %783, %790 : vector<168x32xf32>
    %c0_210 = arith.constant 0 : index
    %c0_211 = arith.constant 0 : index
    %792 = vector.load %arg22[%c0_210, %c0_211] : memref<32x32xf32, #tpu.memory_space<vmem>>, vector<32x32xf32>
    %cst_212 = arith.constant dense<0.000000e+00> : vector<168x32xf32>
    %793 = tpu.matmul %791, %792, %cst_212 {dimension_numbers = #tpu.dot_dimension_numbers<[1], [0], [0], [1], [0, 0, 1, 1], [], []>} : vector<168x32xf32>, vector<32x32xf32>, vector<168x32xf32> -> vector<168x32xf32>
    %c0_213 = arith.constant 0 : index
    %c0_214 = arith.constant 0 : index
    %794 = vector.load %arg23[%c0_213, %c0_214] : memref<1x32xf32, #tpu.memory_space<vmem>>, vector<1x32xf32>
    %795 = vector.broadcast %794 : vector<1x32xf32> to vector<168x32xf32>
    %796 = arith.addf %793, %795 : vector<168x32xf32>
    %797 = math.tanh %796 : vector<168x32xf32>
    %798 = vector.shape_cast %797 : vector<168x32xf32> to vector<21x8x32xf32>
    %799 = vector.shape_cast %791 : vector<168x32xf32> to vector<21x8x32xf32>
    %c0_215 = arith.constant 0 : index
    %c0_216 = arith.constant 0 : index
    %800 = vector.load %arg24[%c0_215, %c0_216] : memref<1x32xf32, #tpu.memory_space<vmem>>, vector<1x32xf32>
    %801 = vector.shape_cast %800 : vector<1x32xf32> to vector<1x1x32xf32>
    %802 = vector.broadcast %801 : vector<1x1x32xf32> to vector<21x8x32xf32>
    %803 = arith.mulf %798, %802 : vector<21x8x32xf32>
    %cst_217 = arith.constant dense<0.000000e+00> : vector<21x8xf32>
    %804 = vector.multi_reduction <add>, %803, %cst_217 [2] : vector<21x8x32xf32> to vector<21x8xf32>
    %805 = vector.shape_cast %804 : vector<21x8xf32> to vector<21x8x1xf32>
    %cst_218 = arith.constant dense<0xFF800000> : vector<8x1xf32>
    %806 = vector.multi_reduction <maximumf>, %805, %cst_218 [0] : vector<21x8x1xf32> to vector<8x1xf32>
    %807 = vector.shape_cast %806 : vector<8x1xf32> to vector<1x8x1xf32>
    %808 = vector.broadcast %807 : vector<1x8x1xf32> to vector<21x8x1xf32>
    %809 = arith.subf %805, %808 : vector<21x8x1xf32>
    %810 = math.exp %809 : vector<21x8x1xf32>
    %cst_219 = arith.constant dense<0.000000e+00> : vector<8x1xf32>
    %811 = vector.multi_reduction <add>, %810, %cst_219 [0] : vector<21x8x1xf32> to vector<8x1xf32>
    %812 = vector.shape_cast %811 : vector<8x1xf32> to vector<1x8x1xf32>
    %813 = vector.broadcast %812 : vector<1x8x1xf32> to vector<21x8x1xf32>
    %814 = arith.divf %810, %813 : vector<21x8x1xf32>
    %815 = vector.broadcast %814 : vector<21x8x1xf32> to vector<21x8x32xf32>
    %816 = arith.mulf %815, %799 : vector<21x8x32xf32>
    %cst_220 = arith.constant dense<0.000000e+00> : vector<8x32xf32>
    %817 = vector.multi_reduction <add>, %816, %cst_220 [0] : vector<21x8x32xf32> to vector<8x32xf32>
    %c0_221 = arith.constant 0 : index
    %c0_222 = arith.constant 0 : index
    %818 = vector.load %arg25[%c0_221, %c0_222] : memref<32x128xf32, #tpu.memory_space<vmem>>, vector<32x128xf32>
    %cst_223 = arith.constant dense<0.000000e+00> : vector<8x128xf32>
    %819 = tpu.matmul %817, %818, %cst_223 {dimension_numbers = #tpu.dot_dimension_numbers<[1], [0], [0], [1], [0, 0, 1, 1], [], []>} : vector<8x32xf32>, vector<32x128xf32>, vector<8x128xf32> -> vector<8x128xf32>
    %c0_224 = arith.constant 0 : index
    %c0_225 = arith.constant 0 : index
    %820 = vector.load %arg26[%c0_224, %c0_225] : memref<1x128xf32, #tpu.memory_space<vmem>>, vector<1x128xf32>
    %821 = vector.broadcast %820 : vector<1x128xf32> to vector<8x128xf32>
    %822 = arith.addf %819, %821 : vector<8x128xf32>
    %c0_226 = arith.constant 0 : index
    %c0_227 = arith.constant 0 : index
    %823 = vector.load %arg27[%c0_226, %c0_227] : memref<8x128xf32, #tpu.memory_space<vmem>>, vector<8x128xf32>
    tpu.vector_store %arg27[%c0_226, %c0_227], %822 {strides = array<i32>} : memref<8x128xf32, #tpu.memory_space<vmem>>, vector<8x128xf32>,
    return
  }
  func.func @transform_0(%arg0: i32) -> (i32, i32) {
    %c0_i32 = arith.constant 0 : i32
    %c0_i32_0 = arith.constant 0 : i32
    return %arg0, %c0_i32 : i32, i32
  }
  func.func @transform_1(%arg0: i32) -> (i32, i32) {
    %c0_i32 = arith.constant 0 : i32
    %c0_i32_0 = arith.constant 0 : i32
    %c0_i32_1 = arith.constant 0 : i32
    return %c0_i32, %c0_i32_0 : i32, i32
  }
  func.func @transform_2(%arg0: i32) -> (i32, i32) {
    %c0_i32 = arith.constant 0 : i32
    %c0_i32_0 = arith.constant 0 : i32
    %c0_i32_1 = arith.constant 0 : i32
    return %c0_i32, %c0_i32_0 : i32, i32
  }
  func.func @transform_3(%arg0: i32) -> (i32, i32) {
    %c0_i32 = arith.constant 0 : i32
    %c0_i32_0 = arith.constant 0 : i32
    %c0_i32_1 = arith.constant 0 : i32
    return %c0_i32, %c0_i32_0 : i32, i32
  }
  func.func @transform_4(%arg0: i32) -> (i32, i32) {
    %c0_i32 = arith.constant 0 : i32
    %c0_i32_0 = arith.constant 0 : i32
    %c0_i32_1 = arith.constant 0 : i32
    return %c0_i32, %c0_i32_0 : i32, i32
  }
  func.func @transform_5(%arg0: i32) -> (i32, i32) {
    %c0_i32 = arith.constant 0 : i32
    %c0_i32_0 = arith.constant 0 : i32
    %c0_i32_1 = arith.constant 0 : i32
    return %c0_i32, %c0_i32_0 : i32, i32
  }
  func.func @transform_6(%arg0: i32) -> (i32, i32) {
    %c0_i32 = arith.constant 0 : i32
    %c0_i32_0 = arith.constant 0 : i32
    %c0_i32_1 = arith.constant 0 : i32
    return %c0_i32, %c0_i32_0 : i32, i32
  }
  func.func @transform_7(%arg0: i32) -> (i32, i32) {
    %c0_i32 = arith.constant 0 : i32
    %c0_i32_0 = arith.constant 0 : i32
    %c0_i32_1 = arith.constant 0 : i32
    return %c0_i32, %c0_i32_0 : i32, i32
  }
  func.func @transform_8(%arg0: i32) -> (i32, i32) {
    %c0_i32 = arith.constant 0 : i32
    %c0_i32_0 = arith.constant 0 : i32
    %c0_i32_1 = arith.constant 0 : i32
    return %c0_i32, %c0_i32_0 : i32, i32
  }
  func.func @transform_9(%arg0: i32) -> (i32, i32) {
    %c0_i32 = arith.constant 0 : i32
    %c0_i32_0 = arith.constant 0 : i32
    %c0_i32_1 = arith.constant 0 : i32
    return %c0_i32, %c0_i32_0 : i32, i32
  }
  func.func @transform_10(%arg0: i32) -> (i32, i32) {
    %c0_i32 = arith.constant 0 : i32
    %c0_i32_0 = arith.constant 0 : i32
    %c0_i32_1 = arith.constant 0 : i32
    return %c0_i32, %c0_i32_0 : i32, i32
  }
  func.func @transform_11(%arg0: i32) -> (i32, i32) {
    %c0_i32 = arith.constant 0 : i32
    %c0_i32_0 = arith.constant 0 : i32
    %c0_i32_1 = arith.constant 0 : i32
    return %c0_i32, %c0_i32_0 : i32, i32
  }
  func.func @transform_12(%arg0: i32) -> (i32, i32) {
    %c0_i32 = arith.constant 0 : i32
    %c0_i32_0 = arith.constant 0 : i32
    %c0_i32_1 = arith.constant 0 : i32
    return %c0_i32, %c0_i32_0 : i32, i32
  }
  func.func @transform_13(%arg0: i32) -> (i32, i32) {
    %c0_i32 = arith.constant 0 : i32
    %c0_i32_0 = arith.constant 0 : i32
    %c0_i32_1 = arith.constant 0 : i32
    return %c0_i32, %c0_i32_0 : i32, i32
  }
  func.func @transform_14(%arg0: i32) -> (i32, i32) {
    %c0_i32 = arith.constant 0 : i32
    %c0_i32_0 = arith.constant 0 : i32
    %c0_i32_1 = arith.constant 0 : i32
    return %c0_i32, %c0_i32_0 : i32, i32
  }
  func.func @transform_15(%arg0: i32) -> (i32, i32) {
    %c0_i32 = arith.constant 0 : i32
    %c0_i32_0 = arith.constant 0 : i32
    %c0_i32_1 = arith.constant 0 : i32
    return %c0_i32, %c0_i32_0 : i32, i32
  }
  func.func @transform_16(%arg0: i32) -> (i32, i32) {
    %c0_i32 = arith.constant 0 : i32
    %c0_i32_0 = arith.constant 0 : i32
    %c0_i32_1 = arith.constant 0 : i32
    return %c0_i32, %c0_i32_0 : i32, i32
  }
  func.func @transform_17(%arg0: i32) -> (i32, i32) {
    %c0_i32 = arith.constant 0 : i32
    %c0_i32_0 = arith.constant 0 : i32
    %c0_i32_1 = arith.constant 0 : i32
    return %c0_i32, %c0_i32_0 : i32, i32
  }
  func.func @transform_18(%arg0: i32) -> (i32, i32) {
    %c0_i32 = arith.constant 0 : i32
    %c0_i32_0 = arith.constant 0 : i32
    %c0_i32_1 = arith.constant 0 : i32
    return %c0_i32, %c0_i32_0 : i32, i32
  }
  func.func @transform_19(%arg0: i32) -> (i32, i32) {
    %c0_i32 = arith.constant 0 : i32
    %c0_i32_0 = arith.constant 0 : i32
    %c0_i32_1 = arith.constant 0 : i32
    return %c0_i32, %c0_i32_0 : i32, i32
  }
  func.func @transform_20(%arg0: i32) -> (i32, i32) {
    %c0_i32 = arith.constant 0 : i32
    %c0_i32_0 = arith.constant 0 : i32
    %c0_i32_1 = arith.constant 0 : i32
    return %c0_i32, %c0_i32_0 : i32, i32
  }
  func.func @transform_21(%arg0: i32) -> (i32, i32) {
    %c0_i32 = arith.constant 0 : i32
    %c0_i32_0 = arith.constant 0 : i32
    %c0_i32_1 = arith.constant 0 : i32
    return %c0_i32, %c0_i32_0 : i32, i32
  }
  func.func @transform_22(%arg0: i32) -> (i32, i32) {
    %c0_i32 = arith.constant 0 : i32
    %c0_i32_0 = arith.constant 0 : i32
    %c0_i32_1 = arith.constant 0 : i32
    return %c0_i32, %c0_i32_0 : i32, i32
  }
  func.func @transform_23(%arg0: i32) -> (i32, i32) {
    %c0_i32 = arith.constant 0 : i32
    %c0_i32_0 = arith.constant 0 : i32
    %c0_i32_1 = arith.constant 0 : i32
    return %c0_i32, %c0_i32_0 : i32, i32
  }
  func.func @transform_24(%arg0: i32) -> (i32, i32) {
    %c0_i32 = arith.constant 0 : i32
    %c0_i32_0 = arith.constant 0 : i32
    %c0_i32_1 = arith.constant 0 : i32
    return %c0_i32, %c0_i32_0 : i32, i32
  }
  func.func @transform_25(%arg0: i32) -> (i32, i32) {
    %c0_i32 = arith.constant 0 : i32
    %c0_i32_0 = arith.constant 0 : i32
    %c0_i32_1 = arith.constant 0 : i32
    return %c0_i32, %c0_i32_0 : i32, i32
  }
  func.func @transform_26(%arg0: i32) -> (i32, i32) {
    %c0_i32 = arith.constant 0 : i32
    %c0_i32_0 = arith.constant 0 : i32
    return %arg0, %c0_i32 : i32, i32
  }
}

</mosaic_0001>

<llo_original>
// kernel: reverse
$region0: #{reverse}
  %s0 = inlined_call_operand.vmem [shape: f32[2,256], index: 0, kind: input, shape index: {}]
  %s1 = inlined_call_operand.vmem [shape: f32[2,256], index: 1, kind: output, shape index: {}]
  %v2 = vlaneseq
  %v3 = vsub.s32 127, %v2
  %4 = vset.pattern.permute.xlu0 %v3
  $region1: #{reverse} parent=0
    #allocation0 [shape = 'u8[4096]{0}', space=vmem, size = 0x1000, scoped, tag = 'operand span for operand 0']
    #allocation1 [shape = 'u8[2048]{0}', space=vmem, size = 0x800, scoped, tag = 'packed  for operand 0']
    #allocation2 [shape = 'u8[4096]{0}', space=vmem, size = 0x1000, scoped, tag = 'operand span for operand 1']
    #allocation3 [shape = 'u8[2048]{0}', space=vmem, size = 0x800, scoped, tag = 'packed  for operand 1']
    loop: start=0, step=1, limit=4
    $region2: #{reverse} parent=1 // loop_pre_header
      _
    $region3: #{reverse} parent=1 // loop_header
      %s6 = sphi 0, %s10
      %p7 = scmp.ge.s32.totalorder %s6, 4
      %s13 = sphi 0, %s25
      %s14 = sphi 0, %s21
      %s15 = sphi 0, %s13
      %s16 = sphi 0, %s14
      %s17 = sphi 0, %s15
      %s18 = sphi 0, %s16
    $region4: #{reverse} parent=1 // loop_header_branch
      %9 = sbr.rel (%p7) target = $region8
    $region5: #{reverse} parent=1 // loop_body
      %s11 = ssub.s32 %s6, 1
      %s12 = ssub.s32 %s6, 2
      %s19 = sadd.s32 1, %s14
      %p20 = scmp.ge.s32.totalorder %s19, 2
      %s21 = scalar_select %p20, 0, %s19
      %s22 = sadd.s32 1, %s13
      %s23 = scalar_select %p20, %s22, %s13
      %p24 = scmp.ge.s32.totalorder %s23, 1
      %s25 = scalar_select %p24, 0, %s23
      %p26 = scmp.le.s32.totalorder 1, %s6
      %p27 = scmp.lt.s32.totalorder %s6, 3
      %p28 = pnand %p26, %p27
      %p29 = pneg %p28
      // Predicated region
      $region9: #{reverse} parent=5 // pred_check
        _
      $region10: #{reverse} parent=5 // pred_check_branch
        %31 = sbr.rel (%p28) target = $region12
      $region11: #{reverse} parent=5 // pred_region
        %s32 = ssub.s32 %s6, 1
      $region12: #{reverse} parent=5 // pred_fallthru
        _
      %p33 = scmp.lt.s32.totalorder %s6, 2
      // Predicated region
      $region13: #{reverse} parent=5 // pred_check
        %p34 = pneg %p33
      $region14: #{reverse} parent=5 // pred_check_branch
        %36 = sbr.rel (%p34) target = $region16
      $region15: #{reverse} parent=5 // pred_region
        %s37 = sand.u32 %s6, 1
        %s38 = sand.u32 %s6, 1
        %s39 = smul.addr %s38, 2
        %s40 = scalar_lea.vmem [#allocation1], %s39
        %s41 = ssub.s32 1, %s14
        %s42 = smul.addr %s13, 2
        %s43 = sadd.s32 %s41, %s42
        %s44 = smul.addr %s43, 2
        %s45 = scalar_lea.vmem %s0, %s44
        // Predicated region
        $region17: #{reverse} parent=15 // pred_check
          _
        $region18: #{reverse} parent=15 // pred_check_branch
          %47 = sbr.rel (0) target = $region20
        $region19: #{reverse} parent=15 // pred_region
          // Predicated region
          $region21: #{reverse} parent=19 // pred_check
            _
          $region22: #{reverse} parent=19 // pred_check_branch
            %49 = sbr.rel target = $region24
          $region23: #{reverse} parent=19 // pred_region
            // Predicated region
            $region36: #{reverse} parent=23 // pred_check
              _
            $region37: #{reverse} parent=23 // pred_check_branch
              %65 = sbr.rel (0) target = $region39
            $region38: #{reverse} parent=23 // pred_region
              %s67 = ssub.s32 4, 1
              loop: start=0, step=1, limit=1
              $region40: #{reverse} parent=38 // loop_pre_header
                _
              $region41: #{reverse} parent=38 // loop_header
                %s69 = sphi 0, %s73
                %p70 = scmp.ge.s32.totalorder %s69, 1
                %s74 = sphi %s45, %s45
                %s75 = sphi %s40, %s40
              $region42: #{reverse} parent=38 // loop_header_branch
                %72 = sbr.rel (%p70) target = $region46
              $region43: #{reverse} parent=38 // loop_body
                %v76 = vld [vmem:[%s74] sm:%s67]
                %77 = vst [vmem:[%s75] sm:%s67] %v76
              $region44: #{reverse} parent=38 // loop_footer
                %s73 = sadd.s32 1, %s69
              $region45: #{reverse} parent=38 // loop_footer_branch
                %68 = sbr.rel target = $region41
              $region46: #{reverse} parent=38 // loop_exit
                _
            $region39: #{reverse} parent=23 // pred_fallthru
              _
          $region24: #{reverse} parent=19 // pred_fallthru
            _
          // Predicated region
          $region25: #{reverse} parent=19 // pred_check
            _
          $region26: #{reverse} parent=19 // pred_check_branch
            %51 = sbr.rel (0) target = $region28
          $region27: #{reverse} parent=19 // pred_region
            %s53 = ssub.s32 4, 1
            loop: start=0, step=1, limit=1
            $region29: #{reverse} parent=27 // loop_pre_header
              _
            $region30: #{reverse} parent=27 // loop_header
              %s55 = sphi 0, %s59
              %p56 = scmp.ge.s32.totalorder %s55, 1
              %s60 = sphi %s45, %s45
              %s61 = sphi %s40, %s40
            $region31: #{reverse} parent=27 // loop_header_branch
              %58 = sbr.rel (%p56) target = $region35
            $region32: #{reverse} parent=27 // loop_body
              %v62 = vld [vmem:[%s60] sm:%s53]
              %63 = vst [vmem:[%s61] sm:%s53] %v62
            $region33: #{reverse} parent=27 // loop_footer
              %s59 = sadd.s32 1, %s55
            $region34: #{reverse} parent=27 // loop_footer_branch
              %54 = sbr.rel target = $region30
            $region35: #{reverse} parent=27 // loop_exit
              _
          $region28: #{reverse} parent=19 // pred_fallthru
            _
        $region20: #{reverse} parent=15 // pred_fallthru
          _
        %78 = vnop
      $region16: #{reverse} parent=5 // pred_fallthru
        _
      %p79 = scmp.le.s32.totalorder 1, %s6
      %p80 = scmp.lt.s32.totalorder %s6, 3
      %p81 = pnand %p79, %p80
      %p82 = pneg %p81
      // Predicated region
      $region47: #{reverse} parent=5 // pred_check
        _
      $region48: #{reverse} parent=5 // pred_check_branch
        %84 = sbr.rel (%p81) target = $region50
      $region49: #{reverse} parent=5 // pred_region
        %s85 = ssub.s32 %s6, 1
        %s86 = sand.u32 %s11, 1
        %s87 = sand.u32 %s11, 1
        %s88 = smul.addr %s87, 2
        %s89 = scalar_lea.vmem [#allocation1], %s88
        %s90 = sand.u32 %s11, 1
        %s91 = sand.u32 %s11, 1
        %s92 = smul.addr %s91, 2
        %s93 = scalar_lea.vmem [#allocation1], %s92
        %s94 = sand.u32 %s11, 1
        %s95 = sand.u32 %s11, 1
        %s96 = smul.addr %s95, 2
        %s97 = scalar_lea.vmem [#allocation3], %s96
        %s99 = sshll.u32 1, 2
        %s100 = ssub.s32 %s99, 1
        %v101 = vld [vmem:[%s93] sm:%s100]
        %102 = vst [vmem:[#allocation0] sm:%s100] %v101
        %s103 = ssub.s32 1, %s16
        %v104 = vld [vmem:[#allocation0] sm:$0xff]
        %105 = vperm.xlu0 %4, %v104
        %v106 = vpop.permute.xlu0 %105
        %107 = vst [vmem:[#allocation2] sm:$0xff] %v106
        %s109 = sshll.u32 1, 2
        %s110 = ssub.s32 %s109, 1
        %v112 = vld [vmem:[#allocation2] sm:%s110]
        %s113 = sshll.u32 1, 2
        %s114 = ssub.s32 %s113, 1
        %115 = vst [vmem:[%s97] sm:%s114] %v112
        %s116 = sand.u32 %s11, 1
        %s117 = sand.u32 %s11, 1
        %s118 = smul.addr %s117, 2
        %s119 = scalar_lea.vmem [#allocation3], %s118
        %s120 = smul.addr %s15, 2
        %s121 = sadd.s32 %s16, %s120
        %s122 = smul.addr %s121, 2
        %s123 = scalar_lea.vmem %s1, %s122
        // Predicated region
        $region51: #{reverse} parent=49 // pred_check
          _
        $region52: #{reverse} parent=49 // pred_check_branch
          %125 = sbr.rel (0) target = $region54
        $region53: #{reverse} parent=49 // pred_region
          // Predicated region
          $region55: #{reverse} parent=53 // pred_check
            _
          $region56: #{reverse} parent=53 // pred_check_branch
            %127 = sbr.rel target = $region58
          $region57: #{reverse} parent=53 // pred_region
            // Predicated region
            $region70: #{reverse} parent=57 // pred_check
              _
            $region71: #{reverse} parent=57 // pred_check_branch
              %143 = sbr.rel (0) target = $region73
            $region72: #{reverse} parent=57 // pred_region
              %s145 = ssub.s32 4, 1
              loop: start=0, step=1, limit=1
              $region74: #{reverse} parent=72 // loop_pre_header
                _
              $region75: #{reverse} parent=72 // loop_header
                %s147 = sphi 0, %s151
                %p148 = scmp.ge.s32.totalorder %s147, 1
                %s152 = sphi %s119, %s119
                %s153 = sphi %s123, %s123
              $region76: #{reverse} parent=72 // loop_header_branch
                %150 = sbr.rel (%p148) target = $region80
              $region77: #{reverse} parent=72 // loop_body
                %v154 = vld [vmem:[%s152] sm:%s145]
                %155 = vst [vmem:[%s153] sm:%s145] %v154
              $region78: #{reverse} parent=72 // loop_footer
                %s151 = sadd.s32 1, %s147
              $region79: #{reverse} parent=72 // loop_footer_branch
                %146 = sbr.rel target = $region75
              $region80: #{reverse} parent=72 // loop_exit
                _
            $region73: #{reverse} parent=57 // pred_fallthru
              _
          $region58: #{reverse} parent=53 // pred_fallthru
            _
          // Predicated region
          $region59: #{reverse} parent=53 // pred_check
            _
          $region60: #{reverse} parent=53 // pred_check_branch
            %129 = sbr.rel (0) target = $region62
          $region61: #{reverse} parent=53 // pred_region
            %s131 = ssub.s32 4, 1
            loop: start=0, step=1, limit=1
            $region63: #{reverse} parent=61 // loop_pre_header
              _
            $region64: #{reverse} parent=61 // loop_header
              %s133 = sphi 0, %s137
              %p134 = scmp.ge.s32.totalorder %s133, 1
              %s138 = sphi %s119, %s119
              %s139 = sphi %s123, %s123
            $region65: #{reverse} parent=61 // loop_header_branch
              %136 = sbr.rel (%p134) target = $region69
            $region66: #{reverse} parent=61 // loop_body
              %v140 = vld [vmem:[%s138] sm:%s131]
              %141 = vst [vmem:[%s139] sm:%s131] %v140
            $region67: #{reverse} parent=61 // loop_footer
              %s137 = sadd.s32 1, %s133
            $region68: #{reverse} parent=61 // loop_footer_branch
              %132 = sbr.rel target = $region64
            $region69: #{reverse} parent=61 // loop_exit
              _
          $region62: #{reverse} parent=53 // pred_fallthru
            _
        $region54: #{reverse} parent=49 // pred_fallthru
          _
        %156 = vnop
      $region50: #{reverse} parent=5 // pred_fallthru
        _
      %p157 = scmp.le.s32.totalorder 2, %s6
      // Predicated region
      $region81: #{reverse} parent=5 // pred_check
        %p158 = pneg %p157
      $region82: #{reverse} parent=5 // pred_check_branch
        %160 = sbr.rel (%p158) target = $region84
      $region83: #{reverse} parent=5 // pred_region
        %s161 = ssub.s32 %s6, 2
        %s162 = sand.u32 %s12, 1
        %s163 = sand.u32 %s12, 1
        %s164 = smul.addr %s163, 2
        %s165 = scalar_lea.vmem [#allocation3], %s164
      $region84: #{reverse} parent=5 // pred_fallthru
        _
    $region6: #{reverse} parent=1 // loop_footer
      %s10 = sadd.s32 1, %s6
    $region7: #{reverse} parent=1 // loop_footer_branch
      %5 = sbr.rel target = $region3
    $region8: #{reverse} parent=1 // loop_exit
      _

// kernel: phi_fc_recurrent_forward.1
$region0: #{phi_fc_recurrent_forward.1}
  #allocation0 [shape = 'u32[]', space=smem, size = 0x4, offset = 0x4, fixed_abs, tag = 'smem constant byte address 0x4 - core index']
  #allocation1 [shape = 'u32[144,128]{1,0:T(1,128)}', space=vmem, size = 0x12000, scoped, tag = 'internal scratch']
  %s0 = inlined_call_operand.vmem [shape: f32[8,3600], index: 0, kind: input, shape index: {}]
  %s1 = inlined_call_operand.vmem [shape: bf16[400,512], index: 1, kind: input, shape index: {}]
  %s2 = inlined_call_operand.vmem [shape: bf16[256,64], index: 2, kind: input, shape index: {}]
  %s3 = inlined_call_operand.vmem [shape: bf16[64,64], index: 3, kind: input, shape index: {}]
  %s4 = inlined_call_operand.vmem [shape: f32[1,64], index: 4, kind: input, shape index: {}]
  %s5 = inlined_call_operand.vmem [shape: bf16[64,64], index: 5, kind: input, shape index: {}]
  %s6 = inlined_call_operand.vmem [shape: f32[1,64], index: 6, kind: input, shape index: {}]
  %s7 = inlined_call_operand.vmem [shape: f32[64,32], index: 7, kind: input, shape index: {}]
  %s8 = inlined_call_operand.vmem [shape: f32[64,32], index: 8, kind: input, shape index: {}]
  %s9 = inlined_call_operand.vmem [shape: f32[64,32], index: 9, kind: input, shape index: {}]
  %s10 = inlined_call_operand.vmem [shape: f32[1,32], index: 10, kind: input, shape index: {}]
  %s11 = inlined_call_operand.vmem [shape: f32[1,32], index: 11, kind: input, shape index: {}]
  %s12 = inlined_call_operand.vmem [shape: f32[1,32], index: 12, kind: input, shape index: {}]
  %s13 = inlined_call_operand.vmem [shape: f32[32,32], index: 13, kind: input, shape index: {}]
  %s14 = inlined_call_operand.vmem [shape: f32[32,32], index: 14, kind: input, shape index: {}]
  %s15 = inlined_call_operand.vmem [shape: f32[32,32], index: 15, kind: input, shape index: {}]
  %s16 = inlined_call_operand.vmem [shape: f32[1,32], index: 16, kind: input, shape index: {}]
  %s17 = inlined_call_operand.vmem [shape: f32[1,32], index: 17, kind: input, shape index: {}]
  %s18 = inlined_call_operand.vmem [shape: f32[1,32], index: 18, kind: input, shape index: {}]
  %s19 = inlined_call_operand.hbm [shape: f32[32,32], index: 19, kind: input, shape index: {}]
  %s20 = inlined_call_operand.vmem [shape: f32[1,32], index: 20, kind: input, shape index: {}]
  %s21 = inlined_call_operand.hbm [shape: f32[32,32], index: 21, kind: input, shape index: {}]
  %s22 = inlined_call_operand.vmem [shape: f32[1,32], index: 22, kind: input, shape index: {}]
  %s23 = inlined_call_operand.vmem [shape: f32[1,32], index: 23, kind: input, shape index: {}]
  %s24 = inlined_call_operand.vmem [shape: f32[32,128], index: 24, kind: input, shape index: {}]
  %s25 = inlined_call_operand.vmem [shape: f32[1,128], index: 25, kind: input, shape index: {}]
  %s26 = inlined_call_operand.vmem [shape: f32[8,128], index: 26, kind: output, shape index: {}]
  %s27 = sld [smem:[#allocation0]]
  $region122: #{phi_fc_recurrent_forward.1} parent=0
    _
  %s29 = ssub.s32 1, %s27
  %s30 = scalar_select 0, %s29, %s27
  $region1: #{phi_fc_recurrent_forward.1} parent=0
    #allocation2 [shape = 'u8[16384]{0}', space=vmem, size = 0x4000, scoped, tag = 'input window, operand 19, single buffered']
    #allocation3 [shape = 's32[1]{0}', space=sflag, size = 0x4, scoped, tag = 'scoped memory for phi_fc_recurrent_forward.1']
    #allocation4 [shape = 'u8[16384]{0}', space=vmem, size = 0x4000, scoped, tag = 'input window, operand 21, single buffered']
    #allocation5 [shape = 's32[1]{0}', space=sflag, size = 0x4, scoped, tag = 'scoped memory for phi_fc_recurrent_forward.1']
    %31 = vsyncpa [#allocation3], 0
    %32 = vsyncpa [#allocation5], 0
    // Predicated region
    $region2: #{phi_fc_recurrent_forward.1} parent=1 // pred_check
      _
    $region3: #{phi_fc_recurrent_forward.1} parent=1 // pred_check_branch
      %34 = sbr.rel (0) target = $region5
    $region4: #{phi_fc_recurrent_forward.1} parent=1 // pred_region
      _
    $region5: #{phi_fc_recurrent_forward.1} parent=1 // pred_fallthru
      _
    // Predicated region
    $region6: #{phi_fc_recurrent_forward.1} parent=1 // pred_check
      _
    $region7: #{phi_fc_recurrent_forward.1} parent=1 // pred_check_branch
      %36 = sbr.rel (0) target = $region9
    $region8: #{phi_fc_recurrent_forward.1} parent=1 // pred_region
      _
    $region9: #{phi_fc_recurrent_forward.1} parent=1 // pred_fallthru
      _
    // Predicated region
    $region10: #{phi_fc_recurrent_forward.1} parent=1 // pred_check
      _
    $region11: #{phi_fc_recurrent_forward.1} parent=1 // pred_check_branch
      %38 = sbr.rel (0) target = $region13
    $region12: #{phi_fc_recurrent_forward.1} parent=1 // pred_region
      _
    $region13: #{phi_fc_recurrent_forward.1} parent=1 // pred_fallthru
      _
    // Predicated region
    $region14: #{phi_fc_recurrent_forward.1} parent=1 // pred_check
      _
    $region15: #{phi_fc_recurrent_forward.1} parent=1 // pred_check_branch
      %40 = sbr.rel (0) target = $region17
    $region16: #{phi_fc_recurrent_forward.1} parent=1 // pred_region
      _
    $region17: #{phi_fc_recurrent_forward.1} parent=1 // pred_fallthru
      _
    // Predicated region
    $region18: #{phi_fc_recurrent_forward.1} parent=1 // pred_check
      _
    $region19: #{phi_fc_recurrent_forward.1} parent=1 // pred_check_branch
      %42 = sbr.rel (0) target = $region21
    $region20: #{phi_fc_recurrent_forward.1} parent=1 // pred_region
      _
    $region21: #{phi_fc_recurrent_forward.1} parent=1 // pred_fallthru
      _
    // Predicated region
    $region22: #{phi_fc_recurrent_forward.1} parent=1 // pred_check
      _
    $region23: #{phi_fc_recurrent_forward.1} parent=1 // pred_check_branch
      %44 = sbr.rel (0) target = $region25
    $region24: #{phi_fc_recurrent_forward.1} parent=1 // pred_region
      _
    $region25: #{phi_fc_recurrent_forward.1} parent=1 // pred_fallthru
      _
    // Predicated region
    $region26: #{phi_fc_recurrent_forward.1} parent=1 // pred_check
      _
    $region27: #{phi_fc_recurrent_forward.1} parent=1 // pred_check_branch
      %46 = sbr.rel (0) target = $region29
    $region28: #{phi_fc_recurrent_forward.1} parent=1 // pred_region
      _
    $region29: #{phi_fc_recurrent_forward.1} parent=1 // pred_fallthru
      _
    // Predicated region
    $region30: #{phi_fc_recurrent_forward.1} parent=1 // pred_check
      _
    $region31: #{phi_fc_recurrent_forward.1} parent=1 // pred_check_branch
      %48 = sbr.rel (0) target = $region33
    $region32: #{phi_fc_recurrent_forward.1} parent=1 // pred_region
      _
    $region33: #{phi_fc_recurrent_forward.1} parent=1 // pred_fallthru
      _
    // Predicated region
    $region34: #{phi_fc_recurrent_forward.1} parent=1 // pred_check
      _
    $region35: #{phi_fc_recurrent_forward.1} parent=1 // pred_check_branch
      %50 = sbr.rel (0) target = $region37
    $region36: #{phi_fc_recurrent_forward.1} parent=1 // pred_region
      _
    $region37: #{phi_fc_recurrent_forward.1} parent=1 // pred_fallthru
      _
    // Predicated region
    $region38: #{phi_fc_recurrent_forward.1} parent=1 // pred_check
      _
    $region39: #{phi_fc_recurrent_forward.1} parent=1 // pred_check_branch
      %52 = sbr.rel (0) target = $region41
    $region40: #{phi_fc_recurrent_forward.1} parent=1 // pred_region
      _
    $region41: #{phi_fc_recurrent_forward.1} parent=1 // pred_fallthru
      _
    // Predicated region
    $region42: #{phi_fc_recurrent_forward.1} parent=1 // pred_check
      _
    $region43: #{phi_fc_recurrent_forward.1} parent=1 // pred_check_branch
      %54 = sbr.rel (0) target = $region45
    $region44: #{phi_fc_recurrent_forward.1} parent=1 // pred_region
      _
    $region45: #{phi_fc_recurrent_forward.1} parent=1 // pred_fallthru
      _
    // Predicated region
    $region46: #{phi_fc_recurrent_forward.1} parent=1 // pred_check
      _
    $region47: #{phi_fc_recurrent_forward.1} parent=1 // pred_check_branch
      %56 = sbr.rel (0) target = $region49
    $region48: #{phi_fc_recurrent_forward.1} parent=1 // pred_region
      _
    $region49: #{phi_fc_recurrent_forward.1} parent=1 // pred_fallthru
      _
    // Predicated region
    $region50: #{phi_fc_recurrent_forward.1} parent=1 // pred_check
      _
    $region51: #{phi_fc_recurrent_forward.1} parent=1 // pred_check_branch
      %58 = sbr.rel (0) target = $region53
    $region52: #{phi_fc_recurrent_forward.1} parent=1 // pred_region
      _
    $region53: #{phi_fc_recurrent_forward.1} parent=1 // pred_fallthru
      _
    // Predicated region
    $region54: #{phi_fc_recurrent_forward.1} parent=1 // pred_check
      _
    $region55: #{phi_fc_recurrent_forward.1} parent=1 // pred_check_branch
      %60 = sbr.rel (0) target = $region57
    $region56: #{phi_fc_recurrent_forward.1} parent=1 // pred_region
      _
    $region57: #{phi_fc_recurrent_forward.1} parent=1 // pred_fallthru
      _
    // Predicated region
    $region58: #{phi_fc_recurrent_forward.1} parent=1 // pred_check
      _
    $region59: #{phi_fc_recurrent_forward.1} parent=1 // pred_check_branch
      %62 = sbr.rel (0) target = $region61
    $region60: #{phi_fc_recurrent_forward.1} parent=1 // pred_region
      _
    $region61: #{phi_fc_recurrent_forward.1} parent=1 // pred_fallthru
      _
    // Predicated region
    $region62: #{phi_fc_recurrent_forward.1} parent=1 // pred_check
      _
    $region63: #{phi_fc_recurrent_forward.1} parent=1 // pred_check_branch
      %64 = sbr.rel (0) target = $region65
    $region64: #{phi_fc_recurrent_forward.1} parent=1 // pred_region
      _
    $region65: #{phi_fc_recurrent_forward.1} parent=1 // pred_fallthru
      _
    // Predicated region
    $region66: #{phi_fc_recurrent_forward.1} parent=1 // pred_check
      _
    $region67: #{phi_fc_recurrent_forward.1} parent=1 // pred_check_branch
      %66 = sbr.rel (0) target = $region69
    $region68: #{phi_fc_recurrent_forward.1} parent=1 // pred_region
      _
    $region69: #{phi_fc_recurrent_forward.1} parent=1 // pred_fallthru
      _
    // Predicated region
    $region70: #{phi_fc_recurrent_forward.1} parent=1 // pred_check
      _
    $region71: #{phi_fc_recurrent_forward.1} parent=1 // pred_check_branch
      %68 = sbr.rel (0) target = $region73
    $region72: #{phi_fc_recurrent_forward.1} parent=1 // pred_region
      _
    $region73: #{phi_fc_recurrent_forward.1} parent=1 // pred_fallthru
      _
    // Predicated region
    $region74: #{phi_fc_recurrent_forward.1} parent=1 // pred_check
      _
    $region75: #{phi_fc_recurrent_forward.1} parent=1 // pred_check_branch
      %70 = sbr.rel (0) target = $region77
    $region76: #{phi_fc_recurrent_forward.1} parent=1 // pred_region
      _
    $region77: #{phi_fc_recurrent_forward.1} parent=1 // pred_fallthru
      _
    // Predicated region
    $region78: #{phi_fc_recurrent_forward.1} parent=1 // pred_check
      _
    $region79: #{phi_fc_recurrent_forward.1} parent=1 // pred_check_branch
      %72 = sbr.rel (0) target = $region81
    $region80: #{phi_fc_recurrent_forward.1} parent=1 // pred_region
      %s74 = ssub.s32 512, 512
      %75 = vsyncadd [#allocation3], %s74
      %s76 = sshll.u32 [#allocation2], 4
      %s77 = int_to_ptr.vmem [resolvable:$true] %s76
      %82 = dma.hbm_to_vmem [thread:$0]  %s19, 512, %s77, [#allocation3], 128, 128, 8
    $region81: #{phi_fc_recurrent_forward.1} parent=1 // pred_fallthru
      _
    // Predicated region
    $region82: #{phi_fc_recurrent_forward.1} parent=1 // pred_check
      _
    $region83: #{phi_fc_recurrent_forward.1} parent=1 // pred_check_branch
      %84 = sbr.rel (0) target = $region85
    $region84: #{phi_fc_recurrent_forward.1} parent=1 // pred_region
      _
    $region85: #{phi_fc_recurrent_forward.1} parent=1 // pred_fallthru
      _
    // Predicated region
    $region86: #{phi_fc_recurrent_forward.1} parent=1 // pred_check
      _
    $region87: #{phi_fc_recurrent_forward.1} parent=1 // pred_check_branch
      %86 = sbr.rel (0) target = $region89
    $region88: #{phi_fc_recurrent_forward.1} parent=1 // pred_region
      %s88 = ssub.s32 512, 512
      %89 = vsyncadd [#allocation5], %s88
      %s90 = sshll.u32 [#allocation4], 4
      %s91 = int_to_ptr.vmem [resolvable:$true] %s90
      %96 = dma.hbm_to_vmem [thread:$0]  %s21, 512, %s91, [#allocation5], 128, 128, 8
    $region89: #{phi_fc_recurrent_forward.1} parent=1 // pred_fallthru
      _
    // Predicated region
    $region90: #{phi_fc_recurrent_forward.1} parent=1 // pred_check
      _
    $region91: #{phi_fc_recurrent_forward.1} parent=1 // pred_check_branch
      %98 = sbr.rel (0) target = $region93
    $region92: #{phi_fc_recurrent_forward.1} parent=1 // pred_region
      _
    $region93: #{phi_fc_recurrent_forward.1} parent=1 // pred_fallthru
      _
    // Predicated region
    $region94: #{phi_fc_recurrent_forward.1} parent=1 // pred_check
      _
    $region95: #{phi_fc_recurrent_forward.1} parent=1 // pred_check_branch
      %100 = sbr.rel (0) target = $region97
    $region96: #{phi_fc_recurrent_forward.1} parent=1 // pred_region
      _
    $region97: #{phi_fc_recurrent_forward.1} parent=1 // pred_fallthru
      _
    // Predicated region
    $region98: #{phi_fc_recurrent_forward.1} parent=1 // pred_check
      _
    $region99: #{phi_fc_recurrent_forward.1} parent=1 // pred_check_branch
      %102 = sbr.rel (0) target = $region101
    $region100: #{phi_fc_recurrent_forward.1} parent=1 // pred_region
      _
    $region101: #{phi_fc_recurrent_forward.1} parent=1 // pred_fallthru
      _
    // Predicated region
    $region102: #{phi_fc_recurrent_forward.1} parent=1 // pred_check
      _
    $region103: #{phi_fc_recurrent_forward.1} parent=1 // pred_check_branch
      %104 = sbr.rel (0) target = $region105
    $region104: #{phi_fc_recurrent_forward.1} parent=1 // pred_region
      _
    $region105: #{phi_fc_recurrent_forward.1} parent=1 // pred_fallthru
      _
    // Predicated region
    $region106: #{phi_fc_recurrent_forward.1} parent=1 // pred_check
      _
    $region107: #{phi_fc_recurrent_forward.1} parent=1 // pred_check_branch
      %106 = sbr.rel (0) target = $region109
    $region108: #{phi_fc_recurrent_forward.1} parent=1 // pred_region
      %107 = dma.done [#allocation3], 512
    $region109: #{phi_fc_recurrent_forward.1} parent=1 // pred_fallthru
      _
    // Predicated region
    $region110: #{phi_fc_recurrent_forward.1} parent=1 // pred_check
      _
    $region111: #{phi_fc_recurrent_forward.1} parent=1 // pred_check_branch
      %109 = sbr.rel (0) target = $region113
    $region112: #{phi_fc_recurrent_forward.1} parent=1 // pred_region
      %110 = dma.done [#allocation5], 512
    $region113: #{phi_fc_recurrent_forward.1} parent=1 // pred_fallthru
      _
    %v112 = vld [vmem:[%s0] sm:$0xff]
    %v113 = vld [vmem:[%s0 + $0x8] sm:$0xff]
    %v114 = vld [vmem:[%s0 + $0x10] sm:$0xff]
    %v115 = vld [vmem:[%s0 + $0x18] sm:$0xff]
    %v116 = vld [vmem:[%s0 + $0x20] sm:$0xff]
    %v117 = vld [vmem:[%s0 + $0x28] sm:$0xff]
    %v118 = vld [vmem:[%s0 + $0x30] sm:$0xff]
    %v119 = vld [vmem:[%s0 + $0x38] sm:$0xff]
    %v120 = vld [vmem:[%s0 + $0x40] sm:$0xff]
    %v121 = vld [vmem:[%s0 + $0x48] sm:$0xff]
    %v122 = vld [vmem:[%s0 + $0x50] sm:$0xff]
    %v123 = vld [vmem:[%s0 + $0x58] sm:$0xff]
    %v124 = vld [vmem:[%s0 + $0x60] sm:$0xff]
    %v125 = vld [vmem:[%s0 + $0x68] sm:$0xff]
    %v126 = vld [vmem:[%s0 + $0x70] sm:$0xff]
    %v127 = vld [vmem:[%s0 + $0x78] sm:$0xff]
    %v128 = vld [vmem:[%s0 + $0x80] sm:$0xff]
    %v129 = vld [vmem:[%s0 + $0x88] sm:$0xff]
    %v130 = vld [vmem:[%s0 + $0x90] sm:$0xff]
    %v131 = vld [vmem:[%s0 + $0x98] sm:$0xff]
    %v132 = vld [vmem:[%s0 + $0xa0] sm:$0xff]
    %v133 = vld [vmem:[%s0 + $0xa8] sm:$0xff]
    %v134 = vld [vmem:[%s0 + $0xb0] sm:$0xff]
    %v135 = vld [vmem:[%s0 + $0xb8] sm:$0xff]
    %v136 = vld [vmem:[%s0 + $0xc0] sm:$0xff]
    %v137 = vld [vmem:[%s0 + $0xc8] sm:$0xff]
    %v138 = vld [vmem:[%s0 + $0xd0] sm:$0xff]
    %v139 = vld [vmem:[%s0 + $0xd8] sm:$0xff]
    %v140 = vld [vmem:[%s0 + $0xe0] sm:$0xff]
    %145 = vrot.lane.b32.xlu0 %v113, 96
    %v146 = vpop.permute.xlu0 %145
    %147 = vrot.lane.b32.xlu0 %v114, 96
    %v148 = vpop.permute.xlu0 %147
    %149 = vrot.lane.b32.xlu0 %v115, 96
    %v150 = vpop.permute.xlu0 %149
    %151 = vrot.lane.b32.xlu0 %v116, 96
    %v152 = vpop.permute.xlu0 %151
    %vm153 = vcmask 785408
    %v154 = vsel %vm153, %v146, %v148
    %v155 = vsel %vm153, %v148, %v150
    %v156 = vsel %vm153, %v150, %v152
    %162 = vrot.lane.b32.xlu0 %v114, 64
    %v163 = vpop.permute.xlu0 %162
    %164 = vrot.lane.b32.xlu0 %v115, 64
    %v165 = vpop.permute.xlu0 %164
    %166 = vrot.lane.b32.xlu0 %v116, 64
    %v167 = vpop.permute.xlu0 %166
    %168 = vrot.lane.b32.xlu0 %v117, 64
    %v169 = vpop.permute.xlu0 %168
    %vm170 = vcmask 523264
    %v171 = vsel %vm170, %v163, %v165
    %v172 = vsel %vm170, %v165, %v167
    %v173 = vsel %vm170, %v167, %v169
    %179 = vrot.lane.b32.xlu0 %v115, 32
    %v180 = vpop.permute.xlu0 %179
    %181 = vrot.lane.b32.xlu0 %v116, 32
    %v182 = vpop.permute.xlu0 %181
    %183 = vrot.lane.b32.xlu0 %v117, 32
    %v184 = vpop.permute.xlu0 %183
    %185 = vrot.lane.b32.xlu0 %v118, 32
    %v186 = vpop.permute.xlu0 %185
    %vm187 = vcmask 261120
    %v188 = vsel %vm187, %v180, %v182
    %v189 = vsel %vm187, %v182, %v184
    %v190 = vsel %vm187, %v184, %v186
    %198 = vrot.lane.b32.xlu0 %v118, 96
    %v199 = vpop.permute.xlu0 %198
    %200 = vrot.lane.b32.xlu0 %v119, 96
    %v201 = vpop.permute.xlu0 %200
    %202 = vrot.lane.b32.xlu0 %v120, 96
    %v203 = vpop.permute.xlu0 %202
    %204 = vrot.lane.b32.xlu0 %v121, 96
    %v205 = vpop.permute.xlu0 %204
    %v206 = vsel %vm153, %v199, %v201
    %v207 = vsel %vm153, %v201, %v203
    %v208 = vsel %vm153, %v203, %v205
    %214 = vrot.lane.b32.xlu0 %v119, 64
    %v215 = vpop.permute.xlu0 %214
    %216 = vrot.lane.b32.xlu0 %v120, 64
    %v217 = vpop.permute.xlu0 %216
    %218 = vrot.lane.b32.xlu0 %v121, 64
    %v219 = vpop.permute.xlu0 %218
    %220 = vrot.lane.b32.xlu0 %v122, 64
    %v221 = vpop.permute.xlu0 %220
    %v222 = vsel %vm170, %v215, %v217
    %v223 = vsel %vm170, %v217, %v219
    %v224 = vsel %vm170, %v219, %v221
    %230 = vrot.lane.b32.xlu0 %v120, 32
    %v231 = vpop.permute.xlu0 %230
    %232 = vrot.lane.b32.xlu0 %v121, 32
    %v233 = vpop.permute.xlu0 %232
    %234 = vrot.lane.b32.xlu0 %v122, 32
    %v235 = vpop.permute.xlu0 %234
    %236 = vrot.lane.b32.xlu0 %v123, 32
    %v237 = vpop.permute.xlu0 %236
    %v238 = vsel %vm187, %v231, %v233
    %v239 = vsel %vm187, %v233, %v235
    %v240 = vsel %vm187, %v235, %v237
    %248 = vrot.lane.b32.xlu0 %v123, 96
    %v249 = vpop.permute.xlu0 %248
    %250 = vrot.lane.b32.xlu0 %v124, 96
    %v251 = vpop.permute.xlu0 %250
    %252 = vrot.lane.b32.xlu0 %v125, 96
    %v253 = vpop.permute.xlu0 %252
    %254 = vrot.lane.b32.xlu0 %v126, 96
    %v255 = vpop.permute.xlu0 %254
    %v256 = vsel %vm153, %v249, %v251
    %v257 = vsel %vm153, %v251, %v253
    %v258 = vsel %vm153, %v253, %v255
    %264 = vrot.lane.b32.xlu0 %v124, 64
    %v265 = vpop.permute.xlu0 %264
    %266 = vrot.lane.b32.xlu0 %v125, 64
    %v267 = vpop.permute.xlu0 %266
    %268 = vrot.lane.b32.xlu0 %v126, 64
    %v269 = vpop.permute.xlu0 %268
    %270 = vrot.lane.b32.xlu0 %v127, 64
    %v271 = vpop.permute.xlu0 %270
    %v272 = vsel %vm170, %v265, %v267
    %v273 = vsel %vm170, %v267, %v269
    %v274 = vsel %vm170, %v269, %v271
    %280 = vrot.lane.b32.xlu0 %v125, 32
    %v281 = vpop.permute.xlu0 %280
    %282 = vrot.lane.b32.xlu0 %v126, 32
    %v283 = vpop.permute.xlu0 %282
    %284 = vrot.lane.b32.xlu0 %v127, 32
    %v285 = vpop.permute.xlu0 %284
    %286 = vrot.lane.b32.xlu0 %v128, 32
    %v287 = vpop.permute.xlu0 %286
    %v288 = vsel %vm187, %v281, %v283
    %v289 = vsel %vm187, %v283, %v285
    %v290 = vsel %vm187, %v285, %v287
    %298 = vrot.lane.b32.xlu0 %v128, 96
    %v299 = vpop.permute.xlu0 %298
    %300 = vrot.lane.b32.xlu0 %v129, 96
    %v301 = vpop.permute.xlu0 %300
    %302 = vrot.lane.b32.xlu0 %v130, 96
    %v303 = vpop.permute.xlu0 %302
    %304 = vrot.lane.b32.xlu0 %v131, 96
    %v305 = vpop.permute.xlu0 %304
    %v306 = vsel %vm153, %v299, %v301
    %v307 = vsel %vm153, %v301, %v303
    %v308 = vsel %vm153, %v303, %v305
    %314 = vrot.lane.b32.xlu0 %v129, 64
    %v315 = vpop.permute.xlu0 %314
    %316 = vrot.lane.b32.xlu0 %v130, 64
    %v317 = vpop.permute.xlu0 %316
    %318 = vrot.lane.b32.xlu0 %v131, 64
    %v319 = vpop.permute.xlu0 %318
    %320 = vrot.lane.b32.xlu0 %v132, 64
    %v321 = vpop.permute.xlu0 %320
    %v322 = vsel %vm170, %v315, %v317
    %v323 = vsel %vm170, %v317, %v319
    %v324 = vsel %vm170, %v319, %v321
    %330 = vrot.lane.b32.xlu0 %v130, 32
    %v331 = vpop.permute.xlu0 %330
    %332 = vrot.lane.b32.xlu0 %v131, 32
    %v333 = vpop.permute.xlu0 %332
    %334 = vrot.lane.b32.xlu0 %v132, 32
    %v335 = vpop.permute.xlu0 %334
    %336 = vrot.lane.b32.xlu0 %v133, 32
    %v337 = vpop.permute.xlu0 %336
    %v338 = vsel %vm187, %v331, %v333
    %v339 = vsel %vm187, %v333, %v335
    %v340 = vsel %vm187, %v335, %v337
    %348 = vrot.lane.b32.xlu0 %v133, 96
    %v349 = vpop.permute.xlu0 %348
    %350 = vrot.lane.b32.xlu0 %v134, 96
    %v351 = vpop.permute.xlu0 %350
    %352 = vrot.lane.b32.xlu0 %v135, 96
    %v353 = vpop.permute.xlu0 %352
    %354 = vrot.lane.b32.xlu0 %v136, 96
    %v355 = vpop.permute.xlu0 %354
    %v356 = vsel %vm153, %v349, %v351
    %v357 = vsel %vm153, %v351, %v353
    %v358 = vsel %vm153, %v353, %v355
    %364 = vrot.lane.b32.xlu0 %v134, 64
    %v365 = vpop.permute.xlu0 %364
    %366 = vrot.lane.b32.xlu0 %v135, 64
    %v367 = vpop.permute.xlu0 %366
    %368 = vrot.lane.b32.xlu0 %v136, 64
    %v369 = vpop.permute.xlu0 %368
    %370 = vrot.lane.b32.xlu0 %v137, 64
    %v371 = vpop.permute.xlu0 %370
    %v372 = vsel %vm170, %v365, %v367
    %v373 = vsel %vm170, %v367, %v369
    %v374 = vsel %vm170, %v369, %v371
    %380 = vrot.lane.b32.xlu0 %v135, 32
    %v381 = vpop.permute.xlu0 %380
    %382 = vrot.lane.b32.xlu0 %v136, 32
    %v383 = vpop.permute.xlu0 %382
    %384 = vrot.lane.b32.xlu0 %v137, 32
    %v385 = vpop.permute.xlu0 %384
    %386 = vrot.lane.b32.xlu0 %v138, 32
    %v387 = vpop.permute.xlu0 %386
    %v388 = vsel %vm187, %v381, %v383
    %v389 = vsel %vm187, %v383, %v385
    %v390 = vsel %vm187, %v385, %v387
    %v395 = vpack.c.bf16 %v154, %v112
    %v396 = vpack.c.bf16 %v155, %v113
    %v397 = vpack.c.bf16 %v156, %v114
    %v398 = vpack.c.bf16 %v152, %v115
    %v399 = vpack.c.bf16 %v188, %v171
    %v400 = vpack.c.bf16 %v189, %v172
    %v401 = vpack.c.bf16 %v190, %v173
    %v402 = vpack.c.bf16 %v186, %v169
    %v403 = vpack.c.bf16 %v206, %v117
    %v404 = vpack.c.bf16 %v207, %v118
    %v405 = vpack.c.bf16 %v208, %v119
    %v406 = vpack.c.bf16 %v205, %v120
    %v407 = vpack.c.bf16 %v238, %v222
    %v408 = vpack.c.bf16 %v239, %v223
    %v409 = vpack.c.bf16 %v240, %v224
    %v410 = vpack.c.bf16 %v237, %v221
    %v411 = vpack.c.bf16 %v256, %v122
    %v412 = vpack.c.bf16 %v257, %v123
    %v413 = vpack.c.bf16 %v258, %v124
    %v414 = vpack.c.bf16 %v255, %v125
    %v415 = vpack.c.bf16 %v288, %v272
    %v416 = vpack.c.bf16 %v289, %v273
    %v417 = vpack.c.bf16 %v290, %v274
    %v418 = vpack.c.bf16 %v287, %v271
    %v419 = vpack.c.bf16 %v306, %v127
    %v420 = vpack.c.bf16 %v307, %v128
    %v421 = vpack.c.bf16 %v308, %v129
    %v422 = vpack.c.bf16 %v305, %v130
    %v423 = vpack.c.bf16 %v338, %v322
    %v424 = vpack.c.bf16 %v339, %v323
    %v425 = vpack.c.bf16 %v340, %v324
    %v426 = vpack.c.bf16 %v337, %v321
    %v427 = vpack.c.bf16 %v356, %v132
    %v428 = vpack.c.bf16 %v357, %v133
    %v429 = vpack.c.bf16 %v358, %v134
    %v430 = vpack.c.bf16 %v355, %v135
    %v431 = vpack.c.bf16 %v388, %v372
    %v432 = vpack.c.bf16 %v389, %v373
    %v433 = vpack.c.bf16 %v390, %v374
    %v434 = vpack.c.bf16 %v387, %v371
    %v435 = vpack.c.bf16 %v137, %v137
    %v436 = vpack.c.bf16 %v138, %v138
    %v437 = vpack.c.bf16 %v139, %v139
    %v438 = vpack.c.bf16 %v140, %v140
    %v439 = vld [vmem:[%s1] sm:$0xff]
    %v440 = vld [vmem:[%s1 + $0x8] sm:$0xff]
    %v441 = vld [vmem:[%s1 + $0x10] sm:$0xff]
    %v442 = vld [vmem:[%s1 + $0x18] sm:$0xff]
    %v443 = vld [vmem:[%s1 + $0x20] sm:$0xff]
    %v444 = vld [vmem:[%s1 + $0x28] sm:$0xff]
    %v445 = vld [vmem:[%s1 + $0x30] sm:$0xff]
    %v446 = vld [vmem:[%s1 + $0x38] sm:$0xff]
    %v447 = vld [vmem:[%s1 + $0x40] sm:$0xff]
    %v448 = vld [vmem:[%s1 + $0x48] sm:$0xff]
    %v449 = vld [vmem:[%s1 + $0x50] sm:$0xff]
    %v450 = vld [vmem:[%s1 + $0x58] sm:$0xff]
    %v451 = vld [vmem:[%s1 + $0x60] sm:$0xff]
    %v452 = vld [vmem:[%s1 + $0x68] sm:$0xff]
    %v453 = vld [vmem:[%s1 + $0x70] sm:$0xff]
    %v454 = vld [vmem:[%s1 + $0x78] sm:$0xff]
    %v455 = vld [vmem:[%s1 + $0x80] sm:$0xff]
    %v456 = vld [vmem:[%s1 + $0x88] sm:$0xff]
    %v457 = vld [vmem:[%s1 + $0x90] sm:$0xff]
    %v458 = vld [vmem:[%s1 + $0x98] sm:$0xff]
    %v459 = vld [vmem:[%s1 + $0xa0] sm:$0xff]
    %v460 = vld [vmem:[%s1 + $0xa8] sm:$0xff]
    %v461 = vld [vmem:[%s1 + $0xb0] sm:$0xff]
    %v462 = vld [vmem:[%s1 + $0xb8] sm:$0xff]
    %v463 = vld [vmem:[%s1 + $0xc0] sm:$0xff]
    %v464 = vld [vmem:[%s1 + $0xc8] sm:$0xff]
    %v465 = vld [vmem:[%s1 + $0xd0] sm:$0xff]
    %v466 = vld [vmem:[%s1 + $0xd8] sm:$0xff]
    %v467 = vld [vmem:[%s1 + $0xe0] sm:$0xff]
    %v468 = vld [vmem:[%s1 + $0xe8] sm:$0xff]
    %v469 = vld [vmem:[%s1 + $0xf0] sm:$0xff]
    %v470 = vld [vmem:[%s1 + $0xf8] sm:$0xff]
    %v471 = vld [vmem:[%s1 + $0x100] sm:$0xff]
    %v472 = vld [vmem:[%s1 + $0x108] sm:$0xff]
    %v473 = vld [vmem:[%s1 + $0x110] sm:$0xff]
    %v474 = vld [vmem:[%s1 + $0x118] sm:$0xff]
    %v475 = vld [vmem:[%s1 + $0x120] sm:$0xff]
    %v476 = vld [vmem:[%s1 + $0x128] sm:$0xff]
    %v477 = vld [vmem:[%s1 + $0x130] sm:$0xff]
    %v478 = vld [vmem:[%s1 + $0x138] sm:$0xff]
    %v479 = vld [vmem:[%s1 + $0x140] sm:$0xff]
    %v480 = vld [vmem:[%s1 + $0x148] sm:$0xff]
    %v481 = vld [vmem:[%s1 + $0x150] sm:$0xff]
    %v482 = vld [vmem:[%s1 + $0x158] sm:$0xff]
    %v483 = vld [vmem:[%s1 + $0x160] sm:$0xff]
    %v484 = vld [vmem:[%s1 + $0x168] sm:$0xff]
    %v485 = vld [vmem:[%s1 + $0x170] sm:$0xff]
    %v486 = vld [vmem:[%s1 + $0x178] sm:$0xff]
    %v487 = vld [vmem:[%s1 + $0x180] sm:$0xff]
    %v488 = vld [vmem:[%s1 + $0x188] sm:$0xff]
    %v489 = vld [vmem:[%s1 + $0x190] sm:$0xff]
    %v490 = vld [vmem:[%s1 + $0x198] sm:$0xff]
    %v491 = vld [vmem:[%s1 + $0x1a0] sm:$0xff]
    %v492 = vld [vmem:[%s1 + $0x1a8] sm:$0xff]
    %v493 = vld [vmem:[%s1 + $0x1b0] sm:$0xff]
    %v494 = vld [vmem:[%s1 + $0x1b8] sm:$0xff]
    %v495 = vld [vmem:[%s1 + $0x1c0] sm:$0xff]
    %v496 = vld [vmem:[%s1 + $0x1c8] sm:$0xff]
    %v497 = vld [vmem:[%s1 + $0x1d0] sm:$0xff]
    %v498 = vld [vmem:[%s1 + $0x1d8] sm:$0xff]
    %v499 = vld [vmem:[%s1 + $0x1e0] sm:$0xff]
    %v500 = vld [vmem:[%s1 + $0x1e8] sm:$0xff]
    %v501 = vld [vmem:[%s1 + $0x1f0] sm:$0xff]
    %v502 = vld [vmem:[%s1 + $0x1f8] sm:$0xff]
    %v503 = vld [vmem:[%s1 + $0x200] sm:$0xff]
    %v504 = vld [vmem:[%s1 + $0x208] sm:$0xff]
    %v505 = vld [vmem:[%s1 + $0x210] sm:$0xff]
    %v506 = vld [vmem:[%s1 + $0x218] sm:$0xff]
    %v507 = vld [vmem:[%s1 + $0x220] sm:$0xff]
    %v508 = vld [vmem:[%s1 + $0x228] sm:$0xff]
    %v509 = vld [vmem:[%s1 + $0x230] sm:$0xff]
    %v510 = vld [vmem:[%s1 + $0x238] sm:$0xff]
    %v511 = vld [vmem:[%s1 + $0x240] sm:$0xff]
    %v512 = vld [vmem:[%s1 + $0x248] sm:$0xff]
    %v513 = vld [vmem:[%s1 + $0x250] sm:$0xff]
    %v514 = vld [vmem:[%s1 + $0x258] sm:$0xff]
    %v515 = vld [vmem:[%s1 + $0x260] sm:$0xff]
    %v516 = vld [vmem:[%s1 + $0x268] sm:$0xff]
    %v517 = vld [vmem:[%s1 + $0x270] sm:$0xff]
    %v518 = vld [vmem:[%s1 + $0x278] sm:$0xff]
    %v519 = vld [vmem:[%s1 + $0x280] sm:$0xff]
    %v520 = vld [vmem:[%s1 + $0x288] sm:$0xff]
    %v521 = vld [vmem:[%s1 + $0x290] sm:$0xff]
    %v522 = vld [vmem:[%s1 + $0x298] sm:$0xff]
    %v523 = vld [vmem:[%s1 + $0x2a0] sm:$0xff]
    %v524 = vld [vmem:[%s1 + $0x2a8] sm:$0xff]
    %v525 = vld [vmem:[%s1 + $0x2b0] sm:$0xff]
    %v526 = vld [vmem:[%s1 + $0x2b8] sm:$0xff]
    %v527 = vld [vmem:[%s1 + $0x2c0] sm:$0xff]
    %v528 = vld [vmem:[%s1 + $0x2c8] sm:$0xff]
    %v529 = vld [vmem:[%s1 + $0x2d0] sm:$0xff]
    %v530 = vld [vmem:[%s1 + $0x2d8] sm:$0xff]
    %v531 = vld [vmem:[%s1 + $0x2e0] sm:$0xff]
    %v532 = vld [vmem:[%s1 + $0x2e8] sm:$0xff]
    %v533 = vld [vmem:[%s1 + $0x2f0] sm:$0xff]
    %v534 = vld [vmem:[%s1 + $0x2f8] sm:$0xff]
    %v535 = vld [vmem:[%s1 + $0x300] sm:$0xff]
    %v536 = vld [vmem:[%s1 + $0x308] sm:$0xff]
    %v537 = vld [vmem:[%s1 + $0x310] sm:$0xff]
    %v538 = vld [vmem:[%s1 + $0x318] sm:$0xff]
    %v639 = vunpack.c.l.b16 %v439
    %v640 = vunpack.c.h.b16 %v439
    %v641 = vunpack.c.l.b16 %v440
    %v642 = vunpack.c.h.b16 %v440
    %v643 = vunpack.c.l.b16 %v441
    %v644 = vunpack.c.h.b16 %v441
    %v645 = vunpack.c.l.b16 %v442
    %v646 = vunpack.c.h.b16 %v442
    %v647 = vunpack.c.l.b16 %v443
    %v648 = vunpack.c.h.b16 %v443
    %v649 = vunpack.c.l.b16 %v444
    %v650 = vunpack.c.h.b16 %v444
    %v651 = vunpack.c.l.b16 %v445
    %v652 = vunpack.c.h.b16 %v445
    %v653 = vunpack.c.l.b16 %v446
    %v654 = vunpack.c.h.b16 %v446
    %v655 = vunpack.c.l.b16 %v447
    %v656 = vunpack.c.h.b16 %v447
    %v657 = vunpack.c.l.b16 %v448
    %v658 = vunpack.c.h.b16 %v448
    %v659 = vunpack.c.l.b16 %v449
    %v660 = vunpack.c.h.b16 %v449
    %v661 = vunpack.c.l.b16 %v450
    %v662 = vunpack.c.h.b16 %v450
    %v663 = vunpack.c.l.b16 %v451
    %v664 = vunpack.c.h.b16 %v451
    %v665 = vunpack.c.l.b16 %v452
    %v666 = vunpack.c.h.b16 %v452
    %v667 = vunpack.c.l.b16 %v453
    %v668 = vunpack.c.h.b16 %v453
    %v669 = vunpack.c.l.b16 %v454
    %v670 = vunpack.c.h.b16 %v454
    %v671 = vunpack.c.l.b16 %v455
    %v672 = vunpack.c.h.b16 %v455
    %v673 = vunpack.c.l.b16 %v456
    %v674 = vunpack.c.h.b16 %v456
    %v675 = vunpack.c.l.b16 %v457
    %v676 = vunpack.c.h.b16 %v457
    %v677 = vunpack.c.l.b16 %v458
    %v678 = vunpack.c.h.b16 %v458
    %v679 = vunpack.c.l.b16 %v459
    %v680 = vunpack.c.h.b16 %v459
    %v681 = vunpack.c.l.b16 %v460
    %v682 = vunpack.c.h.b16 %v460
    %v683 = vunpack.c.l.b16 %v461
    %v684 = vunpack.c.h.b16 %v461
    %v685 = vunpack.c.l.b16 %v462
    %v686 = vunpack.c.h.b16 %v462
    %v687 = vunpack.c.l.b16 %v463
    %v688 = vunpack.c.h.b16 %v463
    %v689 = vunpack.c.l.b16 %v464
    %v690 = vunpack.c.h.b16 %v464
    %v691 = vunpack.c.l.b16 %v465
    %v692 = vunpack.c.h.b16 %v465
    %v693 = vunpack.c.l.b16 %v466
    %v694 = vunpack.c.h.b16 %v466
    %v695 = vunpack.c.l.b16 %v467
    %v696 = vunpack.c.h.b16 %v467
    %v697 = vunpack.c.l.b16 %v468
    %v698 = vunpack.c.h.b16 %v468
    %v699 = vunpack.c.l.b16 %v469
    %v700 = vunpack.c.h.b16 %v469
    %v701 = vunpack.c.l.b16 %v470
    %v702 = vunpack.c.h.b16 %v470
    %v703 = vunpack.c.l.b16 %v471
    %v704 = vunpack.c.h.b16 %v471
    %v705 = vunpack.c.l.b16 %v472
    %v706 = vunpack.c.h.b16 %v472
    %v707 = vunpack.c.l.b16 %v473
    %v708 = vunpack.c.h.b16 %v473
    %v709 = vunpack.c.l.b16 %v474
    %v710 = vunpack.c.h.b16 %v474
    %v711 = vunpack.c.l.b16 %v475
    %v712 = vunpack.c.h.b16 %v475
    %v713 = vunpack.c.l.b16 %v476
    %v714 = vunpack.c.h.b16 %v476
    %v715 = vunpack.c.l.b16 %v477
    %v716 = vunpack.c.h.b16 %v477
    %v717 = vunpack.c.l.b16 %v478
    %v718 = vunpack.c.h.b16 %v478
    %v719 = vunpack.c.l.b16 %v479
    %v720 = vunpack.c.h.b16 %v479
    %v721 = vunpack.c.l.b16 %v480
    %v722 = vunpack.c.h.b16 %v480
    %v723 = vunpack.c.l.b16 %v481
    %v724 = vunpack.c.h.b16 %v481
    %v725 = vunpack.c.l.b16 %v482
    %v726 = vunpack.c.h.b16 %v482
    %v727 = vunpack.c.l.b16 %v483
    %v728 = vunpack.c.h.b16 %v483
    %v729 = vunpack.c.l.b16 %v484
    %v730 = vunpack.c.h.b16 %v484
    %v731 = vunpack.c.l.b16 %v485
    %v732 = vunpack.c.h.b16 %v485
    %v733 = vunpack.c.l.b16 %v486
    %v734 = vunpack.c.h.b16 %v486
    %v735 = vunpack.c.l.b16 %v487
    %v736 = vunpack.c.h.b16 %v487
    %v737 = vunpack.c.l.b16 %v488
    %v738 = vunpack.c.h.b16 %v488
    %v739 = vunpack.c.l.b16 %v489
    %v740 = vunpack.c.h.b16 %v489
    %v741 = vunpack.c.l.b16 %v490
    %v742 = vunpack.c.h.b16 %v490
    %v743 = vunpack.c.l.b16 %v491
    %v744 = vunpack.c.h.b16 %v491
    %v745 = vunpack.c.l.b16 %v492
    %v746 = vunpack.c.h.b16 %v492
    %v747 = vunpack.c.l.b16 %v493
    %v748 = vunpack.c.h.b16 %v493
    %v749 = vunpack.c.l.b16 %v494
    %v750 = vunpack.c.h.b16 %v494
    %v751 = vunpack.c.l.b16 %v495
    %v752 = vunpack.c.h.b16 %v495
    %v753 = vunpack.c.l.b16 %v496
    %v754 = vunpack.c.h.b16 %v496
    %v755 = vunpack.c.l.b16 %v497
    %v756 = vunpack.c.h.b16 %v497
    %v757 = vunpack.c.l.b16 %v498
    %v758 = vunpack.c.h.b16 %v498
    %v759 = vunpack.c.l.b16 %v499
    %v760 = vunpack.c.h.b16 %v499
    %v761 = vunpack.c.l.b16 %v500
    %v762 = vunpack.c.h.b16 %v500
    %v763 = vunpack.c.l.b16 %v501
    %v764 = vunpack.c.h.b16 %v501
    %v765 = vunpack.c.l.b16 %v502
    %v766 = vunpack.c.h.b16 %v502
    %v767 = vunpack.c.l.b16 %v503
    %v768 = vunpack.c.h.b16 %v503
    %v769 = vunpack.c.l.b16 %v504
    %v770 = vunpack.c.h.b16 %v504
    %v771 = vunpack.c.l.b16 %v505
    %v772 = vunpack.c.h.b16 %v505
    %v773 = vunpack.c.l.b16 %v506
    %v774 = vunpack.c.h.b16 %v506
    %v775 = vunpack.c.l.b16 %v507
    %v776 = vunpack.c.h.b16 %v507
    %v777 = vunpack.c.l.b16 %v508
    %v778 = vunpack.c.h.b16 %v508
    %v779 = vunpack.c.l.b16 %v509
    %v780 = vunpack.c.h.b16 %v509
    %v781 = vunpack.c.l.b16 %v510
    %v782 = vunpack.c.h.b16 %v510
    %v783 = vunpack.c.l.b16 %v511
    %v784 = vunpack.c.h.b16 %v511
    %v785 = vunpack.c.l.b16 %v512
    %v786 = vunpack.c.h.b16 %v512
    %v787 = vunpack.c.l.b16 %v513
    %v788 = vunpack.c.h.b16 %v513
    %v789 = vunpack.c.l.b16 %v514
    %v790 = vunpack.c.h.b16 %v514
    %v791 = vunpack.c.l.b16 %v515
    %v792 = vunpack.c.h.b16 %v515
    %v793 = vunpack.c.l.b16 %v516
    %v794 = vunpack.c.h.b16 %v516
    %v795 = vunpack.c.l.b16 %v517
    %v796 = vunpack.c.h.b16 %v517
    %v797 = vunpack.c.l.b16 %v518
    %v798 = vunpack.c.h.b16 %v518
    %v799 = vunpack.c.l.b16 %v519
    %v800 = vunpack.c.h.b16 %v519
    %v801 = vunpack.c.l.b16 %v520
    %v802 = vunpack.c.h.b16 %v520
    %v803 = vunpack.c.l.b16 %v521
    %v804 = vunpack.c.h.b16 %v521
    %v805 = vunpack.c.l.b16 %v522
    %v806 = vunpack.c.h.b16 %v522
    %v807 = vunpack.c.l.b16 %v523
    %v808 = vunpack.c.h.b16 %v523
    %v809 = vunpack.c.l.b16 %v524
    %v810 = vunpack.c.h.b16 %v524
    %v811 = vunpack.c.l.b16 %v525
    %v812 = vunpack.c.h.b16 %v525
    %v813 = vunpack.c.l.b16 %v526
    %v814 = vunpack.c.h.b16 %v526
    %v815 = vunpack.c.l.b16 %v527
    %v816 = vunpack.c.h.b16 %v527
    %v817 = vunpack.c.l.b16 %v528
    %v818 = vunpack.c.h.b16 %v528
    %v819 = vunpack.c.l.b16 %v529
    %v820 = vunpack.c.h.b16 %v529
    %v821 = vunpack.c.l.b16 %v530
    %v822 = vunpack.c.h.b16 %v530
    %v823 = vunpack.c.l.b16 %v531
    %v824 = vunpack.c.h.b16 %v531
    %v825 = vunpack.c.l.b16 %v532
    %v826 = vunpack.c.h.b16 %v532
    %v827 = vunpack.c.l.b16 %v533
    %v828 = vunpack.c.h.b16 %v533
    %v829 = vunpack.c.l.b16 %v534
    %v830 = vunpack.c.h.b16 %v534
    %v831 = vunpack.c.l.b16 %v535
    %v832 = vunpack.c.h.b16 %v535
    %v833 = vunpack.c.l.b16 %v536
    %v834 = vunpack.c.h.b16 %v536
    %v835 = vunpack.c.l.b16 %v537
    %v836 = vunpack.c.h.b16 %v537
    %v837 = vunpack.c.l.b16 %v538
    %v838 = vunpack.c.h.b16 %v538
    %v839 = vpack.c.b16 %v643, %v639
    %v840 = vpack.c.b16 %v644, %v640
    %v841 = vpack.c.b16 %v645, %v641
    %v842 = vpack.c.b16 %v646, %v642
    %v843 = vpack.c.b16 %v651, %v647
    %v844 = vpack.c.b16 %v652, %v648
    %v845 = vpack.c.b16 %v653, %v649
    %v846 = vpack.c.b16 %v654, %v650
    %v847 = vpack.c.b16 %v659, %v655
    %v848 = vpack.c.b16 %v660, %v656
    %v849 = vpack.c.b16 %v661, %v657
    %v850 = vpack.c.b16 %v662, %v658
    %v851 = vpack.c.b16 %v667, %v663
    %v852 = vpack.c.b16 %v668, %v664
    %v853 = vpack.c.b16 %v669, %v665
    %v854 = vpack.c.b16 %v670, %v666
    %v855 = vpack.c.b16 %v675, %v671
    %v856 = vpack.c.b16 %v676, %v672
    %v857 = vpack.c.b16 %v677, %v673
    %v858 = vpack.c.b16 %v678, %v674
    %v859 = vpack.c.b16 %v683, %v679
    %v860 = vpack.c.b16 %v684, %v680
    %v861 = vpack.c.b16 %v685, %v681
    %v862 = vpack.c.b16 %v686, %v682
    %v863 = vpack.c.b16 %v691, %v687
    %v864 = vpack.c.b16 %v692, %v688
    %v865 = vpack.c.b16 %v693, %v689
    %v866 = vpack.c.b16 %v694, %v690
    %v867 = vpack.c.b16 %v699, %v695
    %v868 = vpack.c.b16 %v700, %v696
    %v869 = vpack.c.b16 %v701, %v697
    %v870 = vpack.c.b16 %v702, %v698
    %v871 = vpack.c.b16 %v707, %v703
    %v872 = vpack.c.b16 %v708, %v704
    %v873 = vpack.c.b16 %v709, %v705
    %v874 = vpack.c.b16 %v710, %v706
    %v875 = vpack.c.b16 %v715, %v711
    %v876 = vpack.c.b16 %v716, %v712
    %v877 = vpack.c.b16 %v717, %v713
    %v878 = vpack.c.b16 %v718, %v714
    %v879 = vpack.c.b16 %v723, %v719
    %v880 = vpack.c.b16 %v724, %v720
    %v881 = vpack.c.b16 %v725, %v721
    %v882 = vpack.c.b16 %v726, %v722
    %v883 = vpack.c.b16 %v731, %v727
    %v884 = vpack.c.b16 %v732, %v728
    %v885 = vpack.c.b16 %v733, %v729
    %v886 = vpack.c.b16 %v734, %v730
    %v887 = vpack.c.b16 %v739, %v735
    %v888 = vpack.c.b16 %v740, %v736
    %v889 = vpack.c.b16 %v741, %v737
    %v890 = vpack.c.b16 %v742, %v738
    %v891 = vpack.c.b16 %v747, %v743
    %v892 = vpack.c.b16 %v748, %v744
    %v893 = vpack.c.b16 %v749, %v745
    %v894 = vpack.c.b16 %v750, %v746
    %v895 = vpack.c.b16 %v755, %v751
    %v896 = vpack.c.b16 %v756, %v752
    %v897 = vpack.c.b16 %v757, %v753
    %v898 = vpack.c.b16 %v758, %v754
    %v899 = vpack.c.b16 %v763, %v759
    %v900 = vpack.c.b16 %v764, %v760
    %v901 = vpack.c.b16 %v765, %v761
    %v902 = vpack.c.b16 %v766, %v762
    %v903 = vpack.c.b16 %v771, %v767
    %v904 = vpack.c.b16 %v772, %v768
    %v905 = vpack.c.b16 %v773, %v769
    %v906 = vpack.c.b16 %v774, %v770
    %v907 = vpack.c.b16 %v779, %v775
    %v908 = vpack.c.b16 %v780, %v776
    %v909 = vpack.c.b16 %v781, %v777
    %v910 = vpack.c.b16 %v782, %v778
    %v911 = vpack.c.b16 %v787, %v783
    %v912 = vpack.c.b16 %v788, %v784
    %v913 = vpack.c.b16 %v789, %v785
    %v914 = vpack.c.b16 %v790, %v786
    %v915 = vpack.c.b16 %v795, %v791
    %v916 = vpack.c.b16 %v796, %v792
    %v917 = vpack.c.b16 %v797, %v793
    %v918 = vpack.c.b16 %v798, %v794
    %v919 = vpack.c.b16 %v803, %v799
    %v920 = vpack.c.b16 %v804, %v800
    %v921 = vpack.c.b16 %v805, %v801
    %v922 = vpack.c.b16 %v806, %v802
    %v923 = vpack.c.b16 %v811, %v807
    %v924 = vpack.c.b16 %v812, %v808
    %v925 = vpack.c.b16 %v813, %v809
    %v926 = vpack.c.b16 %v814, %v810
    %v927 = vpack.c.b16 %v819, %v815
    %v928 = vpack.c.b16 %v820, %v816
    %v929 = vpack.c.b16 %v821, %v817
    %v930 = vpack.c.b16 %v822, %v818
    %v931 = vpack.c.b16 %v827, %v823
    %v932 = vpack.c.b16 %v828, %v824
    %v933 = vpack.c.b16 %v829, %v825
    %v934 = vpack.c.b16 %v830, %v826
    %v935 = vpack.c.b16 %v835, %v831
    %v936 = vpack.c.b16 %v836, %v832
    %v937 = vpack.c.b16 %v837, %v833
    %v938 = vpack.c.b16 %v838, %v834
    %vm1039 = vcmask 130048
    %v1041 = vsel %vm1039, %v398, 0
    %v1044 = vsel %vm1039, %v402, 0
    %v1047 = vsel %vm1039, %v406, 0
    %v1050 = vsel %vm1039, %v410, 0
    %v1053 = vsel %vm1039, %v414, 0
    %v1056 = vsel %vm1039, %v418, 0
    %v1059 = vsel %vm1039, %v422, 0
    %v1062 = vsel %vm1039, %v426, 0
    %v1065 = vsel %vm1039, %v430, 0
    %v1068 = vsel %vm1039, %v434, 0
    %v1071 = vsel %vm1039, %v438, 0
    %1073 = vmatprep.subr.bf16.mxu0 %v868
    %1074 = vmatpush1.bf16.msra.mxu0 %v867
    %1075 = vmatprep.subr.bf16.mxu0 %v864
    %1076 = vmatpush1.bf16.msra.mxu0 %v863
    %1077 = vmatprep.subr.bf16.mxu0 %v860
    %1078 = vmatpush1.bf16.msra.mxu0 %v859
    %1079 = vmatprep.subr.bf16.mxu0 %v856
    %1080 = vmatpush1.bf16.msra.mxu0 %v855
    %1081 = vmatprep.subr.bf16.mxu0 %v852
    %1082 = vmatpush1.bf16.msra.mxu0 %v851
    %1083 = vmatprep.subr.bf16.mxu0 %v848
    %1084 = vmatpush1.bf16.msra.mxu0 %v847
    %1085 = vmatprep.subr.bf16.mxu0 %v844
    %1086 = vmatpush1.bf16.msra.mxu0 %v843
    %1087 = vmatprep.subr.bf16.mxu0 %v840
    %1088 = vmatpush1.bf16.msra.mxu0 %v839
    %1089 = vmatprep.subr.bf16.mxu0 %v900
    %1090 = vmatpush2.bf16.msra.mxu0 %v899
    %1091 = vmatprep.subr.bf16.mxu0 %v896
    %1092 = vmatpush2.bf16.msra.mxu0 %v895
    %1093 = vmatprep.subr.bf16.mxu0 %v892
    %1094 = vmatpush2.bf16.msra.mxu0 %v891
    %1095 = vmatprep.subr.bf16.mxu0 %v888
    %1096 = vmatpush2.bf16.msra.mxu0 %v887
    %1097 = vmatprep.subr.bf16.mxu0 %v884
    %1098 = vmatpush2.bf16.msra.mxu0 %v883
    %1099 = vmatprep.subr.bf16.mxu0 %v880
    %1100 = vmatpush2.bf16.msra.mxu0 %v879
    %1101 = vmatprep.subr.bf16.mxu0 %v876
    %1102 = vmatpush2.bf16.msra.mxu0 %v875
    %1103 = vmatprep.subr.bf16.mxu0 %v872
    %1104 = vmatpush2.bf16.msra.mxu0 %v871
    %1105 = vmatprep.mubr.bf16.mxu0 %v396
    %1106 = vmatmul.mubr.bf16.gmra.mxu0 %v395
    %v1107 = vpop.f32.mrf.mxu0
    %v1108 = vadd.f32 0.0, %v1107
    %v1109 = vpop.f32.mrf.mxu0
    %v1110 = vadd.f32 0.0, %v1109
    %v1111 = vpop.f32.mrf.mxu0
    %v1112 = vadd.f32 0.0, %v1111
    %v1113 = vpop.f32.mrf.mxu0
    %v1114 = vadd.f32 0.0, %v1113
    %1115 = vmatprep.mubr.bf16.mxu0 %v400
    %1116 = vmatmul.mubr.bf16.gmra.mxu0 %v399
    %v1117 = vpop.f32.mrf.mxu0
    %v1118 = vadd.f32 0.0, %v1117
    %v1119 = vpop.f32.mrf.mxu0
    %v1120 = vadd.f32 0.0, %v1119
    %v1121 = vpop.f32.mrf.mxu0
    %v1122 = vadd.f32 0.0, %v1121
    %v1123 = vpop.f32.mrf.mxu0
    %v1124 = vadd.f32 0.0, %v1123
    %1125 = vmatprep.mubr.bf16.mxu0 %v404
    %1126 = vmatmul.mubr.bf16.gmra.mxu0 %v403
    %v1127 = vpop.f32.mrf.mxu0
    %v1128 = vadd.f32 0.0, %v1127
    %v1129 = vpop.f32.mrf.mxu0
    %v1130 = vadd.f32 0.0, %v1129
    %v1131 = vpop.f32.mrf.mxu0
    %v1132 = vadd.f32 0.0, %v1131
    %v1133 = vpop.f32.mrf.mxu0
    %v1134 = vadd.f32 0.0, %v1133
    %1135 = vmatprep.mubr.bf16.mxu0 %v408
    %1136 = vmatmul.mubr.bf16.gmra.mxu0 %v407
    %v1137 = vpop.f32.mrf.mxu0
    %v1138 = vadd.f32 0.0, %v1137
    %v1139 = vpop.f32.mrf.mxu0
    %v1140 = vadd.f32 0.0, %v1139
    %v1141 = vpop.f32.mrf.mxu0
    %v1142 = vadd.f32 0.0, %v1141
    %v1143 = vpop.f32.mrf.mxu0
    %v1144 = vadd.f32 0.0, %v1143
    %1145 = vmatprep.mubr.bf16.mxu0 %v412
    %1146 = vmatmul.mubr.bf16.gmra.mxu0 %v411
    %v1147 = vpop.f32.mrf.mxu0
    %v1148 = vadd.f32 0.0, %v1147
    %v1149 = vpop.f32.mrf.mxu0
    %v1150 = vadd.f32 0.0, %v1149
    %v1151 = vpop.f32.mrf.mxu0
    %v1152 = vadd.f32 0.0, %v1151
    %v1153 = vpop.f32.mrf.mxu0
    %v1154 = vadd.f32 0.0, %v1153
    %1155 = vmatprep.mubr.bf16.mxu0 %v416
    %1156 = vmatmul.mubr.bf16.gmra.mxu0 %v415
    %v1157 = vpop.f32.mrf.mxu0
    %v1158 = vadd.f32 0.0, %v1157
    %v1159 = vpop.f32.mrf.mxu0
    %v1160 = vadd.f32 0.0, %v1159
    %v1161 = vpop.f32.mrf.mxu0
    %v1162 = vadd.f32 0.0, %v1161
    %v1163 = vpop.f32.mrf.mxu0
    %v1164 = vadd.f32 0.0, %v1163
    %1165 = vmatprep.mubr.bf16.mxu0 %v420
    %1166 = vmatmul.mubr.bf16.gmra.mxu0 %v419
    %v1167 = vpop.f32.mrf.mxu0
    %v1168 = vadd.f32 0.0, %v1167
    %v1169 = vpop.f32.mrf.mxu0
    %v1170 = vadd.f32 0.0, %v1169
    %v1171 = vpop.f32.mrf.mxu0
    %v1172 = vadd.f32 0.0, %v1171
    %v1173 = vpop.f32.mrf.mxu0
    %v1174 = vadd.f32 0.0, %v1173
    %1175 = vmatprep.mubr.bf16.mxu0 %v424
    %1176 = vmatmul.mubr.bf16.gmra.mxu0 %v423
    %v1177 = vpop.f32.mrf.mxu0
    %v1178 = vadd.f32 0.0, %v1177
    %v1179 = vpop.f32.mrf.mxu0
    %v1180 = vadd.f32 0.0, %v1179
    %v1181 = vpop.f32.mrf.mxu0
    %v1182 = vadd.f32 0.0, %v1181
    %v1183 = vpop.f32.mrf.mxu0
    %v1184 = vadd.f32 0.0, %v1183
    %1185 = vmatprep.mubr.bf16.mxu0 %v428
    %1186 = vmatmul.mubr.bf16.gmra.mxu0 %v427
    %v1187 = vpop.f32.mrf.mxu0
    %v1188 = vadd.f32 0.0, %v1187
    %v1189 = vpop.f32.mrf.mxu0
    %v1190 = vadd.f32 0.0, %v1189
    %v1191 = vpop.f32.mrf.mxu0
    %v1192 = vadd.f32 0.0, %v1191
    %v1193 = vpop.f32.mrf.mxu0
    %v1194 = vadd.f32 0.0, %v1193
    %1195 = vmatprep.mubr.bf16.mxu0 %v432
    %1196 = vmatmul.mubr.bf16.gmra.mxu0 %v431
    %v1197 = vpop.f32.mrf.mxu0
    %v1198 = vadd.f32 0.0, %v1197
    %v1199 = vpop.f32.mrf.mxu0
    %v1200 = vadd.f32 0.0, %v1199
    %v1201 = vpop.f32.mrf.mxu0
    %v1202 = vadd.f32 0.0, %v1201
    %v1203 = vpop.f32.mrf.mxu0
    %v1204 = vadd.f32 0.0, %v1203
    %1205 = vmatprep.mubr.bf16.mxu0 %v436
    %1206 = vmatmul.mubr.bf16.gmra.mxu0 %v435
    %v1207 = vpop.f32.mrf.mxu0
    %v1208 = vadd.f32 0.0, %v1207
    %v1209 = vpop.f32.mrf.mxu0
    %v1210 = vadd.f32 0.0, %v1209
    %v1211 = vpop.f32.mrf.mxu0
    %v1212 = vpop.f32.mrf.mxu0
    %1213 = vdwg.mxu0
    %1214 = vmatprep.subr.bf16.mxu0 %v932
    %1215 = vmatpush1.bf16.msra.mxu0 %v931
    %1216 = vmatprep.subr.bf16.mxu0 %v928
    %1217 = vmatpush1.bf16.msra.mxu0 %v927
    %1218 = vmatprep.subr.bf16.mxu0 %v924
    %1219 = vmatpush1.bf16.msra.mxu0 %v923
    %1220 = vmatprep.subr.bf16.mxu0 %v920
    %1221 = vmatpush1.bf16.msra.mxu0 %v919
    %1222 = vmatprep.subr.bf16.mxu0 %v916
    %1223 = vmatpush1.bf16.msra.mxu0 %v915
    %1224 = vmatprep.subr.bf16.mxu0 %v912
    %1225 = vmatpush1.bf16.msra.mxu0 %v911
    %1226 = vmatprep.subr.bf16.mxu0 %v908
    %1227 = vmatpush1.bf16.msra.mxu0 %v907
    %1228 = vmatprep.subr.bf16.mxu0 %v904
    %1229 = vmatpush1.bf16.msra.mxu0 %v903
    %1230 = vmatprep.subr.bf16.mxu0 0
    %1231 = vmatpush2.bf16.msra.mxu0 0
    %1232 = vmatprep.subr.bf16.mxu0 0
    %1233 = vmatpush2.bf16.msra.mxu0 0
    %1234 = vmatprep.subr.bf16.mxu0 0
    %1235 = vmatpush2.bf16.msra.mxu0 0
    %1236 = vmatprep.subr.bf16.mxu0 0
    %1237 = vmatpush2.bf16.msra.mxu0 0
    %1238 = vmatprep.subr.bf16.mxu0 0
    %1239 = vmatpush2.bf16.msra.mxu0 0
    %1240 = vmatprep.subr.bf16.mxu0 0
    %1241 = vmatpush2.bf16.msra.mxu0 0
    %1242 = vmatprep.subr.bf16.mxu0 0
    %1243 = vmatpush2.bf16.msra.mxu0 0
    %1244 = vmatprep.subr.bf16.mxu0 %v936
    %1245 = vmatpush2.bf16.msra.mxu0 %v935
    %1246 = vmatprep.mubr.bf16.mxu0 %v1041
    %1247 = vmatmul.mubr.bf16.gmra.mxu0 %v397
    %v1248 = vpop.f32.mrf.mxu0
    %v1249 = vadd.f32 %v1108, %v1248
    %v1250 = vpop.f32.mrf.mxu0
    %v1251 = vadd.f32 %v1110, %v1250
    %v1252 = vpop.f32.mrf.mxu0
    %v1253 = vadd.f32 %v1112, %v1252
    %v1254 = vpop.f32.mrf.mxu0
    %v1255 = vadd.f32 %v1114, %v1254
    %1256 = vmatprep.mubr.bf16.mxu0 %v1044
    %1257 = vmatmul.mubr.bf16.gmra.mxu0 %v401
    %v1258 = vpop.f32.mrf.mxu0
    %v1259 = vadd.f32 %v1118, %v1258
    %v1260 = vpop.f32.mrf.mxu0
    %v1261 = vadd.f32 %v1120, %v1260
    %v1262 = vpop.f32.mrf.mxu0
    %v1263 = vadd.f32 %v1122, %v1262
    %v1264 = vpop.f32.mrf.mxu0
    %v1265 = vadd.f32 %v1124, %v1264
    %1266 = vmatprep.mubr.bf16.mxu0 %v1047
    %1267 = vmatmul.mubr.bf16.gmra.mxu0 %v405
    %v1268 = vpop.f32.mrf.mxu0
    %v1269 = vadd.f32 %v1128, %v1268
    %v1270 = vpop.f32.mrf.mxu0
    %v1271 = vadd.f32 %v1130, %v1270
    %v1272 = vpop.f32.mrf.mxu0
    %v1273 = vadd.f32 %v1132, %v1272
    %v1274 = vpop.f32.mrf.mxu0
    %v1275 = vadd.f32 %v1134, %v1274
    %1276 = vmatprep.mubr.bf16.mxu0 %v1050
    %1277 = vmatmul.mubr.bf16.gmra.mxu0 %v409
    %v1278 = vpop.f32.mrf.mxu0
    %v1279 = vadd.f32 %v1138, %v1278
    %v1280 = vpop.f32.mrf.mxu0
    %v1281 = vadd.f32 %v1140, %v1280
    %v1282 = vpop.f32.mrf.mxu0
    %v1283 = vadd.f32 %v1142, %v1282
    %v1284 = vpop.f32.mrf.mxu0
    %v1285 = vadd.f32 %v1144, %v1284
    %1286 = vmatprep.mubr.bf16.mxu0 %v1053
    %1287 = vmatmul.mubr.bf16.gmra.mxu0 %v413
    %v1288 = vpop.f32.mrf.mxu0
    %v1289 = vadd.f32 %v1148, %v1288
    %v1290 = vpop.f32.mrf.mxu0
    %v1291 = vadd.f32 %v1150, %v1290
    %v1292 = vpop.f32.mrf.mxu0
    %v1293 = vadd.f32 %v1152, %v1292
    %v1294 = vpop.f32.mrf.mxu0
    %v1295 = vadd.f32 %v1154, %v1294
    %1296 = vmatprep.mubr.bf16.mxu0 %v1056
    %1297 = vmatmul.mubr.bf16.gmra.mxu0 %v417
    %v1298 = vpop.f32.mrf.mxu0
    %v1299 = vadd.f32 %v1158, %v1298
    %v1300 = vpop.f32.mrf.mxu0
    %v1301 = vadd.f32 %v1160, %v1300
    %v1302 = vpop.f32.mrf.mxu0
    %v1303 = vadd.f32 %v1162, %v1302
    %v1304 = vpop.f32.mrf.mxu0
    %v1305 = vadd.f32 %v1164, %v1304
    %1306 = vmatprep.mubr.bf16.mxu0 %v1059
    %1307 = vmatmul.mubr.bf16.gmra.mxu0 %v421
    %v1308 = vpop.f32.mrf.mxu0
    %v1309 = vadd.f32 %v1168, %v1308
    %v1310 = vpop.f32.mrf.mxu0
    %v1311 = vadd.f32 %v1170, %v1310
    %v1312 = vpop.f32.mrf.mxu0
    %v1313 = vadd.f32 %v1172, %v1312
    %v1314 = vpop.f32.mrf.mxu0
    %v1315 = vadd.f32 %v1174, %v1314
    %1316 = vmatprep.mubr.bf16.mxu0 %v1062
    %1317 = vmatmul.mubr.bf16.gmra.mxu0 %v425
    %v1318 = vpop.f32.mrf.mxu0
    %v1319 = vadd.f32 %v1178, %v1318
    %v1320 = vpop.f32.mrf.mxu0
    %v1321 = vadd.f32 %v1180, %v1320
    %v1322 = vpop.f32.mrf.mxu0
    %v1323 = vadd.f32 %v1182, %v1322
    %v1324 = vpop.f32.mrf.mxu0
    %v1325 = vadd.f32 %v1184, %v1324
    %1326 = vmatprep.mubr.bf16.mxu0 %v1065
    %1327 = vmatmul.mubr.bf16.gmra.mxu0 %v429
    %v1328 = vpop.f32.mrf.mxu0
    %v1329 = vadd.f32 %v1188, %v1328
    %v1330 = vpop.f32.mrf.mxu0
    %v1331 = vadd.f32 %v1190, %v1330
    %v1332 = vpop.f32.mrf.mxu0
    %v1333 = vadd.f32 %v1192, %v1332
    %v1334 = vpop.f32.mrf.mxu0
    %v1335 = vadd.f32 %v1194, %v1334
    %1336 = vmatprep.mubr.bf16.mxu0 %v1068
    %1337 = vmatmul.mubr.bf16.gmra.mxu0 %v433
    %v1338 = vpop.f32.mrf.mxu0
    %v1339 = vadd.f32 %v1198, %v1338
    %v1340 = vpop.f32.mrf.mxu0
    %v1341 = vadd.f32 %v1200, %v1340
    %v1342 = vpop.f32.mrf.mxu0
    %v1343 = vadd.f32 %v1202, %v1342
    %v1344 = vpop.f32.mrf.mxu0
    %v1345 = vadd.f32 %v1204, %v1344
    %1346 = vmatprep.mubr.bf16.mxu0 %v1071
    %1347 = vmatmul.mubr.bf16.gmra.mxu0 %v437
    %v1348 = vpop.f32.mrf.mxu0
    %v1349 = vadd.f32 %v1208, %v1348
    %v1350 = vpop.f32.mrf.mxu0
    %v1351 = vadd.f32 %v1210, %v1350
    %v1352 = vpop.f32.mrf.mxu0
    %v1353 = vpop.f32.mrf.mxu0
    %1354 = vdwg.mxu0
    %1355 = vmatprep.subr.bf16.mxu0 %v870
    %1356 = vmatpush1.bf16.msra.mxu0 %v869
    %1357 = vmatprep.subr.bf16.mxu0 %v866
    %1358 = vmatpush1.bf16.msra.mxu0 %v865
    %1359 = vmatprep.subr.bf16.mxu0 %v862
    %1360 = vmatpush1.bf16.msra.mxu0 %v861
    %1361 = vmatprep.subr.bf16.mxu0 %v858
    %1362 = vmatpush1.bf16.msra.mxu0 %v857
    %1363 = vmatprep.subr.bf16.mxu0 %v854
    %1364 = vmatpush1.bf16.msra.mxu0 %v853
    %1365 = vmatprep.subr.bf16.mxu0 %v850
    %1366 = vmatpush1.bf16.msra.mxu0 %v849
    %1367 = vmatprep.subr.bf16.mxu0 %v846
    %1368 = vmatpush1.bf16.msra.mxu0 %v845
    %1369 = vmatprep.subr.bf16.mxu0 %v842
    %1370 = vmatpush1.bf16.msra.mxu0 %v841
    %1371 = vmatprep.subr.bf16.mxu0 %v902
    %1372 = vmatpush2.bf16.msra.mxu0 %v901
    %1373 = vmatprep.subr.bf16.mxu0 %v898
    %1374 = vmatpush2.bf16.msra.mxu0 %v897
    %1375 = vmatprep.subr.bf16.mxu0 %v894
    %1376 = vmatpush2.bf16.msra.mxu0 %v893
    %1377 = vmatprep.subr.bf16.mxu0 %v890
    %1378 = vmatpush2.bf16.msra.mxu0 %v889
    %1379 = vmatprep.subr.bf16.mxu0 %v886
    %1380 = vmatpush2.bf16.msra.mxu0 %v885
    %1381 = vmatprep.subr.bf16.mxu0 %v882
    %1382 = vmatpush2.bf16.msra.mxu0 %v881
    %1383 = vmatprep.subr.bf16.mxu0 %v878
    %1384 = vmatpush2.bf16.msra.mxu0 %v877
    %1385 = vmatprep.subr.bf16.mxu0 %v874
    %1386 = vmatpush2.bf16.msra.mxu0 %v873
    %1387 = vmatprep.mubr.bf16.mxu0 %v396
    %1388 = vmatmul.mubr.bf16.gmra.mxu0 %v395
    %v1389 = vpop.f32.mrf.mxu0
    %v1390 = vadd.f32 0.0, %v1389
    %v1391 = vpop.f32.mrf.mxu0
    %v1392 = vadd.f32 0.0, %v1391
    %v1393 = vpop.f32.mrf.mxu0
    %v1394 = vadd.f32 0.0, %v1393
    %v1395 = vpop.f32.mrf.mxu0
    %v1396 = vadd.f32 0.0, %v1395
    %1397 = vmatprep.mubr.bf16.mxu0 %v400
    %1398 = vmatmul.mubr.bf16.gmra.mxu0 %v399
    %v1399 = vpop.f32.mrf.mxu0
    %v1400 = vadd.f32 0.0, %v1399
    %v1401 = vpop.f32.mrf.mxu0
    %v1402 = vadd.f32 0.0, %v1401
    %v1403 = vpop.f32.mrf.mxu0
    %v1404 = vadd.f32 0.0, %v1403
    %v1405 = vpop.f32.mrf.mxu0
    %v1406 = vadd.f32 0.0, %v1405
    %1407 = vmatprep.mubr.bf16.mxu0 %v404
    %1408 = vmatmul.mubr.bf16.gmra.mxu0 %v403
    %v1409 = vpop.f32.mrf.mxu0
    %v1410 = vadd.f32 0.0, %v1409
    %v1411 = vpop.f32.mrf.mxu0
    %v1412 = vadd.f32 0.0, %v1411
    %v1413 = vpop.f32.mrf.mxu0
    %v1414 = vadd.f32 0.0, %v1413
    %v1415 = vpop.f32.mrf.mxu0
    %v1416 = vadd.f32 0.0, %v1415
    %1417 = vmatprep.mubr.bf16.mxu0 %v408
    %1418 = vmatmul.mubr.bf16.gmra.mxu0 %v407
    %v1419 = vpop.f32.mrf.mxu0
    %v1420 = vadd.f32 0.0, %v1419
    %v1421 = vpop.f32.mrf.mxu0
    %v1422 = vadd.f32 0.0, %v1421
    %v1423 = vpop.f32.mrf.mxu0
    %v1424 = vadd.f32 0.0, %v1423
    %v1425 = vpop.f32.mrf.mxu0
    %v1426 = vadd.f32 0.0, %v1425
    %1427 = vmatprep.mubr.bf16.mxu0 %v412
    %1428 = vmatmul.mubr.bf16.gmra.mxu0 %v411
    %v1429 = vpop.f32.mrf.mxu0
    %v1430 = vadd.f32 0.0, %v1429
    %v1431 = vpop.f32.mrf.mxu0
    %v1432 = vadd.f32 0.0, %v1431
    %v1433 = vpop.f32.mrf.mxu0
    %v1434 = vadd.f32 0.0, %v1433
    %v1435 = vpop.f32.mrf.mxu0
    %v1436 = vadd.f32 0.0, %v1435
    %1437 = vmatprep.mubr.bf16.mxu0 %v416
    %1438 = vmatmul.mubr.bf16.gmra.mxu0 %v415
    %v1439 = vpop.f32.mrf.mxu0
    %v1440 = vadd.f32 0.0, %v1439
    %v1441 = vpop.f32.mrf.mxu0
    %v1442 = vadd.f32 0.0, %v1441
    %v1443 = vpop.f32.mrf.mxu0
    %v1444 = vadd.f32 0.0, %v1443
    %v1445 = vpop.f32.mrf.mxu0
    %v1446 = vadd.f32 0.0, %v1445
    %1447 = vmatprep.mubr.bf16.mxu0 %v420
    %1448 = vmatmul.mubr.bf16.gmra.mxu0 %v419
    %v1449 = vpop.f32.mrf.mxu0
    %v1450 = vadd.f32 0.0, %v1449
    %v1451 = vpop.f32.mrf.mxu0
    %v1452 = vadd.f32 0.0, %v1451
    %v1453 = vpop.f32.mrf.mxu0
    %v1454 = vadd.f32 0.0, %v1453
    %v1455 = vpop.f32.mrf.mxu0
    %v1456 = vadd.f32 0.0, %v1455
    %1457 = vmatprep.mubr.bf16.mxu0 %v424
    %1458 = vmatmul.mubr.bf16.gmra.mxu0 %v423
    %v1459 = vpop.f32.mrf.mxu0
    %v1460 = vadd.f32 0.0, %v1459
    %v1461 = vpop.f32.mrf.mxu0
    %v1462 = vadd.f32 0.0, %v1461
    %v1463 = vpop.f32.mrf.mxu0
    %v1464 = vadd.f32 0.0, %v1463
    %v1465 = vpop.f32.mrf.mxu0
    %v1466 = vadd.f32 0.0, %v1465
    %1467 = vmatprep.mubr.bf16.mxu0 %v428
    %1468 = vmatmul.mubr.bf16.gmra.mxu0 %v427
    %v1469 = vpop.f32.mrf.mxu0
    %v1470 = vadd.f32 0.0, %v1469
    %v1471 = vpop.f32.mrf.mxu0
    %v1472 = vadd.f32 0.0, %v1471
    %v1473 = vpop.f32.mrf.mxu0
    %v1474 = vadd.f32 0.0, %v1473
    %v1475 = vpop.f32.mrf.mxu0
    %v1476 = vadd.f32 0.0, %v1475
    %1477 = vmatprep.mubr.bf16.mxu0 %v432
    %1478 = vmatmul.mubr.bf16.gmra.mxu0 %v431
    %v1479 = vpop.f32.mrf.mxu0
    %v1480 = vadd.f32 0.0, %v1479
    %v1481 = vpop.f32.mrf.mxu0
    %v1482 = vadd.f32 0.0, %v1481
    %v1483 = vpop.f32.mrf.mxu0
    %v1484 = vadd.f32 0.0, %v1483
    %v1485 = vpop.f32.mrf.mxu0
    %v1486 = vadd.f32 0.0, %v1485
    %1487 = vmatprep.mubr.bf16.mxu0 %v436
    %1488 = vmatmul.mubr.bf16.gmra.mxu0 %v435
    %v1489 = vpop.f32.mrf.mxu0
    %v1490 = vadd.f32 0.0, %v1489
    %v1491 = vpop.f32.mrf.mxu0
    %v1492 = vadd.f32 0.0, %v1491
    %v1493 = vpop.f32.mrf.mxu0
    %v1494 = vpop.f32.mrf.mxu0
    %1495 = vdwg.mxu0
    %1496 = vmatprep.subr.bf16.mxu0 %v934
    %1497 = vmatpush1.bf16.msra.mxu0 %v933
    %1498 = vmatprep.subr.bf16.mxu0 %v930
    %1499 = vmatpush1.bf16.msra.mxu0 %v929
    %1500 = vmatprep.subr.bf16.mxu0 %v926
    %1501 = vmatpush1.bf16.msra.mxu0 %v925
    %1502 = vmatprep.subr.bf16.mxu0 %v922
    %1503 = vmatpush1.bf16.msra.mxu0 %v921
    %1504 = vmatprep.subr.bf16.mxu0 %v918
    %1505 = vmatpush1.bf16.msra.mxu0 %v917
    %1506 = vmatprep.subr.bf16.mxu0 %v914
    %1507 = vmatpush1.bf16.msra.mxu0 %v913
    %1508 = vmatprep.subr.bf16.mxu0 %v910
    %1509 = vmatpush1.bf16.msra.mxu0 %v909
    %1510 = vmatprep.subr.bf16.mxu0 %v906
    %1511 = vmatpush1.bf16.msra.mxu0 %v905
    %1512 = vmatprep.subr.bf16.mxu0 0
    %1513 = vmatpush2.bf16.msra.mxu0 0
    %1514 = vmatprep.subr.bf16.mxu0 0
    %1515 = vmatpush2.bf16.msra.mxu0 0
    %1516 = vmatprep.subr.bf16.mxu0 0
    %1517 = vmatpush2.bf16.msra.mxu0 0
    %1518 = vmatprep.subr.bf16.mxu0 0
    %1519 = vmatpush2.bf16.msra.mxu0 0
    %1520 = vmatprep.subr.bf16.mxu0 0
    %1521 = vmatpush2.bf16.msra.mxu0 0
    %1522 = vmatprep.subr.bf16.mxu0 0
    %1523 = vmatpush2.bf16.msra.mxu0 0
    %1524 = vmatprep.subr.bf16.mxu0 0
    %1525 = vmatpush2.bf16.msra.mxu0 0
    %1526 = vmatprep.subr.bf16.mxu0 %v938
    %1527 = vmatpush2.bf16.msra.mxu0 %v937
    %1528 = vmatprep.mubr.bf16.mxu0 %v1041
    %1529 = vmatmul.mubr.bf16.gmra.mxu0 %v397
    %v1530 = vpop.f32.mrf.mxu0
    %v1531 = vadd.f32 %v1390, %v1530
    %v1532 = vpop.f32.mrf.mxu0
    %v1533 = vadd.f32 %v1392, %v1532
    %v1534 = vpop.f32.mrf.mxu0
    %v1535 = vadd.f32 %v1394, %v1534
    %v1536 = vpop.f32.mrf.mxu0
    %v1537 = vadd.f32 %v1396, %v1536
    %1538 = vmatprep.mubr.bf16.mxu0 %v1044
    %1539 = vmatmul.mubr.bf16.gmra.mxu0 %v401
    %v1540 = vpop.f32.mrf.mxu0
    %v1541 = vadd.f32 %v1400, %v1540
    %v1542 = vpop.f32.mrf.mxu0
    %v1543 = vadd.f32 %v1402, %v1542
    %v1544 = vpop.f32.mrf.mxu0
    %v1545 = vadd.f32 %v1404, %v1544
    %v1546 = vpop.f32.mrf.mxu0
    %v1547 = vadd.f32 %v1406, %v1546
    %1548 = vmatprep.mubr.bf16.mxu0 %v1047
    %1549 = vmatmul.mubr.bf16.gmra.mxu0 %v405
    %v1550 = vpop.f32.mrf.mxu0
    %v1551 = vadd.f32 %v1410, %v1550
    %v1552 = vpop.f32.mrf.mxu0
    %v1553 = vadd.f32 %v1412, %v1552
    %v1554 = vpop.f32.mrf.mxu0
    %v1555 = vadd.f32 %v1414, %v1554
    %v1556 = vpop.f32.mrf.mxu0
    %v1557 = vadd.f32 %v1416, %v1556
    %1558 = vmatprep.mubr.bf16.mxu0 %v1050
    %1559 = vmatmul.mubr.bf16.gmra.mxu0 %v409
    %v1560 = vpop.f32.mrf.mxu0
    %v1561 = vadd.f32 %v1420, %v1560
    %v1562 = vpop.f32.mrf.mxu0
    %v1563 = vadd.f32 %v1422, %v1562
    %v1564 = vpop.f32.mrf.mxu0
    %v1565 = vadd.f32 %v1424, %v1564
    %v1566 = vpop.f32.mrf.mxu0
    %v1567 = vadd.f32 %v1426, %v1566
    %1568 = vmatprep.mubr.bf16.mxu0 %v1053
    %1569 = vmatmul.mubr.bf16.gmra.mxu0 %v413
    %v1570 = vpop.f32.mrf.mxu0
    %v1571 = vadd.f32 %v1430, %v1570
    %v1572 = vpop.f32.mrf.mxu0
    %v1573 = vadd.f32 %v1432, %v1572
    %v1574 = vpop.f32.mrf.mxu0
    %v1575 = vadd.f32 %v1434, %v1574
    %v1576 = vpop.f32.mrf.mxu0
    %v1577 = vadd.f32 %v1436, %v1576
    %1578 = vmatprep.mubr.bf16.mxu0 %v1056
    %1579 = vmatmul.mubr.bf16.gmra.mxu0 %v417
    %v1580 = vpop.f32.mrf.mxu0
    %v1581 = vadd.f32 %v1440, %v1580
    %v1582 = vpop.f32.mrf.mxu0
    %v1583 = vadd.f32 %v1442, %v1582
    %v1584 = vpop.f32.mrf.mxu0
    %v1585 = vadd.f32 %v1444, %v1584
    %v1586 = vpop.f32.mrf.mxu0
    %v1587 = vadd.f32 %v1446, %v1586
    %1588 = vmatprep.mubr.bf16.mxu0 %v1059
    %1589 = vmatmul.mubr.bf16.gmra.mxu0 %v421
    %v1590 = vpop.f32.mrf.mxu0
    %v1591 = vadd.f32 %v1450, %v1590
    %v1592 = vpop.f32.mrf.mxu0
    %v1593 = vadd.f32 %v1452, %v1592
    %v1594 = vpop.f32.mrf.mxu0
    %v1595 = vadd.f32 %v1454, %v1594
    %v1596 = vpop.f32.mrf.mxu0
    %v1597 = vadd.f32 %v1456, %v1596
    %1598 = vmatprep.mubr.bf16.mxu0 %v1062
    %1599 = vmatmul.mubr.bf16.gmra.mxu0 %v425
    %v1600 = vpop.f32.mrf.mxu0
    %v1601 = vadd.f32 %v1460, %v1600
    %v1602 = vpop.f32.mrf.mxu0
    %v1603 = vadd.f32 %v1462, %v1602
    %v1604 = vpop.f32.mrf.mxu0
    %v1605 = vadd.f32 %v1464, %v1604
    %v1606 = vpop.f32.mrf.mxu0
    %v1607 = vadd.f32 %v1466, %v1606
    %1608 = vmatprep.mubr.bf16.mxu0 %v1065
    %1609 = vmatmul.mubr.bf16.gmra.mxu0 %v429
    %v1610 = vpop.f32.mrf.mxu0
    %v1611 = vadd.f32 %v1470, %v1610
    %v1612 = vpop.f32.mrf.mxu0
    %v1613 = vadd.f32 %v1472, %v1612
    %v1614 = vpop.f32.mrf.mxu0
    %v1615 = vadd.f32 %v1474, %v1614
    %v1616 = vpop.f32.mrf.mxu0
    %v1617 = vadd.f32 %v1476, %v1616
    %1618 = vmatprep.mubr.bf16.mxu0 %v1068
    %1619 = vmatmul.mubr.bf16.gmra.mxu0 %v433
    %v1620 = vpop.f32.mrf.mxu0
    %v1621 = vadd.f32 %v1480, %v1620
    %v1622 = vpop.f32.mrf.mxu0
    %v1623 = vadd.f32 %v1482, %v1622
    %v1624 = vpop.f32.mrf.mxu0
    %v1625 = vadd.f32 %v1484, %v1624
    %v1626 = vpop.f32.mrf.mxu0
    %v1627 = vadd.f32 %v1486, %v1626
    %1628 = vmatprep.mubr.bf16.mxu0 %v1071
    %1629 = vmatmul.mubr.bf16.gmra.mxu0 %v437
    %v1630 = vpop.f32.mrf.mxu0
    %v1631 = vadd.f32 %v1490, %v1630
    %v1632 = vpop.f32.mrf.mxu0
    %v1633 = vadd.f32 %v1492, %v1632
    %v1634 = vpop.f32.mrf.mxu0
    %v1635 = vpop.f32.mrf.mxu0
    %1636 = vdwg.mxu0
    %v1637 = vmul.f32 %v1249, %v1249
    %v1638 = vmul.f32 %v1251, %v1251
    %v1639 = vmul.f32 %v1253, %v1253
    %v1640 = vmul.f32 %v1255, %v1255
    %v1641 = vmul.f32 %v1259, %v1259
    %v1642 = vmul.f32 %v1261, %v1261
    %v1643 = vmul.f32 %v1263, %v1263
    %v1644 = vmul.f32 %v1265, %v1265
    %v1645 = vmul.f32 %v1269, %v1269
    %v1646 = vmul.f32 %v1271, %v1271
    %v1647 = vmul.f32 %v1273, %v1273
    %v1648 = vmul.f32 %v1275, %v1275
    %v1649 = vmul.f32 %v1279, %v1279
    %v1650 = vmul.f32 %v1281, %v1281
    %v1651 = vmul.f32 %v1283, %v1283
    %v1652 = vmul.f32 %v1285, %v1285
    %v1653 = vmul.f32 %v1289, %v1289
    %v1654 = vmul.f32 %v1291, %v1291
    %v1655 = vmul.f32 %v1293, %v1293
    %v1656 = vmul.f32 %v1295, %v1295
    %v1657 = vmul.f32 %v1299, %v1299
    %v1658 = vmul.f32 %v1301, %v1301
    %v1659 = vmul.f32 %v1303, %v1303
    %v1660 = vmul.f32 %v1305, %v1305
    %v1661 = vmul.f32 %v1309, %v1309
    %v1662 = vmul.f32 %v1311, %v1311
    %v1663 = vmul.f32 %v1313, %v1313
    %v1664 = vmul.f32 %v1315, %v1315
    %v1665 = vmul.f32 %v1319, %v1319
    %v1666 = vmul.f32 %v1321, %v1321
    %v1667 = vmul.f32 %v1323, %v1323
    %v1668 = vmul.f32 %v1325, %v1325
    %v1669 = vmul.f32 %v1329, %v1329
    %v1670 = vmul.f32 %v1331, %v1331
    %v1671 = vmul.f32 %v1333, %v1333
    %v1672 = vmul.f32 %v1335, %v1335
    %v1673 = vmul.f32 %v1339, %v1339
    %v1674 = vmul.f32 %v1341, %v1341
    %v1675 = vmul.f32 %v1343, %v1343
    %v1676 = vmul.f32 %v1345, %v1345
    %v1677 = vmul.f32 %v1349, %v1349
    %v1678 = vmul.f32 %v1351, %v1351
    %v1679 = vmul.f32 %v1531, %v1531
    %v1680 = vmul.f32 %v1533, %v1533
    %v1681 = vmul.f32 %v1535, %v1535
    %v1682 = vmul.f32 %v1537, %v1537
    %v1683 = vmul.f32 %v1541, %v1541
    %v1684 = vmul.f32 %v1543, %v1543
    %v1685 = vmul.f32 %v1545, %v1545
    %v1686 = vmul.f32 %v1547, %v1547
    %v1687 = vmul.f32 %v1551, %v1551
    %v1688 = vmul.f32 %v1553, %v1553
    %v1689 = vmul.f32 %v1555, %v1555
    %v1690 = vmul.f32 %v1557, %v1557
    %v1691 = vmul.f32 %v1561, %v1561
    %v1692 = vmul.f32 %v1563, %v1563
    %v1693 = vmul.f32 %v1565, %v1565
    %v1694 = vmul.f32 %v1567, %v1567
    %v1695 = vmul.f32 %v1571, %v1571
    %v1696 = vmul.f32 %v1573, %v1573
    %v1697 = vmul.f32 %v1575, %v1575
    %v1698 = vmul.f32 %v1577, %v1577
    %v1699 = vmul.f32 %v1581, %v1581
    %v1700 = vmul.f32 %v1583, %v1583
    %v1701 = vmul.f32 %v1585, %v1585
    %v1702 = vmul.f32 %v1587, %v1587
    %v1703 = vmul.f32 %v1591, %v1591
    %v1704 = vmul.f32 %v1593, %v1593
    %v1705 = vmul.f32 %v1595, %v1595
    %v1706 = vmul.f32 %v1597, %v1597
    %v1707 = vmul.f32 %v1601, %v1601
    %v1708 = vmul.f32 %v1603, %v1603
    %v1709 = vmul.f32 %v1605, %v1605
    %v1710 = vmul.f32 %v1607, %v1607
    %v1711 = vmul.f32 %v1611, %v1611
    %v1712 = vmul.f32 %v1613, %v1613
    %v1713 = vmul.f32 %v1615, %v1615
    %v1714 = vmul.f32 %v1617, %v1617
    %v1715 = vmul.f32 %v1621, %v1621
    %v1716 = vmul.f32 %v1623, %v1623
    %v1717 = vmul.f32 %v1625, %v1625
    %v1718 = vmul.f32 %v1627, %v1627
    %v1719 = vmul.f32 %v1631, %v1631
    %v1720 = vmul.f32 %v1633, %v1633
    %v1721 = vadd.f32 %v1637, %v1679
    %v1722 = vadd.f32 %v1638, %v1680
    %v1723 = vadd.f32 %v1639, %v1681
    %v1724 = vadd.f32 %v1640, %v1682
    %v1725 = vadd.f32 %v1641, %v1683
    %v1726 = vadd.f32 %v1642, %v1684
    %v1727 = vadd.f32 %v1643, %v1685
    %v1728 = vadd.f32 %v1644, %v1686
    %v1729 = vadd.f32 %v1645, %v1687
    %v1730 = vadd.f32 %v1646, %v1688
    %v1731 = vadd.f32 %v1647, %v1689
    %v1732 = vadd.f32 %v1648, %v1690
    %v1733 = vadd.f32 %v1649, %v1691
    %v1734 = vadd.f32 %v1650, %v1692
    %v1735 = vadd.f32 %v1651, %v1693
    %v1736 = vadd.f32 %v1652, %v1694
    %v1737 = vadd.f32 %v1653, %v1695
    %v1738 = vadd.f32 %v1654, %v1696
    %v1739 = vadd.f32 %v1655, %v1697
    %v1740 = vadd.f32 %v1656, %v1698
    %v1741 = vadd.f32 %v1657, %v1699
    %v1742 = vadd.f32 %v1658, %v1700
    %v1743 = vadd.f32 %v1659, %v1701
    %v1744 = vadd.f32 %v1660, %v1702
    %v1745 = vadd.f32 %v1661, %v1703
    %v1746 = vadd.f32 %v1662, %v1704
    %v1747 = vadd.f32 %v1663, %v1705
    %v1748 = vadd.f32 %v1664, %v1706
    %v1749 = vadd.f32 %v1665, %v1707
    %v1750 = vadd.f32 %v1666, %v1708
    %v1751 = vadd.f32 %v1667, %v1709
    %v1752 = vadd.f32 %v1668, %v1710
    %v1753 = vadd.f32 %v1669, %v1711
    %v1754 = vadd.f32 %v1670, %v1712
    %v1755 = vadd.f32 %v1671, %v1713
    %v1756 = vadd.f32 %v1672, %v1714
    %v1757 = vadd.f32 %v1673, %v1715
    %v1758 = vadd.f32 %v1674, %v1716
    %v1759 = vadd.f32 %v1675, %v1717
    %v1760 = vadd.f32 %v1676, %v1718
    %v1761 = vadd.f32 %v1677, %v1719
    %v1762 = vadd.f32 %v1678, %v1720
    %v1763 = vpack.c.bf16 %v1723, %v1721
    %v1764 = vpack.c.bf16 %v1724, %v1722
    %v1765 = vpack.c.bf16 %v1727, %v1725
    %v1766 = vpack.c.bf16 %v1728, %v1726
    %v1767 = vpack.c.bf16 %v1731, %v1729
    %v1768 = vpack.c.bf16 %v1732, %v1730
    %v1769 = vpack.c.bf16 %v1735, %v1733
    %v1770 = vpack.c.bf16 %v1736, %v1734
    %v1771 = vpack.c.bf16 %v1739, %v1737
    %v1772 = vpack.c.bf16 %v1740, %v1738
    %v1773 = vpack.c.bf16 %v1743, %v1741
    %v1774 = vpack.c.bf16 %v1744, %v1742
    %v1775 = vpack.c.bf16 %v1747, %v1745
    %v1776 = vpack.c.bf16 %v1748, %v1746
    %v1777 = vpack.c.bf16 %v1751, %v1749
    %v1778 = vpack.c.bf16 %v1752, %v1750
    %v1779 = vpack.c.bf16 %v1755, %v1753
    %v1780 = vpack.c.bf16 %v1756, %v1754
    %v1781 = vpack.c.bf16 %v1759, %v1757
    %v1782 = vpack.c.bf16 %v1760, %v1758
    %v1783 = vpack.c.bf16 %v1761, %v1761
    %v1784 = vpack.c.bf16 %v1762, %v1762
    %v1785 = vld [vmem:[%s2] sm:$0xf]
    %v1786 = vld [vmem:[%s2 + $0x4] sm:$0xf]
    %v1787 = vld [vmem:[%s2 + $0x8] sm:$0xf]
    %v1788 = vld [vmem:[%s2 + $0xc] sm:$0xf]
    %v1789 = vld [vmem:[%s2 + $0x10] sm:$0xf]
    %v1790 = vld [vmem:[%s2 + $0x14] sm:$0xf]
    %v1791 = vld [vmem:[%s2 + $0x18] sm:$0xf]
    %v1792 = vld [vmem:[%s2 + $0x1c] sm:$0xf]
    %v1793 = vld [vmem:[%s2 + $0x20] sm:$0xf]
    %v1794 = vld [vmem:[%s2 + $0x24] sm:$0xf]
    %v1795 = vld [vmem:[%s2 + $0x28] sm:$0xf]
    %v1796 = vld [vmem:[%s2 + $0x2c] sm:$0xf]
    %v1797 = vld [vmem:[%s2 + $0x30] sm:$0xf]
    %v1798 = vld [vmem:[%s2 + $0x34] sm:$0xf]
    %v1799 = vld [vmem:[%s2 + $0x38] sm:$0xf]
    %v1800 = vld [vmem:[%s2 + $0x3c] sm:$0xf]
    %v1801 = vld [vmem:[%s2 + $0x40] sm:$0xf]
    %v1802 = vld [vmem:[%s2 + $0x44] sm:$0xf]
    %v1803 = vld [vmem:[%s2 + $0x48] sm:$0xf]
    %v1804 = vld [vmem:[%s2 + $0x4c] sm:$0xf]
    %v1805 = vld [vmem:[%s2 + $0x50] sm:$0xf]
    %v1806 = vld [vmem:[%s2 + $0x54] sm:$0xf]
    %v1807 = vld [vmem:[%s2 + $0x58] sm:$0xf]
    %v1808 = vld [vmem:[%s2 + $0x5c] sm:$0xf]
    %v1809 = vld [vmem:[%s2 + $0x60] sm:$0xf]
    %v1810 = vld [vmem:[%s2 + $0x64] sm:$0xf]
    %v1811 = vld [vmem:[%s2 + $0x68] sm:$0xf]
    %v1812 = vld [vmem:[%s2 + $0x6c] sm:$0xf]
    %v1813 = vld [vmem:[%s2 + $0x70] sm:$0xf]
    %v1814 = vld [vmem:[%s2 + $0x74] sm:$0xf]
    %v1815 = vld [vmem:[%s2 + $0x78] sm:$0xf]
    %v1816 = vld [vmem:[%s2 + $0x7c] sm:$0xf]
    %v1849 = vunpack.c.l.b16 %v1785
    %v1850 = vunpack.c.l.b16 %v1786
    %v1851 = vunpack.c.l.b16 %v1787
    %v1852 = vunpack.c.l.b16 %v1788
    %v1853 = vunpack.c.l.b16 %v1789
    %v1854 = vunpack.c.l.b16 %v1790
    %v1855 = vunpack.c.l.b16 %v1791
    %v1856 = vunpack.c.l.b16 %v1792
    %v1857 = vunpack.c.l.b16 %v1793
    %v1858 = vunpack.c.l.b16 %v1794
    %v1859 = vunpack.c.l.b16 %v1795
    %v1860 = vunpack.c.l.b16 %v1796
    %v1861 = vunpack.c.l.b16 %v1797
    %v1862 = vunpack.c.l.b16 %v1798
    %v1863 = vunpack.c.l.b16 %v1799
    %v1864 = vunpack.c.l.b16 %v1800
    %v1865 = vunpack.c.l.b16 %v1801
    %v1866 = vunpack.c.l.b16 %v1802
    %v1867 = vunpack.c.l.b16 %v1803
    %v1868 = vunpack.c.l.b16 %v1804
    %v1869 = vunpack.c.l.b16 %v1805
    %v1870 = vunpack.c.l.b16 %v1806
    %v1871 = vunpack.c.l.b16 %v1807
    %v1872 = vunpack.c.l.b16 %v1808
    %v1873 = vunpack.c.l.b16 %v1809
    %v1874 = vunpack.c.l.b16 %v1810
    %v1875 = vunpack.c.l.b16 %v1811
    %v1876 = vunpack.c.l.b16 %v1812
    %v1877 = vunpack.c.l.b16 %v1813
    %v1878 = vunpack.c.l.b16 %v1814
    %v1879 = vunpack.c.l.b16 %v1815
    %v1880 = vunpack.c.l.b16 %v1816
    %v1881 = vpack.c.b16 %v1850, %v1849
    %v1882 = vpack.c.b16 %v1852, %v1851
    %v1883 = vpack.c.b16 %v1854, %v1853
    %v1884 = vpack.c.b16 %v1856, %v1855
    %v1885 = vpack.c.b16 %v1858, %v1857
    %v1886 = vpack.c.b16 %v1860, %v1859
    %v1887 = vpack.c.b16 %v1862, %v1861
    %v1888 = vpack.c.b16 %v1864, %v1863
    %v1889 = vpack.c.b16 %v1866, %v1865
    %v1890 = vpack.c.b16 %v1868, %v1867
    %v1891 = vpack.c.b16 %v1870, %v1869
    %v1892 = vpack.c.b16 %v1872, %v1871
    %v1893 = vpack.c.b16 %v1874, %v1873
    %v1894 = vpack.c.b16 %v1876, %v1875
    %v1895 = vpack.c.b16 %v1878, %v1877
    %v1896 = vpack.c.b16 %v1880, %v1879
    %1913 = vmatprep.subr.bf16.mxu0 0
    %1914 = vmatpush1.bf16.msra.mxu0 %v1888
    %1915 = vmatprep.subr.bf16.mxu0 0
    %1916 = vmatpush1.bf16.msra.mxu0 %v1887
    %1917 = vmatprep.subr.bf16.mxu0 0
    %1918 = vmatpush1.bf16.msra.mxu0 %v1886
    %1919 = vmatprep.subr.bf16.mxu0 0
    %1920 = vmatpush1.bf16.msra.mxu0 %v1885
    %1921 = vmatprep.subr.bf16.mxu0 0
    %1922 = vmatpush1.bf16.msra.mxu0 %v1884
    %1923 = vmatprep.subr.bf16.mxu0 0
    %1924 = vmatpush1.bf16.msra.mxu0 %v1883
    %1925 = vmatprep.subr.bf16.mxu0 0
    %1926 = vmatpush1.bf16.msra.mxu0 %v1882
    %1927 = vmatprep.subr.bf16.mxu0 0
    %1928 = vmatpush1.bf16.msra.mxu0 %v1881
    %1929 = vmatprep.subr.bf16.mxu0 0
    %1930 = vmatpush2.bf16.msra.mxu0 %v1896
    %1931 = vmatprep.subr.bf16.mxu0 0
    %1932 = vmatpush2.bf16.msra.mxu0 %v1895
    %1933 = vmatprep.subr.bf16.mxu0 0
    %1934 = vmatpush2.bf16.msra.mxu0 %v1894
    %1935 = vmatprep.subr.bf16.mxu0 0
    %1936 = vmatpush2.bf16.msra.mxu0 %v1893
    %1937 = vmatprep.subr.bf16.mxu0 0
    %1938 = vmatpush2.bf16.msra.mxu0 %v1892
    %1939 = vmatprep.subr.bf16.mxu0 0
    %1940 = vmatpush2.bf16.msra.mxu0 %v1891
    %1941 = vmatprep.subr.bf16.mxu0 0
    %1942 = vmatpush2.bf16.msra.mxu0 %v1890
    %1943 = vmatprep.subr.bf16.mxu0 0
    %1944 = vmatpush2.bf16.msra.mxu0 %v1889
    %1945 = vmatprep.mubr.bf16.mxu0 %v1764
    %1946 = vmatmul.mubr.bf16.gmra.mxu0 %v1763
    %v1947 = vpop.f32.mrf.mxu0
    %v1948 = vadd.f32 0.0, %v1947
    %v1949 = vpop.f32.mrf.mxu0
    %v1950 = vpop.f32.mrf.mxu0
    %v1951 = vadd.f32 0.0, %v1950
    %v1952 = vpop.f32.mrf.mxu0
    %1953 = vmatprep.mubr.bf16.mxu0 %v1766
    %1954 = vmatmul.mubr.bf16.gmra.mxu0 %v1765
    %v1955 = vpop.f32.mrf.mxu0
    %v1956 = vadd.f32 0.0, %v1955
    %v1957 = vpop.f32.mrf.mxu0
    %v1958 = vpop.f32.mrf.mxu0
    %v1959 = vadd.f32 0.0, %v1958
    %v1960 = vpop.f32.mrf.mxu0
    %1961 = vmatprep.mubr.bf16.mxu0 %v1768
    %1962 = vmatmul.mubr.bf16.gmra.mxu0 %v1767
    %v1963 = vpop.f32.mrf.mxu0
    %v1964 = vadd.f32 0.0, %v1963
    %v1965 = vpop.f32.mrf.mxu0
    %v1966 = vpop.f32.mrf.mxu0
    %v1967 = vadd.f32 0.0, %v1966
    %v1968 = vpop.f32.mrf.mxu0
    %1969 = vmatprep.mubr.bf16.mxu0 %v1770
    %1970 = vmatmul.mubr.bf16.gmra.mxu0 %v1769
    %v1971 = vpop.f32.mrf.mxu0
    %v1972 = vadd.f32 0.0, %v1971
    %v1973 = vpop.f32.mrf.mxu0
    %v1974 = vpop.f32.mrf.mxu0
    %v1975 = vadd.f32 0.0, %v1974
    %v1976 = vpop.f32.mrf.mxu0
    %1977 = vmatprep.mubr.bf16.mxu0 %v1772
    %1978 = vmatmul.mubr.bf16.gmra.mxu0 %v1771
    %v1979 = vpop.f32.mrf.mxu0
    %v1980 = vadd.f32 0.0, %v1979
    %v1981 = vpop.f32.mrf.mxu0
    %v1982 = vpop.f32.mrf.mxu0
    %v1983 = vadd.f32 0.0, %v1982
    %v1984 = vpop.f32.mrf.mxu0
    %1985 = vmatprep.mubr.bf16.mxu0 %v1774
    %1986 = vmatmul.mubr.bf16.gmra.mxu0 %v1773
    %v1987 = vpop.f32.mrf.mxu0
    %v1988 = vadd.f32 0.0, %v1987
    %v1989 = vpop.f32.mrf.mxu0
    %v1990 = vpop.f32.mrf.mxu0
    %v1991 = vadd.f32 0.0, %v1990
    %v1992 = vpop.f32.mrf.mxu0
    %1993 = vmatprep.mubr.bf16.mxu0 %v1776
    %1994 = vmatmul.mubr.bf16.gmra.mxu0 %v1775
    %v1995 = vpop.f32.mrf.mxu0
    %v1996 = vadd.f32 0.0, %v1995
    %v1997 = vpop.f32.mrf.mxu0
    %v1998 = vpop.f32.mrf.mxu0
    %v1999 = vadd.f32 0.0, %v1998
    %v2000 = vpop.f32.mrf.mxu0
    %2001 = vmatprep.mubr.bf16.mxu0 %v1778
    %2002 = vmatmul.mubr.bf16.gmra.mxu0 %v1777
    %v2003 = vpop.f32.mrf.mxu0
    %v2004 = vadd.f32 0.0, %v2003
    %v2005 = vpop.f32.mrf.mxu0
    %v2006 = vpop.f32.mrf.mxu0
    %v2007 = vadd.f32 0.0, %v2006
    %v2008 = vpop.f32.mrf.mxu0
    %2009 = vmatprep.mubr.bf16.mxu0 %v1780
    %2010 = vmatmul.mubr.bf16.gmra.mxu0 %v1779
    %v2011 = vpop.f32.mrf.mxu0
    %v2012 = vadd.f32 0.0, %v2011
    %v2013 = vpop.f32.mrf.mxu0
    %v2014 = vpop.f32.mrf.mxu0
    %v2015 = vadd.f32 0.0, %v2014
    %v2016 = vpop.f32.mrf.mxu0
    %2017 = vmatprep.mubr.bf16.mxu0 %v1782
    %2018 = vmatmul.mubr.bf16.gmra.mxu0 %v1781
    %v2019 = vpop.f32.mrf.mxu0
    %v2020 = vadd.f32 0.0, %v2019
    %v2021 = vpop.f32.mrf.mxu0
    %v2022 = vpop.f32.mrf.mxu0
    %v2023 = vadd.f32 0.0, %v2022
    %v2024 = vpop.f32.mrf.mxu0
    %2025 = vmatprep.mubr.bf16.mxu0 %v1784
    %2026 = vmatmul.mubr.bf16.gmra.mxu0 %v1783
    %v2027 = vpop.f32.mrf.mxu0
    %v2028 = vadd.f32 0.0, %v2027
    %v2029 = vpop.f32.mrf.mxu0
    %v2030 = vpop.f32.mrf.mxu0
    %v2031 = vpop.f32.mrf.mxu0
    %2032 = vdwg.mxu0
    %v2033 = vmax.f32 %v1948, 1e-10
    %v2034 = vmax.f32 %v1951, 1e-10
    %v2035 = vmax.f32 %v1956, 1e-10
    %v2036 = vmax.f32 %v1959, 1e-10
    %v2037 = vmax.f32 %v1964, 1e-10
    %v2038 = vmax.f32 %v1967, 1e-10
    %v2039 = vmax.f32 %v1972, 1e-10
    %v2040 = vmax.f32 %v1975, 1e-10
    %v2041 = vmax.f32 %v1980, 1e-10
    %v2042 = vmax.f32 %v1983, 1e-10
    %v2043 = vmax.f32 %v1988, 1e-10
    %v2044 = vmax.f32 %v1991, 1e-10
    %v2045 = vmax.f32 %v1996, 1e-10
    %v2046 = vmax.f32 %v1999, 1e-10
    %v2047 = vmax.f32 %v2004, 1e-10
    %v2048 = vmax.f32 %v2007, 1e-10
    %v2049 = vmax.f32 %v2012, 1e-10
    %v2050 = vmax.f32 %v2015, 1e-10
    %v2051 = vmax.f32 %v2020, 1e-10
    %v2052 = vmax.f32 %v2023, 1e-10
    %v2053 = vmax.f32 %v2028, 1e-10
    %v2054 = vlog2.pop %v2033
    %v2055 = vmul.f32 %v2054, 0.6931472
    %v2056 = vlog2.pop %v2034
    %v2057 = vmul.f32 %v2056, 0.6931472
    %v2058 = vlog2.pop %v2035
    %v2059 = vmul.f32 %v2058, 0.6931472
    %v2060 = vlog2.pop %v2036
    %v2061 = vmul.f32 %v2060, 0.6931472
    %v2062 = vlog2.pop %v2037
    %v2063 = vmul.f32 %v2062, 0.6931472
    %v2064 = vlog2.pop %v2038
    %v2065 = vmul.f32 %v2064, 0.6931472
    %v2066 = vlog2.pop %v2039
    %v2067 = vmul.f32 %v2066, 0.6931472
    %v2068 = vlog2.pop %v2040
    %v2069 = vmul.f32 %v2068, 0.6931472
    %v2070 = vlog2.pop %v2041
    %v2071 = vmul.f32 %v2070, 0.6931472
    %v2072 = vlog2.pop %v2042
    %v2073 = vmul.f32 %v2072, 0.6931472
    %v2074 = vlog2.pop %v2043
    %v2075 = vmul.f32 %v2074, 0.6931472
    %v2076 = vlog2.pop %v2044
    %v2077 = vmul.f32 %v2076, 0.6931472
    %v2078 = vlog2.pop %v2045
    %v2079 = vmul.f32 %v2078, 0.6931472
    %v2080 = vlog2.pop %v2046
    %v2081 = vmul.f32 %v2080, 0.6931472
    %v2082 = vlog2.pop %v2047
    %v2083 = vmul.f32 %v2082, 0.6931472
    %v2084 = vlog2.pop %v2048
    %v2085 = vmul.f32 %v2084, 0.6931472
    %v2086 = vlog2.pop %v2049
    %v2087 = vmul.f32 %v2086, 0.6931472
    %v2088 = vlog2.pop %v2050
    %v2089 = vmul.f32 %v2088, 0.6931472
    %v2090 = vlog2.pop %v2051
    %v2091 = vmul.f32 %v2090, 0.6931472
    %v2092 = vlog2.pop %v2052
    %v2093 = vmul.f32 %v2092, 0.6931472
    %v2094 = vlog2.pop %v2053
    %v2095 = vmul.f32 %v2094, 0.6931472
    %v2096 = vmul.f32 %v2055, 0.4342945
    %v2097 = vmul.f32 %v2057, 0.4342945
    %v2098 = vmul.f32 %v2059, 0.4342945
    %v2099 = vmul.f32 %v2061, 0.4342945
    %v2100 = vmul.f32 %v2063, 0.4342945
    %v2101 = vmul.f32 %v2065, 0.4342945
    %v2102 = vmul.f32 %v2067, 0.4342945
    %v2103 = vmul.f32 %v2069, 0.4342945
    %v2104 = vmul.f32 %v2071, 0.4342945
    %v2105 = vmul.f32 %v2073, 0.4342945
    %v2106 = vmul.f32 %v2075, 0.4342945
    %v2107 = vmul.f32 %v2077, 0.4342945
    %v2108 = vmul.f32 %v2079, 0.4342945
    %v2109 = vmul.f32 %v2081, 0.4342945
    %v2110 = vmul.f32 %v2083, 0.4342945
    %v2111 = vmul.f32 %v2085, 0.4342945
    %v2112 = vmul.f32 %v2087, 0.4342945
    %v2113 = vmul.f32 %v2089, 0.4342945
    %v2114 = vmul.f32 %v2091, 0.4342945
    %v2115 = vmul.f32 %v2093, 0.4342945
    %v2116 = vmul.f32 %v2095, 0.4342945
    %v2117 = vmul.f32 %v2096, 10.0
    %v2118 = vmul.f32 %v2097, 10.0
    %v2119 = vmul.f32 %v2098, 10.0
    %v2120 = vmul.f32 %v2099, 10.0
    %v2121 = vmul.f32 %v2100, 10.0
    %v2122 = vmul.f32 %v2101, 10.0
    %v2123 = vmul.f32 %v2102, 10.0
    %v2124 = vmul.f32 %v2103, 10.0
    %v2125 = vmul.f32 %v2104, 10.0
    %v2126 = vmul.f32 %v2105, 10.0
    %v2127 = vmul.f32 %v2106, 10.0
    %v2128 = vmul.f32 %v2107, 10.0
    %v2129 = vmul.f32 %v2108, 10.0
    %v2130 = vmul.f32 %v2109, 10.0
    %v2131 = vmul.f32 %v2110, 10.0
    %v2132 = vmul.f32 %v2111, 10.0
    %v2133 = vmul.f32 %v2112, 10.0
    %v2134 = vmul.f32 %v2113, 10.0
    %v2135 = vmul.f32 %v2114, 10.0
    %v2136 = vmul.f32 %v2115, 10.0
    %v2137 = vmul.f32 %v2116, 10.0
    %v2138 = vsel %vm170, %v2117, 0.0
    %2139 = vadd.xlane.f32.xlu0 %v2138
    %v2140 = vpop.xlane.xlu0 %2139
    %v2141 = vsel %vm170, %v2118, 0.0
    %2142 = vadd.xlane.f32.xlu0 %v2141
    %v2143 = vpop.xlane.xlu0 %2142
    %v2144 = vsel %vm170, %v2119, 0.0
    %2145 = vadd.xlane.f32.xlu0 %v2144
    %v2146 = vpop.xlane.xlu0 %2145
    %v2147 = vsel %vm170, %v2120, 0.0
    %2148 = vadd.xlane.f32.xlu0 %v2147
    %v2149 = vpop.xlane.xlu0 %2148
    %v2150 = vsel %vm170, %v2121, 0.0
    %2151 = vadd.xlane.f32.xlu0 %v2150
    %v2152 = vpop.xlane.xlu0 %2151
    %v2153 = vsel %vm170, %v2122, 0.0
    %2154 = vadd.xlane.f32.xlu0 %v2153
    %v2155 = vpop.xlane.xlu0 %2154
    %v2156 = vsel %vm170, %v2123, 0.0
    %2157 = vadd.xlane.f32.xlu0 %v2156
    %v2158 = vpop.xlane.xlu0 %2157
    %v2159 = vsel %vm170, %v2124, 0.0
    %2160 = vadd.xlane.f32.xlu0 %v2159
    %v2161 = vpop.xlane.xlu0 %2160
    %v2162 = vsel %vm170, %v2125, 0.0
    %2163 = vadd.xlane.f32.xlu0 %v2162
    %v2164 = vpop.xlane.xlu0 %2163
    %v2165 = vsel %vm170, %v2126, 0.0
    %2166 = vadd.xlane.f32.xlu0 %v2165
    %v2167 = vpop.xlane.xlu0 %2166
    %v2168 = vsel %vm170, %v2127, 0.0
    %2169 = vadd.xlane.f32.xlu0 %v2168
    %v2170 = vpop.xlane.xlu0 %2169
    %v2171 = vsel %vm170, %v2128, 0.0
    %2172 = vadd.xlane.f32.xlu0 %v2171
    %v2173 = vpop.xlane.xlu0 %2172
    %v2174 = vsel %vm170, %v2129, 0.0
    %2175 = vadd.xlane.f32.xlu0 %v2174
    %v2176 = vpop.xlane.xlu0 %2175
    %v2177 = vsel %vm170, %v2130, 0.0
    %2178 = vadd.xlane.f32.xlu0 %v2177
    %v2179 = vpop.xlane.xlu0 %2178
    %v2180 = vsel %vm170, %v2131, 0.0
    %2181 = vadd.xlane.f32.xlu0 %v2180
    %v2182 = vpop.xlane.xlu0 %2181
    %v2183 = vsel %vm170, %v2132, 0.0
    %2184 = vadd.xlane.f32.xlu0 %v2183
    %v2185 = vpop.xlane.xlu0 %2184
    %v2186 = vsel %vm170, %v2133, 0.0
    %2187 = vadd.xlane.f32.xlu0 %v2186
    %v2188 = vpop.xlane.xlu0 %2187
    %v2189 = vsel %vm170, %v2134, 0.0
    %2190 = vadd.xlane.f32.xlu0 %v2189
    %v2191 = vpop.xlane.xlu0 %2190
    %v2192 = vsel %vm170, %v2135, 0.0
    %2193 = vadd.xlane.f32.xlu0 %v2192
    %v2194 = vpop.xlane.xlu0 %2193
    %v2195 = vsel %vm170, %v2136, 0.0
    %2196 = vadd.xlane.f32.xlu0 %v2195
    %v2197 = vpop.xlane.xlu0 %2196
    %v2198 = vsel %vm170, %v2137, 0.0
    %2199 = vadd.xlane.f32.xlu0 %v2198
    %v2200 = vpop.xlane.xlu0 %2199
    %v2201 = vrcp.pop 64.0
    %v2202 = vmul.f32 %v2140, %v2201
    %v2203 = vmul.f32 %v2143, %v2201
    %v2204 = vmul.f32 %v2146, %v2201
    %v2205 = vmul.f32 %v2149, %v2201
    %v2206 = vmul.f32 %v2152, %v2201
    %v2207 = vmul.f32 %v2155, %v2201
    %v2208 = vmul.f32 %v2158, %v2201
    %v2209 = vmul.f32 %v2161, %v2201
    %v2210 = vmul.f32 %v2164, %v2201
    %v2211 = vmul.f32 %v2167, %v2201
    %v2212 = vmul.f32 %v2170, %v2201
    %v2213 = vmul.f32 %v2173, %v2201
    %v2214 = vmul.f32 %v2176, %v2201
    %v2215 = vmul.f32 %v2179, %v2201
    %v2216 = vmul.f32 %v2182, %v2201
    %v2217 = vmul.f32 %v2185, %v2201
    %v2218 = vmul.f32 %v2188, %v2201
    %v2219 = vmul.f32 %v2191, %v2201
    %v2220 = vmul.f32 %v2194, %v2201
    %v2221 = vmul.f32 %v2197, %v2201
    %v2222 = vmul.f32 %v2200, %v2201
    %v2223 = vadd.f32 %v2202, %v2203
    %v2224 = vadd.f32 %v2223, %v2204
    %v2225 = vadd.f32 %v2224, %v2205
    %v2226 = vadd.f32 %v2225, %v2206
    %v2227 = vadd.f32 %v2226, %v2207
    %v2228 = vadd.f32 %v2227, %v2208
    %v2229 = vadd.f32 %v2228, %v2209
    %v2230 = vadd.f32 %v2229, %v2210
    %v2231 = vadd.f32 %v2230, %v2211
    %v2232 = vadd.f32 %v2231, %v2212
    %v2233 = vadd.f32 %v2232, %v2213
    %v2234 = vadd.f32 %v2233, %v2214
    %v2235 = vadd.f32 %v2234, %v2215
    %v2236 = vadd.f32 %v2235, %v2216
    %v2237 = vadd.f32 %v2236, %v2217
    %v2238 = vadd.f32 %v2237, %v2218
    %v2239 = vadd.f32 %v2238, %v2219
    %v2240 = vadd.f32 %v2239, %v2220
    %v2241 = vadd.f32 %v2240, %v2221
    %v2242 = vadd.f32 %v2241, %v2222
    %v2243 = vrcp.pop 21.0
    %v2244 = vmul.f32 %v2242, %v2243
    %v2245 = vsub.f32 %v2117, %v2244
    %v2246 = vsub.f32 %v2118, %v2244
    %v2247 = vsub.f32 %v2119, %v2244
    %v2248 = vsub.f32 %v2120, %v2244
    %v2249 = vsub.f32 %v2121, %v2244
    %v2250 = vsub.f32 %v2122, %v2244
    %v2251 = vsub.f32 %v2123, %v2244
    %v2252 = vsub.f32 %v2124, %v2244
    %v2253 = vsub.f32 %v2125, %v2244
    %v2254 = vsub.f32 %v2126, %v2244
    %v2255 = vsub.f32 %v2127, %v2244
    %v2256 = vsub.f32 %v2128, %v2244
    %v2257 = vsub.f32 %v2129, %v2244
    %v2258 = vsub.f32 %v2130, %v2244
    %v2259 = vsub.f32 %v2131, %v2244
    %v2260 = vsub.f32 %v2132, %v2244
    %v2261 = vsub.f32 %v2133, %v2244
    %v2262 = vsub.f32 %v2134, %v2244
    %v2263 = vsub.f32 %v2135, %v2244
    %v2264 = vsub.f32 %v2136, %v2244
    %v2265 = vsub.f32 %v2137, %v2244
    %v2266 = vmul.f32 %v2245, %v2245
    %v2267 = vmul.f32 %v2246, %v2246
    %v2268 = vmul.f32 %v2247, %v2247
    %v2269 = vmul.f32 %v2248, %v2248
    %v2270 = vmul.f32 %v2249, %v2249
    %v2271 = vmul.f32 %v2250, %v2250
    %v2272 = vmul.f32 %v2251, %v2251
    %v2273 = vmul.f32 %v2252, %v2252
    %v2274 = vmul.f32 %v2253, %v2253
    %v2275 = vmul.f32 %v2254, %v2254
    %v2276 = vmul.f32 %v2255, %v2255
    %v2277 = vmul.f32 %v2256, %v2256
    %v2278 = vmul.f32 %v2257, %v2257
    %v2279 = vmul.f32 %v2258, %v2258
    %v2280 = vmul.f32 %v2259, %v2259
    %v2281 = vmul.f32 %v2260, %v2260
    %v2282 = vmul.f32 %v2261, %v2261
    %v2283 = vmul.f32 %v2262, %v2262
    %v2284 = vmul.f32 %v2263, %v2263
    %v2285 = vmul.f32 %v2264, %v2264
    %v2286 = vmul.f32 %v2265, %v2265
    %v2287 = vsel %vm170, %v2266, 0.0
    %2288 = vadd.xlane.f32.xlu0 %v2287
    %v2289 = vpop.xlane.xlu0 %2288
    %v2290 = vsel %vm170, %v2267, 0.0
    %2291 = vadd.xlane.f32.xlu0 %v2290
    %v2292 = vpop.xlane.xlu0 %2291
    %v2293 = vsel %vm170, %v2268, 0.0
    %2294 = vadd.xlane.f32.xlu0 %v2293
    %v2295 = vpop.xlane.xlu0 %2294
    %v2296 = vsel %vm170, %v2269, 0.0
    %2297 = vadd.xlane.f32.xlu0 %v2296
    %v2298 = vpop.xlane.xlu0 %2297
    %v2299 = vsel %vm170, %v2270, 0.0
    %2300 = vadd.xlane.f32.xlu0 %v2299
    %v2301 = vpop.xlane.xlu0 %2300
    %v2302 = vsel %vm170, %v2271, 0.0
    %2303 = vadd.xlane.f32.xlu0 %v2302
    %v2304 = vpop.xlane.xlu0 %2303
    %v2305 = vsel %vm170, %v2272, 0.0
    %2306 = vadd.xlane.f32.xlu0 %v2305
    %v2307 = vpop.xlane.xlu0 %2306
    %v2308 = vsel %vm170, %v2273, 0.0
    %2309 = vadd.xlane.f32.xlu0 %v2308
    %v2310 = vpop.xlane.xlu0 %2309
    %v2311 = vsel %vm170, %v2274, 0.0
    %2312 = vadd.xlane.f32.xlu0 %v2311
    %v2313 = vpop.xlane.xlu0 %2312
    %v2314 = vsel %vm170, %v2275, 0.0
    %2315 = vadd.xlane.f32.xlu0 %v2314
    %v2316 = vpop.xlane.xlu0 %2315
    %v2317 = vsel %vm170, %v2276, 0.0
    %2318 = vadd.xlane.f32.xlu0 %v2317
    %v2319 = vpop.xlane.xlu0 %2318
    %v2320 = vsel %vm170, %v2277, 0.0
    %2321 = vadd.xlane.f32.xlu0 %v2320
    %v2322 = vpop.xlane.xlu0 %2321
    %v2323 = vsel %vm170, %v2278, 0.0
    %2324 = vadd.xlane.f32.xlu0 %v2323
    %v2325 = vpop.xlane.xlu0 %2324
    %v2326 = vsel %vm170, %v2279, 0.0
    %2327 = vadd.xlane.f32.xlu0 %v2326
    %v2328 = vpop.xlane.xlu0 %2327
    %v2329 = vsel %vm170, %v2280, 0.0
    %2330 = vadd.xlane.f32.xlu0 %v2329
    %v2331 = vpop.xlane.xlu0 %2330
    %v2332 = vsel %vm170, %v2281, 0.0
    %2333 = vadd.xlane.f32.xlu0 %v2332
    %v2334 = vpop.xlane.xlu0 %2333
    %v2335 = vsel %vm170, %v2282, 0.0
    %2336 = vadd.xlane.f32.xlu0 %v2335
    %v2337 = vpop.xlane.xlu0 %2336
    %v2338 = vsel %vm170, %v2283, 0.0
    %2339 = vadd.xlane.f32.xlu0 %v2338
    %v2340 = vpop.xlane.xlu0 %2339
    %v2341 = vsel %vm170, %v2284, 0.0
    %2342 = vadd.xlane.f32.xlu0 %v2341
    %v2343 = vpop.xlane.xlu0 %2342
    %v2344 = vsel %vm170, %v2285, 0.0
    %2345 = vadd.xlane.f32.xlu0 %v2344
    %v2346 = vpop.xlane.xlu0 %2345
    %v2347 = vsel %vm170, %v2286, 0.0
    %2348 = vadd.xlane.f32.xlu0 %v2347
    %v2349 = vpop.xlane.xlu0 %2348
    %v2350 = vadd.f32 %v2289, %v2292
    %v2351 = vadd.f32 %v2350, %v2295
    %v2352 = vadd.f32 %v2351, %v2298
    %v2353 = vadd.f32 %v2352, %v2301
    %v2354 = vadd.f32 %v2353, %v2304
    %v2355 = vadd.f32 %v2354, %v2307
    %v2356 = vadd.f32 %v2355, %v2310
    %v2357 = vadd.f32 %v2356, %v2313
    %v2358 = vadd.f32 %v2357, %v2316
    %v2359 = vadd.f32 %v2358, %v2319
    %v2360 = vadd.f32 %v2359, %v2322
    %v2361 = vadd.f32 %v2360, %v2325
    %v2362 = vadd.f32 %v2361, %v2328
    %v2363 = vadd.f32 %v2362, %v2331
    %v2364 = vadd.f32 %v2363, %v2334
    %v2365 = vadd.f32 %v2364, %v2337
    %v2366 = vadd.f32 %v2365, %v2340
    %v2367 = vadd.f32 %v2366, %v2343
    %v2368 = vadd.f32 %v2367, %v2346
    %v2369 = vadd.f32 %v2368, %v2349
    %v2370 = vrcp.pop 1343.0
    %v2371 = vmul.f32 %v2369, %v2370
    %v2372 = vrsqrt.pop %v2371
    %v2373 = vmul.f32 %v2371, %v2372
    %vm2374 = vcmp.eq.f32.partialorder %v2371, inf
    %v2375 = vsel %vm2374, %v2371, %v2373
    %vm2376 = vcmp.eq.f32.partialorder %v2371, 0.0
    %v2377 = vand.u32 %v2371, 2147483648
    %v2378 = vsel %vm2376, %v2377, %v2375
    %v2379 = vadd.f32 %v2378, 1e-05
    %v2380 = vrcp.pop %v2379
    %v2381 = vmul.f32 1.0, %v2380
    %v2382 = vmul.f32 %v2245, %v2381
    %v2383 = vmul.f32 %v2246, %v2381
    %v2384 = vmul.f32 %v2247, %v2381
    %v2385 = vmul.f32 %v2248, %v2381
    %v2386 = vmul.f32 %v2249, %v2381
    %v2387 = vmul.f32 %v2250, %v2381
    %v2388 = vmul.f32 %v2251, %v2381
    %v2389 = vmul.f32 %v2252, %v2381
    %v2390 = vmul.f32 %v2253, %v2381
    %v2391 = vmul.f32 %v2254, %v2381
    %v2392 = vmul.f32 %v2255, %v2381
    %v2393 = vmul.f32 %v2256, %v2381
    %v2394 = vmul.f32 %v2257, %v2381
    %v2395 = vmul.f32 %v2258, %v2381
    %v2396 = vmul.f32 %v2259, %v2381
    %v2397 = vmul.f32 %v2260, %v2381
    %v2398 = vmul.f32 %v2261, %v2381
    %v2399 = vmul.f32 %v2262, %v2381
    %v2400 = vmul.f32 %v2263, %v2381
    %v2401 = vmul.f32 %v2264, %v2381
    %v2402 = vmul.f32 %v2265, %v2381
    %v2403 = vpack.c.bf16 %v2383, %v2382
    %v2404 = vpack.c.bf16 %v2385, %v2384
    %v2405 = vpack.c.bf16 %v2387, %v2386
    %v2406 = vpack.c.bf16 %v2389, %v2388
    %v2407 = vpack.c.bf16 %v2391, %v2390
    %v2408 = vpack.c.bf16 %v2393, %v2392
    %v2409 = vpack.c.bf16 %v2395, %v2394
    %v2410 = vpack.c.bf16 %v2397, %v2396
    %v2411 = vpack.c.bf16 %v2399, %v2398
    %v2412 = vpack.c.bf16 %v2401, %v2400
    %v2413 = vpack.c.bf16 %v2402, %v2402
    %v2414 = vld [vmem:[%s3] sm:$0xf]
    %v2415 = vld [vmem:[%s3 + $0x4] sm:$0xf]
    %v2416 = vld [vmem:[%s3 + $0x8] sm:$0xf]
    %v2417 = vld [vmem:[%s3 + $0xc] sm:$0xf]
    %v2418 = vld [vmem:[%s3 + $0x10] sm:$0xf]
    %v2419 = vld [vmem:[%s3 + $0x14] sm:$0xf]
    %v2420 = vld [vmem:[%s3 + $0x18] sm:$0xf]
    %v2421 = vld [vmem:[%s3 + $0x1c] sm:$0xf]
    %v2422 = vld [vmem:[%s4] sm:$0x1]
    %v2424 = vlaneseq
    %v2425 = vshrl.u32 %v2424, 7
    %v2426 = vsub.s32 0, %v2425
    %v2427 = vrot.slane %v2422, %v2426
    %v2437 = vunpack.c.l.b16 %v2414
    %v2438 = vunpack.c.l.b16 %v2415
    %v2439 = vunpack.c.l.b16 %v2416
    %v2440 = vunpack.c.l.b16 %v2417
    %v2441 = vunpack.c.l.b16 %v2418
    %v2442 = vunpack.c.l.b16 %v2419
    %v2443 = vunpack.c.l.b16 %v2420
    %v2444 = vunpack.c.l.b16 %v2421
    %v2445 = vpack.c.b16 %v2438, %v2437
    %v2446 = vpack.c.b16 %v2440, %v2439
    %v2447 = vpack.c.b16 %v2442, %v2441
    %v2448 = vpack.c.b16 %v2444, %v2443
    %v2454 = vsel %vm170, %v2403, 0
    %v2457 = vsel %vm170, %v2404, 0
    %v2460 = vsel %vm170, %v2405, 0
    %v2463 = vsel %vm170, %v2406, 0
    %v2466 = vsel %vm170, %v2407, 0
    %v2469 = vsel %vm170, %v2408, 0
    %v2472 = vsel %vm170, %v2409, 0
    %v2475 = vsel %vm170, %v2410, 0
    %v2478 = vsel %vm170, %v2411, 0
    %v2481 = vsel %vm170, %v2412, 0
    %v2484 = vsel %vm170, %v2413, 0
    %2486 = vmatprep.subr.bf16.mxu0 0
    %2487 = vmatpush1.bf16.msra.mxu0 0
    %2488 = vmatprep.subr.bf16.mxu0 0
    %2489 = vmatpush1.bf16.msra.mxu0 0
    %2490 = vmatprep.subr.bf16.mxu0 0
    %2491 = vmatpush1.bf16.msra.mxu0 0
    %2492 = vmatprep.subr.bf16.mxu0 0
    %2493 = vmatpush1.bf16.msra.mxu0 0
    %2494 = vmatprep.subr.bf16.mxu0 0
    %2495 = vmatpush1.bf16.msra.mxu0 %v2448
    %2496 = vmatprep.subr.bf16.mxu0 0
    %2497 = vmatpush1.bf16.msra.mxu0 %v2447
    %2498 = vmatprep.subr.bf16.mxu0 0
    %2499 = vmatpush1.bf16.msra.mxu0 %v2446
    %2500 = vmatprep.subr.bf16.mxu0 0
    %2501 = vmatpush1.bf16.msra.mxu0 %v2445
    %2502 = vmatprep.subr.bf16.mxu0 0
    %2503 = vmatpush2.bf16.msra.mxu0 0
    %2504 = vmatprep.subr.bf16.mxu0 0
    %2505 = vmatpush2.bf16.msra.mxu0 0
    %2506 = vmatprep.subr.bf16.mxu0 0
    %2507 = vmatpush2.bf16.msra.mxu0 0
    %2508 = vmatprep.subr.bf16.mxu0 0
    %2509 = vmatpush2.bf16.msra.mxu0 0
    %2510 = vmatprep.subr.bf16.mxu0 0
    %2511 = vmatpush2.bf16.msra.mxu0 0
    %2512 = vmatprep.subr.bf16.mxu0 0
    %2513 = vmatpush2.bf16.msra.mxu0 0
    %2514 = vmatprep.subr.bf16.mxu0 0
    %2515 = vmatpush2.bf16.msra.mxu0 0
    %2516 = vmatprep.subr.bf16.mxu0 0
    %2517 = vmatpush2.bf16.msra.mxu0 0
    %2518 = vmatprep.mubr.bf16.mxu0 0
    %2519 = vmatmul.mubr.bf16.gmra.mxu0 %v2454
    %v2520 = vpop.f32.mrf.mxu0
    %v2521 = vadd.f32 %v2427, %v2520
    %v2522 = vpop.f32.mrf.mxu0
    %v2523 = vpop.f32.mrf.mxu0
    %v2524 = vadd.f32 %v2427, %v2523
    %v2525 = vpop.f32.mrf.mxu0
    %2526 = vmatprep.mubr.bf16.mxu0 0
    %2527 = vmatmul.mubr.bf16.gmra.mxu0 %v2457
    %v2528 = vpop.f32.mrf.mxu0
    %v2529 = vadd.f32 %v2427, %v2528
    %v2530 = vpop.f32.mrf.mxu0
    %v2531 = vpop.f32.mrf.mxu0
    %v2532 = vadd.f32 %v2427, %v2531
    %v2533 = vpop.f32.mrf.mxu0
    %2534 = vmatprep.mubr.bf16.mxu0 0
    %2535 = vmatmul.mubr.bf16.gmra.mxu0 %v2460
    %v2536 = vpop.f32.mrf.mxu0
    %v2537 = vadd.f32 %v2427, %v2536
    %v2538 = vpop.f32.mrf.mxu0
    %v2539 = vpop.f32.mrf.mxu0
    %v2540 = vadd.f32 %v2427, %v2539
    %v2541 = vpop.f32.mrf.mxu0
    %2542 = vmatprep.mubr.bf16.mxu0 0
    %2543 = vmatmul.mubr.bf16.gmra.mxu0 %v2463
    %v2544 = vpop.f32.mrf.mxu0
    %v2545 = vadd.f32 %v2427, %v2544
    %v2546 = vpop.f32.mrf.mxu0
    %v2547 = vpop.f32.mrf.mxu0
    %v2548 = vadd.f32 %v2427, %v2547
    %v2549 = vpop.f32.mrf.mxu0
    %2550 = vmatprep.mubr.bf16.mxu0 0
    %2551 = vmatmul.mubr.bf16.gmra.mxu0 %v2466
    %v2552 = vpop.f32.mrf.mxu0
    %v2553 = vadd.f32 %v2427, %v2552
    %v2554 = vpop.f32.mrf.mxu0
    %v2555 = vpop.f32.mrf.mxu0
    %v2556 = vadd.f32 %v2427, %v2555
    %v2557 = vpop.f32.mrf.mxu0
    %2558 = vmatprep.mubr.bf16.mxu0 0
    %2559 = vmatmul.mubr.bf16.gmra.mxu0 %v2469
    %v2560 = vpop.f32.mrf.mxu0
    %v2561 = vadd.f32 %v2427, %v2560
    %v2562 = vpop.f32.mrf.mxu0
    %v2563 = vpop.f32.mrf.mxu0
    %v2564 = vadd.f32 %v2427, %v2563
    %v2565 = vpop.f32.mrf.mxu0
    %2566 = vmatprep.mubr.bf16.mxu0 0
    %2567 = vmatmul.mubr.bf16.gmra.mxu0 %v2472
    %v2568 = vpop.f32.mrf.mxu0
    %v2569 = vadd.f32 %v2427, %v2568
    %v2570 = vpop.f32.mrf.mxu0
    %v2571 = vpop.f32.mrf.mxu0
    %v2572 = vadd.f32 %v2427, %v2571
    %v2573 = vpop.f32.mrf.mxu0
    %2574 = vmatprep.mubr.bf16.mxu0 0
    %2575 = vmatmul.mubr.bf16.gmra.mxu0 %v2475
    %v2576 = vpop.f32.mrf.mxu0
    %v2577 = vadd.f32 %v2427, %v2576
    %v2578 = vpop.f32.mrf.mxu0
    %v2579 = vpop.f32.mrf.mxu0
    %v2580 = vadd.f32 %v2427, %v2579
    %v2581 = vpop.f32.mrf.mxu0
    %2582 = vmatprep.mubr.bf16.mxu0 0
    %2583 = vmatmul.mubr.bf16.gmra.mxu0 %v2478
    %v2584 = vpop.f32.mrf.mxu0
    %v2585 = vadd.f32 %v2427, %v2584
    %v2586 = vpop.f32.mrf.mxu0
    %v2587 = vpop.f32.mrf.mxu0
    %v2588 = vadd.f32 %v2427, %v2587
    %v2589 = vpop.f32.mrf.mxu0
    %2590 = vmatprep.mubr.bf16.mxu0 0
    %2591 = vmatmul.mubr.bf16.gmra.mxu0 %v2481
    %v2592 = vpop.f32.mrf.mxu0
    %v2593 = vadd.f32 %v2427, %v2592
    %v2594 = vpop.f32.mrf.mxu0
    %v2595 = vpop.f32.mrf.mxu0
    %v2596 = vadd.f32 %v2427, %v2595
    %v2597 = vpop.f32.mrf.mxu0
    %2598 = vmatprep.mubr.bf16.mxu0 0
    %2599 = vmatmul.mubr.bf16.gmra.mxu0 %v2484
    %v2600 = vpop.f32.mrf.mxu0
    %v2601 = vadd.f32 %v2427, %v2600
    %v2602 = vpop.f32.mrf.mxu0
    %v2603 = vpop.f32.mrf.mxu0
    %v2604 = vpop.f32.mrf.mxu0
    %2605 = vdwg.mxu0
    %v2606 = vmax.f32 %v2521, 0.0
    %v2607 = vmax.f32 %v2524, 0.0
    %v2608 = vmax.f32 %v2529, 0.0
    %v2609 = vmax.f32 %v2532, 0.0
    %v2610 = vmax.f32 %v2537, 0.0
    %v2611 = vmax.f32 %v2540, 0.0
    %v2612 = vmax.f32 %v2545, 0.0
    %v2613 = vmax.f32 %v2548, 0.0
    %v2614 = vmax.f32 %v2553, 0.0
    %v2615 = vmax.f32 %v2556, 0.0
    %v2616 = vmax.f32 %v2561, 0.0
    %v2617 = vmax.f32 %v2564, 0.0
    %v2618 = vmax.f32 %v2569, 0.0
    %v2619 = vmax.f32 %v2572, 0.0
    %v2620 = vmax.f32 %v2577, 0.0
    %v2621 = vmax.f32 %v2580, 0.0
    %v2622 = vmax.f32 %v2585, 0.0
    %v2623 = vmax.f32 %v2588, 0.0
    %v2624 = vmax.f32 %v2593, 0.0
    %v2625 = vmax.f32 %v2596, 0.0
    %v2626 = vmax.f32 %v2601, 0.0
    %v2627 = vpack.c.bf16 %v2607, %v2606
    %v2628 = vpack.c.bf16 %v2609, %v2608
    %v2629 = vpack.c.bf16 %v2611, %v2610
    %v2630 = vpack.c.bf16 %v2613, %v2612
    %v2631 = vpack.c.bf16 %v2615, %v2614
    %v2632 = vpack.c.bf16 %v2617, %v2616
    %v2633 = vpack.c.bf16 %v2619, %v2618
    %v2634 = vpack.c.bf16 %v2621, %v2620
    %v2635 = vpack.c.bf16 %v2623, %v2622
    %v2636 = vpack.c.bf16 %v2625, %v2624
    %v2637 = vpack.c.bf16 %v2626, %v2626
    %v2638 = vld [vmem:[%s5] sm:$0xf]
    %v2639 = vld [vmem:[%s5 + $0x4] sm:$0xf]
    %v2640 = vld [vmem:[%s5 + $0x8] sm:$0xf]
    %v2641 = vld [vmem:[%s5 + $0xc] sm:$0xf]
    %v2642 = vld [vmem:[%s5 + $0x10] sm:$0xf]
    %v2643 = vld [vmem:[%s5 + $0x14] sm:$0xf]
    %v2644 = vld [vmem:[%s5 + $0x18] sm:$0xf]
    %v2645 = vld [vmem:[%s5 + $0x1c] sm:$0xf]
    %v2646 = vld [vmem:[%s6] sm:$0x1]
    %v2648 = vlaneseq
    %v2649 = vshrl.u32 %v2648, 7
    %v2650 = vsub.s32 0, %v2649
    %v2651 = vrot.slane %v2646, %v2650
    %v2661 = vunpack.c.l.b16 %v2638
    %v2662 = vunpack.c.l.b16 %v2639
    %v2663 = vunpack.c.l.b16 %v2640
    %v2664 = vunpack.c.l.b16 %v2641
    %v2665 = vunpack.c.l.b16 %v2642
    %v2666 = vunpack.c.l.b16 %v2643
    %v2667 = vunpack.c.l.b16 %v2644
    %v2668 = vunpack.c.l.b16 %v2645
    %v2669 = vpack.c.b16 %v2662, %v2661
    %v2670 = vpack.c.b16 %v2664, %v2663
    %v2671 = vpack.c.b16 %v2666, %v2665
    %v2672 = vpack.c.b16 %v2668, %v2667
    %v2678 = vsel %vm170, %v2627, 0
    %v2681 = vsel %vm170, %v2628, 0
    %v2684 = vsel %vm170, %v2629, 0
    %v2687 = vsel %vm170, %v2630, 0
    %v2690 = vsel %vm170, %v2631, 0
    %v2693 = vsel %vm170, %v2632, 0
    %v2696 = vsel %vm170, %v2633, 0
    %v2699 = vsel %vm170, %v2634, 0
    %v2702 = vsel %vm170, %v2635, 0
    %v2705 = vsel %vm170, %v2636, 0
    %v2708 = vsel %vm170, %v2637, 0
    %2710 = vmatprep.subr.bf16.mxu0 0
    %2711 = vmatpush1.bf16.msra.mxu0 0
    %2712 = vmatprep.subr.bf16.mxu0 0
    %2713 = vmatpush1.bf16.msra.mxu0 0
    %2714 = vmatprep.subr.bf16.mxu0 0
    %2715 = vmatpush1.bf16.msra.mxu0 0
    %2716 = vmatprep.subr.bf16.mxu0 0
    %2717 = vmatpush1.bf16.msra.mxu0 0
    %2718 = vmatprep.subr.bf16.mxu0 0
    %2719 = vmatpush1.bf16.msra.mxu0 %v2672
    %2720 = vmatprep.subr.bf16.mxu0 0
    %2721 = vmatpush1.bf16.msra.mxu0 %v2671
    %2722 = vmatprep.subr.bf16.mxu0 0
    %2723 = vmatpush1.bf16.msra.mxu0 %v2670
    %2724 = vmatprep.subr.bf16.mxu0 0
    %2725 = vmatpush1.bf16.msra.mxu0 %v2669
    %2726 = vmatprep.subr.bf16.mxu0 0
    %2727 = vmatpush2.bf16.msra.mxu0 0
    %2728 = vmatprep.subr.bf16.mxu0 0
    %2729 = vmatpush2.bf16.msra.mxu0 0
    %2730 = vmatprep.subr.bf16.mxu0 0
    %2731 = vmatpush2.bf16.msra.mxu0 0
    %2732 = vmatprep.subr.bf16.mxu0 0
    %2733 = vmatpush2.bf16.msra.mxu0 0
    %2734 = vmatprep.subr.bf16.mxu0 0
    %2735 = vmatpush2.bf16.msra.mxu0 0
    %2736 = vmatprep.subr.bf16.mxu0 0
    %2737 = vmatpush2.bf16.msra.mxu0 0
    %2738 = vmatprep.subr.bf16.mxu0 0
    %2739 = vmatpush2.bf16.msra.mxu0 0
    %2740 = vmatprep.subr.bf16.mxu0 0
    %2741 = vmatpush2.bf16.msra.mxu0 0
    %2742 = vmatprep.mubr.bf16.mxu0 0
    %2743 = vmatmul.mubr.bf16.gmra.mxu0 %v2678
    %v2744 = vpop.f32.mrf.mxu0
    %v2745 = vadd.f32 %v2651, %v2744
    %v2746 = vpop.f32.mrf.mxu0
    %v2747 = vpop.f32.mrf.mxu0
    %v2748 = vadd.f32 %v2651, %v2747
    %v2749 = vpop.f32.mrf.mxu0
    %2750 = vmatprep.mubr.bf16.mxu0 0
    %2751 = vmatmul.mubr.bf16.gmra.mxu0 %v2681
    %v2752 = vpop.f32.mrf.mxu0
    %v2753 = vadd.f32 %v2651, %v2752
    %v2754 = vpop.f32.mrf.mxu0
    %v2755 = vpop.f32.mrf.mxu0
    %v2756 = vadd.f32 %v2651, %v2755
    %v2757 = vpop.f32.mrf.mxu0
    %2758 = vmatprep.mubr.bf16.mxu0 0
    %2759 = vmatmul.mubr.bf16.gmra.mxu0 %v2684
    %v2760 = vpop.f32.mrf.mxu0
    %v2761 = vadd.f32 %v2651, %v2760
    %v2762 = vpop.f32.mrf.mxu0
    %v2763 = vpop.f32.mrf.mxu0
    %v2764 = vadd.f32 %v2651, %v2763
    %v2765 = vpop.f32.mrf.mxu0
    %2766 = vmatprep.mubr.bf16.mxu0 0
    %2767 = vmatmul.mubr.bf16.gmra.mxu0 %v2687
    %v2768 = vpop.f32.mrf.mxu0
    %v2769 = vadd.f32 %v2651, %v2768
    %v2770 = vpop.f32.mrf.mxu0
    %v2771 = vpop.f32.mrf.mxu0
    %v2772 = vadd.f32 %v2651, %v2771
    %v2773 = vpop.f32.mrf.mxu0
    %2774 = vmatprep.mubr.bf16.mxu0 0
    %2775 = vmatmul.mubr.bf16.gmra.mxu0 %v2690
    %v2776 = vpop.f32.mrf.mxu0
    %v2777 = vadd.f32 %v2651, %v2776
    %v2778 = vpop.f32.mrf.mxu0
    %v2779 = vpop.f32.mrf.mxu0
    %v2780 = vadd.f32 %v2651, %v2779
    %v2781 = vpop.f32.mrf.mxu0
    %2782 = vmatprep.mubr.bf16.mxu0 0
    %2783 = vmatmul.mubr.bf16.gmra.mxu0 %v2693
    %v2784 = vpop.f32.mrf.mxu0
    %v2785 = vadd.f32 %v2651, %v2784
    %v2786 = vpop.f32.mrf.mxu0
    %v2787 = vpop.f32.mrf.mxu0
    %v2788 = vadd.f32 %v2651, %v2787
    %v2789 = vpop.f32.mrf.mxu0
    %2790 = vmatprep.mubr.bf16.mxu0 0
    %2791 = vmatmul.mubr.bf16.gmra.mxu0 %v2696
    %v2792 = vpop.f32.mrf.mxu0
    %v2793 = vadd.f32 %v2651, %v2792
    %v2794 = vpop.f32.mrf.mxu0
    %v2795 = vpop.f32.mrf.mxu0
    %v2796 = vadd.f32 %v2651, %v2795
    %v2797 = vpop.f32.mrf.mxu0
    %2798 = vmatprep.mubr.bf16.mxu0 0
    %2799 = vmatmul.mubr.bf16.gmra.mxu0 %v2699
    %v2800 = vpop.f32.mrf.mxu0
    %v2801 = vadd.f32 %v2651, %v2800
    %v2802 = vpop.f32.mrf.mxu0
    %v2803 = vpop.f32.mrf.mxu0
    %v2804 = vadd.f32 %v2651, %v2803
    %v2805 = vpop.f32.mrf.mxu0
    %2806 = vmatprep.mubr.bf16.mxu0 0
    %2807 = vmatmul.mubr.bf16.gmra.mxu0 %v2702
    %v2808 = vpop.f32.mrf.mxu0
    %v2809 = vadd.f32 %v2651, %v2808
    %v2810 = vpop.f32.mrf.mxu0
    %v2811 = vpop.f32.mrf.mxu0
    %v2812 = vadd.f32 %v2651, %v2811
    %v2813 = vpop.f32.mrf.mxu0
    %2814 = vmatprep.mubr.bf16.mxu0 0
    %2815 = vmatmul.mubr.bf16.gmra.mxu0 %v2705
    %v2816 = vpop.f32.mrf.mxu0
    %v2817 = vadd.f32 %v2651, %v2816
    %v2818 = vpop.f32.mrf.mxu0
    %v2819 = vpop.f32.mrf.mxu0
    %v2820 = vadd.f32 %v2651, %v2819
    %v2821 = vpop.f32.mrf.mxu0
    %2822 = vmatprep.mubr.bf16.mxu0 0
    %2823 = vmatmul.mubr.bf16.gmra.mxu0 %v2708
    %v2824 = vpop.f32.mrf.mxu0
    %v2825 = vadd.f32 %v2651, %v2824
    %v2826 = vpop.f32.mrf.mxu0
    %v2827 = vpop.f32.mrf.mxu0
    %v2828 = vpop.f32.mrf.mxu0
    %2829 = vdwg.mxu0
    %v2830 = vadd.f32 %v2745, %v2382
    %v2831 = vadd.f32 %v2748, %v2383
    %v2832 = vadd.f32 %v2753, %v2384
    %v2833 = vadd.f32 %v2756, %v2385
    %v2834 = vadd.f32 %v2761, %v2386
    %v2835 = vadd.f32 %v2764, %v2387
    %v2836 = vadd.f32 %v2769, %v2388
    %v2837 = vadd.f32 %v2772, %v2389
    %v2838 = vadd.f32 %v2777, %v2390
    %v2839 = vadd.f32 %v2780, %v2391
    %v2840 = vadd.f32 %v2785, %v2392
    %v2841 = vadd.f32 %v2788, %v2393
    %v2842 = vadd.f32 %v2793, %v2394
    %v2843 = vadd.f32 %v2796, %v2395
    %v2844 = vadd.f32 %v2801, %v2396
    %v2845 = vadd.f32 %v2804, %v2397
    %v2846 = vadd.f32 %v2809, %v2398
    %v2847 = vadd.f32 %v2812, %v2399
    %v2848 = vadd.f32 %v2817, %v2400
    %v2849 = vadd.f32 %v2820, %v2401
    %v2850 = vadd.f32 %v2825, %v2402
    %v2851 = vmax.f32 %v2830, 0.0
    %v2852 = vmax.f32 %v2831, 0.0
    %v2853 = vmax.f32 %v2832, 0.0
    %v2854 = vmax.f32 %v2833, 0.0
    %v2855 = vmax.f32 %v2834, 0.0
    %v2856 = vmax.f32 %v2835, 0.0
    %v2857 = vmax.f32 %v2836, 0.0
    %v2858 = vmax.f32 %v2837, 0.0
    %v2859 = vmax.f32 %v2838, 0.0
    %v2860 = vmax.f32 %v2839, 0.0
    %v2861 = vmax.f32 %v2840, 0.0
    %v2862 = vmax.f32 %v2841, 0.0
    %v2863 = vmax.f32 %v2842, 0.0
    %v2864 = vmax.f32 %v2843, 0.0
    %v2865 = vmax.f32 %v2844, 0.0
    %v2866 = vmax.f32 %v2845, 0.0
    %v2867 = vmax.f32 %v2846, 0.0
    %v2868 = vmax.f32 %v2847, 0.0
    %v2869 = vmax.f32 %v2848, 0.0
    %v2870 = vmax.f32 %v2849, 0.0
    %v2871 = vmax.f32 %v2850, 0.0
    %v2872 = vld [vmem:[%s7] sm:$0xff]
    %v2873 = vld [vmem:[%s7 + $0x8] sm:$0xff]
    %v2874 = vld [vmem:[%s7 + $0x10] sm:$0xff]
    %v2875 = vld [vmem:[%s7 + $0x18] sm:$0xff]
    %v2876 = vld [vmem:[%s7 + $0x20] sm:$0xff]
    %v2877 = vld [vmem:[%s7 + $0x28] sm:$0xff]
    %v2878 = vld [vmem:[%s7 + $0x30] sm:$0xff]
    %v2879 = vld [vmem:[%s7 + $0x38] sm:$0xff]
    %v2880 = vld [vmem:[%s10] sm:$0x1]
    %v2882 = vlaneseq
    %v2883 = vshrl.u32 %v2882, 7
    %v2884 = vsub.s32 0, %v2883
    %v2885 = vrot.slane %v2880, %v2884
    %v2888 = vsel %vm170, %v2851, 0
    %v2891 = vsel %vm170, %v2852, 0
    %v2894 = vsel %vm170, %v2853, 0
    %v2897 = vsel %vm170, %v2854, 0
    %v2900 = vsel %vm170, %v2855, 0
    %v2903 = vsel %vm170, %v2856, 0
    %v2906 = vsel %vm170, %v2857, 0
    %v2909 = vsel %vm170, %v2858, 0
    %v2912 = vsel %vm170, %v2859, 0
    %v2915 = vsel %vm170, %v2860, 0
    %v2918 = vsel %vm170, %v2861, 0
    %v2921 = vsel %vm170, %v2862, 0
    %v2924 = vsel %vm170, %v2863, 0
    %v2927 = vsel %vm170, %v2864, 0
    %v2930 = vsel %vm170, %v2865, 0
    %v2933 = vsel %vm170, %v2866, 0
    %v2936 = vsel %vm170, %v2867, 0
    %v2939 = vsel %vm170, %v2868, 0
    %v2942 = vsel %vm170, %v2869, 0
    %v2945 = vsel %vm170, %v2870, 0
    %v2948 = vsel %vm170, %v2871, 0
    %2950 = vmatprep.subr.mxu0 0.0
    %2951 = vmatpush1.msra.mxu0 0.0
    %2952 = vmatprep.subr.mxu0 0.0
    %2953 = vmatpush1.msra.mxu0 0.0
    %2954 = vmatprep.subr.mxu0 0.0
    %2955 = vmatpush1.msra.mxu0 0.0
    %2956 = vmatprep.subr.mxu0 0.0
    %2957 = vmatpush1.msra.mxu0 0.0
    %2958 = vmatprep.subr.mxu0 0.0
    %2959 = vmatpush1.msra.mxu0 0.0
    %2960 = vmatprep.subr.mxu0 0.0
    %2961 = vmatpush1.msra.mxu0 0.0
    %2962 = vmatprep.subr.mxu0 0.0
    %2963 = vmatpush1.msra.mxu0 0.0
    %2964 = vmatprep.subr.mxu0 0.0
    %2965 = vmatpush1.msra.mxu0 0.0
    %2966 = vmatprep.subr.mxu0 0.0
    %2967 = vmatpush1.msra.mxu0 %v2879
    %2968 = vmatprep.subr.mxu0 0.0
    %2969 = vmatpush1.msra.mxu0 %v2878
    %2970 = vmatprep.subr.mxu0 0.0
    %2971 = vmatpush1.msra.mxu0 %v2877
    %2972 = vmatprep.subr.mxu0 0.0
    %2973 = vmatpush1.msra.mxu0 %v2876
    %2974 = vmatprep.subr.mxu0 0.0
    %2975 = vmatpush1.msra.mxu0 %v2875
    %2976 = vmatprep.subr.mxu0 0.0
    %2977 = vmatpush1.msra.mxu0 %v2874
    %2978 = vmatprep.subr.mxu0 0.0
    %2979 = vmatpush1.msra.mxu0 %v2873
    %2980 = vmatprep.subr.mxu0 0.0
    %2981 = vmatpush1.msra.mxu0 %v2872
    %2982 = vmatprep.subr.mxu0 0.0
    %2983 = vmatpush2.msra.mxu0 0.0
    %2984 = vmatprep.subr.mxu0 0.0
    %2985 = vmatpush2.msra.mxu0 0.0
    %2986 = vmatprep.subr.mxu0 0.0
    %2987 = vmatpush2.msra.mxu0 0.0
    %2988 = vmatprep.subr.mxu0 0.0
    %2989 = vmatpush2.msra.mxu0 0.0
    %2990 = vmatprep.subr.mxu0 0.0
    %2991 = vmatpush2.msra.mxu0 0.0
    %2992 = vmatprep.subr.mxu0 0.0
    %2993 = vmatpush2.msra.mxu0 0.0
    %2994 = vmatprep.subr.mxu0 0.0
    %2995 = vmatpush2.msra.mxu0 0.0
    %2996 = vmatprep.subr.mxu0 0.0
    %2997 = vmatpush2.msra.mxu0 0.0
    %2998 = vmatprep.subr.mxu0 0.0
    %2999 = vmatpush2.msra.mxu0 0.0
    %3000 = vmatprep.subr.mxu0 0.0
    %3001 = vmatpush2.msra.mxu0 0.0
    %3002 = vmatprep.subr.mxu0 0.0
    %3003 = vmatpush2.msra.mxu0 0.0
    %3004 = vmatprep.subr.mxu0 0.0
    %3005 = vmatpush2.msra.mxu0 0.0
    %3006 = vmatprep.subr.mxu0 0.0
    %3007 = vmatpush2.msra.mxu0 0.0
    %3008 = vmatprep.subr.mxu0 0.0
    %3009 = vmatpush2.msra.mxu0 0.0
    %3010 = vmatprep.subr.mxu0 0.0
    %3011 = vmatpush2.msra.mxu0 0.0
    %3012 = vmatprep.subr.mxu0 0.0
    %3013 = vmatpush2.msra.mxu0 0.0
    %3014 = vmatprep.mubr.f32.mxu0 0.0
    %3015 = vmatmul.mubr.f32.gmra.mxu0 %v2888
    %v3016 = vpop.f32.mrf.mxu0
    %v3017 = vadd.f32 %v2885, %v3016
    %v3018 = vpop.f32.mrf.mxu0
    %3019 = vmatprep.mubr.f32.mxu0 0.0
    %3020 = vmatmul.mubr.f32.gmra.mxu0 %v2891
    %v3021 = vpop.f32.mrf.mxu0
    %v3022 = vadd.f32 %v2885, %v3021
    %v3023 = vpop.f32.mrf.mxu0
    %3024 = vmatprep.mubr.f32.mxu0 0.0
    %3025 = vmatmul.mubr.f32.gmra.mxu0 %v2894
    %v3026 = vpop.f32.mrf.mxu0
    %v3027 = vadd.f32 %v2885, %v3026
    %v3028 = vpop.f32.mrf.mxu0
    %3029 = vmatprep.mubr.f32.mxu0 0.0
    %3030 = vmatmul.mubr.f32.gmra.mxu0 %v2897
    %v3031 = vpop.f32.mrf.mxu0
    %v3032 = vadd.f32 %v2885, %v3031
    %v3033 = vpop.f32.mrf.mxu0
    %3034 = vmatprep.mubr.f32.mxu0 0.0
    %3035 = vmatmul.mubr.f32.gmra.mxu0 %v2900
    %v3036 = vpop.f32.mrf.mxu0
    %v3037 = vadd.f32 %v2885, %v3036
    %v3038 = vpop.f32.mrf.mxu0
    %3039 = vmatprep.mubr.f32.mxu0 0.0
    %3040 = vmatmul.mubr.f32.gmra.mxu0 %v2903
    %v3041 = vpop.f32.mrf.mxu0
    %v3042 = vadd.f32 %v2885, %v3041
    %v3043 = vpop.f32.mrf.mxu0
    %3044 = vmatprep.mubr.f32.mxu0 0.0
    %3045 = vmatmul.mubr.f32.gmra.mxu0 %v2906
    %v3046 = vpop.f32.mrf.mxu0
    %v3047 = vadd.f32 %v2885, %v3046
    %v3048 = vpop.f32.mrf.mxu0
    %3049 = vmatprep.mubr.f32.mxu0 0.0
    %3050 = vmatmul.mubr.f32.gmra.mxu0 %v2909
    %v3051 = vpop.f32.mrf.mxu0
    %v3052 = vadd.f32 %v2885, %v3051
    %v3053 = vpop.f32.mrf.mxu0
    %3054 = vmatprep.mubr.f32.mxu0 0.0
    %3055 = vmatmul.mubr.f32.gmra.mxu0 %v2912
    %v3056 = vpop.f32.mrf.mxu0
    %v3057 = vadd.f32 %v2885, %v3056
    %v3058 = vpop.f32.mrf.mxu0
    %3059 = vmatprep.mubr.f32.mxu0 0.0
    %3060 = vmatmul.mubr.f32.gmra.mxu0 %v2915
    %v3061 = vpop.f32.mrf.mxu0
    %v3062 = vadd.f32 %v2885, %v3061
    %v3063 = vpop.f32.mrf.mxu0
    %3064 = vmatprep.mubr.f32.mxu0 0.0
    %3065 = vmatmul.mubr.f32.gmra.mxu0 %v2918
    %v3066 = vpop.f32.mrf.mxu0
    %v3067 = vadd.f32 %v2885, %v3066
    %v3068 = vpop.f32.mrf.mxu0
    %3069 = vmatprep.mubr.f32.mxu0 0.0
    %3070 = vmatmul.mubr.f32.gmra.mxu0 %v2921
    %v3071 = vpop.f32.mrf.mxu0
    %v3072 = vadd.f32 %v2885, %v3071
    %v3073 = vpop.f32.mrf.mxu0
    %3074 = vmatprep.mubr.f32.mxu0 0.0
    %3075 = vmatmul.mubr.f32.gmra.mxu0 %v2924
    %v3076 = vpop.f32.mrf.mxu0
    %v3077 = vadd.f32 %v2885, %v3076
    %v3078 = vpop.f32.mrf.mxu0
    %3079 = vmatprep.mubr.f32.mxu0 0.0
    %3080 = vmatmul.mubr.f32.gmra.mxu0 %v2927
    %v3081 = vpop.f32.mrf.mxu0
    %v3082 = vadd.f32 %v2885, %v3081
    %v3083 = vpop.f32.mrf.mxu0
    %3084 = vmatprep.mubr.f32.mxu0 0.0
    %3085 = vmatmul.mubr.f32.gmra.mxu0 %v2930
    %v3086 = vpop.f32.mrf.mxu0
    %v3087 = vadd.f32 %v2885, %v3086
    %v3088 = vpop.f32.mrf.mxu0
    %3089 = vmatprep.mubr.f32.mxu0 0.0
    %3090 = vmatmul.mubr.f32.gmra.mxu0 %v2933
    %v3091 = vpop.f32.mrf.mxu0
    %v3092 = vadd.f32 %v2885, %v3091
    %v3093 = vpop.f32.mrf.mxu0
    %3094 = vmatprep.mubr.f32.mxu0 0.0
    %3095 = vmatmul.mubr.f32.gmra.mxu0 %v2936
    %v3096 = vpop.f32.mrf.mxu0
    %v3097 = vadd.f32 %v2885, %v3096
    %v3098 = vpop.f32.mrf.mxu0
    %3099 = vmatprep.mubr.f32.mxu0 0.0
    %3100 = vmatmul.mubr.f32.gmra.mxu0 %v2939
    %v3101 = vpop.f32.mrf.mxu0
    %v3102 = vadd.f32 %v2885, %v3101
    %v3103 = vpop.f32.mrf.mxu0
    %3104 = vmatprep.mubr.f32.mxu0 0.0
    %3105 = vmatmul.mubr.f32.gmra.mxu0 %v2942
    %v3106 = vpop.f32.mrf.mxu0
    %v3107 = vadd.f32 %v2885, %v3106
    %v3108 = vpop.f32.mrf.mxu0
    %3109 = vmatprep.mubr.f32.mxu0 0.0
    %3110 = vmatmul.mubr.f32.gmra.mxu0 %v2945
    %v3111 = vpop.f32.mrf.mxu0
    %v3112 = vadd.f32 %v2885, %v3111
    %v3113 = vpop.f32.mrf.mxu0
    %3114 = vmatprep.mubr.f32.mxu0 0.0
    %3115 = vmatmul.mubr.f32.gmra.mxu0 %v2948
    %v3116 = vpop.f32.mrf.mxu0
    %v3117 = vadd.f32 %v2885, %v3116
    %v3118 = vpop.f32.mrf.mxu0
    %3119 = vdwg.mxu0
    %v3120 = vld [vmem:[%s8] sm:$0xff]
    %v3121 = vld [vmem:[%s8 + $0x8] sm:$0xff]
    %v3122 = vld [vmem:[%s8 + $0x10] sm:$0xff]
    %v3123 = vld [vmem:[%s8 + $0x18] sm:$0xff]
    %v3124 = vld [vmem:[%s8 + $0x20] sm:$0xff]
    %v3125 = vld [vmem:[%s8 + $0x28] sm:$0xff]
    %v3126 = vld [vmem:[%s8 + $0x30] sm:$0xff]
    %v3127 = vld [vmem:[%s8 + $0x38] sm:$0xff]
    %v3128 = vld [vmem:[%s11] sm:$0x1]
    %v3130 = vlaneseq
    %v3131 = vshrl.u32 %v3130, 7
    %v3132 = vsub.s32 0, %v3131
    %v3133 = vrot.slane %v3128, %v3132
    %3135 = vmatprep.subr.mxu0 0.0
    %3136 = vmatpush1.msra.mxu0 0.0
    %3137 = vmatprep.subr.mxu0 0.0
    %3138 = vmatpush1.msra.mxu0 0.0
    %3139 = vmatprep.subr.mxu0 0.0
    %3140 = vmatpush1.msra.mxu0 0.0
    %3141 = vmatprep.subr.mxu0 0.0
    %3142 = vmatpush1.msra.mxu0 0.0
    %3143 = vmatprep.subr.mxu0 0.0
    %3144 = vmatpush1.msra.mxu0 0.0
    %3145 = vmatprep.subr.mxu0 0.0
    %3146 = vmatpush1.msra.mxu0 0.0
    %3147 = vmatprep.subr.mxu0 0.0
    %3148 = vmatpush1.msra.mxu0 0.0
    %3149 = vmatprep.subr.mxu0 0.0
    %3150 = vmatpush1.msra.mxu0 0.0
    %3151 = vmatprep.subr.mxu0 0.0
    %3152 = vmatpush1.msra.mxu0 %v3127
    %3153 = vmatprep.subr.mxu0 0.0
    %3154 = vmatpush1.msra.mxu0 %v3126
    %3155 = vmatprep.subr.mxu0 0.0
    %3156 = vmatpush1.msra.mxu0 %v3125
    %3157 = vmatprep.subr.mxu0 0.0
    %3158 = vmatpush1.msra.mxu0 %v3124
    %3159 = vmatprep.subr.mxu0 0.0
    %3160 = vmatpush1.msra.mxu0 %v3123
    %3161 = vmatprep.subr.mxu0 0.0
    %3162 = vmatpush1.msra.mxu0 %v3122
    %3163 = vmatprep.subr.mxu0 0.0
    %3164 = vmatpush1.msra.mxu0 %v3121
    %3165 = vmatprep.subr.mxu0 0.0
    %3166 = vmatpush1.msra.mxu0 %v3120
    %3167 = vmatprep.subr.mxu0 0.0
    %3168 = vmatpush2.msra.mxu0 0.0
    %3169 = vmatprep.subr.mxu0 0.0
    %3170 = vmatpush2.msra.mxu0 0.0
    %3171 = vmatprep.subr.mxu0 0.0
    %3172 = vmatpush2.msra.mxu0 0.0
    %3173 = vmatprep.subr.mxu0 0.0
    %3174 = vmatpush2.msra.mxu0 0.0
    %3175 = vmatprep.subr.mxu0 0.0
    %3176 = vmatpush2.msra.mxu0 0.0
    %3177 = vmatprep.subr.mxu0 0.0
    %3178 = vmatpush2.msra.mxu0 0.0
    %3179 = vmatprep.subr.mxu0 0.0
    %3180 = vmatpush2.msra.mxu0 0.0
    %3181 = vmatprep.subr.mxu0 0.0
    %3182 = vmatpush2.msra.mxu0 0.0
    %3183 = vmatprep.subr.mxu0 0.0
    %3184 = vmatpush2.msra.mxu0 0.0
    %3185 = vmatprep.subr.mxu0 0.0
    %3186 = vmatpush2.msra.mxu0 0.0
    %3187 = vmatprep.subr.mxu0 0.0
    %3188 = vmatpush2.msra.mxu0 0.0
    %3189 = vmatprep.subr.mxu0 0.0
    %3190 = vmatpush2.msra.mxu0 0.0
    %3191 = vmatprep.subr.mxu0 0.0
    %3192 = vmatpush2.msra.mxu0 0.0
    %3193 = vmatprep.subr.mxu0 0.0
    %3194 = vmatpush2.msra.mxu0 0.0
    %3195 = vmatprep.subr.mxu0 0.0
    %3196 = vmatpush2.msra.mxu0 0.0
    %3197 = vmatprep.subr.mxu0 0.0
    %3198 = vmatpush2.msra.mxu0 0.0
    %3199 = vmatprep.mubr.f32.mxu0 0.0
    %3200 = vmatmul.mubr.f32.gmra.mxu0 %v2888
    %v3201 = vpop.f32.mrf.mxu0
    %v3202 = vadd.f32 %v3133, %v3201
    %v3203 = vpop.f32.mrf.mxu0
    %3204 = vmatprep.mubr.f32.mxu0 0.0
    %3205 = vmatmul.mubr.f32.gmra.mxu0 %v2891
    %v3206 = vpop.f32.mrf.mxu0
    %v3207 = vadd.f32 %v3133, %v3206
    %v3208 = vpop.f32.mrf.mxu0
    %3209 = vmatprep.mubr.f32.mxu0 0.0
    %3210 = vmatmul.mubr.f32.gmra.mxu0 %v2894
    %v3211 = vpop.f32.mrf.mxu0
    %v3212 = vadd.f32 %v3133, %v3211
    %v3213 = vpop.f32.mrf.mxu0
    %3214 = vmatprep.mubr.f32.mxu0 0.0
    %3215 = vmatmul.mubr.f32.gmra.mxu0 %v2897
    %v3216 = vpop.f32.mrf.mxu0
    %v3217 = vadd.f32 %v3133, %v3216
    %v3218 = vpop.f32.mrf.mxu0
    %3219 = vmatprep.mubr.f32.mxu0 0.0
    %3220 = vmatmul.mubr.f32.gmra.mxu0 %v2900
    %v3221 = vpop.f32.mrf.mxu0
    %v3222 = vadd.f32 %v3133, %v3221
    %v3223 = vpop.f32.mrf.mxu0
    %3224 = vmatprep.mubr.f32.mxu0 0.0
    %3225 = vmatmul.mubr.f32.gmra.mxu0 %v2903
    %v3226 = vpop.f32.mrf.mxu0
    %v3227 = vadd.f32 %v3133, %v3226
    %v3228 = vpop.f32.mrf.mxu0
    %3229 = vmatprep.mubr.f32.mxu0 0.0
    %3230 = vmatmul.mubr.f32.gmra.mxu0 %v2906
    %v3231 = vpop.f32.mrf.mxu0
    %v3232 = vadd.f32 %v3133, %v3231
    %v3233 = vpop.f32.mrf.mxu0
    %3234 = vmatprep.mubr.f32.mxu0 0.0
    %3235 = vmatmul.mubr.f32.gmra.mxu0 %v2909
    %v3236 = vpop.f32.mrf.mxu0
    %v3237 = vadd.f32 %v3133, %v3236
    %v3238 = vpop.f32.mrf.mxu0
    %3239 = vmatprep.mubr.f32.mxu0 0.0
    %3240 = vmatmul.mubr.f32.gmra.mxu0 %v2912
    %v3241 = vpop.f32.mrf.mxu0
    %v3242 = vadd.f32 %v3133, %v3241
    %v3243 = vpop.f32.mrf.mxu0
    %3244 = vmatprep.mubr.f32.mxu0 0.0
    %3245 = vmatmul.mubr.f32.gmra.mxu0 %v2915
    %v3246 = vpop.f32.mrf.mxu0
    %v3247 = vadd.f32 %v3133, %v3246
    %v3248 = vpop.f32.mrf.mxu0
    %3249 = vmatprep.mubr.f32.mxu0 0.0
    %3250 = vmatmul.mubr.f32.gmra.mxu0 %v2918
    %v3251 = vpop.f32.mrf.mxu0
    %v3252 = vadd.f32 %v3133, %v3251
    %v3253 = vpop.f32.mrf.mxu0
    %3254 = vmatprep.mubr.f32.mxu0 0.0
    %3255 = vmatmul.mubr.f32.gmra.mxu0 %v2921
    %v3256 = vpop.f32.mrf.mxu0
    %v3257 = vadd.f32 %v3133, %v3256
    %v3258 = vpop.f32.mrf.mxu0
    %3259 = vmatprep.mubr.f32.mxu0 0.0
    %3260 = vmatmul.mubr.f32.gmra.mxu0 %v2924
    %v3261 = vpop.f32.mrf.mxu0
    %v3262 = vadd.f32 %v3133, %v3261
    %v3263 = vpop.f32.mrf.mxu0
    %3264 = vmatprep.mubr.f32.mxu0 0.0
    %3265 = vmatmul.mubr.f32.gmra.mxu0 %v2927
    %v3266 = vpop.f32.mrf.mxu0
    %v3267 = vadd.f32 %v3133, %v3266
    %v3268 = vpop.f32.mrf.mxu0
    %3269 = vmatprep.mubr.f32.mxu0 0.0
    %3270 = vmatmul.mubr.f32.gmra.mxu0 %v2930
    %v3271 = vpop.f32.mrf.mxu0
    %v3272 = vadd.f32 %v3133, %v3271
    %v3273 = vpop.f32.mrf.mxu0
    %3274 = vmatprep.mubr.f32.mxu0 0.0
    %3275 = vmatmul.mubr.f32.gmra.mxu0 %v2933
    %v3276 = vpop.f32.mrf.mxu0
    %v3277 = vadd.f32 %v3133, %v3276
    %v3278 = vpop.f32.mrf.mxu0
    %3279 = vmatprep.mubr.f32.mxu0 0.0
    %3280 = vmatmul.mubr.f32.gmra.mxu0 %v2936
    %v3281 = vpop.f32.mrf.mxu0
    %v3282 = vadd.f32 %v3133, %v3281
    %v3283 = vpop.f32.mrf.mxu0
    %3284 = vmatprep.mubr.f32.mxu0 0.0
    %3285 = vmatmul.mubr.f32.gmra.mxu0 %v2939
    %v3286 = vpop.f32.mrf.mxu0
    %v3287 = vadd.f32 %v3133, %v3286
    %v3288 = vpop.f32.mrf.mxu0
    %3289 = vmatprep.mubr.f32.mxu0 0.0
    %3290 = vmatmul.mubr.f32.gmra.mxu0 %v2942
    %v3291 = vpop.f32.mrf.mxu0
    %v3292 = vadd.f32 %v3133, %v3291
    %v3293 = vpop.f32.mrf.mxu0
    %3294 = vmatprep.mubr.f32.mxu0 0.0
    %3295 = vmatmul.mubr.f32.gmra.mxu0 %v2945
    %v3296 = vpop.f32.mrf.mxu0
    %v3297 = vadd.f32 %v3133, %v3296
    %v3298 = vpop.f32.mrf.mxu0
    %3299 = vmatprep.mubr.f32.mxu0 0.0
    %3300 = vmatmul.mubr.f32.gmra.mxu0 %v2948
    %v3301 = vpop.f32.mrf.mxu0
    %v3302 = vadd.f32 %v3133, %v3301
    %v3303 = vpop.f32.mrf.mxu0
    %3304 = vdwg.mxu0
    %v3305 = vld [vmem:[%s9] sm:$0xff]
    %v3306 = vld [vmem:[%s9 + $0x8] sm:$0xff]
    %v3307 = vld [vmem:[%s9 + $0x10] sm:$0xff]
    %v3308 = vld [vmem:[%s9 + $0x18] sm:$0xff]
    %v3309 = vld [vmem:[%s9 + $0x20] sm:$0xff]
    %v3310 = vld [vmem:[%s9 + $0x28] sm:$0xff]
    %v3311 = vld [vmem:[%s9 + $0x30] sm:$0xff]
    %v3312 = vld [vmem:[%s9 + $0x38] sm:$0xff]
    %v3313 = vld [vmem:[%s12] sm:$0x1]
    %v3315 = vlaneseq
    %v3316 = vshrl.u32 %v3315, 7
    %v3317 = vsub.s32 0, %v3316
    %v3318 = vrot.slane %v3313, %v3317
    %3320 = vmatprep.subr.mxu0 0.0
    %3321 = vmatpush1.msra.mxu0 0.0
    %3322 = vmatprep.subr.mxu0 0.0
    %3323 = vmatpush1.msra.mxu0 0.0
    %3324 = vmatprep.subr.mxu0 0.0
    %3325 = vmatpush1.msra.mxu0 0.0
    %3326 = vmatprep.subr.mxu0 0.0
    %3327 = vmatpush1.msra.mxu0 0.0
    %3328 = vmatprep.subr.mxu0 0.0
    %3329 = vmatpush1.msra.mxu0 0.0
    %3330 = vmatprep.subr.mxu0 0.0
    %3331 = vmatpush1.msra.mxu0 0.0
    %3332 = vmatprep.subr.mxu0 0.0
    %3333 = vmatpush1.msra.mxu0 0.0
    %3334 = vmatprep.subr.mxu0 0.0
    %3335 = vmatpush1.msra.mxu0 0.0
    %3336 = vmatprep.subr.mxu0 0.0
    %3337 = vmatpush1.msra.mxu0 %v3312
    %3338 = vmatprep.subr.mxu0 0.0
    %3339 = vmatpush1.msra.mxu0 %v3311
    %3340 = vmatprep.subr.mxu0 0.0
    %3341 = vmatpush1.msra.mxu0 %v3310
    %3342 = vmatprep.subr.mxu0 0.0
    %3343 = vmatpush1.msra.mxu0 %v3309
    %3344 = vmatprep.subr.mxu0 0.0
    %3345 = vmatpush1.msra.mxu0 %v3308
    %3346 = vmatprep.subr.mxu0 0.0
    %3347 = vmatpush1.msra.mxu0 %v3307
    %3348 = vmatprep.subr.mxu0 0.0
    %3349 = vmatpush1.msra.mxu0 %v3306
    %3350 = vmatprep.subr.mxu0 0.0
    %3351 = vmatpush1.msra.mxu0 %v3305
    %3352 = vmatprep.subr.mxu0 0.0
    %3353 = vmatpush2.msra.mxu0 0.0
    %3354 = vmatprep.subr.mxu0 0.0
    %3355 = vmatpush2.msra.mxu0 0.0
    %3356 = vmatprep.subr.mxu0 0.0
    %3357 = vmatpush2.msra.mxu0 0.0
    %3358 = vmatprep.subr.mxu0 0.0
    %3359 = vmatpush2.msra.mxu0 0.0
    %3360 = vmatprep.subr.mxu0 0.0
    %3361 = vmatpush2.msra.mxu0 0.0
    %3362 = vmatprep.subr.mxu0 0.0
    %3363 = vmatpush2.msra.mxu0 0.0
    %3364 = vmatprep.subr.mxu0 0.0
    %3365 = vmatpush2.msra.mxu0 0.0
    %3366 = vmatprep.subr.mxu0 0.0
    %3367 = vmatpush2.msra.mxu0 0.0
    %3368 = vmatprep.subr.mxu0 0.0
    %3369 = vmatpush2.msra.mxu0 0.0
    %3370 = vmatprep.subr.mxu0 0.0
    %3371 = vmatpush2.msra.mxu0 0.0
    %3372 = vmatprep.subr.mxu0 0.0
    %3373 = vmatpush2.msra.mxu0 0.0
    %3374 = vmatprep.subr.mxu0 0.0
    %3375 = vmatpush2.msra.mxu0 0.0
    %3376 = vmatprep.subr.mxu0 0.0
    %3377 = vmatpush2.msra.mxu0 0.0
    %3378 = vmatprep.subr.mxu0 0.0
    %3379 = vmatpush2.msra.mxu0 0.0
    %3380 = vmatprep.subr.mxu0 0.0
    %3381 = vmatpush2.msra.mxu0 0.0
    %3382 = vmatprep.subr.mxu0 0.0
    %3383 = vmatpush2.msra.mxu0 0.0
    %3384 = vmatprep.mubr.f32.mxu0 0.0
    %3385 = vmatmul.mubr.f32.gmra.mxu0 %v2888
    %v3386 = vpop.f32.mrf.mxu0
    %v3387 = vadd.f32 %v3318, %v3386
    %v3388 = vpop.f32.mrf.mxu0
    %3389 = vmatprep.mubr.f32.mxu0 0.0
    %3390 = vmatmul.mubr.f32.gmra.mxu0 %v2891
    %v3391 = vpop.f32.mrf.mxu0
    %v3392 = vadd.f32 %v3318, %v3391
    %v3393 = vpop.f32.mrf.mxu0
    %3394 = vmatprep.mubr.f32.mxu0 0.0
    %3395 = vmatmul.mubr.f32.gmra.mxu0 %v2894
    %v3396 = vpop.f32.mrf.mxu0
    %v3397 = vadd.f32 %v3318, %v3396
    %v3398 = vpop.f32.mrf.mxu0
    %3399 = vmatprep.mubr.f32.mxu0 0.0
    %3400 = vmatmul.mubr.f32.gmra.mxu0 %v2897
    %v3401 = vpop.f32.mrf.mxu0
    %v3402 = vadd.f32 %v3318, %v3401
    %v3403 = vpop.f32.mrf.mxu0
    %3404 = vmatprep.mubr.f32.mxu0 0.0
    %3405 = vmatmul.mubr.f32.gmra.mxu0 %v2900
    %v3406 = vpop.f32.mrf.mxu0
    %v3407 = vadd.f32 %v3318, %v3406
    %v3408 = vpop.f32.mrf.mxu0
    %3409 = vmatprep.mubr.f32.mxu0 0.0
    %3410 = vmatmul.mubr.f32.gmra.mxu0 %v2903
    %v3411 = vpop.f32.mrf.mxu0
    %v3412 = vadd.f32 %v3318, %v3411
    %v3413 = vpop.f32.mrf.mxu0
    %3414 = vmatprep.mubr.f32.mxu0 0.0
    %3415 = vmatmul.mubr.f32.gmra.mxu0 %v2906
    %v3416 = vpop.f32.mrf.mxu0
    %v3417 = vadd.f32 %v3318, %v3416
    %v3418 = vpop.f32.mrf.mxu0
    %3419 = vmatprep.mubr.f32.mxu0 0.0
    %3420 = vmatmul.mubr.f32.gmra.mxu0 %v2909
    %v3421 = vpop.f32.mrf.mxu0
    %v3422 = vadd.f32 %v3318, %v3421
    %v3423 = vpop.f32.mrf.mxu0
    %3424 = vmatprep.mubr.f32.mxu0 0.0
    %3425 = vmatmul.mubr.f32.gmra.mxu0 %v2912
    %v3426 = vpop.f32.mrf.mxu0
    %v3427 = vadd.f32 %v3318, %v3426
    %v3428 = vpop.f32.mrf.mxu0
    %3429 = vmatprep.mubr.f32.mxu0 0.0
    %3430 = vmatmul.mubr.f32.gmra.mxu0 %v2915
    %v3431 = vpop.f32.mrf.mxu0
    %v3432 = vadd.f32 %v3318, %v3431
    %v3433 = vpop.f32.mrf.mxu0
    %3434 = vmatprep.mubr.f32.mxu0 0.0
    %3435 = vmatmul.mubr.f32.gmra.mxu0 %v2918
    %v3436 = vpop.f32.mrf.mxu0
    %v3437 = vadd.f32 %v3318, %v3436
    %v3438 = vpop.f32.mrf.mxu0
    %3439 = vmatprep.mubr.f32.mxu0 0.0
    %3440 = vmatmul.mubr.f32.gmra.mxu0 %v2921
    %v3441 = vpop.f32.mrf.mxu0
    %v3442 = vadd.f32 %v3318, %v3441
    %v3443 = vpop.f32.mrf.mxu0
    %3444 = vmatprep.mubr.f32.mxu0 0.0
    %3445 = vmatmul.mubr.f32.gmra.mxu0 %v2924
    %v3446 = vpop.f32.mrf.mxu0
    %v3447 = vadd.f32 %v3318, %v3446
    %v3448 = vpop.f32.mrf.mxu0
    %3449 = vmatprep.mubr.f32.mxu0 0.0
    %3450 = vmatmul.mubr.f32.gmra.mxu0 %v2927
    %v3451 = vpop.f32.mrf.mxu0
    %v3452 = vadd.f32 %v3318, %v3451
    %v3453 = vpop.f32.mrf.mxu0
    %3454 = vmatprep.mubr.f32.mxu0 0.0
    %3455 = vmatmul.mubr.f32.gmra.mxu0 %v2930
    %v3456 = vpop.f32.mrf.mxu0
    %v3457 = vadd.f32 %v3318, %v3456
    %v3458 = vpop.f32.mrf.mxu0
    %3459 = vmatprep.mubr.f32.mxu0 0.0
    %3460 = vmatmul.mubr.f32.gmra.mxu0 %v2933
    %v3461 = vpop.f32.mrf.mxu0
    %v3462 = vadd.f32 %v3318, %v3461
    %v3463 = vpop.f32.mrf.mxu0
    %3464 = vmatprep.mubr.f32.mxu0 0.0
    %3465 = vmatmul.mubr.f32.gmra.mxu0 %v2936
    %v3466 = vpop.f32.mrf.mxu0
    %v3467 = vadd.f32 %v3318, %v3466
    %v3468 = vpop.f32.mrf.mxu0
    %3469 = vmatprep.mubr.f32.mxu0 0.0
    %3470 = vmatmul.mubr.f32.gmra.mxu0 %v2939
    %v3471 = vpop.f32.mrf.mxu0
    %v3472 = vadd.f32 %v3318, %v3471
    %v3473 = vpop.f32.mrf.mxu0
    %3474 = vmatprep.mubr.f32.mxu0 0.0
    %3475 = vmatmul.mubr.f32.gmra.mxu0 %v2942
    %v3476 = vpop.f32.mrf.mxu0
    %v3477 = vadd.f32 %v3318, %v3476
    %v3478 = vpop.f32.mrf.mxu0
    %3479 = vmatprep.mubr.f32.mxu0 0.0
    %3480 = vmatmul.mubr.f32.gmra.mxu0 %v2945
    %v3481 = vpop.f32.mrf.mxu0
    %v3482 = vadd.f32 %v3318, %v3481
    %v3483 = vpop.f32.mrf.mxu0
    %3484 = vmatprep.mubr.f32.mxu0 0.0
    %3485 = vmatmul.mubr.f32.gmra.mxu0 %v2948
    %v3486 = vpop.f32.mrf.mxu0
    %v3487 = vadd.f32 %v3318, %v3486
    %v3488 = vpop.f32.mrf.mxu0
    %3489 = vdwg.mxu0
    %v3490 = vld [vmem:[%s13] sm:$0xff]
    %v3491 = vld [vmem:[%s13 + $0x8] sm:$0xff]
    %v3492 = vld [vmem:[%s13 + $0x10] sm:$0xff]
    %v3493 = vld [vmem:[%s13 + $0x18] sm:$0xff]
    %v3494 = vld [vmem:[%s14] sm:$0xff]
    %v3495 = vld [vmem:[%s14 + $0x8] sm:$0xff]
    %v3496 = vld [vmem:[%s14 + $0x10] sm:$0xff]
    %v3497 = vld [vmem:[%s14 + $0x18] sm:$0xff]
    %v3498 = vld [vmem:[%s15] sm:$0xff]
    %v3499 = vld [vmem:[%s15 + $0x8] sm:$0xff]
    %v3500 = vld [vmem:[%s15 + $0x10] sm:$0xff]
    %v3501 = vld [vmem:[%s15 + $0x18] sm:$0xff]
    %v3502 = vld [vmem:[%s16] sm:$0x1]
    %v3503 = vld [vmem:[%s17] sm:$0x1]
    %v3504 = vld [vmem:[%s18] sm:$0x1]
    %v3506 = vlaneseq
    %v3507 = vshrl.u32 %v3506, 7
    %v3508 = vsub.s32 0, %v3507
    %v3509 = vrot.slane %v3502, %v3508
    %v3512 = vsel %vm187, 0.0, 0
    %3514 = vmatprep.subr.mxu0 0.0
    %3515 = vmatpush1.msra.mxu0 0.0
    %3516 = vmatprep.subr.mxu0 0.0
    %3517 = vmatpush1.msra.mxu0 0.0
    %3518 = vmatprep.subr.mxu0 0.0
    %3519 = vmatpush1.msra.mxu0 0.0
    %3520 = vmatprep.subr.mxu0 0.0
    %3521 = vmatpush1.msra.mxu0 0.0
    %3522 = vmatprep.subr.mxu0 0.0
    %3523 = vmatpush1.msra.mxu0 0.0
    %3524 = vmatprep.subr.mxu0 0.0
    %3525 = vmatpush1.msra.mxu0 0.0
    %3526 = vmatprep.subr.mxu0 0.0
    %3527 = vmatpush1.msra.mxu0 0.0
    %3528 = vmatprep.subr.mxu0 0.0
    %3529 = vmatpush1.msra.mxu0 0.0
    %3530 = vmatprep.subr.mxu0 0.0
    %3531 = vmatpush1.msra.mxu0 0.0
    %3532 = vmatprep.subr.mxu0 0.0
    %3533 = vmatpush1.msra.mxu0 0.0
    %3534 = vmatprep.subr.mxu0 0.0
    %3535 = vmatpush1.msra.mxu0 0.0
    %3536 = vmatprep.subr.mxu0 0.0
    %3537 = vmatpush1.msra.mxu0 0.0
    %3538 = vmatprep.subr.mxu0 0.0
    %3539 = vmatpush1.msra.mxu0 %v3493
    %3540 = vmatprep.subr.mxu0 0.0
    %3541 = vmatpush1.msra.mxu0 %v3492
    %3542 = vmatprep.subr.mxu0 0.0
    %3543 = vmatpush1.msra.mxu0 %v3491
    %3544 = vmatprep.subr.mxu0 0.0
    %3545 = vmatpush1.msra.mxu0 %v3490
    %3546 = vmatprep.subr.mxu0 0.0
    %3547 = vmatpush2.msra.mxu0 0.0
    %3548 = vmatprep.subr.mxu0 0.0
    %3549 = vmatpush2.msra.mxu0 0.0
    %3550 = vmatprep.subr.mxu0 0.0
    %3551 = vmatpush2.msra.mxu0 0.0
    %3552 = vmatprep.subr.mxu0 0.0
    %3553 = vmatpush2.msra.mxu0 0.0
    %3554 = vmatprep.subr.mxu0 0.0
    %3555 = vmatpush2.msra.mxu0 0.0
    %3556 = vmatprep.subr.mxu0 0.0
    %3557 = vmatpush2.msra.mxu0 0.0
    %3558 = vmatprep.subr.mxu0 0.0
    %3559 = vmatpush2.msra.mxu0 0.0
    %3560 = vmatprep.subr.mxu0 0.0
    %3561 = vmatpush2.msra.mxu0 0.0
    %3562 = vmatprep.subr.mxu0 0.0
    %3563 = vmatpush2.msra.mxu0 0.0
    %3564 = vmatprep.subr.mxu0 0.0
    %3565 = vmatpush2.msra.mxu0 0.0
    %3566 = vmatprep.subr.mxu0 0.0
    %3567 = vmatpush2.msra.mxu0 0.0
    %3568 = vmatprep.subr.mxu0 0.0
    %3569 = vmatpush2.msra.mxu0 0.0
    %3570 = vmatprep.subr.mxu0 0.0
    %3571 = vmatpush2.msra.mxu0 0.0
    %3572 = vmatprep.subr.mxu0 0.0
    %3573 = vmatpush2.msra.mxu0 0.0
    %3574 = vmatprep.subr.mxu0 0.0
    %3575 = vmatpush2.msra.mxu0 0.0
    %3576 = vmatprep.subr.mxu0 0.0
    %3577 = vmatpush2.msra.mxu0 0.0
    %3578 = vmatprep.mubr.f32.mxu0 0.0
    %3579 = vmatmul.mubr.f32.gmra.mxu0 %v3512
    %v3580 = vpop.f32.mrf.mxu0
    %v3581 = vadd.f32 %v3509, %v3580
    %v3582 = vpop.f32.mrf.mxu0
    %3583 = vdwg.mxu0
    %v3585 = vlaneseq
    %v3586 = vshrl.u32 %v3585, 7
    %v3587 = vsub.s32 0, %v3586
    %v3588 = vrot.slane %v3503, %v3587
    %3590 = vmatprep.subr.mxu0 0.0
    %3591 = vmatpush1.msra.mxu0 0.0
    %3592 = vmatprep.subr.mxu0 0.0
    %3593 = vmatpush1.msra.mxu0 0.0
    %3594 = vmatprep.subr.mxu0 0.0
    %3595 = vmatpush1.msra.mxu0 0.0
    %3596 = vmatprep.subr.mxu0 0.0
    %3597 = vmatpush1.msra.mxu0 0.0
    %3598 = vmatprep.subr.mxu0 0.0
    %3599 = vmatpush1.msra.mxu0 0.0
    %3600 = vmatprep.subr.mxu0 0.0
    %3601 = vmatpush1.msra.mxu0 0.0
    %3602 = vmatprep.subr.mxu0 0.0
    %3603 = vmatpush1.msra.mxu0 0.0
    %3604 = vmatprep.subr.mxu0 0.0
    %3605 = vmatpush1.msra.mxu0 0.0
    %3606 = vmatprep.subr.mxu0 0.0
    %3607 = vmatpush1.msra.mxu0 0.0
    %3608 = vmatprep.subr.mxu0 0.0
    %3609 = vmatpush1.msra.mxu0 0.0
    %3610 = vmatprep.subr.mxu0 0.0
    %3611 = vmatpush1.msra.mxu0 0.0
    %3612 = vmatprep.subr.mxu0 0.0
    %3613 = vmatpush1.msra.mxu0 0.0
    %3614 = vmatprep.subr.mxu0 0.0
    %3615 = vmatpush1.msra.mxu0 %v3497
    %3616 = vmatprep.subr.mxu0 0.0
    %3617 = vmatpush1.msra.mxu0 %v3496
    %3618 = vmatprep.subr.mxu0 0.0
    %3619 = vmatpush1.msra.mxu0 %v3495
    %3620 = vmatprep.subr.mxu0 0.0
    %3621 = vmatpush1.msra.mxu0 %v3494
    %3622 = vmatprep.subr.mxu0 0.0
    %3623 = vmatpush2.msra.mxu0 0.0
    %3624 = vmatprep.subr.mxu0 0.0
    %3625 = vmatpush2.msra.mxu0 0.0
    %3626 = vmatprep.subr.mxu0 0.0
    %3627 = vmatpush2.msra.mxu0 0.0
    %3628 = vmatprep.subr.mxu0 0.0
    %3629 = vmatpush2.msra.mxu0 0.0
    %3630 = vmatprep.subr.mxu0 0.0
    %3631 = vmatpush2.msra.mxu0 0.0
    %3632 = vmatprep.subr.mxu0 0.0
    %3633 = vmatpush2.msra.mxu0 0.0
    %3634 = vmatprep.subr.mxu0 0.0
    %3635 = vmatpush2.msra.mxu0 0.0
    %3636 = vmatprep.subr.mxu0 0.0
    %3637 = vmatpush2.msra.mxu0 0.0
    %3638 = vmatprep.subr.mxu0 0.0
    %3639 = vmatpush2.msra.mxu0 0.0
    %3640 = vmatprep.subr.mxu0 0.0
    %3641 = vmatpush2.msra.mxu0 0.0
    %3642 = vmatprep.subr.mxu0 0.0
    %3643 = vmatpush2.msra.mxu0 0.0
    %3644 = vmatprep.subr.mxu0 0.0
    %3645 = vmatpush2.msra.mxu0 0.0
    %3646 = vmatprep.subr.mxu0 0.0
    %3647 = vmatpush2.msra.mxu0 0.0
    %3648 = vmatprep.subr.mxu0 0.0
    %3649 = vmatpush2.msra.mxu0 0.0
    %3650 = vmatprep.subr.mxu0 0.0
    %3651 = vmatpush2.msra.mxu0 0.0
    %3652 = vmatprep.subr.mxu0 0.0
    %3653 = vmatpush2.msra.mxu0 0.0
    %3654 = vmatprep.mubr.f32.mxu0 0.0
    %3655 = vmatmul.mubr.f32.gmra.mxu0 %v3512
    %v3656 = vpop.f32.mrf.mxu0
    %v3657 = vadd.f32 %v3588, %v3656
    %v3658 = vpop.f32.mrf.mxu0
    %3659 = vdwg.mxu0
    %v3661 = vlaneseq
    %v3662 = vshrl.u32 %v3661, 7
    %v3663 = vsub.s32 0, %v3662
    %v3664 = vrot.slane %v3504, %v3663
    %3666 = vmatprep.subr.mxu0 0.0
    %3667 = vmatpush1.msra.mxu0 0.0
    %3668 = vmatprep.subr.mxu0 0.0
    %3669 = vmatpush1.msra.mxu0 0.0
    %3670 = vmatprep.subr.mxu0 0.0
    %3671 = vmatpush1.msra.mxu0 0.0
    %3672 = vmatprep.subr.mxu0 0.0
    %3673 = vmatpush1.msra.mxu0 0.0
    %3674 = vmatprep.subr.mxu0 0.0
    %3675 = vmatpush1.msra.mxu0 0.0
    %3676 = vmatprep.subr.mxu0 0.0
    %3677 = vmatpush1.msra.mxu0 0.0
    %3678 = vmatprep.subr.mxu0 0.0
    %3679 = vmatpush1.msra.mxu0 0.0
    %3680 = vmatprep.subr.mxu0 0.0
    %3681 = vmatpush1.msra.mxu0 0.0
    %3682 = vmatprep.subr.mxu0 0.0
    %3683 = vmatpush1.msra.mxu0 0.0
    %3684 = vmatprep.subr.mxu0 0.0
    %3685 = vmatpush1.msra.mxu0 0.0
    %3686 = vmatprep.subr.mxu0 0.0
    %3687 = vmatpush1.msra.mxu0 0.0
    %3688 = vmatprep.subr.mxu0 0.0
    %3689 = vmatpush1.msra.mxu0 0.0
    %3690 = vmatprep.subr.mxu0 0.0
    %3691 = vmatpush1.msra.mxu0 %v3501
    %3692 = vmatprep.subr.mxu0 0.0
    %3693 = vmatpush1.msra.mxu0 %v3500
    %3694 = vmatprep.subr.mxu0 0.0
    %3695 = vmatpush1.msra.mxu0 %v3499
    %3696 = vmatprep.subr.mxu0 0.0
    %3697 = vmatpush1.msra.mxu0 %v3498
    %3698 = vmatprep.subr.mxu0 0.0
    %3699 = vmatpush2.msra.mxu0 0.0
    %3700 = vmatprep.subr.mxu0 0.0
    %3701 = vmatpush2.msra.mxu0 0.0
    %3702 = vmatprep.subr.mxu0 0.0
    %3703 = vmatpush2.msra.mxu0 0.0
    %3704 = vmatprep.subr.mxu0 0.0
    %3705 = vmatpush2.msra.mxu0 0.0
    %3706 = vmatprep.subr.mxu0 0.0
    %3707 = vmatpush2.msra.mxu0 0.0
    %3708 = vmatprep.subr.mxu0 0.0
    %3709 = vmatpush2.msra.mxu0 0.0
    %3710 = vmatprep.subr.mxu0 0.0
    %3711 = vmatpush2.msra.mxu0 0.0
    %3712 = vmatprep.subr.mxu0 0.0
    %3713 = vmatpush2.msra.mxu0 0.0
    %3714 = vmatprep.subr.mxu0 0.0
    %3715 = vmatpush2.msra.mxu0 0.0
    %3716 = vmatprep.subr.mxu0 0.0
    %3717 = vmatpush2.msra.mxu0 0.0
    %3718 = vmatprep.subr.mxu0 0.0
    %3719 = vmatpush2.msra.mxu0 0.0
    %3720 = vmatprep.subr.mxu0 0.0
    %3721 = vmatpush2.msra.mxu0 0.0
    %3722 = vmatprep.subr.mxu0 0.0
    %3723 = vmatpush2.msra.mxu0 0.0
    %3724 = vmatprep.subr.mxu0 0.0
    %3725 = vmatpush2.msra.mxu0 0.0
    %3726 = vmatprep.subr.mxu0 0.0
    %3727 = vmatpush2.msra.mxu0 0.0
    %3728 = vmatprep.subr.mxu0 0.0
    %3729 = vmatpush2.msra.mxu0 0.0
    %3730 = vmatprep.mubr.f32.mxu0 0.0
    %3731 = vmatmul.mubr.f32.gmra.mxu0 %v3512
    %v3732 = vpop.f32.mrf.mxu0
    %v3733 = vadd.f32 %v3664, %v3732
    %v3734 = vpop.f32.mrf.mxu0
    %3735 = vdwg.mxu0
    %v3736 = vadd.f32 %v3017, %v3581
    %v3737 = vxor.u32 %v3736, 2147483648
    %v3738 = vmul.f32 %v3737, 1.442695
    %v3739 = vpow.pop %v3738
    %v3740 = vadd.f32 %v3739, 1.0
    %v3741 = vrcp.pop %v3740
    %v3742 = vmul.f32 1.0, %v3741
    %v3743 = vadd.f32 %v3202, %v3657
    %v3744 = vxor.u32 %v3743, 2147483648
    %v3745 = vmul.f32 %v3744, 1.442695
    %v3746 = vpow.pop %v3745
    %v3747 = vadd.f32 %v3746, 1.0
    %v3748 = vrcp.pop %v3747
    %v3749 = vmul.f32 1.0, %v3748
    %v3750 = vmul.f32 %v3742, %v3733
    %v3751 = vadd.f32 %v3387, %v3750
    %v3752 = vtanh.pop %v3751
    %v3753 = vsub.f32 1.0, %v3749
    %v3754 = vmul.f32 %v3753, %v3752
    %v3755 = vmul.f32 %v3749, 0.0
    %v3756 = vadd.f32 %v3754, %v3755
    %v3758 = vsel %vm187, %v3756, 0
    %3760 = vmatprep.subr.mxu0 0.0
    %3761 = vmatpush1.msra.mxu0 0.0
    %3762 = vmatprep.subr.mxu0 0.0
    %3763 = vmatpush1.msra.mxu0 0.0
    %3764 = vmatprep.subr.mxu0 0.0
    %3765 = vmatpush1.msra.mxu0 0.0
    %3766 = vmatprep.subr.mxu0 0.0
    %3767 = vmatpush1.msra.mxu0 0.0
    %3768 = vmatprep.subr.mxu0 0.0
    %3769 = vmatpush1.msra.mxu0 0.0
    %3770 = vmatprep.subr.mxu0 0.0
    %3771 = vmatpush1.msra.mxu0 0.0
    %3772 = vmatprep.subr.mxu0 0.0
    %3773 = vmatpush1.msra.mxu0 0.0
    %3774 = vmatprep.subr.mxu0 0.0
    %3775 = vmatpush1.msra.mxu0 0.0
    %3776 = vmatprep.subr.mxu0 0.0
    %3777 = vmatpush1.msra.mxu0 0.0
    %3778 = vmatprep.subr.mxu0 0.0
    %3779 = vmatpush1.msra.mxu0 0.0
    %3780 = vmatprep.subr.mxu0 0.0
    %3781 = vmatpush1.msra.mxu0 0.0
    %3782 = vmatprep.subr.mxu0 0.0
    %3783 = vmatpush1.msra.mxu0 0.0
    %3784 = vmatprep.subr.mxu0 0.0
    %3785 = vmatpush1.msra.mxu0 %v3493
    %3786 = vmatprep.subr.mxu0 0.0
    %3787 = vmatpush1.msra.mxu0 %v3492
    %3788 = vmatprep.subr.mxu0 0.0
    %3789 = vmatpush1.msra.mxu0 %v3491
    %3790 = vmatprep.subr.mxu0 0.0
    %3791 = vmatpush1.msra.mxu0 %v3490
    %3792 = vmatprep.subr.mxu0 0.0
    %3793 = vmatpush2.msra.mxu0 0.0
    %3794 = vmatprep.subr.mxu0 0.0
    %3795 = vmatpush2.msra.mxu0 0.0
    %3796 = vmatprep.subr.mxu0 0.0
    %3797 = vmatpush2.msra.mxu0 0.0
    %3798 = vmatprep.subr.mxu0 0.0
    %3799 = vmatpush2.msra.mxu0 0.0
    %3800 = vmatprep.subr.mxu0 0.0
    %3801 = vmatpush2.msra.mxu0 0.0
    %3802 = vmatprep.subr.mxu0 0.0
    %3803 = vmatpush2.msra.mxu0 0.0
    %3804 = vmatprep.subr.mxu0 0.0
    %3805 = vmatpush2.msra.mxu0 0.0
    %3806 = vmatprep.subr.mxu0 0.0
    %3807 = vmatpush2.msra.mxu0 0.0
    %3808 = vmatprep.subr.mxu0 0.0
    %3809 = vmatpush2.msra.mxu0 0.0
    %3810 = vmatprep.subr.mxu0 0.0
    %3811 = vmatpush2.msra.mxu0 0.0
    %3812 = vmatprep.subr.mxu0 0.0
    %3813 = vmatpush2.msra.mxu0 0.0
    %3814 = vmatprep.subr.mxu0 0.0
    %3815 = vmatpush2.msra.mxu0 0.0
    %3816 = vmatprep.subr.mxu0 0.0
    %3817 = vmatpush2.msra.mxu0 0.0
    %3818 = vmatprep.subr.mxu0 0.0
    %3819 = vmatpush2.msra.mxu0 0.0
    %3820 = vmatprep.subr.mxu0 0.0
    %3821 = vmatpush2.msra.mxu0 0.0
    %3822 = vmatprep.subr.mxu0 0.0
    %3823 = vmatpush2.msra.mxu0 0.0
    %3824 = vmatprep.mubr.f32.mxu0 0.0
    %3825 = vmatmul.mubr.f32.gmra.mxu0 %v3758
    %v3826 = vpop.f32.mrf.mxu0
    %v3827 = vadd.f32 %v3509, %v3826
    %v3828 = vpop.f32.mrf.mxu0
    %3829 = vdwg.mxu0
    %3830 = vmatprep.subr.mxu0 0.0
    %3831 = vmatpush1.msra.mxu0 0.0
    %3832 = vmatprep.subr.mxu0 0.0
    %3833 = vmatpush1.msra.mxu0 0.0
    %3834 = vmatprep.subr.mxu0 0.0
    %3835 = vmatpush1.msra.mxu0 0.0
    %3836 = vmatprep.subr.mxu0 0.0
    %3837 = vmatpush1.msra.mxu0 0.0
    %3838 = vmatprep.subr.mxu0 0.0
    %3839 = vmatpush1.msra.mxu0 0.0
    %3840 = vmatprep.subr.mxu0 0.0
    %3841 = vmatpush1.msra.mxu0 0.0
    %3842 = vmatprep.subr.mxu0 0.0
    %3843 = vmatpush1.msra.mxu0 0.0
    %3844 = vmatprep.subr.mxu0 0.0
    %3845 = vmatpush1.msra.mxu0 0.0
    %3846 = vmatprep.subr.mxu0 0.0
    %3847 = vmatpush1.msra.mxu0 0.0
    %3848 = vmatprep.subr.mxu0 0.0
    %3849 = vmatpush1.msra.mxu0 0.0
    %3850 = vmatprep.subr.mxu0 0.0
    %3851 = vmatpush1.msra.mxu0 0.0
    %3852 = vmatprep.subr.mxu0 0.0
    %3853 = vmatpush1.msra.mxu0 0.0
    %3854 = vmatprep.subr.mxu0 0.0
    %3855 = vmatpush1.msra.mxu0 %v3497
    %3856 = vmatprep.subr.mxu0 0.0
    %3857 = vmatpush1.msra.mxu0 %v3496
    %3858 = vmatprep.subr.mxu0 0.0
    %3859 = vmatpush1.msra.mxu0 %v3495
    %3860 = vmatprep.subr.mxu0 0.0
    %3861 = vmatpush1.msra.mxu0 %v3494
    %3862 = vmatprep.subr.mxu0 0.0
    %3863 = vmatpush2.msra.mxu0 0.0
    %3864 = vmatprep.subr.mxu0 0.0
    %3865 = vmatpush2.msra.mxu0 0.0
    %3866 = vmatprep.subr.mxu0 0.0
    %3867 = vmatpush2.msra.mxu0 0.0
    %3868 = vmatprep.subr.mxu0 0.0
    %3869 = vmatpush2.msra.mxu0 0.0
    %3870 = vmatprep.subr.mxu0 0.0
    %3871 = vmatpush2.msra.mxu0 0.0
    %3872 = vmatprep.subr.mxu0 0.0
    %3873 = vmatpush2.msra.mxu0 0.0
    %3874 = vmatprep.subr.mxu0 0.0
    %3875 = vmatpush2.msra.mxu0 0.0
    %3876 = vmatprep.subr.mxu0 0.0
    %3877 = vmatpush2.msra.mxu0 0.0
    %3878 = vmatprep.subr.mxu0 0.0
    %3879 = vmatpush2.msra.mxu0 0.0
    %3880 = vmatprep.subr.mxu0 0.0
    %3881 = vmatpush2.msra.mxu0 0.0
    %3882 = vmatprep.subr.mxu0 0.0
    %3883 = vmatpush2.msra.mxu0 0.0
    %3884 = vmatprep.subr.mxu0 0.0
    %3885 = vmatpush2.msra.mxu0 0.0
    %3886 = vmatprep.subr.mxu0 0.0
    %3887 = vmatpush2.msra.mxu0 0.0
    %3888 = vmatprep.subr.mxu0 0.0
    %3889 = vmatpush2.msra.mxu0 0.0
    %3890 = vmatprep.subr.mxu0 0.0
    %3891 = vmatpush2.msra.mxu0 0.0
    %3892 = vmatprep.subr.mxu0 0.0
    %3893 = vmatpush2.msra.mxu0 0.0
    %3894 = vmatprep.mubr.f32.mxu0 0.0
    %3895 = vmatmul.mubr.f32.gmra.mxu0 %v3758
    %v3896 = vpop.f32.mrf.mxu0
    %v3897 = vadd.f32 %v3588, %v3896
    %v3898 = vpop.f32.mrf.mxu0
    %3899 = vdwg.mxu0
    %3900 = vmatprep.subr.mxu0 0.0
    %3901 = vmatpush1.msra.mxu0 0.0
    %3902 = vmatprep.subr.mxu0 0.0
    %3903 = vmatpush1.msra.mxu0 0.0
    %3904 = vmatprep.subr.mxu0 0.0
    %3905 = vmatpush1.msra.mxu0 0.0
    %3906 = vmatprep.subr.mxu0 0.0
    %3907 = vmatpush1.msra.mxu0 0.0
    %3908 = vmatprep.subr.mxu0 0.0
    %3909 = vmatpush1.msra.mxu0 0.0
    %3910 = vmatprep.subr.mxu0 0.0
    %3911 = vmatpush1.msra.mxu0 0.0
    %3912 = vmatprep.subr.mxu0 0.0
    %3913 = vmatpush1.msra.mxu0 0.0
    %3914 = vmatprep.subr.mxu0 0.0
    %3915 = vmatpush1.msra.mxu0 0.0
    %3916 = vmatprep.subr.mxu0 0.0
    %3917 = vmatpush1.msra.mxu0 0.0
    %3918 = vmatprep.subr.mxu0 0.0
    %3919 = vmatpush1.msra.mxu0 0.0
    %3920 = vmatprep.subr.mxu0 0.0
    %3921 = vmatpush1.msra.mxu0 0.0
    %3922 = vmatprep.subr.mxu0 0.0
    %3923 = vmatpush1.msra.mxu0 0.0
    %3924 = vmatprep.subr.mxu0 0.0
    %3925 = vmatpush1.msra.mxu0 %v3501
    %3926 = vmatprep.subr.mxu0 0.0
    %3927 = vmatpush1.msra.mxu0 %v3500
    %3928 = vmatprep.subr.mxu0 0.0
    %3929 = vmatpush1.msra.mxu0 %v3499
    %3930 = vmatprep.subr.mxu0 0.0
    %3931 = vmatpush1.msra.mxu0 %v3498
    %3932 = vmatprep.subr.mxu0 0.0
    %3933 = vmatpush2.msra.mxu0 0.0
    %3934 = vmatprep.subr.mxu0 0.0
    %3935 = vmatpush2.msra.mxu0 0.0
    %3936 = vmatprep.subr.mxu0 0.0
    %3937 = vmatpush2.msra.mxu0 0.0
    %3938 = vmatprep.subr.mxu0 0.0
    %3939 = vmatpush2.msra.mxu0 0.0
    %3940 = vmatprep.subr.mxu0 0.0
    %3941 = vmatpush2.msra.mxu0 0.0
    %3942 = vmatprep.subr.mxu0 0.0
    %3943 = vmatpush2.msra.mxu0 0.0
    %3944 = vmatprep.subr.mxu0 0.0
    %3945 = vmatpush2.msra.mxu0 0.0
    %3946 = vmatprep.subr.mxu0 0.0
    %3947 = vmatpush2.msra.mxu0 0.0
    %3948 = vmatprep.subr.mxu0 0.0
    %3949 = vmatpush2.msra.mxu0 0.0
    %3950 = vmatprep.subr.mxu0 0.0
    %3951 = vmatpush2.msra.mxu0 0.0
    %3952 = vmatprep.subr.mxu0 0.0
    %3953 = vmatpush2.msra.mxu0 0.0
    %3954 = vmatprep.subr.mxu0 0.0
    %3955 = vmatpush2.msra.mxu0 0.0
    %3956 = vmatprep.subr.mxu0 0.0
    %3957 = vmatpush2.msra.mxu0 0.0
    %3958 = vmatprep.subr.mxu0 0.0
    %3959 = vmatpush2.msra.mxu0 0.0
    %3960 = vmatprep.subr.mxu0 0.0
    %3961 = vmatpush2.msra.mxu0 0.0
    %3962 = vmatprep.subr.mxu0 0.0
    %3963 = vmatpush2.msra.mxu0 0.0
    %3964 = vmatprep.mubr.f32.mxu0 0.0
    %3965 = vmatmul.mubr.f32.gmra.mxu0 %v3758
    %v3966 = vpop.f32.mrf.mxu0
    %v3967 = vadd.f32 %v3664, %v3966
    %v3968 = vpop.f32.mrf.mxu0
    %3969 = vdwg.mxu0
    %v3970 = vadd.f32 %v3022, %v3827
    %v3971 = vxor.u32 %v3970, 2147483648
    %v3972 = vmul.f32 %v3971, 1.442695
    %v3973 = vpow.pop %v3972
    %v3974 = vadd.f32 %v3973, 1.0
    %v3975 = vrcp.pop %v3974
    %v3976 = vmul.f32 1.0, %v3975
    %v3977 = vadd.f32 %v3207, %v3897
    %v3978 = vxor.u32 %v3977, 2147483648
    %v3979 = vmul.f32 %v3978, 1.442695
    %v3980 = vpow.pop %v3979
    %v3981 = vadd.f32 %v3980, 1.0
    %v3982 = vrcp.pop %v3981
    %v3983 = vmul.f32 1.0, %v3982
    %v3984 = vmul.f32 %v3976, %v3967
    %v3985 = vadd.f32 %v3392, %v3984
    %v3986 = vtanh.pop %v3985
    %v3987 = vsub.f32 1.0, %v3983
    %v3988 = vmul.f32 %v3987, %v3986
    %v3989 = vmul.f32 %v3983, %v3756
    %v3990 = vadd.f32 %v3988, %v3989
    %v3992 = vsel %vm187, %v3990, 0
    %3994 = vmatprep.subr.mxu0 0.0
    %3995 = vmatpush1.msra.mxu0 0.0
    %3996 = vmatprep.subr.mxu0 0.0
    %3997 = vmatpush1.msra.mxu0 0.0
    %3998 = vmatprep.subr.mxu0 0.0
    %3999 = vmatpush1.msra.mxu0 0.0
    %4000 = vmatprep.subr.mxu0 0.0
    %4001 = vmatpush1.msra.mxu0 0.0
    %4002 = vmatprep.subr.mxu0 0.0
    %4003 = vmatpush1.msra.mxu0 0.0
    %4004 = vmatprep.subr.mxu0 0.0
    %4005 = vmatpush1.msra.mxu0 0.0
    %4006 = vmatprep.subr.mxu0 0.0
    %4007 = vmatpush1.msra.mxu0 0.0
    %4008 = vmatprep.subr.mxu0 0.0
    %4009 = vmatpush1.msra.mxu0 0.0
    %4010 = vmatprep.subr.mxu0 0.0
    %4011 = vmatpush1.msra.mxu0 0.0
    %4012 = vmatprep.subr.mxu0 0.0
    %4013 = vmatpush1.msra.mxu0 0.0
    %4014 = vmatprep.subr.mxu0 0.0
    %4015 = vmatpush1.msra.mxu0 0.0
    %4016 = vmatprep.subr.mxu0 0.0
    %4017 = vmatpush1.msra.mxu0 0.0
    %4018 = vmatprep.subr.mxu0 0.0
    %4019 = vmatpush1.msra.mxu0 %v3493
    %4020 = vmatprep.subr.mxu0 0.0
    %4021 = vmatpush1.msra.mxu0 %v3492
    %4022 = vmatprep.subr.mxu0 0.0
    %4023 = vmatpush1.msra.mxu0 %v3491
    %4024 = vmatprep.subr.mxu0 0.0
    %4025 = vmatpush1.msra.mxu0 %v3490
    %4026 = vmatprep.subr.mxu0 0.0
    %4027 = vmatpush2.msra.mxu0 0.0
    %4028 = vmatprep.subr.mxu0 0.0
    %4029 = vmatpush2.msra.mxu0 0.0
    %4030 = vmatprep.subr.mxu0 0.0
    %4031 = vmatpush2.msra.mxu0 0.0
    %4032 = vmatprep.subr.mxu0 0.0
    %4033 = vmatpush2.msra.mxu0 0.0
    %4034 = vmatprep.subr.mxu0 0.0
    %4035 = vmatpush2.msra.mxu0 0.0
    %4036 = vmatprep.subr.mxu0 0.0
    %4037 = vmatpush2.msra.mxu0 0.0
    %4038 = vmatprep.subr.mxu0 0.0
    %4039 = vmatpush2.msra.mxu0 0.0
    %4040 = vmatprep.subr.mxu0 0.0
    %4041 = vmatpush2.msra.mxu0 0.0
    %4042 = vmatprep.subr.mxu0 0.0
    %4043 = vmatpush2.msra.mxu0 0.0
    %4044 = vmatprep.subr.mxu0 0.0
    %4045 = vmatpush2.msra.mxu0 0.0
    %4046 = vmatprep.subr.mxu0 0.0
    %4047 = vmatpush2.msra.mxu0 0.0
    %4048 = vmatprep.subr.mxu0 0.0
    %4049 = vmatpush2.msra.mxu0 0.0
    %4050 = vmatprep.subr.mxu0 0.0
    %4051 = vmatpush2.msra.mxu0 0.0
    %4052 = vmatprep.subr.mxu0 0.0
    %4053 = vmatpush2.msra.mxu0 0.0
    %4054 = vmatprep.subr.mxu0 0.0
    %4055 = vmatpush2.msra.mxu0 0.0
    %4056 = vmatprep.subr.mxu0 0.0
    %4057 = vmatpush2.msra.mxu0 0.0
    %4058 = vmatprep.mubr.f32.mxu0 0.0
    %4059 = vmatmul.mubr.f32.gmra.mxu0 %v3992
    %v4060 = vpop.f32.mrf.mxu0
    %v4061 = vadd.f32 %v3509, %v4060
    %v4062 = vpop.f32.mrf.mxu0
    %4063 = vdwg.mxu0
    %4064 = vmatprep.subr.mxu0 0.0
    %4065 = vmatpush1.msra.mxu0 0.0
    %4066 = vmatprep.subr.mxu0 0.0
    %4067 = vmatpush1.msra.mxu0 0.0
    %4068 = vmatprep.subr.mxu0 0.0
    %4069 = vmatpush1.msra.mxu0 0.0
    %4070 = vmatprep.subr.mxu0 0.0
    %4071 = vmatpush1.msra.mxu0 0.0
    %4072 = vmatprep.subr.mxu0 0.0
    %4073 = vmatpush1.msra.mxu0 0.0
    %4074 = vmatprep.subr.mxu0 0.0
    %4075 = vmatpush1.msra.mxu0 0.0
    %4076 = vmatprep.subr.mxu0 0.0
    %4077 = vmatpush1.msra.mxu0 0.0
    %4078 = vmatprep.subr.mxu0 0.0
    %4079 = vmatpush1.msra.mxu0 0.0
    %4080 = vmatprep.subr.mxu0 0.0
    %4081 = vmatpush1.msra.mxu0 0.0
    %4082 = vmatprep.subr.mxu0 0.0
    %4083 = vmatpush1.msra.mxu0 0.0
    %4084 = vmatprep.subr.mxu0 0.0
    %4085 = vmatpush1.msra.mxu0 0.0
    %4086 = vmatprep.subr.mxu0 0.0
    %4087 = vmatpush1.msra.mxu0 0.0
    %4088 = vmatprep.subr.mxu0 0.0
    %4089 = vmatpush1.msra.mxu0 %v3497
    %4090 = vmatprep.subr.mxu0 0.0
    %4091 = vmatpush1.msra.mxu0 %v3496
    %4092 = vmatprep.subr.mxu0 0.0
    %4093 = vmatpush1.msra.mxu0 %v3495
    %4094 = vmatprep.subr.mxu0 0.0
    %4095 = vmatpush1.msra.mxu0 %v3494
    %4096 = vmatprep.subr.mxu0 0.0
    %4097 = vmatpush2.msra.mxu0 0.0
    %4098 = vmatprep.subr.mxu0 0.0
    %4099 = vmatpush2.msra.mxu0 0.0
    %4100 = vmatprep.subr.mxu0 0.0
    %4101 = vmatpush2.msra.mxu0 0.0
    %4102 = vmatprep.subr.mxu0 0.0
    %4103 = vmatpush2.msra.mxu0 0.0
    %4104 = vmatprep.subr.mxu0 0.0
    %4105 = vmatpush2.msra.mxu0 0.0
    %4106 = vmatprep.subr.mxu0 0.0
    %4107 = vmatpush2.msra.mxu0 0.0
    %4108 = vmatprep.subr.mxu0 0.0
    %4109 = vmatpush2.msra.mxu0 0.0
    %4110 = vmatprep.subr.mxu0 0.0
    %4111 = vmatpush2.msra.mxu0 0.0
    %4112 = vmatprep.subr.mxu0 0.0
    %4113 = vmatpush2.msra.mxu0 0.0
    %4114 = vmatprep.subr.mxu0 0.0
    %4115 = vmatpush2.msra.mxu0 0.0
    %4116 = vmatprep.subr.mxu0 0.0
    %4117 = vmatpush2.msra.mxu0 0.0
    %4118 = vmatprep.subr.mxu0 0.0
    %4119 = vmatpush2.msra.mxu0 0.0
    %4120 = vmatprep.subr.mxu0 0.0
    %4121 = vmatpush2.msra.mxu0 0.0
    %4122 = vmatprep.subr.mxu0 0.0
    %4123 = vmatpush2.msra.mxu0 0.0
    %4124 = vmatprep.subr.mxu0 0.0
    %4125 = vmatpush2.msra.mxu0 0.0
    %4126 = vmatprep.subr.mxu0 0.0
    %4127 = vmatpush2.msra.mxu0 0.0
    %4128 = vmatprep.mubr.f32.mxu0 0.0
    %4129 = vmatmul.mubr.f32.gmra.mxu0 %v3992
    %v4130 = vpop.f32.mrf.mxu0
    %v4131 = vadd.f32 %v3588, %v4130
    %v4132 = vpop.f32.mrf.mxu0
    %4133 = vdwg.mxu0
    %4134 = vmatprep.subr.mxu0 0.0
    %4135 = vmatpush1.msra.mxu0 0.0
    %4136 = vmatprep.subr.mxu0 0.0
    %4137 = vmatpush1.msra.mxu0 0.0
    %4138 = vmatprep.subr.mxu0 0.0
    %4139 = vmatpush1.msra.mxu0 0.0
    %4140 = vmatprep.subr.mxu0 0.0
    %4141 = vmatpush1.msra.mxu0 0.0
    %4142 = vmatprep.subr.mxu0 0.0
    %4143 = vmatpush1.msra.mxu0 0.0
    %4144 = vmatprep.subr.mxu0 0.0
    %4145 = vmatpush1.msra.mxu0 0.0
    %4146 = vmatprep.subr.mxu0 0.0
    %4147 = vmatpush1.msra.mxu0 0.0
    %4148 = vmatprep.subr.mxu0 0.0
    %4149 = vmatpush1.msra.mxu0 0.0
    %4150 = vmatprep.subr.mxu0 0.0
    %4151 = vmatpush1.msra.mxu0 0.0
    %4152 = vmatprep.subr.mxu0 0.0
    %4153 = vmatpush1.msra.mxu0 0.0
    %4154 = vmatprep.subr.mxu0 0.0
    %4155 = vmatpush1.msra.mxu0 0.0
    %4156 = vmatprep.subr.mxu0 0.0
    %4157 = vmatpush1.msra.mxu0 0.0
    %4158 = vmatprep.subr.mxu0 0.0
    %4159 = vmatpush1.msra.mxu0 %v3501
    %4160 = vmatprep.subr.mxu0 0.0
    %4161 = vmatpush1.msra.mxu0 %v3500
    %4162 = vmatprep.subr.mxu0 0.0
    %4163 = vmatpush1.msra.mxu0 %v3499
    %4164 = vmatprep.subr.mxu0 0.0
    %4165 = vmatpush1.msra.mxu0 %v3498
    %4166 = vmatprep.subr.mxu0 0.0
    %4167 = vmatpush2.msra.mxu0 0.0
    %4168 = vmatprep.subr.mxu0 0.0
    %4169 = vmatpush2.msra.mxu0 0.0
    %4170 = vmatprep.subr.mxu0 0.0
    %4171 = vmatpush2.msra.mxu0 0.0
    %4172 = vmatprep.subr.mxu0 0.0
    %4173 = vmatpush2.msra.mxu0 0.0
    %4174 = vmatprep.subr.mxu0 0.0
    %4175 = vmatpush2.msra.mxu0 0.0
    %4176 = vmatprep.subr.mxu0 0.0
    %4177 = vmatpush2.msra.mxu0 0.0
    %4178 = vmatprep.subr.mxu0 0.0
    %4179 = vmatpush2.msra.mxu0 0.0
    %4180 = vmatprep.subr.mxu0 0.0
    %4181 = vmatpush2.msra.mxu0 0.0
    %4182 = vmatprep.subr.mxu0 0.0
    %4183 = vmatpush2.msra.mxu0 0.0
    %4184 = vmatprep.subr.mxu0 0.0
    %4185 = vmatpush2.msra.mxu0 0.0
    %4186 = vmatprep.subr.mxu0 0.0
    %4187 = vmatpush2.msra.mxu0 0.0
    %4188 = vmatprep.subr.mxu0 0.0
    %4189 = vmatpush2.msra.mxu0 0.0
    %4190 = vmatprep.subr.mxu0 0.0
    %4191 = vmatpush2.msra.mxu0 0.0
    %4192 = vmatprep.subr.mxu0 0.0
    %4193 = vmatpush2.msra.mxu0 0.0
    %4194 = vmatprep.subr.mxu0 0.0
    %4195 = vmatpush2.msra.mxu0 0.0
    %4196 = vmatprep.subr.mxu0 0.0
    %4197 = vmatpush2.msra.mxu0 0.0
    %4198 = vmatprep.mubr.f32.mxu0 0.0
    %4199 = vmatmul.mubr.f32.gmra.mxu0 %v3992
    %v4200 = vpop.f32.mrf.mxu0
    %v4201 = vadd.f32 %v3664, %v4200
    %v4202 = vpop.f32.mrf.mxu0
    %4203 = vdwg.mxu0
    %v4204 = vadd.f32 %v3027, %v4061
    %v4205 = vxor.u32 %v4204, 2147483648
    %v4206 = vmul.f32 %v4205, 1.442695
    %v4207 = vpow.pop %v4206
    %v4208 = vadd.f32 %v4207, 1.0
    %v4209 = vrcp.pop %v4208
    %v4210 = vmul.f32 1.0, %v4209
    %v4211 = vadd.f32 %v3212, %v4131
    %v4212 = vxor.u32 %v4211, 2147483648
    %v4213 = vmul.f32 %v4212, 1.442695
    %v4214 = vpow.pop %v4213
    %v4215 = vadd.f32 %v4214, 1.0
    %v4216 = vrcp.pop %v4215
    %v4217 = vmul.f32 1.0, %v4216
    %v4218 = vmul.f32 %v4210, %v4201
    %v4219 = vadd.f32 %v3397, %v4218
    %v4220 = vtanh.pop %v4219
    %v4221 = vsub.f32 1.0, %v4217
    %v4222 = vmul.f32 %v4221, %v4220
    %v4223 = vmul.f32 %v4217, %v3990
    %v4224 = vadd.f32 %v4222, %v4223
    %v4226 = vsel %vm187, %v4224, 0
    %4228 = vmatprep.subr.mxu0 0.0
    %4229 = vmatpush1.msra.mxu0 0.0
    %4230 = vmatprep.subr.mxu0 0.0
    %4231 = vmatpush1.msra.mxu0 0.0
    %4232 = vmatprep.subr.mxu0 0.0
    %4233 = vmatpush1.msra.mxu0 0.0
    %4234 = vmatprep.subr.mxu0 0.0
    %4235 = vmatpush1.msra.mxu0 0.0
    %4236 = vmatprep.subr.mxu0 0.0
    %4237 = vmatpush1.msra.mxu0 0.0
    %4238 = vmatprep.subr.mxu0 0.0
    %4239 = vmatpush1.msra.mxu0 0.0
    %4240 = vmatprep.subr.mxu0 0.0
    %4241 = vmatpush1.msra.mxu0 0.0
    %4242 = vmatprep.subr.mxu0 0.0
    %4243 = vmatpush1.msra.mxu0 0.0
    %4244 = vmatprep.subr.mxu0 0.0
    %4245 = vmatpush1.msra.mxu0 0.0
    %4246 = vmatprep.subr.mxu0 0.0
    %4247 = vmatpush1.msra.mxu0 0.0
    %4248 = vmatprep.subr.mxu0 0.0
    %4249 = vmatpush1.msra.mxu0 0.0
    %4250 = vmatprep.subr.mxu0 0.0
    %4251 = vmatpush1.msra.mxu0 0.0
    %4252 = vmatprep.subr.mxu0 0.0
    %4253 = vmatpush1.msra.mxu0 %v3493
    %4254 = vmatprep.subr.mxu0 0.0
    %4255 = vmatpush1.msra.mxu0 %v3492
    %4256 = vmatprep.subr.mxu0 0.0
    %4257 = vmatpush1.msra.mxu0 %v3491
    %4258 = vmatprep.subr.mxu0 0.0
    %4259 = vmatpush1.msra.mxu0 %v3490
    %4260 = vmatprep.subr.mxu0 0.0
    %4261 = vmatpush2.msra.mxu0 0.0
    %4262 = vmatprep.subr.mxu0 0.0
    %4263 = vmatpush2.msra.mxu0 0.0
    %4264 = vmatprep.subr.mxu0 0.0
    %4265 = vmatpush2.msra.mxu0 0.0
    %4266 = vmatprep.subr.mxu0 0.0
    %4267 = vmatpush2.msra.mxu0 0.0
    %4268 = vmatprep.subr.mxu0 0.0
    %4269 = vmatpush2.msra.mxu0 0.0
    %4270 = vmatprep.subr.mxu0 0.0
    %4271 = vmatpush2.msra.mxu0 0.0
    %4272 = vmatprep.subr.mxu0 0.0
    %4273 = vmatpush2.msra.mxu0 0.0
    %4274 = vmatprep.subr.mxu0 0.0
    %4275 = vmatpush2.msra.mxu0 0.0
    %4276 = vmatprep.subr.mxu0 0.0
    %4277 = vmatpush2.msra.mxu0 0.0
    %4278 = vmatprep.subr.mxu0 0.0
    %4279 = vmatpush2.msra.mxu0 0.0
    %4280 = vmatprep.subr.mxu0 0.0
    %4281 = vmatpush2.msra.mxu0 0.0
    %4282 = vmatprep.subr.mxu0 0.0
    %4283 = vmatpush2.msra.mxu0 0.0
    %4284 = vmatprep.subr.mxu0 0.0
    %4285 = vmatpush2.msra.mxu0 0.0
    %4286 = vmatprep.subr.mxu0 0.0
    %4287 = vmatpush2.msra.mxu0 0.0
    %4288 = vmatprep.subr.mxu0 0.0
    %4289 = vmatpush2.msra.mxu0 0.0
    %4290 = vmatprep.subr.mxu0 0.0
    %4291 = vmatpush2.msra.mxu0 0.0
    %4292 = vmatprep.mubr.f32.mxu0 0.0
    %4293 = vmatmul.mubr.f32.gmra.mxu0 %v4226
    %v4294 = vpop.f32.mrf.mxu0
    %v4295 = vadd.f32 %v3509, %v4294
    %v4296 = vpop.f32.mrf.mxu0
    %4297 = vdwg.mxu0
    %4298 = vmatprep.subr.mxu0 0.0
    %4299 = vmatpush1.msra.mxu0 0.0
    %4300 = vmatprep.subr.mxu0 0.0
    %4301 = vmatpush1.msra.mxu0 0.0
    %4302 = vmatprep.subr.mxu0 0.0
    %4303 = vmatpush1.msra.mxu0 0.0
    %4304 = vmatprep.subr.mxu0 0.0
    %4305 = vmatpush1.msra.mxu0 0.0
    %4306 = vmatprep.subr.mxu0 0.0
    %4307 = vmatpush1.msra.mxu0 0.0
    %4308 = vmatprep.subr.mxu0 0.0
    %4309 = vmatpush1.msra.mxu0 0.0
    %4310 = vmatprep.subr.mxu0 0.0
    %4311 = vmatpush1.msra.mxu0 0.0
    %4312 = vmatprep.subr.mxu0 0.0
    %4313 = vmatpush1.msra.mxu0 0.0
    %4314 = vmatprep.subr.mxu0 0.0
    %4315 = vmatpush1.msra.mxu0 0.0
    %4316 = vmatprep.subr.mxu0 0.0
    %4317 = vmatpush1.msra.mxu0 0.0
    %4318 = vmatprep.subr.mxu0 0.0
    %4319 = vmatpush1.msra.mxu0 0.0
    %4320 = vmatprep.subr.mxu0 0.0
    %4321 = vmatpush1.msra.mxu0 0.0
    %4322 = vmatprep.subr.mxu0 0.0
    %4323 = vmatpush1.msra.mxu0 %v3497
    %4324 = vmatprep.subr.mxu0 0.0
    %4325 = vmatpush1.msra.mxu0 %v3496
    %4326 = vmatprep.subr.mxu0 0.0
    %4327 = vmatpush1.msra.mxu0 %v3495
    %4328 = vmatprep.subr.mxu0 0.0
    %4329 = vmatpush1.msra.mxu0 %v3494
    %4330 = vmatprep.subr.mxu0 0.0
    %4331 = vmatpush2.msra.mxu0 0.0
    %4332 = vmatprep.subr.mxu0 0.0
    %4333 = vmatpush2.msra.mxu0 0.0
    %4334 = vmatprep.subr.mxu0 0.0
    %4335 = vmatpush2.msra.mxu0 0.0
    %4336 = vmatprep.subr.mxu0 0.0
    %4337 = vmatpush2.msra.mxu0 0.0
    %4338 = vmatprep.subr.mxu0 0.0
    %4339 = vmatpush2.msra.mxu0 0.0
    %4340 = vmatprep.subr.mxu0 0.0
    %4341 = vmatpush2.msra.mxu0 0.0
    %4342 = vmatprep.subr.mxu0 0.0
    %4343 = vmatpush2.msra.mxu0 0.0
    %4344 = vmatprep.subr.mxu0 0.0
    %4345 = vmatpush2.msra.mxu0 0.0
    %4346 = vmatprep.subr.mxu0 0.0
    %4347 = vmatpush2.msra.mxu0 0.0
    %4348 = vmatprep.subr.mxu0 0.0
    %4349 = vmatpush2.msra.mxu0 0.0
    %4350 = vmatprep.subr.mxu0 0.0
    %4351 = vmatpush2.msra.mxu0 0.0
    %4352 = vmatprep.subr.mxu0 0.0
    %4353 = vmatpush2.msra.mxu0 0.0
    %4354 = vmatprep.subr.mxu0 0.0
    %4355 = vmatpush2.msra.mxu0 0.0
    %4356 = vmatprep.subr.mxu0 0.0
    %4357 = vmatpush2.msra.mxu0 0.0
    %4358 = vmatprep.subr.mxu0 0.0
    %4359 = vmatpush2.msra.mxu0 0.0
    %4360 = vmatprep.subr.mxu0 0.0
    %4361 = vmatpush2.msra.mxu0 0.0
    %4362 = vmatprep.mubr.f32.mxu0 0.0
    %4363 = vmatmul.mubr.f32.gmra.mxu0 %v4226
    %v4364 = vpop.f32.mrf.mxu0
    %v4365 = vadd.f32 %v3588, %v4364
    %v4366 = vpop.f32.mrf.mxu0
    %4367 = vdwg.mxu0
    %4368 = vmatprep.subr.mxu0 0.0
    %4369 = vmatpush1.msra.mxu0 0.0
    %4370 = vmatprep.subr.mxu0 0.0
    %4371 = vmatpush1.msra.mxu0 0.0
    %4372 = vmatprep.subr.mxu0 0.0
    %4373 = vmatpush1.msra.mxu0 0.0
    %4374 = vmatprep.subr.mxu0 0.0
    %4375 = vmatpush1.msra.mxu0 0.0
    %4376 = vmatprep.subr.mxu0 0.0
    %4377 = vmatpush1.msra.mxu0 0.0
    %4378 = vmatprep.subr.mxu0 0.0
    %4379 = vmatpush1.msra.mxu0 0.0
    %4380 = vmatprep.subr.mxu0 0.0
    %4381 = vmatpush1.msra.mxu0 0.0
    %4382 = vmatprep.subr.mxu0 0.0
    %4383 = vmatpush1.msra.mxu0 0.0
    %4384 = vmatprep.subr.mxu0 0.0
    %4385 = vmatpush1.msra.mxu0 0.0
    %4386 = vmatprep.subr.mxu0 0.0
    %4387 = vmatpush1.msra.mxu0 0.0
    %4388 = vmatprep.subr.mxu0 0.0
    %4389 = vmatpush1.msra.mxu0 0.0
    %4390 = vmatprep.subr.mxu0 0.0
    %4391 = vmatpush1.msra.mxu0 0.0
    %4392 = vmatprep.subr.mxu0 0.0
    %4393 = vmatpush1.msra.mxu0 %v3501
    %4394 = vmatprep.subr.mxu0 0.0
    %4395 = vmatpush1.msra.mxu0 %v3500
    %4396 = vmatprep.subr.mxu0 0.0
    %4397 = vmatpush1.msra.mxu0 %v3499
    %4398 = vmatprep.subr.mxu0 0.0
    %4399 = vmatpush1.msra.mxu0 %v3498
    %4400 = vmatprep.subr.mxu0 0.0
    %4401 = vmatpush2.msra.mxu0 0.0
    %4402 = vmatprep.subr.mxu0 0.0
    %4403 = vmatpush2.msra.mxu0 0.0
    %4404 = vmatprep.subr.mxu0 0.0
    %4405 = vmatpush2.msra.mxu0 0.0
    %4406 = vmatprep.subr.mxu0 0.0
    %4407 = vmatpush2.msra.mxu0 0.0
    %4408 = vmatprep.subr.mxu0 0.0
    %4409 = vmatpush2.msra.mxu0 0.0
    %4410 = vmatprep.subr.mxu0 0.0
    %4411 = vmatpush2.msra.mxu0 0.0
    %4412 = vmatprep.subr.mxu0 0.0
    %4413 = vmatpush2.msra.mxu0 0.0
    %4414 = vmatprep.subr.mxu0 0.0
    %4415 = vmatpush2.msra.mxu0 0.0
    %4416 = vmatprep.subr.mxu0 0.0
    %4417 = vmatpush2.msra.mxu0 0.0
    %4418 = vmatprep.subr.mxu0 0.0
    %4419 = vmatpush2.msra.mxu0 0.0
    %4420 = vmatprep.subr.mxu0 0.0
    %4421 = vmatpush2.msra.mxu0 0.0
    %4422 = vmatprep.subr.mxu0 0.0
    %4423 = vmatpush2.msra.mxu0 0.0
    %4424 = vmatprep.subr.mxu0 0.0
    %4425 = vmatpush2.msra.mxu0 0.0
    %4426 = vmatprep.subr.mxu0 0.0
    %4427 = vmatpush2.msra.mxu0 0.0
    %4428 = vmatprep.subr.mxu0 0.0
    %4429 = vmatpush2.msra.mxu0 0.0
    %4430 = vmatprep.subr.mxu0 0.0
    %4431 = vmatpush2.msra.mxu0 0.0
    %4432 = vmatprep.mubr.f32.mxu0 0.0
    %4433 = vmatmul.mubr.f32.gmra.mxu0 %v4226
    %v4434 = vpop.f32.mrf.mxu0
    %v4435 = vadd.f32 %v3664, %v4434
    %v4436 = vpop.f32.mrf.mxu0
    %4437 = vdwg.mxu0
    %v4438 = vadd.f32 %v3032, %v4295
    %v4439 = vxor.u32 %v4438, 2147483648
    %v4440 = vmul.f32 %v4439, 1.442695
    %v4441 = vpow.pop %v4440
    %v4442 = vadd.f32 %v4441, 1.0
    %v4443 = vrcp.pop %v4442
    %v4444 = vmul.f32 1.0, %v4443
    %v4445 = vadd.f32 %v3217, %v4365
    %v4446 = vxor.u32 %v4445, 2147483648
    %v4447 = vmul.f32 %v4446, 1.442695
    %v4448 = vpow.pop %v4447
    %v4449 = vadd.f32 %v4448, 1.0
    %v4450 = vrcp.pop %v4449
    %v4451 = vmul.f32 1.0, %v4450
    %v4452 = vmul.f32 %v4444, %v4435
    %v4453 = vadd.f32 %v3402, %v4452
    %v4454 = vtanh.pop %v4453
    %v4455 = vsub.f32 1.0, %v4451
    %v4456 = vmul.f32 %v4455, %v4454
    %v4457 = vmul.f32 %v4451, %v4224
    %v4458 = vadd.f32 %v4456, %v4457
    %v4460 = vsel %vm187, %v4458, 0
    %4462 = vmatprep.subr.mxu0 0.0
    %4463 = vmatpush1.msra.mxu0 0.0
    %4464 = vmatprep.subr.mxu0 0.0
    %4465 = vmatpush1.msra.mxu0 0.0
    %4466 = vmatprep.subr.mxu0 0.0
    %4467 = vmatpush1.msra.mxu0 0.0
    %4468 = vmatprep.subr.mxu0 0.0
    %4469 = vmatpush1.msra.mxu0 0.0
    %4470 = vmatprep.subr.mxu0 0.0
    %4471 = vmatpush1.msra.mxu0 0.0
    %4472 = vmatprep.subr.mxu0 0.0
    %4473 = vmatpush1.msra.mxu0 0.0
    %4474 = vmatprep.subr.mxu0 0.0
    %4475 = vmatpush1.msra.mxu0 0.0
    %4476 = vmatprep.subr.mxu0 0.0
    %4477 = vmatpush1.msra.mxu0 0.0
    %4478 = vmatprep.subr.mxu0 0.0
    %4479 = vmatpush1.msra.mxu0 0.0
    %4480 = vmatprep.subr.mxu0 0.0
    %4481 = vmatpush1.msra.mxu0 0.0
    %4482 = vmatprep.subr.mxu0 0.0
    %4483 = vmatpush1.msra.mxu0 0.0
    %4484 = vmatprep.subr.mxu0 0.0
    %4485 = vmatpush1.msra.mxu0 0.0
    %4486 = vmatprep.subr.mxu0 0.0
    %4487 = vmatpush1.msra.mxu0 %v3493
    %4488 = vmatprep.subr.mxu0 0.0
    %4489 = vmatpush1.msra.mxu0 %v3492
    %4490 = vmatprep.subr.mxu0 0.0
    %4491 = vmatpush1.msra.mxu0 %v3491
    %4492 = vmatprep.subr.mxu0 0.0
    %4493 = vmatpush1.msra.mxu0 %v3490
    %4494 = vmatprep.subr.mxu0 0.0
    %4495 = vmatpush2.msra.mxu0 0.0
    %4496 = vmatprep.subr.mxu0 0.0
    %4497 = vmatpush2.msra.mxu0 0.0
    %4498 = vmatprep.subr.mxu0 0.0
    %4499 = vmatpush2.msra.mxu0 0.0
    %4500 = vmatprep.subr.mxu0 0.0
    %4501 = vmatpush2.msra.mxu0 0.0
    %4502 = vmatprep.subr.mxu0 0.0
    %4503 = vmatpush2.msra.mxu0 0.0
    %4504 = vmatprep.subr.mxu0 0.0
    %4505 = vmatpush2.msra.mxu0 0.0
    %4506 = vmatprep.subr.mxu0 0.0
    %4507 = vmatpush2.msra.mxu0 0.0
    %4508 = vmatprep.subr.mxu0 0.0
    %4509 = vmatpush2.msra.mxu0 0.0
    %4510 = vmatprep.subr.mxu0 0.0
    %4511 = vmatpush2.msra.mxu0 0.0
    %4512 = vmatprep.subr.mxu0 0.0
    %4513 = vmatpush2.msra.mxu0 0.0
    %4514 = vmatprep.subr.mxu0 0.0
    %4515 = vmatpush2.msra.mxu0 0.0
    %4516 = vmatprep.subr.mxu0 0.0
    %4517 = vmatpush2.msra.mxu0 0.0
    %4518 = vmatprep.subr.mxu0 0.0
    %4519 = vmatpush2.msra.mxu0 0.0
    %4520 = vmatprep.subr.mxu0 0.0
    %4521 = vmatpush2.msra.mxu0 0.0
    %4522 = vmatprep.subr.mxu0 0.0
    %4523 = vmatpush2.msra.mxu0 0.0
    %4524 = vmatprep.subr.mxu0 0.0
    %4525 = vmatpush2.msra.mxu0 0.0
    %4526 = vmatprep.mubr.f32.mxu0 0.0
    %4527 = vmatmul.mubr.f32.gmra.mxu0 %v4460
    %v4528 = vpop.f32.mrf.mxu0
    %v4529 = vadd.f32 %v3509, %v4528
    %v4530 = vpop.f32.mrf.mxu0
    %4531 = vdwg.mxu0
    %4532 = vmatprep.subr.mxu0 0.0
    %4533 = vmatpush1.msra.mxu0 0.0
    %4534 = vmatprep.subr.mxu0 0.0
    %4535 = vmatpush1.msra.mxu0 0.0
    %4536 = vmatprep.subr.mxu0 0.0
    %4537 = vmatpush1.msra.mxu0 0.0
    %4538 = vmatprep.subr.mxu0 0.0
    %4539 = vmatpush1.msra.mxu0 0.0
    %4540 = vmatprep.subr.mxu0 0.0
    %4541 = vmatpush1.msra.mxu0 0.0
    %4542 = vmatprep.subr.mxu0 0.0
    %4543 = vmatpush1.msra.mxu0 0.0
    %4544 = vmatprep.subr.mxu0 0.0
    %4545 = vmatpush1.msra.mxu0 0.0
    %4546 = vmatprep.subr.mxu0 0.0
    %4547 = vmatpush1.msra.mxu0 0.0
    %4548 = vmatprep.subr.mxu0 0.0
    %4549 = vmatpush1.msra.mxu0 0.0
    %4550 = vmatprep.subr.mxu0 0.0
    %4551 = vmatpush1.msra.mxu0 0.0
    %4552 = vmatprep.subr.mxu0 0.0
    %4553 = vmatpush1.msra.mxu0 0.0
    %4554 = vmatprep.subr.mxu0 0.0
    %4555 = vmatpush1.msra.mxu0 0.0
    %4556 = vmatprep.subr.mxu0 0.0
    %4557 = vmatpush1.msra.mxu0 %v3497
    %4558 = vmatprep.subr.mxu0 0.0
    %4559 = vmatpush1.msra.mxu0 %v3496
    %4560 = vmatprep.subr.mxu0 0.0
    %4561 = vmatpush1.msra.mxu0 %v3495
    %4562 = vmatprep.subr.mxu0 0.0
    %4563 = vmatpush1.msra.mxu0 %v3494
    %4564 = vmatprep.subr.mxu0 0.0
    %4565 = vmatpush2.msra.mxu0 0.0
    %4566 = vmatprep.subr.mxu0 0.0
    %4567 = vmatpush2.msra.mxu0 0.0
    %4568 = vmatprep.subr.mxu0 0.0
    %4569 = vmatpush2.msra.mxu0 0.0
    %4570 = vmatprep.subr.mxu0 0.0
    %4571 = vmatpush2.msra.mxu0 0.0
    %4572 = vmatprep.subr.mxu0 0.0
    %4573 = vmatpush2.msra.mxu0 0.0
    %4574 = vmatprep.subr.mxu0 0.0
    %4575 = vmatpush2.msra.mxu0 0.0
    %4576 = vmatprep.subr.mxu0 0.0
    %4577 = vmatpush2.msra.mxu0 0.0
    %4578 = vmatprep.subr.mxu0 0.0
    %4579 = vmatpush2.msra.mxu0 0.0
    %4580 = vmatprep.subr.mxu0 0.0
    %4581 = vmatpush2.msra.mxu0 0.0
    %4582 = vmatprep.subr.mxu0 0.0
    %4583 = vmatpush2.msra.mxu0 0.0
    %4584 = vmatprep.subr.mxu0 0.0
    %4585 = vmatpush2.msra.mxu0 0.0
    %4586 = vmatprep.subr.mxu0 0.0
    %4587 = vmatpush2.msra.mxu0 0.0
    %4588 = vmatprep.subr.mxu0 0.0
    %4589 = vmatpush2.msra.mxu0 0.0
    %4590 = vmatprep.subr.mxu0 0.0
    %4591 = vmatpush2.msra.mxu0 0.0
    %4592 = vmatprep.subr.mxu0 0.0
    %4593 = vmatpush2.msra.mxu0 0.0
    %4594 = vmatprep.subr.mxu0 0.0
    %4595 = vmatpush2.msra.mxu0 0.0
    %4596 = vmatprep.mubr.f32.mxu0 0.0
    %4597 = vmatmul.mubr.f32.gmra.mxu0 %v4460
    %v4598 = vpop.f32.mrf.mxu0
    %v4599 = vadd.f32 %v3588, %v4598
    %v4600 = vpop.f32.mrf.mxu0
    %4601 = vdwg.mxu0
    %4602 = vmatprep.subr.mxu0 0.0
    %4603 = vmatpush1.msra.mxu0 0.0
    %4604 = vmatprep.subr.mxu0 0.0
    %4605 = vmatpush1.msra.mxu0 0.0
    %4606 = vmatprep.subr.mxu0 0.0
    %4607 = vmatpush1.msra.mxu0 0.0
    %4608 = vmatprep.subr.mxu0 0.0
    %4609 = vmatpush1.msra.mxu0 0.0
    %4610 = vmatprep.subr.mxu0 0.0
    %4611 = vmatpush1.msra.mxu0 0.0
    %4612 = vmatprep.subr.mxu0 0.0
    %4613 = vmatpush1.msra.mxu0 0.0
    %4614 = vmatprep.subr.mxu0 0.0
    %4615 = vmatpush1.msra.mxu0 0.0
    %4616 = vmatprep.subr.mxu0 0.0
    %4617 = vmatpush1.msra.mxu0 0.0
    %4618 = vmatprep.subr.mxu0 0.0
    %4619 = vmatpush1.msra.mxu0 0.0
    %4620 = vmatprep.subr.mxu0 0.0
    %4621 = vmatpush1.msra.mxu0 0.0
    %4622 = vmatprep.subr.mxu0 0.0
    %4623 = vmatpush1.msra.mxu0 0.0
    %4624 = vmatprep.subr.mxu0 0.0
    %4625 = vmatpush1.msra.mxu0 0.0
    %4626 = vmatprep.subr.mxu0 0.0
    %4627 = vmatpush1.msra.mxu0 %v3501
    %4628 = vmatprep.subr.mxu0 0.0
    %4629 = vmatpush1.msra.mxu0 %v3500
    %4630 = vmatprep.subr.mxu0 0.0
    %4631 = vmatpush1.msra.mxu0 %v3499
    %4632 = vmatprep.subr.mxu0 0.0
    %4633 = vmatpush1.msra.mxu0 %v3498
    %4634 = vmatprep.subr.mxu0 0.0
    %4635 = vmatpush2.msra.mxu0 0.0
    %4636 = vmatprep.subr.mxu0 0.0
    %4637 = vmatpush2.msra.mxu0 0.0
    %4638 = vmatprep.subr.mxu0 0.0
    %4639 = vmatpush2.msra.mxu0 0.0
    %4640 = vmatprep.subr.mxu0 0.0
    %4641 = vmatpush2.msra.mxu0 0.0
    %4642 = vmatprep.subr.mxu0 0.0
    %4643 = vmatpush2.msra.mxu0 0.0
    %4644 = vmatprep.subr.mxu0 0.0
    %4645 = vmatpush2.msra.mxu0 0.0
    %4646 = vmatprep.subr.mxu0 0.0
    %4647 = vmatpush2.msra.mxu0 0.0
    %4648 = vmatprep.subr.mxu0 0.0
    %4649 = vmatpush2.msra.mxu0 0.0
    %4650 = vmatprep.subr.mxu0 0.0
    %4651 = vmatpush2.msra.mxu0 0.0
    %4652 = vmatprep.subr.mxu0 0.0
    %4653 = vmatpush2.msra.mxu0 0.0
    %4654 = vmatprep.subr.mxu0 0.0
    %4655 = vmatpush2.msra.mxu0 0.0
    %4656 = vmatprep.subr.mxu0 0.0
    %4657 = vmatpush2.msra.mxu0 0.0
    %4658 = vmatprep.subr.mxu0 0.0
    %4659 = vmatpush2.msra.mxu0 0.0
    %4660 = vmatprep.subr.mxu0 0.0
    %4661 = vmatpush2.msra.mxu0 0.0
    %4662 = vmatprep.subr.mxu0 0.0
    %4663 = vmatpush2.msra.mxu0 0.0
    %4664 = vmatprep.subr.mxu0 0.0
    %4665 = vmatpush2.msra.mxu0 0.0
    %4666 = vmatprep.mubr.f32.mxu0 0.0
    %4667 = vmatmul.mubr.f32.gmra.mxu0 %v4460
    %v4668 = vpop.f32.mrf.mxu0
    %v4669 = vadd.f32 %v3664, %v4668
    %v4670 = vpop.f32.mrf.mxu0
    %4671 = vdwg.mxu0
    %v4672 = vadd.f32 %v3037, %v4529
    %v4673 = vxor.u32 %v4672, 2147483648
    %v4674 = vmul.f32 %v4673, 1.442695
    %v4675 = vpow.pop %v4674
    %v4676 = vadd.f32 %v4675, 1.0
    %v4677 = vrcp.pop %v4676
    %v4678 = vmul.f32 1.0, %v4677
    %v4679 = vadd.f32 %v3222, %v4599
    %v4680 = vxor.u32 %v4679, 2147483648
    %v4681 = vmul.f32 %v4680, 1.442695
    %v4682 = vpow.pop %v4681
    %v4683 = vadd.f32 %v4682, 1.0
    %v4684 = vrcp.pop %v4683
    %v4685 = vmul.f32 1.0, %v4684
    %v4686 = vmul.f32 %v4678, %v4669
    %v4687 = vadd.f32 %v3407, %v4686
    %v4688 = vtanh.pop %v4687
    %v4689 = vsub.f32 1.0, %v4685
    %v4690 = vmul.f32 %v4689, %v4688
    %v4691 = vmul.f32 %v4685, %v4458
    %v4692 = vadd.f32 %v4690, %v4691
    %v4694 = vsel %vm187, %v4692, 0
    %4696 = vmatprep.subr.mxu0 0.0
    %4697 = vmatpush1.msra.mxu0 0.0
    %4698 = vmatprep.subr.mxu0 0.0
    %4699 = vmatpush1.msra.mxu0 0.0
    %4700 = vmatprep.subr.mxu0 0.0
    %4701 = vmatpush1.msra.mxu0 0.0
    %4702 = vmatprep.subr.mxu0 0.0
    %4703 = vmatpush1.msra.mxu0 0.0
    %4704 = vmatprep.subr.mxu0 0.0
    %4705 = vmatpush1.msra.mxu0 0.0
    %4706 = vmatprep.subr.mxu0 0.0
    %4707 = vmatpush1.msra.mxu0 0.0
    %4708 = vmatprep.subr.mxu0 0.0
    %4709 = vmatpush1.msra.mxu0 0.0
    %4710 = vmatprep.subr.mxu0 0.0
    %4711 = vmatpush1.msra.mxu0 0.0
    %4712 = vmatprep.subr.mxu0 0.0
    %4713 = vmatpush1.msra.mxu0 0.0
    %4714 = vmatprep.subr.mxu0 0.0
    %4715 = vmatpush1.msra.mxu0 0.0
    %4716 = vmatprep.subr.mxu0 0.0
    %4717 = vmatpush1.msra.mxu0 0.0
    %4718 = vmatprep.subr.mxu0 0.0
    %4719 = vmatpush1.msra.mxu0 0.0
    %4720 = vmatprep.subr.mxu0 0.0
    %4721 = vmatpush1.msra.mxu0 %v3493
    %4722 = vmatprep.subr.mxu0 0.0
    %4723 = vmatpush1.msra.mxu0 %v3492
    %4724 = vmatprep.subr.mxu0 0.0
    %4725 = vmatpush1.msra.mxu0 %v3491
    %4726 = vmatprep.subr.mxu0 0.0
    %4727 = vmatpush1.msra.mxu0 %v3490
    %4728 = vmatprep.subr.mxu0 0.0
    %4729 = vmatpush2.msra.mxu0 0.0
    %4730 = vmatprep.subr.mxu0 0.0
    %4731 = vmatpush2.msra.mxu0 0.0
    %4732 = vmatprep.subr.mxu0 0.0
    %4733 = vmatpush2.msra.mxu0 0.0
    %4734 = vmatprep.subr.mxu0 0.0
    %4735 = vmatpush2.msra.mxu0 0.0
    %4736 = vmatprep.subr.mxu0 0.0
    %4737 = vmatpush2.msra.mxu0 0.0
    %4738 = vmatprep.subr.mxu0 0.0
    %4739 = vmatpush2.msra.mxu0 0.0
    %4740 = vmatprep.subr.mxu0 0.0
    %4741 = vmatpush2.msra.mxu0 0.0
    %4742 = vmatprep.subr.mxu0 0.0
    %4743 = vmatpush2.msra.mxu0 0.0
    %4744 = vmatprep.subr.mxu0 0.0
    %4745 = vmatpush2.msra.mxu0 0.0
    %4746 = vmatprep.subr.mxu0 0.0
    %4747 = vmatpush2.msra.mxu0 0.0
    %4748 = vmatprep.subr.mxu0 0.0
    %4749 = vmatpush2.msra.mxu0 0.0
    %4750 = vmatprep.subr.mxu0 0.0
    %4751 = vmatpush2.msra.mxu0 0.0
    %4752 = vmatprep.subr.mxu0 0.0
    %4753 = vmatpush2.msra.mxu0 0.0
    %4754 = vmatprep.subr.mxu0 0.0
    %4755 = vmatpush2.msra.mxu0 0.0
    %4756 = vmatprep.subr.mxu0 0.0
    %4757 = vmatpush2.msra.mxu0 0.0
    %4758 = vmatprep.subr.mxu0 0.0
    %4759 = vmatpush2.msra.mxu0 0.0
    %4760 = vmatprep.mubr.f32.mxu0 0.0
    %4761 = vmatmul.mubr.f32.gmra.mxu0 %v4694
    %v4762 = vpop.f32.mrf.mxu0
    %v4763 = vadd.f32 %v3509, %v4762
    %v4764 = vpop.f32.mrf.mxu0
    %4765 = vdwg.mxu0
    %4766 = vmatprep.subr.mxu0 0.0
    %4767 = vmatpush1.msra.mxu0 0.0
    %4768 = vmatprep.subr.mxu0 0.0
    %4769 = vmatpush1.msra.mxu0 0.0
    %4770 = vmatprep.subr.mxu0 0.0
    %4771 = vmatpush1.msra.mxu0 0.0
    %4772 = vmatprep.subr.mxu0 0.0
    %4773 = vmatpush1.msra.mxu0 0.0
    %4774 = vmatprep.subr.mxu0 0.0
    %4775 = vmatpush1.msra.mxu0 0.0
    %4776 = vmatprep.subr.mxu0 0.0
    %4777 = vmatpush1.msra.mxu0 0.0
    %4778 = vmatprep.subr.mxu0 0.0
    %4779 = vmatpush1.msra.mxu0 0.0
    %4780 = vmatprep.subr.mxu0 0.0
    %4781 = vmatpush1.msra.mxu0 0.0
    %4782 = vmatprep.subr.mxu0 0.0
    %4783 = vmatpush1.msra.mxu0 0.0
    %4784 = vmatprep.subr.mxu0 0.0
    %4785 = vmatpush1.msra.mxu0 0.0
    %4786 = vmatprep.subr.mxu0 0.0
    %4787 = vmatpush1.msra.mxu0 0.0
    %4788 = vmatprep.subr.mxu0 0.0
    %4789 = vmatpush1.msra.mxu0 0.0
    %4790 = vmatprep.subr.mxu0 0.0
    %4791 = vmatpush1.msra.mxu0 %v3497
    %4792 = vmatprep.subr.mxu0 0.0
    %4793 = vmatpush1.msra.mxu0 %v3496
    %4794 = vmatprep.subr.mxu0 0.0
    %4795 = vmatpush1.msra.mxu0 %v3495
    %4796 = vmatprep.subr.mxu0 0.0
    %4797 = vmatpush1.msra.mxu0 %v3494
    %4798 = vmatprep.subr.mxu0 0.0
    %4799 = vmatpush2.msra.mxu0 0.0
    %4800 = vmatprep.subr.mxu0 0.0
    %4801 = vmatpush2.msra.mxu0 0.0
    %4802 = vmatprep.subr.mxu0 0.0
    %4803 = vmatpush2.msra.mxu0 0.0
    %4804 = vmatprep.subr.mxu0 0.0
    %4805 = vmatpush2.msra.mxu0 0.0
    %4806 = vmatprep.subr.mxu0 0.0
    %4807 = vmatpush2.msra.mxu0 0.0
    %4808 = vmatprep.subr.mxu0 0.0
    %4809 = vmatpush2.msra.mxu0 0.0
    %4810 = vmatprep.subr.mxu0 0.0
    %4811 = vmatpush2.msra.mxu0 0.0
    %4812 = vmatprep.subr.mxu0 0.0
    %4813 = vmatpush2.msra.mxu0 0.0
    %4814 = vmatprep.subr.mxu0 0.0
    %4815 = vmatpush2.msra.mxu0 0.0
    %4816 = vmatprep.subr.mxu0 0.0
    %4817 = vmatpush2.msra.mxu0 0.0
    %4818 = vmatprep.subr.mxu0 0.0
    %4819 = vmatpush2.msra.mxu0 0.0
    %4820 = vmatprep.subr.mxu0 0.0
    %4821 = vmatpush2.msra.mxu0 0.0
    %4822 = vmatprep.subr.mxu0 0.0
    %4823 = vmatpush2.msra.mxu0 0.0
    %4824 = vmatprep.subr.mxu0 0.0
    %4825 = vmatpush2.msra.mxu0 0.0
    %4826 = vmatprep.subr.mxu0 0.0
    %4827 = vmatpush2.msra.mxu0 0.0
    %4828 = vmatprep.subr.mxu0 0.0
    %4829 = vmatpush2.msra.mxu0 0.0
    %4830 = vmatprep.mubr.f32.mxu0 0.0
    %4831 = vmatmul.mubr.f32.gmra.mxu0 %v4694
    %v4832 = vpop.f32.mrf.mxu0
    %v4833 = vadd.f32 %v3588, %v4832
    %v4834 = vpop.f32.mrf.mxu0
    %4835 = vdwg.mxu0
    %4836 = vmatprep.subr.mxu0 0.0
    %4837 = vmatpush1.msra.mxu0 0.0
    %4838 = vmatprep.subr.mxu0 0.0
    %4839 = vmatpush1.msra.mxu0 0.0
    %4840 = vmatprep.subr.mxu0 0.0
    %4841 = vmatpush1.msra.mxu0 0.0
    %4842 = vmatprep.subr.mxu0 0.0
    %4843 = vmatpush1.msra.mxu0 0.0
    %4844 = vmatprep.subr.mxu0 0.0
    %4845 = vmatpush1.msra.mxu0 0.0
    %4846 = vmatprep.subr.mxu0 0.0
    %4847 = vmatpush1.msra.mxu0 0.0
    %4848 = vmatprep.subr.mxu0 0.0
    %4849 = vmatpush1.msra.mxu0 0.0
    %4850 = vmatprep.subr.mxu0 0.0
    %4851 = vmatpush1.msra.mxu0 0.0
    %4852 = vmatprep.subr.mxu0 0.0
    %4853 = vmatpush1.msra.mxu0 0.0
    %4854 = vmatprep.subr.mxu0 0.0
    %4855 = vmatpush1.msra.mxu0 0.0
    %4856 = vmatprep.subr.mxu0 0.0
    %4857 = vmatpush1.msra.mxu0 0.0
    %4858 = vmatprep.subr.mxu0 0.0
    %4859 = vmatpush1.msra.mxu0 0.0
    %4860 = vmatprep.subr.mxu0 0.0
    %4861 = vmatpush1.msra.mxu0 %v3501
    %4862 = vmatprep.subr.mxu0 0.0
    %4863 = vmatpush1.msra.mxu0 %v3500
    %4864 = vmatprep.subr.mxu0 0.0
    %4865 = vmatpush1.msra.mxu0 %v3499
    %4866 = vmatprep.subr.mxu0 0.0
    %4867 = vmatpush1.msra.mxu0 %v3498
    %4868 = vmatprep.subr.mxu0 0.0
    %4869 = vmatpush2.msra.mxu0 0.0
    %4870 = vmatprep.subr.mxu0 0.0
    %4871 = vmatpush2.msra.mxu0 0.0
    %4872 = vmatprep.subr.mxu0 0.0
    %4873 = vmatpush2.msra.mxu0 0.0
    %4874 = vmatprep.subr.mxu0 0.0
    %4875 = vmatpush2.msra.mxu0 0.0
    %4876 = vmatprep.subr.mxu0 0.0
    %4877 = vmatpush2.msra.mxu0 0.0
    %4878 = vmatprep.subr.mxu0 0.0
    %4879 = vmatpush2.msra.mxu0 0.0
    %4880 = vmatprep.subr.mxu0 0.0
    %4881 = vmatpush2.msra.mxu0 0.0
    %4882 = vmatprep.subr.mxu0 0.0
    %4883 = vmatpush2.msra.mxu0 0.0
    %4884 = vmatprep.subr.mxu0 0.0
    %4885 = vmatpush2.msra.mxu0 0.0
    %4886 = vmatprep.subr.mxu0 0.0
    %4887 = vmatpush2.msra.mxu0 0.0
    %4888 = vmatprep.subr.mxu0 0.0
    %4889 = vmatpush2.msra.mxu0 0.0
    %4890 = vmatprep.subr.mxu0 0.0
    %4891 = vmatpush2.msra.mxu0 0.0
    %4892 = vmatprep.subr.mxu0 0.0
    %4893 = vmatpush2.msra.mxu0 0.0
    %4894 = vmatprep.subr.mxu0 0.0
    %4895 = vmatpush2.msra.mxu0 0.0
    %4896 = vmatprep.subr.mxu0 0.0
    %4897 = vmatpush2.msra.mxu0 0.0
    %4898 = vmatprep.subr.mxu0 0.0
    %4899 = vmatpush2.msra.mxu0 0.0
    %4900 = vmatprep.mubr.f32.mxu0 0.0
    %4901 = vmatmul.mubr.f32.gmra.mxu0 %v4694
    %v4902 = vpop.f32.mrf.mxu0
    %v4903 = vadd.f32 %v3664, %v4902
    %v4904 = vpop.f32.mrf.mxu0
    %4905 = vdwg.mxu0
    %v4906 = vadd.f32 %v3042, %v4763
    %v4907 = vxor.u32 %v4906, 2147483648
    %v4908 = vmul.f32 %v4907, 1.442695
    %v4909 = vpow.pop %v4908
    %v4910 = vadd.f32 %v4909, 1.0
    %v4911 = vrcp.pop %v4910
    %v4912 = vmul.f32 1.0, %v4911
    %v4913 = vadd.f32 %v3227, %v4833
    %v4914 = vxor.u32 %v4913, 2147483648
    %v4915 = vmul.f32 %v4914, 1.442695
    %v4916 = vpow.pop %v4915
    %v4917 = vadd.f32 %v4916, 1.0
    %v4918 = vrcp.pop %v4917
    %v4919 = vmul.f32 1.0, %v4918
    %v4920 = vmul.f32 %v4912, %v4903
    %v4921 = vadd.f32 %v3412, %v4920
    %v4922 = vtanh.pop %v4921
    %v4923 = vsub.f32 1.0, %v4919
    %v4924 = vmul.f32 %v4923, %v4922
    %v4925 = vmul.f32 %v4919, %v4692
    %v4926 = vadd.f32 %v4924, %v4925
    %v4928 = vsel %vm187, %v4926, 0
    %4930 = vmatprep.subr.mxu0 0.0
    %4931 = vmatpush1.msra.mxu0 0.0
    %4932 = vmatprep.subr.mxu0 0.0
    %4933 = vmatpush1.msra.mxu0 0.0
    %4934 = vmatprep.subr.mxu0 0.0
    %4935 = vmatpush1.msra.mxu0 0.0
    %4936 = vmatprep.subr.mxu0 0.0
    %4937 = vmatpush1.msra.mxu0 0.0
    %4938 = vmatprep.subr.mxu0 0.0
    %4939 = vmatpush1.msra.mxu0 0.0
    %4940 = vmatprep.subr.mxu0 0.0
    %4941 = vmatpush1.msra.mxu0 0.0
    %4942 = vmatprep.subr.mxu0 0.0
    %4943 = vmatpush1.msra.mxu0 0.0
    %4944 = vmatprep.subr.mxu0 0.0
    %4945 = vmatpush1.msra.mxu0 0.0
    %4946 = vmatprep.subr.mxu0 0.0
    %4947 = vmatpush1.msra.mxu0 0.0
    %4948 = vmatprep.subr.mxu0 0.0
    %4949 = vmatpush1.msra.mxu0 0.0
    %4950 = vmatprep.subr.mxu0 0.0
    %4951 = vmatpush1.msra.mxu0 0.0
    %4952 = vmatprep.subr.mxu0 0.0
    %4953 = vmatpush1.msra.mxu0 0.0
    %4954 = vmatprep.subr.mxu0 0.0
    %4955 = vmatpush1.msra.mxu0 %v3493
    %4956 = vmatprep.subr.mxu0 0.0
    %4957 = vmatpush1.msra.mxu0 %v3492
    %4958 = vmatprep.subr.mxu0 0.0
    %4959 = vmatpush1.msra.mxu0 %v3491
    %4960 = vmatprep.subr.mxu0 0.0
    %4961 = vmatpush1.msra.mxu0 %v3490
    %4962 = vmatprep.subr.mxu0 0.0
    %4963 = vmatpush2.msra.mxu0 0.0
    %4964 = vmatprep.subr.mxu0 0.0
    %4965 = vmatpush2.msra.mxu0 0.0
    %4966 = vmatprep.subr.mxu0 0.0
    %4967 = vmatpush2.msra.mxu0 0.0
    %4968 = vmatprep.subr.mxu0 0.0
    %4969 = vmatpush2.msra.mxu0 0.0
    %4970 = vmatprep.subr.mxu0 0.0
    %4971 = vmatpush2.msra.mxu0 0.0
    %4972 = vmatprep.subr.mxu0 0.0
    %4973 = vmatpush2.msra.mxu0 0.0
    %4974 = vmatprep.subr.mxu0 0.0
    %4975 = vmatpush2.msra.mxu0 0.0
    %4976 = vmatprep.subr.mxu0 0.0
    %4977 = vmatpush2.msra.mxu0 0.0
    %4978 = vmatprep.subr.mxu0 0.0
    %4979 = vmatpush2.msra.mxu0 0.0
    %4980 = vmatprep.subr.mxu0 0.0
    %4981 = vmatpush2.msra.mxu0 0.0
    %4982 = vmatprep.subr.mxu0 0.0
    %4983 = vmatpush2.msra.mxu0 0.0
    %4984 = vmatprep.subr.mxu0 0.0
    %4985 = vmatpush2.msra.mxu0 0.0
    %4986 = vmatprep.subr.mxu0 0.0
    %4987 = vmatpush2.msra.mxu0 0.0
    %4988 = vmatprep.subr.mxu0 0.0
    %4989 = vmatpush2.msra.mxu0 0.0
    %4990 = vmatprep.subr.mxu0 0.0
    %4991 = vmatpush2.msra.mxu0 0.0
    %4992 = vmatprep.subr.mxu0 0.0
    %4993 = vmatpush2.msra.mxu0 0.0
    %4994 = vmatprep.mubr.f32.mxu0 0.0
    %4995 = vmatmul.mubr.f32.gmra.mxu0 %v4928
    %v4996 = vpop.f32.mrf.mxu0
    %v4997 = vadd.f32 %v3509, %v4996
    %v4998 = vpop.f32.mrf.mxu0
    %4999 = vdwg.mxu0
    %5000 = vmatprep.subr.mxu0 0.0
    %5001 = vmatpush1.msra.mxu0 0.0
    %5002 = vmatprep.subr.mxu0 0.0
    %5003 = vmatpush1.msra.mxu0 0.0
    %5004 = vmatprep.subr.mxu0 0.0
    %5005 = vmatpush1.msra.mxu0 0.0
    %5006 = vmatprep.subr.mxu0 0.0
    %5007 = vmatpush1.msra.mxu0 0.0
    %5008 = vmatprep.subr.mxu0 0.0
    %5009 = vmatpush1.msra.mxu0 0.0
    %5010 = vmatprep.subr.mxu0 0.0
    %5011 = vmatpush1.msra.mxu0 0.0
    %5012 = vmatprep.subr.mxu0 0.0
    %5013 = vmatpush1.msra.mxu0 0.0
    %5014 = vmatprep.subr.mxu0 0.0
    %5015 = vmatpush1.msra.mxu0 0.0
    %5016 = vmatprep.subr.mxu0 0.0
    %5017 = vmatpush1.msra.mxu0 0.0
    %5018 = vmatprep.subr.mxu0 0.0
    %5019 = vmatpush1.msra.mxu0 0.0
    %5020 = vmatprep.subr.mxu0 0.0
    %5021 = vmatpush1.msra.mxu0 0.0
    %5022 = vmatprep.subr.mxu0 0.0
    %5023 = vmatpush1.msra.mxu0 0.0
    %5024 = vmatprep.subr.mxu0 0.0
    %5025 = vmatpush1.msra.mxu0 %v3497
    %5026 = vmatprep.subr.mxu0 0.0
    %5027 = vmatpush1.msra.mxu0 %v3496
    %5028 = vmatprep.subr.mxu0 0.0
    %5029 = vmatpush1.msra.mxu0 %v3495
    %5030 = vmatprep.subr.mxu0 0.0
    %5031 = vmatpush1.msra.mxu0 %v3494
    %5032 = vmatprep.subr.mxu0 0.0
    %5033 = vmatpush2.msra.mxu0 0.0
    %5034 = vmatprep.subr.mxu0 0.0
    %5035 = vmatpush2.msra.mxu0 0.0
    %5036 = vmatprep.subr.mxu0 0.0
    %5037 = vmatpush2.msra.mxu0 0.0
    %5038 = vmatprep.subr.mxu0 0.0
    %5039 = vmatpush2.msra.mxu0 0.0
    %5040 = vmatprep.subr.mxu0 0.0
    %5041 = vmatpush2.msra.mxu0 0.0
    %5042 = vmatprep.subr.mxu0 0.0
    %5043 = vmatpush2.msra.mxu0 0.0
    %5044 = vmatprep.subr.mxu0 0.0
    %5045 = vmatpush2.msra.mxu0 0.0
    %5046 = vmatprep.subr.mxu0 0.0
    %5047 = vmatpush2.msra.mxu0 0.0
    %5048 = vmatprep.subr.mxu0 0.0
    %5049 = vmatpush2.msra.mxu0 0.0
    %5050 = vmatprep.subr.mxu0 0.0
    %5051 = vmatpush2.msra.mxu0 0.0
    %5052 = vmatprep.subr.mxu0 0.0
    %5053 = vmatpush2.msra.mxu0 0.0
    %5054 = vmatprep.subr.mxu0 0.0
    %5055 = vmatpush2.msra.mxu0 0.0
    %5056 = vmatprep.subr.mxu0 0.0
    %5057 = vmatpush2.msra.mxu0 0.0
    %5058 = vmatprep.subr.mxu0 0.0
    %5059 = vmatpush2.msra.mxu0 0.0
    %5060 = vmatprep.subr.mxu0 0.0
    %5061 = vmatpush2.msra.mxu0 0.0
    %5062 = vmatprep.subr.mxu0 0.0
    %5063 = vmatpush2.msra.mxu0 0.0
    %5064 = vmatprep.mubr.f32.mxu0 0.0
    %5065 = vmatmul.mubr.f32.gmra.mxu0 %v4928
    %v5066 = vpop.f32.mrf.mxu0
    %v5067 = vadd.f32 %v3588, %v5066
    %v5068 = vpop.f32.mrf.mxu0
    %5069 = vdwg.mxu0
    %5070 = vmatprep.subr.mxu0 0.0
    %5071 = vmatpush1.msra.mxu0 0.0
    %5072 = vmatprep.subr.mxu0 0.0
    %5073 = vmatpush1.msra.mxu0 0.0
    %5074 = vmatprep.subr.mxu0 0.0
    %5075 = vmatpush1.msra.mxu0 0.0
    %5076 = vmatprep.subr.mxu0 0.0
    %5077 = vmatpush1.msra.mxu0 0.0
    %5078 = vmatprep.subr.mxu0 0.0
    %5079 = vmatpush1.msra.mxu0 0.0
    %5080 = vmatprep.subr.mxu0 0.0
    %5081 = vmatpush1.msra.mxu0 0.0
    %5082 = vmatprep.subr.mxu0 0.0
    %5083 = vmatpush1.msra.mxu0 0.0
    %5084 = vmatprep.subr.mxu0 0.0
    %5085 = vmatpush1.msra.mxu0 0.0
    %5086 = vmatprep.subr.mxu0 0.0
    %5087 = vmatpush1.msra.mxu0 0.0
    %5088 = vmatprep.subr.mxu0 0.0
    %5089 = vmatpush1.msra.mxu0 0.0
    %5090 = vmatprep.subr.mxu0 0.0
    %5091 = vmatpush1.msra.mxu0 0.0
    %5092 = vmatprep.subr.mxu0 0.0
    %5093 = vmatpush1.msra.mxu0 0.0
    %5094 = vmatprep.subr.mxu0 0.0
    %5095 = vmatpush1.msra.mxu0 %v3501
    %5096 = vmatprep.subr.mxu0 0.0
    %5097 = vmatpush1.msra.mxu0 %v3500
    %5098 = vmatprep.subr.mxu0 0.0
    %5099 = vmatpush1.msra.mxu0 %v3499
    %5100 = vmatprep.subr.mxu0 0.0
    %5101 = vmatpush1.msra.mxu0 %v3498
    %5102 = vmatprep.subr.mxu0 0.0
    %5103 = vmatpush2.msra.mxu0 0.0
    %5104 = vmatprep.subr.mxu0 0.0
    %5105 = vmatpush2.msra.mxu0 0.0
    %5106 = vmatprep.subr.mxu0 0.0
    %5107 = vmatpush2.msra.mxu0 0.0
    %5108 = vmatprep.subr.mxu0 0.0
    %5109 = vmatpush2.msra.mxu0 0.0
    %5110 = vmatprep.subr.mxu0 0.0
    %5111 = vmatpush2.msra.mxu0 0.0
    %5112 = vmatprep.subr.mxu0 0.0
    %5113 = vmatpush2.msra.mxu0 0.0
    %5114 = vmatprep.subr.mxu0 0.0
    %5115 = vmatpush2.msra.mxu0 0.0
    %5116 = vmatprep.subr.mxu0 0.0
    %5117 = vmatpush2.msra.mxu0 0.0
    %5118 = vmatprep.subr.mxu0 0.0
    %5119 = vmatpush2.msra.mxu0 0.0
    %5120 = vmatprep.subr.mxu0 0.0
    %5121 = vmatpush2.msra.mxu0 0.0
    %5122 = vmatprep.subr.mxu0 0.0
    %5123 = vmatpush2.msra.mxu0 0.0
    %5124 = vmatprep.subr.mxu0 0.0
    %5125 = vmatpush2.msra.mxu0 0.0
    %5126 = vmatprep.subr.mxu0 0.0
    %5127 = vmatpush2.msra.mxu0 0.0
    %5128 = vmatprep.subr.mxu0 0.0
    %5129 = vmatpush2.msra.mxu0 0.0
    %5130 = vmatprep.subr.mxu0 0.0
    %5131 = vmatpush2.msra.mxu0 0.0
    %5132 = vmatprep.subr.mxu0 0.0
    %5133 = vmatpush2.msra.mxu0 0.0
    %5134 = vmatprep.mubr.f32.mxu0 0.0
    %5135 = vmatmul.mubr.f32.gmra.mxu0 %v4928
    %v5136 = vpop.f32.mrf.mxu0
    %v5137 = vadd.f32 %v3664, %v5136
    %v5138 = vpop.f32.mrf.mxu0
    %5139 = vdwg.mxu0
    %v5140 = vadd.f32 %v3047, %v4997
    %v5141 = vxor.u32 %v5140, 2147483648
    %v5142 = vmul.f32 %v5141, 1.442695
    %v5143 = vpow.pop %v5142
    %v5144 = vadd.f32 %v5143, 1.0
    %v5145 = vrcp.pop %v5144
    %v5146 = vmul.f32 1.0, %v5145
    %v5147 = vadd.f32 %v3232, %v5067
    %v5148 = vxor.u32 %v5147, 2147483648
    %v5149 = vmul.f32 %v5148, 1.442695
    %v5150 = vpow.pop %v5149
    %v5151 = vadd.f32 %v5150, 1.0
    %v5152 = vrcp.pop %v5151
    %v5153 = vmul.f32 1.0, %v5152
    %v5154 = vmul.f32 %v5146, %v5137
    %v5155 = vadd.f32 %v3417, %v5154
    %v5156 = vtanh.pop %v5155
    %v5157 = vsub.f32 1.0, %v5153
    %v5158 = vmul.f32 %v5157, %v5156
    %v5159 = vmul.f32 %v5153, %v4926
    %v5160 = vadd.f32 %v5158, %v5159
    %v5162 = vsel %vm187, %v5160, 0
    %5164 = vmatprep.subr.mxu0 0.0
    %5165 = vmatpush1.msra.mxu0 0.0
    %5166 = vmatprep.subr.mxu0 0.0
    %5167 = vmatpush1.msra.mxu0 0.0
    %5168 = vmatprep.subr.mxu0 0.0
    %5169 = vmatpush1.msra.mxu0 0.0
    %5170 = vmatprep.subr.mxu0 0.0
    %5171 = vmatpush1.msra.mxu0 0.0
    %5172 = vmatprep.subr.mxu0 0.0
    %5173 = vmatpush1.msra.mxu0 0.0
    %5174 = vmatprep.subr.mxu0 0.0
    %5175 = vmatpush1.msra.mxu0 0.0
    %5176 = vmatprep.subr.mxu0 0.0
    %5177 = vmatpush1.msra.mxu0 0.0
    %5178 = vmatprep.subr.mxu0 0.0
    %5179 = vmatpush1.msra.mxu0 0.0
    %5180 = vmatprep.subr.mxu0 0.0
    %5181 = vmatpush1.msra.mxu0 0.0
    %5182 = vmatprep.subr.mxu0 0.0
    %5183 = vmatpush1.msra.mxu0 0.0
    %5184 = vmatprep.subr.mxu0 0.0
    %5185 = vmatpush1.msra.mxu0 0.0
    %5186 = vmatprep.subr.mxu0 0.0
    %5187 = vmatpush1.msra.mxu0 0.0
    %5188 = vmatprep.subr.mxu0 0.0
    %5189 = vmatpush1.msra.mxu0 %v3493
    %5190 = vmatprep.subr.mxu0 0.0
    %5191 = vmatpush1.msra.mxu0 %v3492
    %5192 = vmatprep.subr.mxu0 0.0
    %5193 = vmatpush1.msra.mxu0 %v3491
    %5194 = vmatprep.subr.mxu0 0.0
    %5195 = vmatpush1.msra.mxu0 %v3490
    %5196 = vmatprep.subr.mxu0 0.0
    %5197 = vmatpush2.msra.mxu0 0.0
    %5198 = vmatprep.subr.mxu0 0.0
    %5199 = vmatpush2.msra.mxu0 0.0
    %5200 = vmatprep.subr.mxu0 0.0
    %5201 = vmatpush2.msra.mxu0 0.0
    %5202 = vmatprep.subr.mxu0 0.0
    %5203 = vmatpush2.msra.mxu0 0.0
    %5204 = vmatprep.subr.mxu0 0.0
    %5205 = vmatpush2.msra.mxu0 0.0
    %5206 = vmatprep.subr.mxu0 0.0
    %5207 = vmatpush2.msra.mxu0 0.0
    %5208 = vmatprep.subr.mxu0 0.0
    %5209 = vmatpush2.msra.mxu0 0.0
    %5210 = vmatprep.subr.mxu0 0.0
    %5211 = vmatpush2.msra.mxu0 0.0
    %5212 = vmatprep.subr.mxu0 0.0
    %5213 = vmatpush2.msra.mxu0 0.0
    %5214 = vmatprep.subr.mxu0 0.0
    %5215 = vmatpush2.msra.mxu0 0.0
    %5216 = vmatprep.subr.mxu0 0.0
    %5217 = vmatpush2.msra.mxu0 0.0
    %5218 = vmatprep.subr.mxu0 0.0
    %5219 = vmatpush2.msra.mxu0 0.0
    %5220 = vmatprep.subr.mxu0 0.0
    %5221 = vmatpush2.msra.mxu0 0.0
    %5222 = vmatprep.subr.mxu0 0.0
    %5223 = vmatpush2.msra.mxu0 0.0
    %5224 = vmatprep.subr.mxu0 0.0
    %5225 = vmatpush2.msra.mxu0 0.0
    %5226 = vmatprep.subr.mxu0 0.0
    %5227 = vmatpush2.msra.mxu0 0.0
    %5228 = vmatprep.mubr.f32.mxu0 0.0
    %5229 = vmatmul.mubr.f32.gmra.mxu0 %v5162
    %v5230 = vpop.f32.mrf.mxu0
    %v5231 = vadd.f32 %v3509, %v5230
    %v5232 = vpop.f32.mrf.mxu0
    %5233 = vdwg.mxu0
    %5234 = vmatprep.subr.mxu0 0.0
    %5235 = vmatpush1.msra.mxu0 0.0
    %5236 = vmatprep.subr.mxu0 0.0
    %5237 = vmatpush1.msra.mxu0 0.0
    %5238 = vmatprep.subr.mxu0 0.0
    %5239 = vmatpush1.msra.mxu0 0.0
    %5240 = vmatprep.subr.mxu0 0.0
    %5241 = vmatpush1.msra.mxu0 0.0
    %5242 = vmatprep.subr.mxu0 0.0
    %5243 = vmatpush1.msra.mxu0 0.0
    %5244 = vmatprep.subr.mxu0 0.0
    %5245 = vmatpush1.msra.mxu0 0.0
    %5246 = vmatprep.subr.mxu0 0.0
    %5247 = vmatpush1.msra.mxu0 0.0
    %5248 = vmatprep.subr.mxu0 0.0
    %5249 = vmatpush1.msra.mxu0 0.0
    %5250 = vmatprep.subr.mxu0 0.0
    %5251 = vmatpush1.msra.mxu0 0.0
    %5252 = vmatprep.subr.mxu0 0.0
    %5253 = vmatpush1.msra.mxu0 0.0
    %5254 = vmatprep.subr.mxu0 0.0
    %5255 = vmatpush1.msra.mxu0 0.0
    %5256 = vmatprep.subr.mxu0 0.0
    %5257 = vmatpush1.msra.mxu0 0.0
    %5258 = vmatprep.subr.mxu0 0.0
    %5259 = vmatpush1.msra.mxu0 %v3497
    %5260 = vmatprep.subr.mxu0 0.0
    %5261 = vmatpush1.msra.mxu0 %v3496
    %5262 = vmatprep.subr.mxu0 0.0
    %5263 = vmatpush1.msra.mxu0 %v3495
    %5264 = vmatprep.subr.mxu0 0.0
    %5265 = vmatpush1.msra.mxu0 %v3494
    %5266 = vmatprep.subr.mxu0 0.0
    %5267 = vmatpush2.msra.mxu0 0.0
    %5268 = vmatprep.subr.mxu0 0.0
    %5269 = vmatpush2.msra.mxu0 0.0
    %5270 = vmatprep.subr.mxu0 0.0
    %5271 = vmatpush2.msra.mxu0 0.0
    %5272 = vmatprep.subr.mxu0 0.0
    %5273 = vmatpush2.msra.mxu0 0.0
    %5274 = vmatprep.subr.mxu0 0.0
    %5275 = vmatpush2.msra.mxu0 0.0
    %5276 = vmatprep.subr.mxu0 0.0
    %5277 = vmatpush2.msra.mxu0 0.0
    %5278 = vmatprep.subr.mxu0 0.0
    %5279 = vmatpush2.msra.mxu0 0.0
    %5280 = vmatprep.subr.mxu0 0.0
    %5281 = vmatpush2.msra.mxu0 0.0
    %5282 = vmatprep.subr.mxu0 0.0
    %5283 = vmatpush2.msra.mxu0 0.0
    %5284 = vmatprep.subr.mxu0 0.0
    %5285 = vmatpush2.msra.mxu0 0.0
    %5286 = vmatprep.subr.mxu0 0.0
    %5287 = vmatpush2.msra.mxu0 0.0
    %5288 = vmatprep.subr.mxu0 0.0
    %5289 = vmatpush2.msra.mxu0 0.0
    %5290 = vmatprep.subr.mxu0 0.0
    %5291 = vmatpush2.msra.mxu0 0.0
    %5292 = vmatprep.subr.mxu0 0.0
    %5293 = vmatpush2.msra.mxu0 0.0
    %5294 = vmatprep.subr.mxu0 0.0
    %5295 = vmatpush2.msra.mxu0 0.0
    %5296 = vmatprep.subr.mxu0 0.0
    %5297 = vmatpush2.msra.mxu0 0.0
    %5298 = vmatprep.mubr.f32.mxu0 0.0
    %5299 = vmatmul.mubr.f32.gmra.mxu0 %v5162
    %v5300 = vpop.f32.mrf.mxu0
    %v5301 = vadd.f32 %v3588, %v5300
    %v5302 = vpop.f32.mrf.mxu0
    %5303 = vdwg.mxu0
    %5304 = vmatprep.subr.mxu0 0.0
    %5305 = vmatpush1.msra.mxu0 0.0
    %5306 = vmatprep.subr.mxu0 0.0
    %5307 = vmatpush1.msra.mxu0 0.0
    %5308 = vmatprep.subr.mxu0 0.0
    %5309 = vmatpush1.msra.mxu0 0.0
    %5310 = vmatprep.subr.mxu0 0.0
    %5311 = vmatpush1.msra.mxu0 0.0
    %5312 = vmatprep.subr.mxu0 0.0
    %5313 = vmatpush1.msra.mxu0 0.0
    %5314 = vmatprep.subr.mxu0 0.0
    %5315 = vmatpush1.msra.mxu0 0.0
    %5316 = vmatprep.subr.mxu0 0.0
    %5317 = vmatpush1.msra.mxu0 0.0
    %5318 = vmatprep.subr.mxu0 0.0
    %5319 = vmatpush1.msra.mxu0 0.0
    %5320 = vmatprep.subr.mxu0 0.0
    %5321 = vmatpush1.msra.mxu0 0.0
    %5322 = vmatprep.subr.mxu0 0.0
    %5323 = vmatpush1.msra.mxu0 0.0
    %5324 = vmatprep.subr.mxu0 0.0
    %5325 = vmatpush1.msra.mxu0 0.0
    %5326 = vmatprep.subr.mxu0 0.0
    %5327 = vmatpush1.msra.mxu0 0.0
    %5328 = vmatprep.subr.mxu0 0.0
    %5329 = vmatpush1.msra.mxu0 %v3501
    %5330 = vmatprep.subr.mxu0 0.0
    %5331 = vmatpush1.msra.mxu0 %v3500
    %5332 = vmatprep.subr.mxu0 0.0
    %5333 = vmatpush1.msra.mxu0 %v3499
    %5334 = vmatprep.subr.mxu0 0.0
    %5335 = vmatpush1.msra.mxu0 %v3498
    %5336 = vmatprep.subr.mxu0 0.0
    %5337 = vmatpush2.msra.mxu0 0.0
    %5338 = vmatprep.subr.mxu0 0.0
    %5339 = vmatpush2.msra.mxu0 0.0
    %5340 = vmatprep.subr.mxu0 0.0
    %5341 = vmatpush2.msra.mxu0 0.0
    %5342 = vmatprep.subr.mxu0 0.0
    %5343 = vmatpush2.msra.mxu0 0.0
    %5344 = vmatprep.subr.mxu0 0.0
    %5345 = vmatpush2.msra.mxu0 0.0
    %5346 = vmatprep.subr.mxu0 0.0
    %5347 = vmatpush2.msra.mxu0 0.0
    %5348 = vmatprep.subr.mxu0 0.0
    %5349 = vmatpush2.msra.mxu0 0.0
    %5350 = vmatprep.subr.mxu0 0.0
    %5351 = vmatpush2.msra.mxu0 0.0
    %5352 = vmatprep.subr.mxu0 0.0
    %5353 = vmatpush2.msra.mxu0 0.0
    %5354 = vmatprep.subr.mxu0 0.0
    %5355 = vmatpush2.msra.mxu0 0.0
    %5356 = vmatprep.subr.mxu0 0.0
    %5357 = vmatpush2.msra.mxu0 0.0
    %5358 = vmatprep.subr.mxu0 0.0
    %5359 = vmatpush2.msra.mxu0 0.0
    %5360 = vmatprep.subr.mxu0 0.0
    %5361 = vmatpush2.msra.mxu0 0.0
    %5362 = vmatprep.subr.mxu0 0.0
    %5363 = vmatpush2.msra.mxu0 0.0
    %5364 = vmatprep.subr.mxu0 0.0
    %5365 = vmatpush2.msra.mxu0 0.0
    %5366 = vmatprep.subr.mxu0 0.0
    %5367 = vmatpush2.msra.mxu0 0.0
    %5368 = vmatprep.mubr.f32.mxu0 0.0
    %5369 = vmatmul.mubr.f32.gmra.mxu0 %v5162
    %v5370 = vpop.f32.mrf.mxu0
    %v5371 = vadd.f32 %v3664, %v5370
    %v5372 = vpop.f32.mrf.mxu0
    %5373 = vdwg.mxu0
    %v5374 = vadd.f32 %v3052, %v5231
    %v5375 = vxor.u32 %v5374, 2147483648
    %v5376 = vmul.f32 %v5375, 1.442695
    %v5377 = vpow.pop %v5376
    %v5378 = vadd.f32 %v5377, 1.0
    %v5379 = vrcp.pop %v5378
    %v5380 = vmul.f32 1.0, %v5379
    %v5381 = vadd.f32 %v3237, %v5301
    %v5382 = vxor.u32 %v5381, 2147483648
    %v5383 = vmul.f32 %v5382, 1.442695
    %v5384 = vpow.pop %v5383
    %v5385 = vadd.f32 %v5384, 1.0
    %v5386 = vrcp.pop %v5385
    %v5387 = vmul.f32 1.0, %v5386
    %v5388 = vmul.f32 %v5380, %v5371
    %v5389 = vadd.f32 %v3422, %v5388
    %v5390 = vtanh.pop %v5389
    %v5391 = vsub.f32 1.0, %v5387
    %v5392 = vmul.f32 %v5391, %v5390
    %v5393 = vmul.f32 %v5387, %v5160
    %v5394 = vadd.f32 %v5392, %v5393
    %v5396 = vsel %vm187, %v5394, 0
    %5398 = vmatprep.subr.mxu0 0.0
    %5399 = vmatpush1.msra.mxu0 0.0
    %5400 = vmatprep.subr.mxu0 0.0
    %5401 = vmatpush1.msra.mxu0 0.0
    %5402 = vmatprep.subr.mxu0 0.0
    %5403 = vmatpush1.msra.mxu0 0.0
    %5404 = vmatprep.subr.mxu0 0.0
    %5405 = vmatpush1.msra.mxu0 0.0
    %5406 = vmatprep.subr.mxu0 0.0
    %5407 = vmatpush1.msra.mxu0 0.0
    %5408 = vmatprep.subr.mxu0 0.0
    %5409 = vmatpush1.msra.mxu0 0.0
    %5410 = vmatprep.subr.mxu0 0.0
    %5411 = vmatpush1.msra.mxu0 0.0
    %5412 = vmatprep.subr.mxu0 0.0
    %5413 = vmatpush1.msra.mxu0 0.0
    %5414 = vmatprep.subr.mxu0 0.0
    %5415 = vmatpush1.msra.mxu0 0.0
    %5416 = vmatprep.subr.mxu0 0.0
    %5417 = vmatpush1.msra.mxu0 0.0
    %5418 = vmatprep.subr.mxu0 0.0
    %5419 = vmatpush1.msra.mxu0 0.0
    %5420 = vmatprep.subr.mxu0 0.0
    %5421 = vmatpush1.msra.mxu0 0.0
    %5422 = vmatprep.subr.mxu0 0.0
    %5423 = vmatpush1.msra.mxu0 %v3493
    %5424 = vmatprep.subr.mxu0 0.0
    %5425 = vmatpush1.msra.mxu0 %v3492
    %5426 = vmatprep.subr.mxu0 0.0
    %5427 = vmatpush1.msra.mxu0 %v3491
    %5428 = vmatprep.subr.mxu0 0.0
    %5429 = vmatpush1.msra.mxu0 %v3490
    %5430 = vmatprep.subr.mxu0 0.0
    %5431 = vmatpush2.msra.mxu0 0.0
    %5432 = vmatprep.subr.mxu0 0.0
    %5433 = vmatpush2.msra.mxu0 0.0
    %5434 = vmatprep.subr.mxu0 0.0
    %5435 = vmatpush2.msra.mxu0 0.0
    %5436 = vmatprep.subr.mxu0 0.0
    %5437 = vmatpush2.msra.mxu0 0.0
    %5438 = vmatprep.subr.mxu0 0.0
    %5439 = vmatpush2.msra.mxu0 0.0
    %5440 = vmatprep.subr.mxu0 0.0
    %5441 = vmatpush2.msra.mxu0 0.0
    %5442 = vmatprep.subr.mxu0 0.0
    %5443 = vmatpush2.msra.mxu0 0.0
    %5444 = vmatprep.subr.mxu0 0.0
    %5445 = vmatpush2.msra.mxu0 0.0
    %5446 = vmatprep.subr.mxu0 0.0
    %5447 = vmatpush2.msra.mxu0 0.0
    %5448 = vmatprep.subr.mxu0 0.0
    %5449 = vmatpush2.msra.mxu0 0.0
    %5450 = vmatprep.subr.mxu0 0.0
    %5451 = vmatpush2.msra.mxu0 0.0
    %5452 = vmatprep.subr.mxu0 0.0
    %5453 = vmatpush2.msra.mxu0 0.0
    %5454 = vmatprep.subr.mxu0 0.0
    %5455 = vmatpush2.msra.mxu0 0.0
    %5456 = vmatprep.subr.mxu0 0.0
    %5457 = vmatpush2.msra.mxu0 0.0
    %5458 = vmatprep.subr.mxu0 0.0
    %5459 = vmatpush2.msra.mxu0 0.0
    %5460 = vmatprep.subr.mxu0 0.0
    %5461 = vmatpush2.msra.mxu0 0.0
    %5462 = vmatprep.mubr.f32.mxu0 0.0
    %5463 = vmatmul.mubr.f32.gmra.mxu0 %v5396
    %v5464 = vpop.f32.mrf.mxu0
    %v5465 = vadd.f32 %v3509, %v5464
    %v5466 = vpop.f32.mrf.mxu0
    %5467 = vdwg.mxu0
    %5468 = vmatprep.subr.mxu0 0.0
    %5469 = vmatpush1.msra.mxu0 0.0
    %5470 = vmatprep.subr.mxu0 0.0
    %5471 = vmatpush1.msra.mxu0 0.0
    %5472 = vmatprep.subr.mxu0 0.0
    %5473 = vmatpush1.msra.mxu0 0.0
    %5474 = vmatprep.subr.mxu0 0.0
    %5475 = vmatpush1.msra.mxu0 0.0
    %5476 = vmatprep.subr.mxu0 0.0
    %5477 = vmatpush1.msra.mxu0 0.0
    %5478 = vmatprep.subr.mxu0 0.0
    %5479 = vmatpush1.msra.mxu0 0.0
    %5480 = vmatprep.subr.mxu0 0.0
    %5481 = vmatpush1.msra.mxu0 0.0
    %5482 = vmatprep.subr.mxu0 0.0
    %5483 = vmatpush1.msra.mxu0 0.0
    %5484 = vmatprep.subr.mxu0 0.0
    %5485 = vmatpush1.msra.mxu0 0.0
    %5486 = vmatprep.subr.mxu0 0.0
    %5487 = vmatpush1.msra.mxu0 0.0
    %5488 = vmatprep.subr.mxu0 0.0
    %5489 = vmatpush1.msra.mxu0 0.0
    %5490 = vmatprep.subr.mxu0 0.0
    %5491 = vmatpush1.msra.mxu0 0.0
    %5492 = vmatprep.subr.mxu0 0.0
    %5493 = vmatpush1.msra.mxu0 %v3497
    %5494 = vmatprep.subr.mxu0 0.0
    %5495 = vmatpush1.msra.mxu0 %v3496
    %5496 = vmatprep.subr.mxu0 0.0
    %5497 = vmatpush1.msra.mxu0 %v3495
    %5498 = vmatprep.subr.mxu0 0.0
    %5499 = vmatpush1.msra.mxu0 %v3494
    %5500 = vmatprep.subr.mxu0 0.0
    %5501 = vmatpush2.msra.mxu0 0.0
    %5502 = vmatprep.subr.mxu0 0.0
    %5503 = vmatpush2.msra.mxu0 0.0
    %5504 = vmatprep.subr.mxu0 0.0
    %5505 = vmatpush2.msra.mxu0 0.0
    %5506 = vmatprep.subr.mxu0 0.0
    %5507 = vmatpush2.msra.mxu0 0.0
    %5508 = vmatprep.subr.mxu0 0.0
    %5509 = vmatpush2.msra.mxu0 0.0
    %5510 = vmatprep.subr.mxu0 0.0
    %5511 = vmatpush2.msra.mxu0 0.0
    %5512 = vmatprep.subr.mxu0 0.0
    %5513 = vmatpush2.msra.mxu0 0.0
    %5514 = vmatprep.subr.mxu0 0.0
    %5515 = vmatpush2.msra.mxu0 0.0
    %5516 = vmatprep.subr.mxu0 0.0
    %5517 = vmatpush2.msra.mxu0 0.0
    %5518 = vmatprep.subr.mxu0 0.0
    %5519 = vmatpush2.msra.mxu0 0.0
    %5520 = vmatprep.subr.mxu0 0.0
    %5521 = vmatpush2.msra.mxu0 0.0
    %5522 = vmatprep.subr.mxu0 0.0
    %5523 = vmatpush2.msra.mxu0 0.0
    %5524 = vmatprep.subr.mxu0 0.0
    %5525 = vmatpush2.msra.mxu0 0.0
    %5526 = vmatprep.subr.mxu0 0.0
    %5527 = vmatpush2.msra.mxu0 0.0
    %5528 = vmatprep.subr.mxu0 0.0
    %5529 = vmatpush2.msra.mxu0 0.0
    %5530 = vmatprep.subr.mxu0 0.0
    %5531 = vmatpush2.msra.mxu0 0.0
    %5532 = vmatprep.mubr.f32.mxu0 0.0
    %5533 = vmatmul.mubr.f32.gmra.mxu0 %v5396
    %v5534 = vpop.f32.mrf.mxu0
    %v5535 = vadd.f32 %v3588, %v5534
    %v5536 = vpop.f32.mrf.mxu0
    %5537 = vdwg.mxu0
    %5538 = vmatprep.subr.mxu0 0.0
    %5539 = vmatpush1.msra.mxu0 0.0
    %5540 = vmatprep.subr.mxu0 0.0
    %5541 = vmatpush1.msra.mxu0 0.0
    %5542 = vmatprep.subr.mxu0 0.0
    %5543 = vmatpush1.msra.mxu0 0.0
    %5544 = vmatprep.subr.mxu0 0.0
    %5545 = vmatpush1.msra.mxu0 0.0
    %5546 = vmatprep.subr.mxu0 0.0
    %5547 = vmatpush1.msra.mxu0 0.0
    %5548 = vmatprep.subr.mxu0 0.0
    %5549 = vmatpush1.msra.mxu0 0.0
    %5550 = vmatprep.subr.mxu0 0.0
    %5551 = vmatpush1.msra.mxu0 0.0
    %5552 = vmatprep.subr.mxu0 0.0
    %5553 = vmatpush1.msra.mxu0 0.0
    %5554 = vmatprep.subr.mxu0 0.0
    %5555 = vmatpush1.msra.mxu0 0.0
    %5556 = vmatprep.subr.mxu0 0.0
    %5557 = vmatpush1.msra.mxu0 0.0
    %5558 = vmatprep.subr.mxu0 0.0
    %5559 = vmatpush1.msra.mxu0 0.0
    %5560 = vmatprep.subr.mxu0 0.0
    %5561 = vmatpush1.msra.mxu0 0.0
    %5562 = vmatprep.subr.mxu0 0.0
    %5563 = vmatpush1.msra.mxu0 %v3501
    %5564 = vmatprep.subr.mxu0 0.0
    %5565 = vmatpush1.msra.mxu0 %v3500
    %5566 = vmatprep.subr.mxu0 0.0
    %5567 = vmatpush1.msra.mxu0 %v3499
    %5568 = vmatprep.subr.mxu0 0.0
    %5569 = vmatpush1.msra.mxu0 %v3498
    %5570 = vmatprep.subr.mxu0 0.0
    %5571 = vmatpush2.msra.mxu0 0.0
    %5572 = vmatprep.subr.mxu0 0.0
    %5573 = vmatpush2.msra.mxu0 0.0
    %5574 = vmatprep.subr.mxu0 0.0
    %5575 = vmatpush2.msra.mxu0 0.0
    %5576 = vmatprep.subr.mxu0 0.0
    %5577 = vmatpush2.msra.mxu0 0.0
    %5578 = vmatprep.subr.mxu0 0.0
    %5579 = vmatpush2.msra.mxu0 0.0
    %5580 = vmatprep.subr.mxu0 0.0
    %5581 = vmatpush2.msra.mxu0 0.0
    %5582 = vmatprep.subr.mxu0 0.0
    %5583 = vmatpush2.msra.mxu0 0.0
    %5584 = vmatprep.subr.mxu0 0.0
    %5585 = vmatpush2.msra.mxu0 0.0
    %5586 = vmatprep.subr.mxu0 0.0
    %5587 = vmatpush2.msra.mxu0 0.0
    %5588 = vmatprep.subr.mxu0 0.0
    %5589 = vmatpush2.msra.mxu0 0.0
    %5590 = vmatprep.subr.mxu0 0.0
    %5591 = vmatpush2.msra.mxu0 0.0
    %5592 = vmatprep.subr.mxu0 0.0
    %5593 = vmatpush2.msra.mxu0 0.0
    %5594 = vmatprep.subr.mxu0 0.0
    %5595 = vmatpush2.msra.mxu0 0.0
    %5596 = vmatprep.subr.mxu0 0.0
    %5597 = vmatpush2.msra.mxu0 0.0
    %5598 = vmatprep.subr.mxu0 0.0
    %5599 = vmatpush2.msra.mxu0 0.0
    %5600 = vmatprep.subr.mxu0 0.0
    %5601 = vmatpush2.msra.mxu0 0.0
    %5602 = vmatprep.mubr.f32.mxu0 0.0
    %5603 = vmatmul.mubr.f32.gmra.mxu0 %v5396
    %v5604 = vpop.f32.mrf.mxu0
    %v5605 = vadd.f32 %v3664, %v5604
    %v5606 = vpop.f32.mrf.mxu0
    %5607 = vdwg.mxu0
    %v5608 = vadd.f32 %v3057, %v5465
    %v5609 = vxor.u32 %v5608, 2147483648
    %v5610 = vmul.f32 %v5609, 1.442695
    %v5611 = vpow.pop %v5610
    %v5612 = vadd.f32 %v5611, 1.0
    %v5613 = vrcp.pop %v5612
    %v5614 = vmul.f32 1.0, %v5613
    %v5615 = vadd.f32 %v3242, %v5535
    %v5616 = vxor.u32 %v5615, 2147483648
    %v5617 = vmul.f32 %v5616, 1.442695
    %v5618 = vpow.pop %v5617
    %v5619 = vadd.f32 %v5618, 1.0
    %v5620 = vrcp.pop %v5619
    %v5621 = vmul.f32 1.0, %v5620
    %v5622 = vmul.f32 %v5614, %v5605
    %v5623 = vadd.f32 %v3427, %v5622
    %v5624 = vtanh.pop %v5623
    %v5625 = vsub.f32 1.0, %v5621
    %v5626 = vmul.f32 %v5625, %v5624
    %v5627 = vmul.f32 %v5621, %v5394
    %v5628 = vadd.f32 %v5626, %v5627
    %v5630 = vsel %vm187, %v5628, 0
    %5632 = vmatprep.subr.mxu0 0.0
    %5633 = vmatpush1.msra.mxu0 0.0
    %5634 = vmatprep.subr.mxu0 0.0
    %5635 = vmatpush1.msra.mxu0 0.0
    %5636 = vmatprep.subr.mxu0 0.0
    %5637 = vmatpush1.msra.mxu0 0.0
    %5638 = vmatprep.subr.mxu0 0.0
    %5639 = vmatpush1.msra.mxu0 0.0
    %5640 = vmatprep.subr.mxu0 0.0
    %5641 = vmatpush1.msra.mxu0 0.0
    %5642 = vmatprep.subr.mxu0 0.0
    %5643 = vmatpush1.msra.mxu0 0.0
    %5644 = vmatprep.subr.mxu0 0.0
    %5645 = vmatpush1.msra.mxu0 0.0
    %5646 = vmatprep.subr.mxu0 0.0
    %5647 = vmatpush1.msra.mxu0 0.0
    %5648 = vmatprep.subr.mxu0 0.0
    %5649 = vmatpush1.msra.mxu0 0.0
    %5650 = vmatprep.subr.mxu0 0.0
    %5651 = vmatpush1.msra.mxu0 0.0
    %5652 = vmatprep.subr.mxu0 0.0
    %5653 = vmatpush1.msra.mxu0 0.0
    %5654 = vmatprep.subr.mxu0 0.0
    %5655 = vmatpush1.msra.mxu0 0.0
    %5656 = vmatprep.subr.mxu0 0.0
    %5657 = vmatpush1.msra.mxu0 %v3493
    %5658 = vmatprep.subr.mxu0 0.0
    %5659 = vmatpush1.msra.mxu0 %v3492
    %5660 = vmatprep.subr.mxu0 0.0
    %5661 = vmatpush1.msra.mxu0 %v3491
    %5662 = vmatprep.subr.mxu0 0.0
    %5663 = vmatpush1.msra.mxu0 %v3490
    %5664 = vmatprep.subr.mxu0 0.0
    %5665 = vmatpush2.msra.mxu0 0.0
    %5666 = vmatprep.subr.mxu0 0.0
    %5667 = vmatpush2.msra.mxu0 0.0
    %5668 = vmatprep.subr.mxu0 0.0
    %5669 = vmatpush2.msra.mxu0 0.0
    %5670 = vmatprep.subr.mxu0 0.0
    %5671 = vmatpush2.msra.mxu0 0.0
    %5672 = vmatprep.subr.mxu0 0.0
    %5673 = vmatpush2.msra.mxu0 0.0
    %5674 = vmatprep.subr.mxu0 0.0
    %5675 = vmatpush2.msra.mxu0 0.0
    %5676 = vmatprep.subr.mxu0 0.0
    %5677 = vmatpush2.msra.mxu0 0.0
    %5678 = vmatprep.subr.mxu0 0.0
    %5679 = vmatpush2.msra.mxu0 0.0
    %5680 = vmatprep.subr.mxu0 0.0
    %5681 = vmatpush2.msra.mxu0 0.0
    %5682 = vmatprep.subr.mxu0 0.0
    %5683 = vmatpush2.msra.mxu0 0.0
    %5684 = vmatprep.subr.mxu0 0.0
    %5685 = vmatpush2.msra.mxu0 0.0
    %5686 = vmatprep.subr.mxu0 0.0
    %5687 = vmatpush2.msra.mxu0 0.0
    %5688 = vmatprep.subr.mxu0 0.0
    %5689 = vmatpush2.msra.mxu0 0.0
    %5690 = vmatprep.subr.mxu0 0.0
    %5691 = vmatpush2.msra.mxu0 0.0
    %5692 = vmatprep.subr.mxu0 0.0
    %5693 = vmatpush2.msra.mxu0 0.0
    %5694 = vmatprep.subr.mxu0 0.0
    %5695 = vmatpush2.msra.mxu0 0.0
    %5696 = vmatprep.mubr.f32.mxu0 0.0
    %5697 = vmatmul.mubr.f32.gmra.mxu0 %v5630
    %v5698 = vpop.f32.mrf.mxu0
    %v5699 = vadd.f32 %v3509, %v5698
    %v5700 = vpop.f32.mrf.mxu0
    %5701 = vdwg.mxu0
    %5702 = vmatprep.subr.mxu0 0.0
    %5703 = vmatpush1.msra.mxu0 0.0
    %5704 = vmatprep.subr.mxu0 0.0
    %5705 = vmatpush1.msra.mxu0 0.0
    %5706 = vmatprep.subr.mxu0 0.0
    %5707 = vmatpush1.msra.mxu0 0.0
    %5708 = vmatprep.subr.mxu0 0.0
    %5709 = vmatpush1.msra.mxu0 0.0
    %5710 = vmatprep.subr.mxu0 0.0
    %5711 = vmatpush1.msra.mxu0 0.0
    %5712 = vmatprep.subr.mxu0 0.0
    %5713 = vmatpush1.msra.mxu0 0.0
    %5714 = vmatprep.subr.mxu0 0.0
    %5715 = vmatpush1.msra.mxu0 0.0
    %5716 = vmatprep.subr.mxu0 0.0
    %5717 = vmatpush1.msra.mxu0 0.0
    %5718 = vmatprep.subr.mxu0 0.0
    %5719 = vmatpush1.msra.mxu0 0.0
    %5720 = vmatprep.subr.mxu0 0.0
    %5721 = vmatpush1.msra.mxu0 0.0
    %5722 = vmatprep.subr.mxu0 0.0
    %5723 = vmatpush1.msra.mxu0 0.0
    %5724 = vmatprep.subr.mxu0 0.0
    %5725 = vmatpush1.msra.mxu0 0.0
    %5726 = vmatprep.subr.mxu0 0.0
    %5727 = vmatpush1.msra.mxu0 %v3497
    %5728 = vmatprep.subr.mxu0 0.0
    %5729 = vmatpush1.msra.mxu0 %v3496
    %5730 = vmatprep.subr.mxu0 0.0
    %5731 = vmatpush1.msra.mxu0 %v3495
    %5732 = vmatprep.subr.mxu0 0.0
    %5733 = vmatpush1.msra.mxu0 %v3494
    %5734 = vmatprep.subr.mxu0 0.0
    %5735 = vmatpush2.msra.mxu0 0.0
    %5736 = vmatprep.subr.mxu0 0.0
    %5737 = vmatpush2.msra.mxu0 0.0
    %5738 = vmatprep.subr.mxu0 0.0
    %5739 = vmatpush2.msra.mxu0 0.0
    %5740 = vmatprep.subr.mxu0 0.0
    %5741 = vmatpush2.msra.mxu0 0.0
    %5742 = vmatprep.subr.mxu0 0.0
    %5743 = vmatpush2.msra.mxu0 0.0
    %5744 = vmatprep.subr.mxu0 0.0
    %5745 = vmatpush2.msra.mxu0 0.0
    %5746 = vmatprep.subr.mxu0 0.0
    %5747 = vmatpush2.msra.mxu0 0.0
    %5748 = vmatprep.subr.mxu0 0.0
    %5749 = vmatpush2.msra.mxu0 0.0
    %5750 = vmatprep.subr.mxu0 0.0
    %5751 = vmatpush2.msra.mxu0 0.0
    %5752 = vmatprep.subr.mxu0 0.0
    %5753 = vmatpush2.msra.mxu0 0.0
    %5754 = vmatprep.subr.mxu0 0.0
    %5755 = vmatpush2.msra.mxu0 0.0
    %5756 = vmatprep.subr.mxu0 0.0
    %5757 = vmatpush2.msra.mxu0 0.0
    %5758 = vmatprep.subr.mxu0 0.0
    %5759 = vmatpush2.msra.mxu0 0.0
    %5760 = vmatprep.subr.mxu0 0.0
    %5761 = vmatpush2.msra.mxu0 0.0
    %5762 = vmatprep.subr.mxu0 0.0
    %5763 = vmatpush2.msra.mxu0 0.0
    %5764 = vmatprep.subr.mxu0 0.0
    %5765 = vmatpush2.msra.mxu0 0.0
    %5766 = vmatprep.mubr.f32.mxu0 0.0
    %5767 = vmatmul.mubr.f32.gmra.mxu0 %v5630
    %v5768 = vpop.f32.mrf.mxu0
    %v5769 = vadd.f32 %v3588, %v5768
    %v5770 = vpop.f32.mrf.mxu0
    %5771 = vdwg.mxu0
    %5772 = vmatprep.subr.mxu0 0.0
    %5773 = vmatpush1.msra.mxu0 0.0
    %5774 = vmatprep.subr.mxu0 0.0
    %5775 = vmatpush1.msra.mxu0 0.0
    %5776 = vmatprep.subr.mxu0 0.0
    %5777 = vmatpush1.msra.mxu0 0.0
    %5778 = vmatprep.subr.mxu0 0.0
    %5779 = vmatpush1.msra.mxu0 0.0
    %5780 = vmatprep.subr.mxu0 0.0
    %5781 = vmatpush1.msra.mxu0 0.0
    %5782 = vmatprep.subr.mxu0 0.0
    %5783 = vmatpush1.msra.mxu0 0.0
    %5784 = vmatprep.subr.mxu0 0.0
    %5785 = vmatpush1.msra.mxu0 0.0
    %5786 = vmatprep.subr.mxu0 0.0
    %5787 = vmatpush1.msra.mxu0 0.0
    %5788 = vmatprep.subr.mxu0 0.0
    %5789 = vmatpush1.msra.mxu0 0.0
    %5790 = vmatprep.subr.mxu0 0.0
    %5791 = vmatpush1.msra.mxu0 0.0
    %5792 = vmatprep.subr.mxu0 0.0
    %5793 = vmatpush1.msra.mxu0 0.0
    %5794 = vmatprep.subr.mxu0 0.0
    %5795 = vmatpush1.msra.mxu0 0.0
    %5796 = vmatprep.subr.mxu0 0.0
    %5797 = vmatpush1.msra.mxu0 %v3501
    %5798 = vmatprep.subr.mxu0 0.0
    %5799 = vmatpush1.msra.mxu0 %v3500
    %5800 = vmatprep.subr.mxu0 0.0
    %5801 = vmatpush1.msra.mxu0 %v3499
    %5802 = vmatprep.subr.mxu0 0.0
    %5803 = vmatpush1.msra.mxu0 %v3498
    %5804 = vmatprep.subr.mxu0 0.0
    %5805 = vmatpush2.msra.mxu0 0.0
    %5806 = vmatprep.subr.mxu0 0.0
    %5807 = vmatpush2.msra.mxu0 0.0
    %5808 = vmatprep.subr.mxu0 0.0
    %5809 = vmatpush2.msra.mxu0 0.0
    %5810 = vmatprep.subr.mxu0 0.0
    %5811 = vmatpush2.msra.mxu0 0.0
    %5812 = vmatprep.subr.mxu0 0.0
    %5813 = vmatpush2.msra.mxu0 0.0
    %5814 = vmatprep.subr.mxu0 0.0
    %5815 = vmatpush2.msra.mxu0 0.0
    %5816 = vmatprep.subr.mxu0 0.0
    %5817 = vmatpush2.msra.mxu0 0.0
    %5818 = vmatprep.subr.mxu0 0.0
    %5819 = vmatpush2.msra.mxu0 0.0
    %5820 = vmatprep.subr.mxu0 0.0
    %5821 = vmatpush2.msra.mxu0 0.0
    %5822 = vmatprep.subr.mxu0 0.0
    %5823 = vmatpush2.msra.mxu0 0.0
    %5824 = vmatprep.subr.mxu0 0.0
    %5825 = vmatpush2.msra.mxu0 0.0
    %5826 = vmatprep.subr.mxu0 0.0
    %5827 = vmatpush2.msra.mxu0 0.0
    %5828 = vmatprep.subr.mxu0 0.0
    %5829 = vmatpush2.msra.mxu0 0.0
    %5830 = vmatprep.subr.mxu0 0.0
    %5831 = vmatpush2.msra.mxu0 0.0
    %5832 = vmatprep.subr.mxu0 0.0
    %5833 = vmatpush2.msra.mxu0 0.0
    %5834 = vmatprep.subr.mxu0 0.0
    %5835 = vmatpush2.msra.mxu0 0.0
    %5836 = vmatprep.mubr.f32.mxu0 0.0
    %5837 = vmatmul.mubr.f32.gmra.mxu0 %v5630
    %v5838 = vpop.f32.mrf.mxu0
    %v5839 = vadd.f32 %v3664, %v5838
    %v5840 = vpop.f32.mrf.mxu0
    %5841 = vdwg.mxu0
    %v5842 = vadd.f32 %v3062, %v5699
    %v5843 = vxor.u32 %v5842, 2147483648
    %v5844 = vmul.f32 %v5843, 1.442695
    %v5845 = vpow.pop %v5844
    %v5846 = vadd.f32 %v5845, 1.0
    %v5847 = vrcp.pop %v5846
    %v5848 = vmul.f32 1.0, %v5847
    %v5849 = vadd.f32 %v3247, %v5769
    %v5850 = vxor.u32 %v5849, 2147483648
    %v5851 = vmul.f32 %v5850, 1.442695
    %v5852 = vpow.pop %v5851
    %v5853 = vadd.f32 %v5852, 1.0
    %v5854 = vrcp.pop %v5853
    %v5855 = vmul.f32 1.0, %v5854
    %v5856 = vmul.f32 %v5848, %v5839
    %v5857 = vadd.f32 %v3432, %v5856
    %v5858 = vtanh.pop %v5857
    %v5859 = vsub.f32 1.0, %v5855
    %v5860 = vmul.f32 %v5859, %v5858
    %v5861 = vmul.f32 %v5855, %v5628
    %v5862 = vadd.f32 %v5860, %v5861
    %v5864 = vsel %vm187, %v5862, 0
    %5866 = vmatprep.subr.mxu0 0.0
    %5867 = vmatpush1.msra.mxu0 0.0
    %5868 = vmatprep.subr.mxu0 0.0
    %5869 = vmatpush1.msra.mxu0 0.0
    %5870 = vmatprep.subr.mxu0 0.0
    %5871 = vmatpush1.msra.mxu0 0.0
    %5872 = vmatprep.subr.mxu0 0.0
    %5873 = vmatpush1.msra.mxu0 0.0
    %5874 = vmatprep.subr.mxu0 0.0
    %5875 = vmatpush1.msra.mxu0 0.0
    %5876 = vmatprep.subr.mxu0 0.0
    %5877 = vmatpush1.msra.mxu0 0.0
    %5878 = vmatprep.subr.mxu0 0.0
    %5879 = vmatpush1.msra.mxu0 0.0
    %5880 = vmatprep.subr.mxu0 0.0
    %5881 = vmatpush1.msra.mxu0 0.0
    %5882 = vmatprep.subr.mxu0 0.0
    %5883 = vmatpush1.msra.mxu0 0.0
    %5884 = vmatprep.subr.mxu0 0.0
    %5885 = vmatpush1.msra.mxu0 0.0
    %5886 = vmatprep.subr.mxu0 0.0
    %5887 = vmatpush1.msra.mxu0 0.0
    %5888 = vmatprep.subr.mxu0 0.0
    %5889 = vmatpush1.msra.mxu0 0.0
    %5890 = vmatprep.subr.mxu0 0.0
    %5891 = vmatpush1.msra.mxu0 %v3493
    %5892 = vmatprep.subr.mxu0 0.0
    %5893 = vmatpush1.msra.mxu0 %v3492
    %5894 = vmatprep.subr.mxu0 0.0
    %5895 = vmatpush1.msra.mxu0 %v3491
    %5896 = vmatprep.subr.mxu0 0.0
    %5897 = vmatpush1.msra.mxu0 %v3490
    %5898 = vmatprep.subr.mxu0 0.0
    %5899 = vmatpush2.msra.mxu0 0.0
    %5900 = vmatprep.subr.mxu0 0.0
    %5901 = vmatpush2.msra.mxu0 0.0
    %5902 = vmatprep.subr.mxu0 0.0
    %5903 = vmatpush2.msra.mxu0 0.0
    %5904 = vmatprep.subr.mxu0 0.0
    %5905 = vmatpush2.msra.mxu0 0.0
    %5906 = vmatprep.subr.mxu0 0.0
    %5907 = vmatpush2.msra.mxu0 0.0
    %5908 = vmatprep.subr.mxu0 0.0
    %5909 = vmatpush2.msra.mxu0 0.0
    %5910 = vmatprep.subr.mxu0 0.0
    %5911 = vmatpush2.msra.mxu0 0.0
    %5912 = vmatprep.subr.mxu0 0.0
    %5913 = vmatpush2.msra.mxu0 0.0
    %5914 = vmatprep.subr.mxu0 0.0
    %5915 = vmatpush2.msra.mxu0 0.0
    %5916 = vmatprep.subr.mxu0 0.0
    %5917 = vmatpush2.msra.mxu0 0.0
    %5918 = vmatprep.subr.mxu0 0.0
    %5919 = vmatpush2.msra.mxu0 0.0
    %5920 = vmatprep.subr.mxu0 0.0
    %5921 = vmatpush2.msra.mxu0 0.0
    %5922 = vmatprep.subr.mxu0 0.0
    %5923 = vmatpush2.msra.mxu0 0.0
    %5924 = vmatprep.subr.mxu0 0.0
    %5925 = vmatpush2.msra.mxu0 0.0
    %5926 = vmatprep.subr.mxu0 0.0
    %5927 = vmatpush2.msra.mxu0 0.0
    %5928 = vmatprep.subr.mxu0 0.0
    %5929 = vmatpush2.msra.mxu0 0.0
    %5930 = vmatprep.mubr.f32.mxu0 0.0
    %5931 = vmatmul.mubr.f32.gmra.mxu0 %v5864
    %v5932 = vpop.f32.mrf.mxu0
    %v5933 = vadd.f32 %v3509, %v5932
    %v5934 = vpop.f32.mrf.mxu0
    %5935 = vdwg.mxu0
    %5936 = vmatprep.subr.mxu0 0.0
    %5937 = vmatpush1.msra.mxu0 0.0
    %5938 = vmatprep.subr.mxu0 0.0
    %5939 = vmatpush1.msra.mxu0 0.0
    %5940 = vmatprep.subr.mxu0 0.0
    %5941 = vmatpush1.msra.mxu0 0.0
    %5942 = vmatprep.subr.mxu0 0.0
    %5943 = vmatpush1.msra.mxu0 0.0
    %5944 = vmatprep.subr.mxu0 0.0
    %5945 = vmatpush1.msra.mxu0 0.0
    %5946 = vmatprep.subr.mxu0 0.0
    %5947 = vmatpush1.msra.mxu0 0.0
    %5948 = vmatprep.subr.mxu0 0.0
    %5949 = vmatpush1.msra.mxu0 0.0
    %5950 = vmatprep.subr.mxu0 0.0
    %5951 = vmatpush1.msra.mxu0 0.0
    %5952 = vmatprep.subr.mxu0 0.0
    %5953 = vmatpush1.msra.mxu0 0.0
    %5954 = vmatprep.subr.mxu0 0.0
    %5955 = vmatpush1.msra.mxu0 0.0
    %5956 = vmatprep.subr.mxu0 0.0
    %5957 = vmatpush1.msra.mxu0 0.0
    %5958 = vmatprep.subr.mxu0 0.0
    %5959 = vmatpush1.msra.mxu0 0.0
    %5960 = vmatprep.subr.mxu0 0.0
    %5961 = vmatpush1.msra.mxu0 %v3497
    %5962 = vmatprep.subr.mxu0 0.0
    %5963 = vmatpush1.msra.mxu0 %v3496
    %5964 = vmatprep.subr.mxu0 0.0
    %5965 = vmatpush1.msra.mxu0 %v3495
    %5966 = vmatprep.subr.mxu0 0.0
    %5967 = vmatpush1.msra.mxu0 %v3494
    %5968 = vmatprep.subr.mxu0 0.0
    %5969 = vmatpush2.msra.mxu0 0.0
    %5970 = vmatprep.subr.mxu0 0.0
    %5971 = vmatpush2.msra.mxu0 0.0
    %5972 = vmatprep.subr.mxu0 0.0
    %5973 = vmatpush2.msra.mxu0 0.0
    %5974 = vmatprep.subr.mxu0 0.0
    %5975 = vmatpush2.msra.mxu0 0.0
    %5976 = vmatprep.subr.mxu0 0.0
    %5977 = vmatpush2.msra.mxu0 0.0
    %5978 = vmatprep.subr.mxu0 0.0
    %5979 = vmatpush2.msra.mxu0 0.0
    %5980 = vmatprep.subr.mxu0 0.0
    %5981 = vmatpush2.msra.mxu0 0.0
    %5982 = vmatprep.subr.mxu0 0.0
    %5983 = vmatpush2.msra.mxu0 0.0
    %5984 = vmatprep.subr.mxu0 0.0
    %5985 = vmatpush2.msra.mxu0 0.0
    %5986 = vmatprep.subr.mxu0 0.0
    %5987 = vmatpush2.msra.mxu0 0.0
    %5988 = vmatprep.subr.mxu0 0.0
    %5989 = vmatpush2.msra.mxu0 0.0
    %5990 = vmatprep.subr.mxu0 0.0
    %5991 = vmatpush2.msra.mxu0 0.0
    %5992 = vmatprep.subr.mxu0 0.0
    %5993 = vmatpush2.msra.mxu0 0.0
    %5994 = vmatprep.subr.mxu0 0.0
    %5995 = vmatpush2.msra.mxu0 0.0
    %5996 = vmatprep.subr.mxu0 0.0
    %5997 = vmatpush2.msra.mxu0 0.0
    %5998 = vmatprep.subr.mxu0 0.0
    %5999 = vmatpush2.msra.mxu0 0.0
    %6000 = vmatprep.mubr.f32.mxu0 0.0
    %6001 = vmatmul.mubr.f32.gmra.mxu0 %v5864
    %v6002 = vpop.f32.mrf.mxu0
    %v6003 = vadd.f32 %v3588, %v6002
    %v6004 = vpop.f32.mrf.mxu0
    %6005 = vdwg.mxu0
    %6006 = vmatprep.subr.mxu0 0.0
    %6007 = vmatpush1.msra.mxu0 0.0
    %6008 = vmatprep.subr.mxu0 0.0
    %6009 = vmatpush1.msra.mxu0 0.0
    %6010 = vmatprep.subr.mxu0 0.0
    %6011 = vmatpush1.msra.mxu0 0.0
    %6012 = vmatprep.subr.mxu0 0.0
    %6013 = vmatpush1.msra.mxu0 0.0
    %6014 = vmatprep.subr.mxu0 0.0
    %6015 = vmatpush1.msra.mxu0 0.0
    %6016 = vmatprep.subr.mxu0 0.0
    %6017 = vmatpush1.msra.mxu0 0.0
    %6018 = vmatprep.subr.mxu0 0.0
    %6019 = vmatpush1.msra.mxu0 0.0
    %6020 = vmatprep.subr.mxu0 0.0
    %6021 = vmatpush1.msra.mxu0 0.0
    %6022 = vmatprep.subr.mxu0 0.0
    %6023 = vmatpush1.msra.mxu0 0.0
    %6024 = vmatprep.subr.mxu0 0.0
    %6025 = vmatpush1.msra.mxu0 0.0
    %6026 = vmatprep.subr.mxu0 0.0
    %6027 = vmatpush1.msra.mxu0 0.0
    %6028 = vmatprep.subr.mxu0 0.0
    %6029 = vmatpush1.msra.mxu0 0.0
    %6030 = vmatprep.subr.mxu0 0.0
    %6031 = vmatpush1.msra.mxu0 %v3501
    %6032 = vmatprep.subr.mxu0 0.0
    %6033 = vmatpush1.msra.mxu0 %v3500
    %6034 = vmatprep.subr.mxu0 0.0
    %6035 = vmatpush1.msra.mxu0 %v3499
    %6036 = vmatprep.subr.mxu0 0.0
    %6037 = vmatpush1.msra.mxu0 %v3498
    %6038 = vmatprep.subr.mxu0 0.0
    %6039 = vmatpush2.msra.mxu0 0.0
    %6040 = vmatprep.subr.mxu0 0.0
    %6041 = vmatpush2.msra.mxu0 0.0
    %6042 = vmatprep.subr.mxu0 0.0
    %6043 = vmatpush2.msra.mxu0 0.0
    %6044 = vmatprep.subr.mxu0 0.0
    %6045 = vmatpush2.msra.mxu0 0.0
    %6046 = vmatprep.subr.mxu0 0.0
    %6047 = vmatpush2.msra.mxu0 0.0
    %6048 = vmatprep.subr.mxu0 0.0
    %6049 = vmatpush2.msra.mxu0 0.0
    %6050 = vmatprep.subr.mxu0 0.0
    %6051 = vmatpush2.msra.mxu0 0.0
    %6052 = vmatprep.subr.mxu0 0.0
    %6053 = vmatpush2.msra.mxu0 0.0
    %6054 = vmatprep.subr.mxu0 0.0
    %6055 = vmatpush2.msra.mxu0 0.0
    %6056 = vmatprep.subr.mxu0 0.0
    %6057 = vmatpush2.msra.mxu0 0.0
    %6058 = vmatprep.subr.mxu0 0.0
    %6059 = vmatpush2.msra.mxu0 0.0
    %6060 = vmatprep.subr.mxu0 0.0
    %6061 = vmatpush2.msra.mxu0 0.0
    %6062 = vmatprep.subr.mxu0 0.0
    %6063 = vmatpush2.msra.mxu0 0.0
    %6064 = vmatprep.subr.mxu0 0.0
    %6065 = vmatpush2.msra.mxu0 0.0
    %6066 = vmatprep.subr.mxu0 0.0
    %6067 = vmatpush2.msra.mxu0 0.0
    %6068 = vmatprep.subr.mxu0 0.0
    %6069 = vmatpush2.msra.mxu0 0.0
    %6070 = vmatprep.mubr.f32.mxu0 0.0
    %6071 = vmatmul.mubr.f32.gmra.mxu0 %v5864
    %v6072 = vpop.f32.mrf.mxu0
    %v6073 = vadd.f32 %v3664, %v6072
    %v6074 = vpop.f32.mrf.mxu0
    %6075 = vdwg.mxu0
    %v6076 = vadd.f32 %v3067, %v5933
    %v6077 = vxor.u32 %v6076, 2147483648
    %v6078 = vmul.f32 %v6077, 1.442695
    %v6079 = vpow.pop %v6078
    %v6080 = vadd.f32 %v6079, 1.0
    %v6081 = vrcp.pop %v6080
    %v6082 = vmul.f32 1.0, %v6081
    %v6083 = vadd.f32 %v3252, %v6003
    %v6084 = vxor.u32 %v6083, 2147483648
    %v6085 = vmul.f32 %v6084, 1.442695
    %v6086 = vpow.pop %v6085
    %v6087 = vadd.f32 %v6086, 1.0
    %v6088 = vrcp.pop %v6087
    %v6089 = vmul.f32 1.0, %v6088
    %v6090 = vmul.f32 %v6082, %v6073
    %v6091 = vadd.f32 %v3437, %v6090
    %v6092 = vtanh.pop %v6091
    %v6093 = vsub.f32 1.0, %v6089
    %v6094 = vmul.f32 %v6093, %v6092
    %v6095 = vmul.f32 %v6089, %v5862
    %v6096 = vadd.f32 %v6094, %v6095
    %v6098 = vsel %vm187, %v6096, 0
    %6100 = vmatprep.subr.mxu0 0.0
    %6101 = vmatpush1.msra.mxu0 0.0
    %6102 = vmatprep.subr.mxu0 0.0
    %6103 = vmatpush1.msra.mxu0 0.0
    %6104 = vmatprep.subr.mxu0 0.0
    %6105 = vmatpush1.msra.mxu0 0.0
    %6106 = vmatprep.subr.mxu0 0.0
    %6107 = vmatpush1.msra.mxu0 0.0
    %6108 = vmatprep.subr.mxu0 0.0
    %6109 = vmatpush1.msra.mxu0 0.0
    %6110 = vmatprep.subr.mxu0 0.0
    %6111 = vmatpush1.msra.mxu0 0.0
    %6112 = vmatprep.subr.mxu0 0.0
    %6113 = vmatpush1.msra.mxu0 0.0
    %6114 = vmatprep.subr.mxu0 0.0
    %6115 = vmatpush1.msra.mxu0 0.0
    %6116 = vmatprep.subr.mxu0 0.0
    %6117 = vmatpush1.msra.mxu0 0.0
    %6118 = vmatprep.subr.mxu0 0.0
    %6119 = vmatpush1.msra.mxu0 0.0
    %6120 = vmatprep.subr.mxu0 0.0
    %6121 = vmatpush1.msra.mxu0 0.0
    %6122 = vmatprep.subr.mxu0 0.0
    %6123 = vmatpush1.msra.mxu0 0.0
    %6124 = vmatprep.subr.mxu0 0.0
    %6125 = vmatpush1.msra.mxu0 %v3493
    %6126 = vmatprep.subr.mxu0 0.0
    %6127 = vmatpush1.msra.mxu0 %v3492
    %6128 = vmatprep.subr.mxu0 0.0
    %6129 = vmatpush1.msra.mxu0 %v3491
    %6130 = vmatprep.subr.mxu0 0.0
    %6131 = vmatpush1.msra.mxu0 %v3490
    %6132 = vmatprep.subr.mxu0 0.0
    %6133 = vmatpush2.msra.mxu0 0.0
    %6134 = vmatprep.subr.mxu0 0.0
    %6135 = vmatpush2.msra.mxu0 0.0
    %6136 = vmatprep.subr.mxu0 0.0
    %6137 = vmatpush2.msra.mxu0 0.0
    %6138 = vmatprep.subr.mxu0 0.0
    %6139 = vmatpush2.msra.mxu0 0.0
    %6140 = vmatprep.subr.mxu0 0.0
    %6141 = vmatpush2.msra.mxu0 0.0
    %6142 = vmatprep.subr.mxu0 0.0
    %6143 = vmatpush2.msra.mxu0 0.0
    %6144 = vmatprep.subr.mxu0 0.0
    %6145 = vmatpush2.msra.mxu0 0.0
    %6146 = vmatprep.subr.mxu0 0.0
    %6147 = vmatpush2.msra.mxu0 0.0
    %6148 = vmatprep.subr.mxu0 0.0
    %6149 = vmatpush2.msra.mxu0 0.0
    %6150 = vmatprep.subr.mxu0 0.0
    %6151 = vmatpush2.msra.mxu0 0.0
    %6152 = vmatprep.subr.mxu0 0.0
    %6153 = vmatpush2.msra.mxu0 0.0
    %6154 = vmatprep.subr.mxu0 0.0
    %6155 = vmatpush2.msra.mxu0 0.0
    %6156 = vmatprep.subr.mxu0 0.0
    %6157 = vmatpush2.msra.mxu0 0.0
    %6158 = vmatprep.subr.mxu0 0.0
    %6159 = vmatpush2.msra.mxu0 0.0
    %6160 = vmatprep.subr.mxu0 0.0
    %6161 = vmatpush2.msra.mxu0 0.0
    %6162 = vmatprep.subr.mxu0 0.0
    %6163 = vmatpush2.msra.mxu0 0.0
    %6164 = vmatprep.mubr.f32.mxu0 0.0
    %6165 = vmatmul.mubr.f32.gmra.mxu0 %v6098
    %v6166 = vpop.f32.mrf.mxu0
    %v6167 = vadd.f32 %v3509, %v6166
    %v6168 = vpop.f32.mrf.mxu0
    %6169 = vdwg.mxu0
    %6170 = vmatprep.subr.mxu0 0.0
    %6171 = vmatpush1.msra.mxu0 0.0
    %6172 = vmatprep.subr.mxu0 0.0
    %6173 = vmatpush1.msra.mxu0 0.0
    %6174 = vmatprep.subr.mxu0 0.0
    %6175 = vmatpush1.msra.mxu0 0.0
    %6176 = vmatprep.subr.mxu0 0.0
    %6177 = vmatpush1.msra.mxu0 0.0
    %6178 = vmatprep.subr.mxu0 0.0
    %6179 = vmatpush1.msra.mxu0 0.0
    %6180 = vmatprep.subr.mxu0 0.0
    %6181 = vmatpush1.msra.mxu0 0.0
    %6182 = vmatprep.subr.mxu0 0.0
    %6183 = vmatpush1.msra.mxu0 0.0
    %6184 = vmatprep.subr.mxu0 0.0
    %6185 = vmatpush1.msra.mxu0 0.0
    %6186 = vmatprep.subr.mxu0 0.0
    %6187 = vmatpush1.msra.mxu0 0.0
    %6188 = vmatprep.subr.mxu0 0.0
    %6189 = vmatpush1.msra.mxu0 0.0
    %6190 = vmatprep.subr.mxu0 0.0
    %6191 = vmatpush1.msra.mxu0 0.0
    %6192 = vmatprep.subr.mxu0 0.0
    %6193 = vmatpush1.msra.mxu0 0.0
    %6194 = vmatprep.subr.mxu0 0.0
    %6195 = vmatpush1.msra.mxu0 %v3497
    %6196 = vmatprep.subr.mxu0 0.0
    %6197 = vmatpush1.msra.mxu0 %v3496
    %6198 = vmatprep.subr.mxu0 0.0
    %6199 = vmatpush1.msra.mxu0 %v3495
    %6200 = vmatprep.subr.mxu0 0.0
    %6201 = vmatpush1.msra.mxu0 %v3494
    %6202 = vmatprep.subr.mxu0 0.0
    %6203 = vmatpush2.msra.mxu0 0.0
    %6204 = vmatprep.subr.mxu0 0.0
    %6205 = vmatpush2.msra.mxu0 0.0
    %6206 = vmatprep.subr.mxu0 0.0
    %6207 = vmatpush2.msra.mxu0 0.0
    %6208 = vmatprep.subr.mxu0 0.0
    %6209 = vmatpush2.msra.mxu0 0.0
    %6210 = vmatprep.subr.mxu0 0.0
    %6211 = vmatpush2.msra.mxu0 0.0
    %6212 = vmatprep.subr.mxu0 0.0
    %6213 = vmatpush2.msra.mxu0 0.0
    %6214 = vmatprep.subr.mxu0 0.0
    %6215 = vmatpush2.msra.mxu0 0.0
    %6216 = vmatprep.subr.mxu0 0.0
    %6217 = vmatpush2.msra.mxu0 0.0
    %6218 = vmatprep.subr.mxu0 0.0
    %6219 = vmatpush2.msra.mxu0 0.0
    %6220 = vmatprep.subr.mxu0 0.0
    %6221 = vmatpush2.msra.mxu0 0.0
    %6222 = vmatprep.subr.mxu0 0.0
    %6223 = vmatpush2.msra.mxu0 0.0
    %6224 = vmatprep.subr.mxu0 0.0
    %6225 = vmatpush2.msra.mxu0 0.0
    %6226 = vmatprep.subr.mxu0 0.0
    %6227 = vmatpush2.msra.mxu0 0.0
    %6228 = vmatprep.subr.mxu0 0.0
    %6229 = vmatpush2.msra.mxu0 0.0
    %6230 = vmatprep.subr.mxu0 0.0
    %6231 = vmatpush2.msra.mxu0 0.0
    %6232 = vmatprep.subr.mxu0 0.0
    %6233 = vmatpush2.msra.mxu0 0.0
    %6234 = vmatprep.mubr.f32.mxu0 0.0
    %6235 = vmatmul.mubr.f32.gmra.mxu0 %v6098
    %v6236 = vpop.f32.mrf.mxu0
    %v6237 = vadd.f32 %v3588, %v6236
    %v6238 = vpop.f32.mrf.mxu0
    %6239 = vdwg.mxu0
    %6240 = vmatprep.subr.mxu0 0.0
    %6241 = vmatpush1.msra.mxu0 0.0
    %6242 = vmatprep.subr.mxu0 0.0
    %6243 = vmatpush1.msra.mxu0 0.0
    %6244 = vmatprep.subr.mxu0 0.0
    %6245 = vmatpush1.msra.mxu0 0.0
    %6246 = vmatprep.subr.mxu0 0.0
    %6247 = vmatpush1.msra.mxu0 0.0
    %6248 = vmatprep.subr.mxu0 0.0
    %6249 = vmatpush1.msra.mxu0 0.0
    %6250 = vmatprep.subr.mxu0 0.0
    %6251 = vmatpush1.msra.mxu0 0.0
    %6252 = vmatprep.subr.mxu0 0.0
    %6253 = vmatpush1.msra.mxu0 0.0
    %6254 = vmatprep.subr.mxu0 0.0
    %6255 = vmatpush1.msra.mxu0 0.0
    %6256 = vmatprep.subr.mxu0 0.0
    %6257 = vmatpush1.msra.mxu0 0.0
    %6258 = vmatprep.subr.mxu0 0.0
    %6259 = vmatpush1.msra.mxu0 0.0
    %6260 = vmatprep.subr.mxu0 0.0
    %6261 = vmatpush1.msra.mxu0 0.0
    %6262 = vmatprep.subr.mxu0 0.0
    %6263 = vmatpush1.msra.mxu0 0.0
    %6264 = vmatprep.subr.mxu0 0.0
    %6265 = vmatpush1.msra.mxu0 %v3501
    %6266 = vmatprep.subr.mxu0 0.0
    %6267 = vmatpush1.msra.mxu0 %v3500
    %6268 = vmatprep.subr.mxu0 0.0
    %6269 = vmatpush1.msra.mxu0 %v3499
    %6270 = vmatprep.subr.mxu0 0.0
    %6271 = vmatpush1.msra.mxu0 %v3498
    %6272 = vmatprep.subr.mxu0 0.0
    %6273 = vmatpush2.msra.mxu0 0.0
    %6274 = vmatprep.subr.mxu0 0.0
    %6275 = vmatpush2.msra.mxu0 0.0
    %6276 = vmatprep.subr.mxu0 0.0
    %6277 = vmatpush2.msra.mxu0 0.0
    %6278 = vmatprep.subr.mxu0 0.0
    %6279 = vmatpush2.msra.mxu0 0.0
    %6280 = vmatprep.subr.mxu0 0.0
    %6281 = vmatpush2.msra.mxu0 0.0
    %6282 = vmatprep.subr.mxu0 0.0
    %6283 = vmatpush2.msra.mxu0 0.0
    %6284 = vmatprep.subr.mxu0 0.0
    %6285 = vmatpush2.msra.mxu0 0.0
    %6286 = vmatprep.subr.mxu0 0.0
    %6287 = vmatpush2.msra.mxu0 0.0
    %6288 = vmatprep.subr.mxu0 0.0
    %6289 = vmatpush2.msra.mxu0 0.0
    %6290 = vmatprep.subr.mxu0 0.0
    %6291 = vmatpush2.msra.mxu0 0.0
    %6292 = vmatprep.subr.mxu0 0.0
    %6293 = vmatpush2.msra.mxu0 0.0
    %6294 = vmatprep.subr.mxu0 0.0
    %6295 = vmatpush2.msra.mxu0 0.0
    %6296 = vmatprep.subr.mxu0 0.0
    %6297 = vmatpush2.msra.mxu0 0.0
    %6298 = vmatprep.subr.mxu0 0.0
    %6299 = vmatpush2.msra.mxu0 0.0
    %6300 = vmatprep.subr.mxu0 0.0
    %6301 = vmatpush2.msra.mxu0 0.0
    %6302 = vmatprep.subr.mxu0 0.0
    %6303 = vmatpush2.msra.mxu0 0.0
    %6304 = vmatprep.mubr.f32.mxu0 0.0
    %6305 = vmatmul.mubr.f32.gmra.mxu0 %v6098
    %v6306 = vpop.f32.mrf.mxu0
    %v6307 = vadd.f32 %v3664, %v6306
    %v6308 = vpop.f32.mrf.mxu0
    %6309 = vdwg.mxu0
    %v6310 = vadd.f32 %v3072, %v6167
    %v6311 = vxor.u32 %v6310, 2147483648
    %v6312 = vmul.f32 %v6311, 1.442695
    %v6313 = vpow.pop %v6312
    %v6314 = vadd.f32 %v6313, 1.0
    %v6315 = vrcp.pop %v6314
    %v6316 = vmul.f32 1.0, %v6315
    %v6317 = vadd.f32 %v3257, %v6237
    %v6318 = vxor.u32 %v6317, 2147483648
    %v6319 = vmul.f32 %v6318, 1.442695
    %v6320 = vpow.pop %v6319
    %v6321 = vadd.f32 %v6320, 1.0
    %v6322 = vrcp.pop %v6321
    %v6323 = vmul.f32 1.0, %v6322
    %v6324 = vmul.f32 %v6316, %v6307
    %v6325 = vadd.f32 %v3442, %v6324
    %v6326 = vtanh.pop %v6325
    %v6327 = vsub.f32 1.0, %v6323
    %v6328 = vmul.f32 %v6327, %v6326
    %v6329 = vmul.f32 %v6323, %v6096
    %v6330 = vadd.f32 %v6328, %v6329
    %v6332 = vsel %vm187, %v6330, 0
    %6334 = vmatprep.subr.mxu0 0.0
    %6335 = vmatpush1.msra.mxu0 0.0
    %6336 = vmatprep.subr.mxu0 0.0
    %6337 = vmatpush1.msra.mxu0 0.0
    %6338 = vmatprep.subr.mxu0 0.0
    %6339 = vmatpush1.msra.mxu0 0.0
    %6340 = vmatprep.subr.mxu0 0.0
    %6341 = vmatpush1.msra.mxu0 0.0
    %6342 = vmatprep.subr.mxu0 0.0
    %6343 = vmatpush1.msra.mxu0 0.0
    %6344 = vmatprep.subr.mxu0 0.0
    %6345 = vmatpush1.msra.mxu0 0.0
    %6346 = vmatprep.subr.mxu0 0.0
    %6347 = vmatpush1.msra.mxu0 0.0
    %6348 = vmatprep.subr.mxu0 0.0
    %6349 = vmatpush1.msra.mxu0 0.0
    %6350 = vmatprep.subr.mxu0 0.0
    %6351 = vmatpush1.msra.mxu0 0.0
    %6352 = vmatprep.subr.mxu0 0.0
    %6353 = vmatpush1.msra.mxu0 0.0
    %6354 = vmatprep.subr.mxu0 0.0
    %6355 = vmatpush1.msra.mxu0 0.0
    %6356 = vmatprep.subr.mxu0 0.0
    %6357 = vmatpush1.msra.mxu0 0.0
    %6358 = vmatprep.subr.mxu0 0.0
    %6359 = vmatpush1.msra.mxu0 %v3493
    %6360 = vmatprep.subr.mxu0 0.0
    %6361 = vmatpush1.msra.mxu0 %v3492
    %6362 = vmatprep.subr.mxu0 0.0
    %6363 = vmatpush1.msra.mxu0 %v3491
    %6364 = vmatprep.subr.mxu0 0.0
    %6365 = vmatpush1.msra.mxu0 %v3490
    %6366 = vmatprep.subr.mxu0 0.0
    %6367 = vmatpush2.msra.mxu0 0.0
    %6368 = vmatprep.subr.mxu0 0.0
    %6369 = vmatpush2.msra.mxu0 0.0
    %6370 = vmatprep.subr.mxu0 0.0
    %6371 = vmatpush2.msra.mxu0 0.0
    %6372 = vmatprep.subr.mxu0 0.0
    %6373 = vmatpush2.msra.mxu0 0.0
    %6374 = vmatprep.subr.mxu0 0.0
    %6375 = vmatpush2.msra.mxu0 0.0
    %6376 = vmatprep.subr.mxu0 0.0
    %6377 = vmatpush2.msra.mxu0 0.0
    %6378 = vmatprep.subr.mxu0 0.0
    %6379 = vmatpush2.msra.mxu0 0.0
    %6380 = vmatprep.subr.mxu0 0.0
    %6381 = vmatpush2.msra.mxu0 0.0
    %6382 = vmatprep.subr.mxu0 0.0
    %6383 = vmatpush2.msra.mxu0 0.0
    %6384 = vmatprep.subr.mxu0 0.0
    %6385 = vmatpush2.msra.mxu0 0.0
    %6386 = vmatprep.subr.mxu0 0.0
    %6387 = vmatpush2.msra.mxu0 0.0
    %6388 = vmatprep.subr.mxu0 0.0
    %6389 = vmatpush2.msra.mxu0 0.0
    %6390 = vmatprep.subr.mxu0 0.0
    %6391 = vmatpush2.msra.mxu0 0.0
    %6392 = vmatprep.subr.mxu0 0.0
    %6393 = vmatpush2.msra.mxu0 0.0
    %6394 = vmatprep.subr.mxu0 0.0
    %6395 = vmatpush2.msra.mxu0 0.0
    %6396 = vmatprep.subr.mxu0 0.0
    %6397 = vmatpush2.msra.mxu0 0.0
    %6398 = vmatprep.mubr.f32.mxu0 0.0
    %6399 = vmatmul.mubr.f32.gmra.mxu0 %v6332
    %v6400 = vpop.f32.mrf.mxu0
    %v6401 = vadd.f32 %v3509, %v6400
    %v6402 = vpop.f32.mrf.mxu0
    %6403 = vdwg.mxu0
    %6404 = vmatprep.subr.mxu0 0.0
    %6405 = vmatpush1.msra.mxu0 0.0
    %6406 = vmatprep.subr.mxu0 0.0
    %6407 = vmatpush1.msra.mxu0 0.0
    %6408 = vmatprep.subr.mxu0 0.0
    %6409 = vmatpush1.msra.mxu0 0.0
    %6410 = vmatprep.subr.mxu0 0.0
    %6411 = vmatpush1.msra.mxu0 0.0
    %6412 = vmatprep.subr.mxu0 0.0
    %6413 = vmatpush1.msra.mxu0 0.0
    %6414 = vmatprep.subr.mxu0 0.0
    %6415 = vmatpush1.msra.mxu0 0.0
    %6416 = vmatprep.subr.mxu0 0.0
    %6417 = vmatpush1.msra.mxu0 0.0
    %6418 = vmatprep.subr.mxu0 0.0
    %6419 = vmatpush1.msra.mxu0 0.0
    %6420 = vmatprep.subr.mxu0 0.0
    %6421 = vmatpush1.msra.mxu0 0.0
    %6422 = vmatprep.subr.mxu0 0.0
    %6423 = vmatpush1.msra.mxu0 0.0
    %6424 = vmatprep.subr.mxu0 0.0
    %6425 = vmatpush1.msra.mxu0 0.0
    %6426 = vmatprep.subr.mxu0 0.0
    %6427 = vmatpush1.msra.mxu0 0.0
    %6428 = vmatprep.subr.mxu0 0.0
    %6429 = vmatpush1.msra.mxu0 %v3497
    %6430 = vmatprep.subr.mxu0 0.0
    %6431 = vmatpush1.msra.mxu0 %v3496
    %6432 = vmatprep.subr.mxu0 0.0
    %6433 = vmatpush1.msra.mxu0 %v3495
    %6434 = vmatprep.subr.mxu0 0.0
    %6435 = vmatpush1.msra.mxu0 %v3494
    %6436 = vmatprep.subr.mxu0 0.0
    %6437 = vmatpush2.msra.mxu0 0.0
    %6438 = vmatprep.subr.mxu0 0.0
    %6439 = vmatpush2.msra.mxu0 0.0
    %6440 = vmatprep.subr.mxu0 0.0
    %6441 = vmatpush2.msra.mxu0 0.0
    %6442 = vmatprep.subr.mxu0 0.0
    %6443 = vmatpush2.msra.mxu0 0.0
    %6444 = vmatprep.subr.mxu0 0.0
    %6445 = vmatpush2.msra.mxu0 0.0
    %6446 = vmatprep.subr.mxu0 0.0
    %6447 = vmatpush2.msra.mxu0 0.0
    %6448 = vmatprep.subr.mxu0 0.0
    %6449 = vmatpush2.msra.mxu0 0.0
    %6450 = vmatprep.subr.mxu0 0.0
    %6451 = vmatpush2.msra.mxu0 0.0
    %6452 = vmatprep.subr.mxu0 0.0
    %6453 = vmatpush2.msra.mxu0 0.0
    %6454 = vmatprep.subr.mxu0 0.0
    %6455 = vmatpush2.msra.mxu0 0.0
    %6456 = vmatprep.subr.mxu0 0.0
    %6457 = vmatpush2.msra.mxu0 0.0
    %6458 = vmatprep.subr.mxu0 0.0
    %6459 = vmatpush2.msra.mxu0 0.0
    %6460 = vmatprep.subr.mxu0 0.0
    %6461 = vmatpush2.msra.mxu0 0.0
    %6462 = vmatprep.subr.mxu0 0.0
    %6463 = vmatpush2.msra.mxu0 0.0
    %6464 = vmatprep.subr.mxu0 0.0
    %6465 = vmatpush2.msra.mxu0 0.0
    %6466 = vmatprep.subr.mxu0 0.0
    %6467 = vmatpush2.msra.mxu0 0.0
    %6468 = vmatprep.mubr.f32.mxu0 0.0
    %6469 = vmatmul.mubr.f32.gmra.mxu0 %v6332
    %v6470 = vpop.f32.mrf.mxu0
    %v6471 = vadd.f32 %v3588, %v6470
    %v6472 = vpop.f32.mrf.mxu0
    %6473 = vdwg.mxu0
    %6474 = vmatprep.subr.mxu0 0.0
    %6475 = vmatpush1.msra.mxu0 0.0
    %6476 = vmatprep.subr.mxu0 0.0
    %6477 = vmatpush1.msra.mxu0 0.0
    %6478 = vmatprep.subr.mxu0 0.0
    %6479 = vmatpush1.msra.mxu0 0.0
    %6480 = vmatprep.subr.mxu0 0.0
    %6481 = vmatpush1.msra.mxu0 0.0
    %6482 = vmatprep.subr.mxu0 0.0
    %6483 = vmatpush1.msra.mxu0 0.0
    %6484 = vmatprep.subr.mxu0 0.0
    %6485 = vmatpush1.msra.mxu0 0.0
    %6486 = vmatprep.subr.mxu0 0.0
    %6487 = vmatpush1.msra.mxu0 0.0
    %6488 = vmatprep.subr.mxu0 0.0
    %6489 = vmatpush1.msra.mxu0 0.0
    %6490 = vmatprep.subr.mxu0 0.0
    %6491 = vmatpush1.msra.mxu0 0.0
    %6492 = vmatprep.subr.mxu0 0.0
    %6493 = vmatpush1.msra.mxu0 0.0
    %6494 = vmatprep.subr.mxu0 0.0
    %6495 = vmatpush1.msra.mxu0 0.0
    %6496 = vmatprep.subr.mxu0 0.0
    %6497 = vmatpush1.msra.mxu0 0.0
    %6498 = vmatprep.subr.mxu0 0.0
    %6499 = vmatpush1.msra.mxu0 %v3501
    %6500 = vmatprep.subr.mxu0 0.0
    %6501 = vmatpush1.msra.mxu0 %v3500
    %6502 = vmatprep.subr.mxu0 0.0
    %6503 = vmatpush1.msra.mxu0 %v3499
    %6504 = vmatprep.subr.mxu0 0.0
    %6505 = vmatpush1.msra.mxu0 %v3498
    %6506 = vmatprep.subr.mxu0 0.0
    %6507 = vmatpush2.msra.mxu0 0.0
    %6508 = vmatprep.subr.mxu0 0.0
    %6509 = vmatpush2.msra.mxu0 0.0
    %6510 = vmatprep.subr.mxu0 0.0
    %6511 = vmatpush2.msra.mxu0 0.0
    %6512 = vmatprep.subr.mxu0 0.0
    %6513 = vmatpush2.msra.mxu0 0.0
    %6514 = vmatprep.subr.mxu0 0.0
    %6515 = vmatpush2.msra.mxu0 0.0
    %6516 = vmatprep.subr.mxu0 0.0
    %6517 = vmatpush2.msra.mxu0 0.0
    %6518 = vmatprep.subr.mxu0 0.0
    %6519 = vmatpush2.msra.mxu0 0.0
    %6520 = vmatprep.subr.mxu0 0.0
    %6521 = vmatpush2.msra.mxu0 0.0
    %6522 = vmatprep.subr.mxu0 0.0
    %6523 = vmatpush2.msra.mxu0 0.0
    %6524 = vmatprep.subr.mxu0 0.0
    %6525 = vmatpush2.msra.mxu0 0.0
    %6526 = vmatprep.subr.mxu0 0.0
    %6527 = vmatpush2.msra.mxu0 0.0
    %6528 = vmatprep.subr.mxu0 0.0
    %6529 = vmatpush2.msra.mxu0 0.0
    %6530 = vmatprep.subr.mxu0 0.0
    %6531 = vmatpush2.msra.mxu0 0.0
    %6532 = vmatprep.subr.mxu0 0.0
    %6533 = vmatpush2.msra.mxu0 0.0
    %6534 = vmatprep.subr.mxu0 0.0
    %6535 = vmatpush2.msra.mxu0 0.0
    %6536 = vmatprep.subr.mxu0 0.0
    %6537 = vmatpush2.msra.mxu0 0.0
    %6538 = vmatprep.mubr.f32.mxu0 0.0
    %6539 = vmatmul.mubr.f32.gmra.mxu0 %v6332
    %v6540 = vpop.f32.mrf.mxu0
    %v6541 = vadd.f32 %v3664, %v6540
    %v6542 = vpop.f32.mrf.mxu0
    %6543 = vdwg.mxu0
    %v6544 = vadd.f32 %v3077, %v6401
    %v6545 = vxor.u32 %v6544, 2147483648
    %v6546 = vmul.f32 %v6545, 1.442695
    %v6547 = vpow.pop %v6546
    %v6548 = vadd.f32 %v6547, 1.0
    %v6549 = vrcp.pop %v6548
    %v6550 = vmul.f32 1.0, %v6549
    %v6551 = vadd.f32 %v3262, %v6471
    %v6552 = vxor.u32 %v6551, 2147483648
    %v6553 = vmul.f32 %v6552, 1.442695
    %v6554 = vpow.pop %v6553
    %v6555 = vadd.f32 %v6554, 1.0
    %v6556 = vrcp.pop %v6555
    %v6557 = vmul.f32 1.0, %v6556
    %v6558 = vmul.f32 %v6550, %v6541
    %v6559 = vadd.f32 %v3447, %v6558
    %v6560 = vtanh.pop %v6559
    %v6561 = vsub.f32 1.0, %v6557
    %v6562 = vmul.f32 %v6561, %v6560
    %v6563 = vmul.f32 %v6557, %v6330
    %v6564 = vadd.f32 %v6562, %v6563
    %v6566 = vsel %vm187, %v6564, 0
    %6568 = vmatprep.subr.mxu0 0.0
    %6569 = vmatpush1.msra.mxu0 0.0
    %6570 = vmatprep.subr.mxu0 0.0
    %6571 = vmatpush1.msra.mxu0 0.0
    %6572 = vmatprep.subr.mxu0 0.0
    %6573 = vmatpush1.msra.mxu0 0.0
    %6574 = vmatprep.subr.mxu0 0.0
    %6575 = vmatpush1.msra.mxu0 0.0
    %6576 = vmatprep.subr.mxu0 0.0
    %6577 = vmatpush1.msra.mxu0 0.0
    %6578 = vmatprep.subr.mxu0 0.0
    %6579 = vmatpush1.msra.mxu0 0.0
    %6580 = vmatprep.subr.mxu0 0.0
    %6581 = vmatpush1.msra.mxu0 0.0
    %6582 = vmatprep.subr.mxu0 0.0
    %6583 = vmatpush1.msra.mxu0 0.0
    %6584 = vmatprep.subr.mxu0 0.0
    %6585 = vmatpush1.msra.mxu0 0.0
    %6586 = vmatprep.subr.mxu0 0.0
    %6587 = vmatpush1.msra.mxu0 0.0
    %6588 = vmatprep.subr.mxu0 0.0
    %6589 = vmatpush1.msra.mxu0 0.0
    %6590 = vmatprep.subr.mxu0 0.0
    %6591 = vmatpush1.msra.mxu0 0.0
    %6592 = vmatprep.subr.mxu0 0.0
    %6593 = vmatpush1.msra.mxu0 %v3493
    %6594 = vmatprep.subr.mxu0 0.0
    %6595 = vmatpush1.msra.mxu0 %v3492
    %6596 = vmatprep.subr.mxu0 0.0
    %6597 = vmatpush1.msra.mxu0 %v3491
    %6598 = vmatprep.subr.mxu0 0.0
    %6599 = vmatpush1.msra.mxu0 %v3490
    %6600 = vmatprep.subr.mxu0 0.0
    %6601 = vmatpush2.msra.mxu0 0.0
    %6602 = vmatprep.subr.mxu0 0.0
    %6603 = vmatpush2.msra.mxu0 0.0
    %6604 = vmatprep.subr.mxu0 0.0
    %6605 = vmatpush2.msra.mxu0 0.0
    %6606 = vmatprep.subr.mxu0 0.0
    %6607 = vmatpush2.msra.mxu0 0.0
    %6608 = vmatprep.subr.mxu0 0.0
    %6609 = vmatpush2.msra.mxu0 0.0
    %6610 = vmatprep.subr.mxu0 0.0
    %6611 = vmatpush2.msra.mxu0 0.0
    %6612 = vmatprep.subr.mxu0 0.0
    %6613 = vmatpush2.msra.mxu0 0.0
    %6614 = vmatprep.subr.mxu0 0.0
    %6615 = vmatpush2.msra.mxu0 0.0
    %6616 = vmatprep.subr.mxu0 0.0
    %6617 = vmatpush2.msra.mxu0 0.0
    %6618 = vmatprep.subr.mxu0 0.0
    %6619 = vmatpush2.msra.mxu0 0.0
    %6620 = vmatprep.subr.mxu0 0.0
    %6621 = vmatpush2.msra.mxu0 0.0
    %6622 = vmatprep.subr.mxu0 0.0
    %6623 = vmatpush2.msra.mxu0 0.0
    %6624 = vmatprep.subr.mxu0 0.0
    %6625 = vmatpush2.msra.mxu0 0.0
    %6626 = vmatprep.subr.mxu0 0.0
    %6627 = vmatpush2.msra.mxu0 0.0
    %6628 = vmatprep.subr.mxu0 0.0
    %6629 = vmatpush2.msra.mxu0 0.0
    %6630 = vmatprep.subr.mxu0 0.0
    %6631 = vmatpush2.msra.mxu0 0.0
    %6632 = vmatprep.mubr.f32.mxu0 0.0
    %6633 = vmatmul.mubr.f32.gmra.mxu0 %v6566
    %v6634 = vpop.f32.mrf.mxu0
    %v6635 = vadd.f32 %v3509, %v6634
    %v6636 = vpop.f32.mrf.mxu0
    %6637 = vdwg.mxu0
    %6638 = vmatprep.subr.mxu0 0.0
    %6639 = vmatpush1.msra.mxu0 0.0
    %6640 = vmatprep.subr.mxu0 0.0
    %6641 = vmatpush1.msra.mxu0 0.0
    %6642 = vmatprep.subr.mxu0 0.0
    %6643 = vmatpush1.msra.mxu0 0.0
    %6644 = vmatprep.subr.mxu0 0.0
    %6645 = vmatpush1.msra.mxu0 0.0
    %6646 = vmatprep.subr.mxu0 0.0
    %6647 = vmatpush1.msra.mxu0 0.0
    %6648 = vmatprep.subr.mxu0 0.0
    %6649 = vmatpush1.msra.mxu0 0.0
    %6650 = vmatprep.subr.mxu0 0.0
    %6651 = vmatpush1.msra.mxu0 0.0
    %6652 = vmatprep.subr.mxu0 0.0
    %6653 = vmatpush1.msra.mxu0 0.0
    %6654 = vmatprep.subr.mxu0 0.0
    %6655 = vmatpush1.msra.mxu0 0.0
    %6656 = vmatprep.subr.mxu0 0.0
    %6657 = vmatpush1.msra.mxu0 0.0
    %6658 = vmatprep.subr.mxu0 0.0
    %6659 = vmatpush1.msra.mxu0 0.0
    %6660 = vmatprep.subr.mxu0 0.0
    %6661 = vmatpush1.msra.mxu0 0.0
    %6662 = vmatprep.subr.mxu0 0.0
    %6663 = vmatpush1.msra.mxu0 %v3497
    %6664 = vmatprep.subr.mxu0 0.0
    %6665 = vmatpush1.msra.mxu0 %v3496
    %6666 = vmatprep.subr.mxu0 0.0
    %6667 = vmatpush1.msra.mxu0 %v3495
    %6668 = vmatprep.subr.mxu0 0.0
    %6669 = vmatpush1.msra.mxu0 %v3494
    %6670 = vmatprep.subr.mxu0 0.0
    %6671 = vmatpush2.msra.mxu0 0.0
    %6672 = vmatprep.subr.mxu0 0.0
    %6673 = vmatpush2.msra.mxu0 0.0
    %6674 = vmatprep.subr.mxu0 0.0
    %6675 = vmatpush2.msra.mxu0 0.0
    %6676 = vmatprep.subr.mxu0 0.0
    %6677 = vmatpush2.msra.mxu0 0.0
    %6678 = vmatprep.subr.mxu0 0.0
    %6679 = vmatpush2.msra.mxu0 0.0
    %6680 = vmatprep.subr.mxu0 0.0
    %6681 = vmatpush2.msra.mxu0 0.0
    %6682 = vmatprep.subr.mxu0 0.0
    %6683 = vmatpush2.msra.mxu0 0.0
    %6684 = vmatprep.subr.mxu0 0.0
    %6685 = vmatpush2.msra.mxu0 0.0
    %6686 = vmatprep.subr.mxu0 0.0
    %6687 = vmatpush2.msra.mxu0 0.0
    %6688 = vmatprep.subr.mxu0 0.0
    %6689 = vmatpush2.msra.mxu0 0.0
    %6690 = vmatprep.subr.mxu0 0.0
    %6691 = vmatpush2.msra.mxu0 0.0
    %6692 = vmatprep.subr.mxu0 0.0
    %6693 = vmatpush2.msra.mxu0 0.0
    %6694 = vmatprep.subr.mxu0 0.0
    %6695 = vmatpush2.msra.mxu0 0.0
    %6696 = vmatprep.subr.mxu0 0.0
    %6697 = vmatpush2.msra.mxu0 0.0
    %6698 = vmatprep.subr.mxu0 0.0
    %6699 = vmatpush2.msra.mxu0 0.0
    %6700 = vmatprep.subr.mxu0 0.0
    %6701 = vmatpush2.msra.mxu0 0.0
    %6702 = vmatprep.mubr.f32.mxu0 0.0
    %6703 = vmatmul.mubr.f32.gmra.mxu0 %v6566
    %v6704 = vpop.f32.mrf.mxu0
    %v6705 = vadd.f32 %v3588, %v6704
    %v6706 = vpop.f32.mrf.mxu0
    %6707 = vdwg.mxu0
    %6708 = vmatprep.subr.mxu0 0.0
    %6709 = vmatpush1.msra.mxu0 0.0
    %6710 = vmatprep.subr.mxu0 0.0
    %6711 = vmatpush1.msra.mxu0 0.0
    %6712 = vmatprep.subr.mxu0 0.0
    %6713 = vmatpush1.msra.mxu0 0.0
    %6714 = vmatprep.subr.mxu0 0.0
    %6715 = vmatpush1.msra.mxu0 0.0
    %6716 = vmatprep.subr.mxu0 0.0
    %6717 = vmatpush1.msra.mxu0 0.0
    %6718 = vmatprep.subr.mxu0 0.0
    %6719 = vmatpush1.msra.mxu0 0.0
    %6720 = vmatprep.subr.mxu0 0.0
    %6721 = vmatpush1.msra.mxu0 0.0
    %6722 = vmatprep.subr.mxu0 0.0
    %6723 = vmatpush1.msra.mxu0 0.0
    %6724 = vmatprep.subr.mxu0 0.0
    %6725 = vmatpush1.msra.mxu0 0.0
    %6726 = vmatprep.subr.mxu0 0.0
    %6727 = vmatpush1.msra.mxu0 0.0
    %6728 = vmatprep.subr.mxu0 0.0
    %6729 = vmatpush1.msra.mxu0 0.0
    %6730 = vmatprep.subr.mxu0 0.0
    %6731 = vmatpush1.msra.mxu0 0.0
    %6732 = vmatprep.subr.mxu0 0.0
    %6733 = vmatpush1.msra.mxu0 %v3501
    %6734 = vmatprep.subr.mxu0 0.0
    %6735 = vmatpush1.msra.mxu0 %v3500
    %6736 = vmatprep.subr.mxu0 0.0
    %6737 = vmatpush1.msra.mxu0 %v3499
    %6738 = vmatprep.subr.mxu0 0.0
    %6739 = vmatpush1.msra.mxu0 %v3498
    %6740 = vmatprep.subr.mxu0 0.0
    %6741 = vmatpush2.msra.mxu0 0.0
    %6742 = vmatprep.subr.mxu0 0.0
    %6743 = vmatpush2.msra.mxu0 0.0
    %6744 = vmatprep.subr.mxu0 0.0
    %6745 = vmatpush2.msra.mxu0 0.0
    %6746 = vmatprep.subr.mxu0 0.0
    %6747 = vmatpush2.msra.mxu0 0.0
    %6748 = vmatprep.subr.mxu0 0.0
    %6749 = vmatpush2.msra.mxu0 0.0
    %6750 = vmatprep.subr.mxu0 0.0
    %6751 = vmatpush2.msra.mxu0 0.0
    %6752 = vmatprep.subr.mxu0 0.0
    %6753 = vmatpush2.msra.mxu0 0.0
    %6754 = vmatprep.subr.mxu0 0.0
    %6755 = vmatpush2.msra.mxu0 0.0
    %6756 = vmatprep.subr.mxu0 0.0
    %6757 = vmatpush2.msra.mxu0 0.0
    %6758 = vmatprep.subr.mxu0 0.0
    %6759 = vmatpush2.msra.mxu0 0.0
    %6760 = vmatprep.subr.mxu0 0.0
    %6761 = vmatpush2.msra.mxu0 0.0
    %6762 = vmatprep.subr.mxu0 0.0
    %6763 = vmatpush2.msra.mxu0 0.0
    %6764 = vmatprep.subr.mxu0 0.0
    %6765 = vmatpush2.msra.mxu0 0.0
    %6766 = vmatprep.subr.mxu0 0.0
    %6767 = vmatpush2.msra.mxu0 0.0
    %6768 = vmatprep.subr.mxu0 0.0
    %6769 = vmatpush2.msra.mxu0 0.0
    %6770 = vmatprep.subr.mxu0 0.0
    %6771 = vmatpush2.msra.mxu0 0.0
    %6772 = vmatprep.mubr.f32.mxu0 0.0
    %6773 = vmatmul.mubr.f32.gmra.mxu0 %v6566
    %v6774 = vpop.f32.mrf.mxu0
    %v6775 = vadd.f32 %v3664, %v6774
    %v6776 = vpop.f32.mrf.mxu0
    %6777 = vdwg.mxu0
    %v6778 = vadd.f32 %v3082, %v6635
    %v6779 = vxor.u32 %v6778, 2147483648
    %v6780 = vmul.f32 %v6779, 1.442695
    %v6781 = vpow.pop %v6780
    %v6782 = vadd.f32 %v6781, 1.0
    %v6783 = vrcp.pop %v6782
    %v6784 = vmul.f32 1.0, %v6783
    %v6785 = vadd.f32 %v3267, %v6705
    %v6786 = vxor.u32 %v6785, 2147483648
    %v6787 = vmul.f32 %v6786, 1.442695
    %v6788 = vpow.pop %v6787
    %v6789 = vadd.f32 %v6788, 1.0
    %v6790 = vrcp.pop %v6789
    %v6791 = vmul.f32 1.0, %v6790
    %v6792 = vmul.f32 %v6784, %v6775
    %v6793 = vadd.f32 %v3452, %v6792
    %v6794 = vtanh.pop %v6793
    %v6795 = vsub.f32 1.0, %v6791
    %v6796 = vmul.f32 %v6795, %v6794
    %v6797 = vmul.f32 %v6791, %v6564
    %v6798 = vadd.f32 %v6796, %v6797
    %v6800 = vsel %vm187, %v6798, 0
    %6802 = vmatprep.subr.mxu0 0.0
    %6803 = vmatpush1.msra.mxu0 0.0
    %6804 = vmatprep.subr.mxu0 0.0
    %6805 = vmatpush1.msra.mxu0 0.0
    %6806 = vmatprep.subr.mxu0 0.0
    %6807 = vmatpush1.msra.mxu0 0.0
    %6808 = vmatprep.subr.mxu0 0.0
    %6809 = vmatpush1.msra.mxu0 0.0
    %6810 = vmatprep.subr.mxu0 0.0
    %6811 = vmatpush1.msra.mxu0 0.0
    %6812 = vmatprep.subr.mxu0 0.0
    %6813 = vmatpush1.msra.mxu0 0.0
    %6814 = vmatprep.subr.mxu0 0.0
    %6815 = vmatpush1.msra.mxu0 0.0
    %6816 = vmatprep.subr.mxu0 0.0
    %6817 = vmatpush1.msra.mxu0 0.0
    %6818 = vmatprep.subr.mxu0 0.0
    %6819 = vmatpush1.msra.mxu0 0.0
    %6820 = vmatprep.subr.mxu0 0.0
    %6821 = vmatpush1.msra.mxu0 0.0
    %6822 = vmatprep.subr.mxu0 0.0
    %6823 = vmatpush1.msra.mxu0 0.0
    %6824 = vmatprep.subr.mxu0 0.0
    %6825 = vmatpush1.msra.mxu0 0.0
    %6826 = vmatprep.subr.mxu0 0.0
    %6827 = vmatpush1.msra.mxu0 %v3493
    %6828 = vmatprep.subr.mxu0 0.0
    %6829 = vmatpush1.msra.mxu0 %v3492
    %6830 = vmatprep.subr.mxu0 0.0
    %6831 = vmatpush1.msra.mxu0 %v3491
    %6832 = vmatprep.subr.mxu0 0.0
    %6833 = vmatpush1.msra.mxu0 %v3490
    %6834 = vmatprep.subr.mxu0 0.0
    %6835 = vmatpush2.msra.mxu0 0.0
    %6836 = vmatprep.subr.mxu0 0.0
    %6837 = vmatpush2.msra.mxu0 0.0
    %6838 = vmatprep.subr.mxu0 0.0
    %6839 = vmatpush2.msra.mxu0 0.0
    %6840 = vmatprep.subr.mxu0 0.0
    %6841 = vmatpush2.msra.mxu0 0.0
    %6842 = vmatprep.subr.mxu0 0.0
    %6843 = vmatpush2.msra.mxu0 0.0
    %6844 = vmatprep.subr.mxu0 0.0
    %6845 = vmatpush2.msra.mxu0 0.0
    %6846 = vmatprep.subr.mxu0 0.0
    %6847 = vmatpush2.msra.mxu0 0.0
    %6848 = vmatprep.subr.mxu0 0.0
    %6849 = vmatpush2.msra.mxu0 0.0
    %6850 = vmatprep.subr.mxu0 0.0
    %6851 = vmatpush2.msra.mxu0 0.0
    %6852 = vmatprep.subr.mxu0 0.0
    %6853 = vmatpush2.msra.mxu0 0.0
    %6854 = vmatprep.subr.mxu0 0.0
    %6855 = vmatpush2.msra.mxu0 0.0
    %6856 = vmatprep.subr.mxu0 0.0
    %6857 = vmatpush2.msra.mxu0 0.0
    %6858 = vmatprep.subr.mxu0 0.0
    %6859 = vmatpush2.msra.mxu0 0.0
    %6860 = vmatprep.subr.mxu0 0.0
    %6861 = vmatpush2.msra.mxu0 0.0
    %6862 = vmatprep.subr.mxu0 0.0
    %6863 = vmatpush2.msra.mxu0 0.0
    %6864 = vmatprep.subr.mxu0 0.0
    %6865 = vmatpush2.msra.mxu0 0.0
    %6866 = vmatprep.mubr.f32.mxu0 0.0
    %6867 = vmatmul.mubr.f32.gmra.mxu0 %v6800
    %v6868 = vpop.f32.mrf.mxu0
    %v6869 = vadd.f32 %v3509, %v6868
    %v6870 = vpop.f32.mrf.mxu0
    %6871 = vdwg.mxu0
    %6872 = vmatprep.subr.mxu0 0.0
    %6873 = vmatpush1.msra.mxu0 0.0
    %6874 = vmatprep.subr.mxu0 0.0
    %6875 = vmatpush1.msra.mxu0 0.0
    %6876 = vmatprep.subr.mxu0 0.0
    %6877 = vmatpush1.msra.mxu0 0.0
    %6878 = vmatprep.subr.mxu0 0.0
    %6879 = vmatpush1.msra.mxu0 0.0
    %6880 = vmatprep.subr.mxu0 0.0
    %6881 = vmatpush1.msra.mxu0 0.0
    %6882 = vmatprep.subr.mxu0 0.0
    %6883 = vmatpush1.msra.mxu0 0.0
    %6884 = vmatprep.subr.mxu0 0.0
    %6885 = vmatpush1.msra.mxu0 0.0
    %6886 = vmatprep.subr.mxu0 0.0
    %6887 = vmatpush1.msra.mxu0 0.0
    %6888 = vmatprep.subr.mxu0 0.0
    %6889 = vmatpush1.msra.mxu0 0.0
    %6890 = vmatprep.subr.mxu0 0.0
    %6891 = vmatpush1.msra.mxu0 0.0
    %6892 = vmatprep.subr.mxu0 0.0
    %6893 = vmatpush1.msra.mxu0 0.0
    %6894 = vmatprep.subr.mxu0 0.0
    %6895 = vmatpush1.msra.mxu0 0.0
    %6896 = vmatprep.subr.mxu0 0.0
    %6897 = vmatpush1.msra.mxu0 %v3497
    %6898 = vmatprep.subr.mxu0 0.0
    %6899 = vmatpush1.msra.mxu0 %v3496
    %6900 = vmatprep.subr.mxu0 0.0
    %6901 = vmatpush1.msra.mxu0 %v3495
    %6902 = vmatprep.subr.mxu0 0.0
    %6903 = vmatpush1.msra.mxu0 %v3494
    %6904 = vmatprep.subr.mxu0 0.0
    %6905 = vmatpush2.msra.mxu0 0.0
    %6906 = vmatprep.subr.mxu0 0.0
    %6907 = vmatpush2.msra.mxu0 0.0
    %6908 = vmatprep.subr.mxu0 0.0
    %6909 = vmatpush2.msra.mxu0 0.0
    %6910 = vmatprep.subr.mxu0 0.0
    %6911 = vmatpush2.msra.mxu0 0.0
    %6912 = vmatprep.subr.mxu0 0.0
    %6913 = vmatpush2.msra.mxu0 0.0
    %6914 = vmatprep.subr.mxu0 0.0
    %6915 = vmatpush2.msra.mxu0 0.0
    %6916 = vmatprep.subr.mxu0 0.0
    %6917 = vmatpush2.msra.mxu0 0.0
    %6918 = vmatprep.subr.mxu0 0.0
    %6919 = vmatpush2.msra.mxu0 0.0
    %6920 = vmatprep.subr.mxu0 0.0
    %6921 = vmatpush2.msra.mxu0 0.0
    %6922 = vmatprep.subr.mxu0 0.0
    %6923 = vmatpush2.msra.mxu0 0.0
    %6924 = vmatprep.subr.mxu0 0.0
    %6925 = vmatpush2.msra.mxu0 0.0
    %6926 = vmatprep.subr.mxu0 0.0
    %6927 = vmatpush2.msra.mxu0 0.0
    %6928 = vmatprep.subr.mxu0 0.0
    %6929 = vmatpush2.msra.mxu0 0.0
    %6930 = vmatprep.subr.mxu0 0.0
    %6931 = vmatpush2.msra.mxu0 0.0
    %6932 = vmatprep.subr.mxu0 0.0
    %6933 = vmatpush2.msra.mxu0 0.0
    %6934 = vmatprep.subr.mxu0 0.0
    %6935 = vmatpush2.msra.mxu0 0.0
    %6936 = vmatprep.mubr.f32.mxu0 0.0
    %6937 = vmatmul.mubr.f32.gmra.mxu0 %v6800
    %v6938 = vpop.f32.mrf.mxu0
    %v6939 = vadd.f32 %v3588, %v6938
    %v6940 = vpop.f32.mrf.mxu0
    %6941 = vdwg.mxu0
    %6942 = vmatprep.subr.mxu0 0.0
    %6943 = vmatpush1.msra.mxu0 0.0
    %6944 = vmatprep.subr.mxu0 0.0
    %6945 = vmatpush1.msra.mxu0 0.0
    %6946 = vmatprep.subr.mxu0 0.0
    %6947 = vmatpush1.msra.mxu0 0.0
    %6948 = vmatprep.subr.mxu0 0.0
    %6949 = vmatpush1.msra.mxu0 0.0
    %6950 = vmatprep.subr.mxu0 0.0
    %6951 = vmatpush1.msra.mxu0 0.0
    %6952 = vmatprep.subr.mxu0 0.0
    %6953 = vmatpush1.msra.mxu0 0.0
    %6954 = vmatprep.subr.mxu0 0.0
    %6955 = vmatpush1.msra.mxu0 0.0
    %6956 = vmatprep.subr.mxu0 0.0
    %6957 = vmatpush1.msra.mxu0 0.0
    %6958 = vmatprep.subr.mxu0 0.0
    %6959 = vmatpush1.msra.mxu0 0.0
    %6960 = vmatprep.subr.mxu0 0.0
    %6961 = vmatpush1.msra.mxu0 0.0
    %6962 = vmatprep.subr.mxu0 0.0
    %6963 = vmatpush1.msra.mxu0 0.0
    %6964 = vmatprep.subr.mxu0 0.0
    %6965 = vmatpush1.msra.mxu0 0.0
    %6966 = vmatprep.subr.mxu0 0.0
    %6967 = vmatpush1.msra.mxu0 %v3501
    %6968 = vmatprep.subr.mxu0 0.0
    %6969 = vmatpush1.msra.mxu0 %v3500
    %6970 = vmatprep.subr.mxu0 0.0
    %6971 = vmatpush1.msra.mxu0 %v3499
    %6972 = vmatprep.subr.mxu0 0.0
    %6973 = vmatpush1.msra.mxu0 %v3498
    %6974 = vmatprep.subr.mxu0 0.0
    %6975 = vmatpush2.msra.mxu0 0.0
    %6976 = vmatprep.subr.mxu0 0.0
    %6977 = vmatpush2.msra.mxu0 0.0
    %6978 = vmatprep.subr.mxu0 0.0
    %6979 = vmatpush2.msra.mxu0 0.0
    %6980 = vmatprep.subr.mxu0 0.0
    %6981 = vmatpush2.msra.mxu0 0.0
    %6982 = vmatprep.subr.mxu0 0.0
    %6983 = vmatpush2.msra.mxu0 0.0
    %6984 = vmatprep.subr.mxu0 0.0
    %6985 = vmatpush2.msra.mxu0 0.0
    %6986 = vmatprep.subr.mxu0 0.0
    %6987 = vmatpush2.msra.mxu0 0.0
    %6988 = vmatprep.subr.mxu0 0.0
    %6989 = vmatpush2.msra.mxu0 0.0
    %6990 = vmatprep.subr.mxu0 0.0
    %6991 = vmatpush2.msra.mxu0 0.0
    %6992 = vmatprep.subr.mxu0 0.0
    %6993 = vmatpush2.msra.mxu0 0.0
    %6994 = vmatprep.subr.mxu0 0.0
    %6995 = vmatpush2.msra.mxu0 0.0
    %6996 = vmatprep.subr.mxu0 0.0
    %6997 = vmatpush2.msra.mxu0 0.0
    %6998 = vmatprep.subr.mxu0 0.0
    %6999 = vmatpush2.msra.mxu0 0.0
    %7000 = vmatprep.subr.mxu0 0.0
    %7001 = vmatpush2.msra.mxu0 0.0
    %7002 = vmatprep.subr.mxu0 0.0
    %7003 = vmatpush2.msra.mxu0 0.0
    %7004 = vmatprep.subr.mxu0 0.0
    %7005 = vmatpush2.msra.mxu0 0.0
    %7006 = vmatprep.mubr.f32.mxu0 0.0
    %7007 = vmatmul.mubr.f32.gmra.mxu0 %v6800
    %v7008 = vpop.f32.mrf.mxu0
    %v7009 = vadd.f32 %v3664, %v7008
    %v7010 = vpop.f32.mrf.mxu0
    %7011 = vdwg.mxu0
    %v7012 = vadd.f32 %v3087, %v6869
    %v7013 = vxor.u32 %v7012, 2147483648
    %v7014 = vmul.f32 %v7013, 1.442695
    %v7015 = vpow.pop %v7014
    %v7016 = vadd.f32 %v7015, 1.0
    %v7017 = vrcp.pop %v7016
    %v7018 = vmul.f32 1.0, %v7017
    %v7019 = vadd.f32 %v3272, %v6939
    %v7020 = vxor.u32 %v7019, 2147483648
    %v7021 = vmul.f32 %v7020, 1.442695
    %v7022 = vpow.pop %v7021
    %v7023 = vadd.f32 %v7022, 1.0
    %v7024 = vrcp.pop %v7023
    %v7025 = vmul.f32 1.0, %v7024
    %v7026 = vmul.f32 %v7018, %v7009
    %v7027 = vadd.f32 %v3457, %v7026
    %v7028 = vtanh.pop %v7027
    %v7029 = vsub.f32 1.0, %v7025
    %v7030 = vmul.f32 %v7029, %v7028
    %v7031 = vmul.f32 %v7025, %v6798
    %v7032 = vadd.f32 %v7030, %v7031
    %v7034 = vsel %vm187, %v7032, 0
    %7036 = vmatprep.subr.mxu0 0.0
    %7037 = vmatpush1.msra.mxu0 0.0
    %7038 = vmatprep.subr.mxu0 0.0
    %7039 = vmatpush1.msra.mxu0 0.0
    %7040 = vmatprep.subr.mxu0 0.0
    %7041 = vmatpush1.msra.mxu0 0.0
    %7042 = vmatprep.subr.mxu0 0.0
    %7043 = vmatpush1.msra.mxu0 0.0
    %7044 = vmatprep.subr.mxu0 0.0
    %7045 = vmatpush1.msra.mxu0 0.0
    %7046 = vmatprep.subr.mxu0 0.0
    %7047 = vmatpush1.msra.mxu0 0.0
    %7048 = vmatprep.subr.mxu0 0.0
    %7049 = vmatpush1.msra.mxu0 0.0
    %7050 = vmatprep.subr.mxu0 0.0
    %7051 = vmatpush1.msra.mxu0 0.0
    %7052 = vmatprep.subr.mxu0 0.0
    %7053 = vmatpush1.msra.mxu0 0.0
    %7054 = vmatprep.subr.mxu0 0.0
    %7055 = vmatpush1.msra.mxu0 0.0
    %7056 = vmatprep.subr.mxu0 0.0
    %7057 = vmatpush1.msra.mxu0 0.0
    %7058 = vmatprep.subr.mxu0 0.0
    %7059 = vmatpush1.msra.mxu0 0.0
    %7060 = vmatprep.subr.mxu0 0.0
    %7061 = vmatpush1.msra.mxu0 %v3493
    %7062 = vmatprep.subr.mxu0 0.0
    %7063 = vmatpush1.msra.mxu0 %v3492
    %7064 = vmatprep.subr.mxu0 0.0
    %7065 = vmatpush1.msra.mxu0 %v3491
    %7066 = vmatprep.subr.mxu0 0.0
    %7067 = vmatpush1.msra.mxu0 %v3490
    %7068 = vmatprep.subr.mxu0 0.0
    %7069 = vmatpush2.msra.mxu0 0.0
    %7070 = vmatprep.subr.mxu0 0.0
    %7071 = vmatpush2.msra.mxu0 0.0
    %7072 = vmatprep.subr.mxu0 0.0
    %7073 = vmatpush2.msra.mxu0 0.0
    %7074 = vmatprep.subr.mxu0 0.0
    %7075 = vmatpush2.msra.mxu0 0.0
    %7076 = vmatprep.subr.mxu0 0.0
    %7077 = vmatpush2.msra.mxu0 0.0
    %7078 = vmatprep.subr.mxu0 0.0
    %7079 = vmatpush2.msra.mxu0 0.0
    %7080 = vmatprep.subr.mxu0 0.0
    %7081 = vmatpush2.msra.mxu0 0.0
    %7082 = vmatprep.subr.mxu0 0.0
    %7083 = vmatpush2.msra.mxu0 0.0
    %7084 = vmatprep.subr.mxu0 0.0
    %7085 = vmatpush2.msra.mxu0 0.0
    %7086 = vmatprep.subr.mxu0 0.0
    %7087 = vmatpush2.msra.mxu0 0.0
    %7088 = vmatprep.subr.mxu0 0.0
    %7089 = vmatpush2.msra.mxu0 0.0
    %7090 = vmatprep.subr.mxu0 0.0
    %7091 = vmatpush2.msra.mxu0 0.0
    %7092 = vmatprep.subr.mxu0 0.0
    %7093 = vmatpush2.msra.mxu0 0.0
    %7094 = vmatprep.subr.mxu0 0.0
    %7095 = vmatpush2.msra.mxu0 0.0
    %7096 = vmatprep.subr.mxu0 0.0
    %7097 = vmatpush2.msra.mxu0 0.0
    %7098 = vmatprep.subr.mxu0 0.0
    %7099 = vmatpush2.msra.mxu0 0.0
    %7100 = vmatprep.mubr.f32.mxu0 0.0
    %7101 = vmatmul.mubr.f32.gmra.mxu0 %v7034
    %v7102 = vpop.f32.mrf.mxu0
    %v7103 = vadd.f32 %v3509, %v7102
    %v7104 = vpop.f32.mrf.mxu0
    %7105 = vdwg.mxu0
    %7106 = vmatprep.subr.mxu0 0.0
    %7107 = vmatpush1.msra.mxu0 0.0
    %7108 = vmatprep.subr.mxu0 0.0
    %7109 = vmatpush1.msra.mxu0 0.0
    %7110 = vmatprep.subr.mxu0 0.0
    %7111 = vmatpush1.msra.mxu0 0.0
    %7112 = vmatprep.subr.mxu0 0.0
    %7113 = vmatpush1.msra.mxu0 0.0
    %7114 = vmatprep.subr.mxu0 0.0
    %7115 = vmatpush1.msra.mxu0 0.0
    %7116 = vmatprep.subr.mxu0 0.0
    %7117 = vmatpush1.msra.mxu0 0.0
    %7118 = vmatprep.subr.mxu0 0.0
    %7119 = vmatpush1.msra.mxu0 0.0
    %7120 = vmatprep.subr.mxu0 0.0
    %7121 = vmatpush1.msra.mxu0 0.0
    %7122 = vmatprep.subr.mxu0 0.0
    %7123 = vmatpush1.msra.mxu0 0.0
    %7124 = vmatprep.subr.mxu0 0.0
    %7125 = vmatpush1.msra.mxu0 0.0
    %7126 = vmatprep.subr.mxu0 0.0
    %7127 = vmatpush1.msra.mxu0 0.0
    %7128 = vmatprep.subr.mxu0 0.0
    %7129 = vmatpush1.msra.mxu0 0.0
    %7130 = vmatprep.subr.mxu0 0.0
    %7131 = vmatpush1.msra.mxu0 %v3497
    %7132 = vmatprep.subr.mxu0 0.0
    %7133 = vmatpush1.msra.mxu0 %v3496
    %7134 = vmatprep.subr.mxu0 0.0
    %7135 = vmatpush1.msra.mxu0 %v3495
    %7136 = vmatprep.subr.mxu0 0.0
    %7137 = vmatpush1.msra.mxu0 %v3494
    %7138 = vmatprep.subr.mxu0 0.0
    %7139 = vmatpush2.msra.mxu0 0.0
    %7140 = vmatprep.subr.mxu0 0.0
    %7141 = vmatpush2.msra.mxu0 0.0
    %7142 = vmatprep.subr.mxu0 0.0
    %7143 = vmatpush2.msra.mxu0 0.0
    %7144 = vmatprep.subr.mxu0 0.0
    %7145 = vmatpush2.msra.mxu0 0.0
    %7146 = vmatprep.subr.mxu0 0.0
    %7147 = vmatpush2.msra.mxu0 0.0
    %7148 = vmatprep.subr.mxu0 0.0
    %7149 = vmatpush2.msra.mxu0 0.0
    %7150 = vmatprep.subr.mxu0 0.0
    %7151 = vmatpush2.msra.mxu0 0.0
    %7152 = vmatprep.subr.mxu0 0.0
    %7153 = vmatpush2.msra.mxu0 0.0
    %7154 = vmatprep.subr.mxu0 0.0
    %7155 = vmatpush2.msra.mxu0 0.0
    %7156 = vmatprep.subr.mxu0 0.0
    %7157 = vmatpush2.msra.mxu0 0.0
    %7158 = vmatprep.subr.mxu0 0.0
    %7159 = vmatpush2.msra.mxu0 0.0
    %7160 = vmatprep.subr.mxu0 0.0
    %7161 = vmatpush2.msra.mxu0 0.0
    %7162 = vmatprep.subr.mxu0 0.0
    %7163 = vmatpush2.msra.mxu0 0.0
    %7164 = vmatprep.subr.mxu0 0.0
    %7165 = vmatpush2.msra.mxu0 0.0
    %7166 = vmatprep.subr.mxu0 0.0
    %7167 = vmatpush2.msra.mxu0 0.0
    %7168 = vmatprep.subr.mxu0 0.0
    %7169 = vmatpush2.msra.mxu0 0.0
    %7170 = vmatprep.mubr.f32.mxu0 0.0
    %7171 = vmatmul.mubr.f32.gmra.mxu0 %v7034
    %v7172 = vpop.f32.mrf.mxu0
    %v7173 = vadd.f32 %v3588, %v7172
    %v7174 = vpop.f32.mrf.mxu0
    %7175 = vdwg.mxu0
    %7176 = vmatprep.subr.mxu0 0.0
    %7177 = vmatpush1.msra.mxu0 0.0
    %7178 = vmatprep.subr.mxu0 0.0
    %7179 = vmatpush1.msra.mxu0 0.0
    %7180 = vmatprep.subr.mxu0 0.0
    %7181 = vmatpush1.msra.mxu0 0.0
    %7182 = vmatprep.subr.mxu0 0.0
    %7183 = vmatpush1.msra.mxu0 0.0
    %7184 = vmatprep.subr.mxu0 0.0
    %7185 = vmatpush1.msra.mxu0 0.0
    %7186 = vmatprep.subr.mxu0 0.0
    %7187 = vmatpush1.msra.mxu0 0.0
    %7188 = vmatprep.subr.mxu0 0.0
    %7189 = vmatpush1.msra.mxu0 0.0
    %7190 = vmatprep.subr.mxu0 0.0
    %7191 = vmatpush1.msra.mxu0 0.0
    %7192 = vmatprep.subr.mxu0 0.0
    %7193 = vmatpush1.msra.mxu0 0.0
    %7194 = vmatprep.subr.mxu0 0.0
    %7195 = vmatpush1.msra.mxu0 0.0
    %7196 = vmatprep.subr.mxu0 0.0
    %7197 = vmatpush1.msra.mxu0 0.0
    %7198 = vmatprep.subr.mxu0 0.0
    %7199 = vmatpush1.msra.mxu0 0.0
    %7200 = vmatprep.subr.mxu0 0.0
    %7201 = vmatpush1.msra.mxu0 %v3501
    %7202 = vmatprep.subr.mxu0 0.0
    %7203 = vmatpush1.msra.mxu0 %v3500
    %7204 = vmatprep.subr.mxu0 0.0
    %7205 = vmatpush1.msra.mxu0 %v3499
    %7206 = vmatprep.subr.mxu0 0.0
    %7207 = vmatpush1.msra.mxu0 %v3498
    %7208 = vmatprep.subr.mxu0 0.0
    %7209 = vmatpush2.msra.mxu0 0.0
    %7210 = vmatprep.subr.mxu0 0.0
    %7211 = vmatpush2.msra.mxu0 0.0
    %7212 = vmatprep.subr.mxu0 0.0
    %7213 = vmatpush2.msra.mxu0 0.0
    %7214 = vmatprep.subr.mxu0 0.0
    %7215 = vmatpush2.msra.mxu0 0.0
    %7216 = vmatprep.subr.mxu0 0.0
    %7217 = vmatpush2.msra.mxu0 0.0
    %7218 = vmatprep.subr.mxu0 0.0
    %7219 = vmatpush2.msra.mxu0 0.0
    %7220 = vmatprep.subr.mxu0 0.0
    %7221 = vmatpush2.msra.mxu0 0.0
    %7222 = vmatprep.subr.mxu0 0.0
    %7223 = vmatpush2.msra.mxu0 0.0
    %7224 = vmatprep.subr.mxu0 0.0
    %7225 = vmatpush2.msra.mxu0 0.0
    %7226 = vmatprep.subr.mxu0 0.0
    %7227 = vmatpush2.msra.mxu0 0.0
    %7228 = vmatprep.subr.mxu0 0.0
    %7229 = vmatpush2.msra.mxu0 0.0
    %7230 = vmatprep.subr.mxu0 0.0
    %7231 = vmatpush2.msra.mxu0 0.0
    %7232 = vmatprep.subr.mxu0 0.0
    %7233 = vmatpush2.msra.mxu0 0.0
    %7234 = vmatprep.subr.mxu0 0.0
    %7235 = vmatpush2.msra.mxu0 0.0
    %7236 = vmatprep.subr.mxu0 0.0
    %7237 = vmatpush2.msra.mxu0 0.0
    %7238 = vmatprep.subr.mxu0 0.0
    %7239 = vmatpush2.msra.mxu0 0.0
    %7240 = vmatprep.mubr.f32.mxu0 0.0
    %7241 = vmatmul.mubr.f32.gmra.mxu0 %v7034
    %v7242 = vpop.f32.mrf.mxu0
    %v7243 = vadd.f32 %v3664, %v7242
    %v7244 = vpop.f32.mrf.mxu0
    %7245 = vdwg.mxu0
    %v7246 = vadd.f32 %v3092, %v7103
    %v7247 = vxor.u32 %v7246, 2147483648
    %v7248 = vmul.f32 %v7247, 1.442695
    %v7249 = vpow.pop %v7248
    %v7250 = vadd.f32 %v7249, 1.0
    %v7251 = vrcp.pop %v7250
    %v7252 = vmul.f32 1.0, %v7251
    %v7253 = vadd.f32 %v3277, %v7173
    %v7254 = vxor.u32 %v7253, 2147483648
    %v7255 = vmul.f32 %v7254, 1.442695
    %v7256 = vpow.pop %v7255
    %v7257 = vadd.f32 %v7256, 1.0
    %v7258 = vrcp.pop %v7257
    %v7259 = vmul.f32 1.0, %v7258
    %v7260 = vmul.f32 %v7252, %v7243
    %v7261 = vadd.f32 %v3462, %v7260
    %v7262 = vtanh.pop %v7261
    %v7263 = vsub.f32 1.0, %v7259
    %v7264 = vmul.f32 %v7263, %v7262
    %v7265 = vmul.f32 %v7259, %v7032
    %v7266 = vadd.f32 %v7264, %v7265
    %v7268 = vsel %vm187, %v7266, 0
    %7270 = vmatprep.subr.mxu0 0.0
    %7271 = vmatpush1.msra.mxu0 0.0
    %7272 = vmatprep.subr.mxu0 0.0
    %7273 = vmatpush1.msra.mxu0 0.0
    %7274 = vmatprep.subr.mxu0 0.0
    %7275 = vmatpush1.msra.mxu0 0.0
    %7276 = vmatprep.subr.mxu0 0.0
    %7277 = vmatpush1.msra.mxu0 0.0
    %7278 = vmatprep.subr.mxu0 0.0
    %7279 = vmatpush1.msra.mxu0 0.0
    %7280 = vmatprep.subr.mxu0 0.0
    %7281 = vmatpush1.msra.mxu0 0.0
    %7282 = vmatprep.subr.mxu0 0.0
    %7283 = vmatpush1.msra.mxu0 0.0
    %7284 = vmatprep.subr.mxu0 0.0
    %7285 = vmatpush1.msra.mxu0 0.0
    %7286 = vmatprep.subr.mxu0 0.0
    %7287 = vmatpush1.msra.mxu0 0.0
    %7288 = vmatprep.subr.mxu0 0.0
    %7289 = vmatpush1.msra.mxu0 0.0
    %7290 = vmatprep.subr.mxu0 0.0
    %7291 = vmatpush1.msra.mxu0 0.0
    %7292 = vmatprep.subr.mxu0 0.0
    %7293 = vmatpush1.msra.mxu0 0.0
    %7294 = vmatprep.subr.mxu0 0.0
    %7295 = vmatpush1.msra.mxu0 %v3493
    %7296 = vmatprep.subr.mxu0 0.0
    %7297 = vmatpush1.msra.mxu0 %v3492
    %7298 = vmatprep.subr.mxu0 0.0
    %7299 = vmatpush1.msra.mxu0 %v3491
    %7300 = vmatprep.subr.mxu0 0.0
    %7301 = vmatpush1.msra.mxu0 %v3490
    %7302 = vmatprep.subr.mxu0 0.0
    %7303 = vmatpush2.msra.mxu0 0.0
    %7304 = vmatprep.subr.mxu0 0.0
    %7305 = vmatpush2.msra.mxu0 0.0
    %7306 = vmatprep.subr.mxu0 0.0
    %7307 = vmatpush2.msra.mxu0 0.0
    %7308 = vmatprep.subr.mxu0 0.0
    %7309 = vmatpush2.msra.mxu0 0.0
    %7310 = vmatprep.subr.mxu0 0.0
    %7311 = vmatpush2.msra.mxu0 0.0
    %7312 = vmatprep.subr.mxu0 0.0
    %7313 = vmatpush2.msra.mxu0 0.0
    %7314 = vmatprep.subr.mxu0 0.0
    %7315 = vmatpush2.msra.mxu0 0.0
    %7316 = vmatprep.subr.mxu0 0.0
    %7317 = vmatpush2.msra.mxu0 0.0
    %7318 = vmatprep.subr.mxu0 0.0
    %7319 = vmatpush2.msra.mxu0 0.0
    %7320 = vmatprep.subr.mxu0 0.0
    %7321 = vmatpush2.msra.mxu0 0.0
    %7322 = vmatprep.subr.mxu0 0.0
    %7323 = vmatpush2.msra.mxu0 0.0
    %7324 = vmatprep.subr.mxu0 0.0
    %7325 = vmatpush2.msra.mxu0 0.0
    %7326 = vmatprep.subr.mxu0 0.0
    %7327 = vmatpush2.msra.mxu0 0.0
    %7328 = vmatprep.subr.mxu0 0.0
    %7329 = vmatpush2.msra.mxu0 0.0
    %7330 = vmatprep.subr.mxu0 0.0
    %7331 = vmatpush2.msra.mxu0 0.0
    %7332 = vmatprep.subr.mxu0 0.0
    %7333 = vmatpush2.msra.mxu0 0.0
    %7334 = vmatprep.mubr.f32.mxu0 0.0
    %7335 = vmatmul.mubr.f32.gmra.mxu0 %v7268
    %v7336 = vpop.f32.mrf.mxu0
    %v7337 = vadd.f32 %v3509, %v7336
    %v7338 = vpop.f32.mrf.mxu0
    %7339 = vdwg.mxu0
    %7340 = vmatprep.subr.mxu0 0.0
    %7341 = vmatpush1.msra.mxu0 0.0
    %7342 = vmatprep.subr.mxu0 0.0
    %7343 = vmatpush1.msra.mxu0 0.0
    %7344 = vmatprep.subr.mxu0 0.0
    %7345 = vmatpush1.msra.mxu0 0.0
    %7346 = vmatprep.subr.mxu0 0.0
    %7347 = vmatpush1.msra.mxu0 0.0
    %7348 = vmatprep.subr.mxu0 0.0
    %7349 = vmatpush1.msra.mxu0 0.0
    %7350 = vmatprep.subr.mxu0 0.0
    %7351 = vmatpush1.msra.mxu0 0.0
    %7352 = vmatprep.subr.mxu0 0.0
    %7353 = vmatpush1.msra.mxu0 0.0
    %7354 = vmatprep.subr.mxu0 0.0
    %7355 = vmatpush1.msra.mxu0 0.0
    %7356 = vmatprep.subr.mxu0 0.0
    %7357 = vmatpush1.msra.mxu0 0.0
    %7358 = vmatprep.subr.mxu0 0.0
    %7359 = vmatpush1.msra.mxu0 0.0
    %7360 = vmatprep.subr.mxu0 0.0
    %7361 = vmatpush1.msra.mxu0 0.0
    %7362 = vmatprep.subr.mxu0 0.0
    %7363 = vmatpush1.msra.mxu0 0.0
    %7364 = vmatprep.subr.mxu0 0.0
    %7365 = vmatpush1.msra.mxu0 %v3497
    %7366 = vmatprep.subr.mxu0 0.0
    %7367 = vmatpush1.msra.mxu0 %v3496
    %7368 = vmatprep.subr.mxu0 0.0
    %7369 = vmatpush1.msra.mxu0 %v3495
    %7370 = vmatprep.subr.mxu0 0.0
    %7371 = vmatpush1.msra.mxu0 %v3494
    %7372 = vmatprep.subr.mxu0 0.0
    %7373 = vmatpush2.msra.mxu0 0.0
    %7374 = vmatprep.subr.mxu0 0.0
    %7375 = vmatpush2.msra.mxu0 0.0
    %7376 = vmatprep.subr.mxu0 0.0
    %7377 = vmatpush2.msra.mxu0 0.0
    %7378 = vmatprep.subr.mxu0 0.0
    %7379 = vmatpush2.msra.mxu0 0.0
    %7380 = vmatprep.subr.mxu0 0.0
    %7381 = vmatpush2.msra.mxu0 0.0
    %7382 = vmatprep.subr.mxu0 0.0
    %7383 = vmatpush2.msra.mxu0 0.0
    %7384 = vmatprep.subr.mxu0 0.0
    %7385 = vmatpush2.msra.mxu0 0.0
    %7386 = vmatprep.subr.mxu0 0.0
    %7387 = vmatpush2.msra.mxu0 0.0
    %7388 = vmatprep.subr.mxu0 0.0
    %7389 = vmatpush2.msra.mxu0 0.0
    %7390 = vmatprep.subr.mxu0 0.0
    %7391 = vmatpush2.msra.mxu0 0.0
    %7392 = vmatprep.subr.mxu0 0.0
    %7393 = vmatpush2.msra.mxu0 0.0
    %7394 = vmatprep.subr.mxu0 0.0
    %7395 = vmatpush2.msra.mxu0 0.0
    %7396 = vmatprep.subr.mxu0 0.0
    %7397 = vmatpush2.msra.mxu0 0.0
    %7398 = vmatprep.subr.mxu0 0.0
    %7399 = vmatpush2.msra.mxu0 0.0
    %7400 = vmatprep.subr.mxu0 0.0
    %7401 = vmatpush2.msra.mxu0 0.0
    %7402 = vmatprep.subr.mxu0 0.0
    %7403 = vmatpush2.msra.mxu0 0.0
    %7404 = vmatprep.mubr.f32.mxu0 0.0
    %7405 = vmatmul.mubr.f32.gmra.mxu0 %v7268
    %v7406 = vpop.f32.mrf.mxu0
    %v7407 = vadd.f32 %v3588, %v7406
    %v7408 = vpop.f32.mrf.mxu0
    %7409 = vdwg.mxu0
    %7410 = vmatprep.subr.mxu0 0.0
    %7411 = vmatpush1.msra.mxu0 0.0
    %7412 = vmatprep.subr.mxu0 0.0
    %7413 = vmatpush1.msra.mxu0 0.0
    %7414 = vmatprep.subr.mxu0 0.0
    %7415 = vmatpush1.msra.mxu0 0.0
    %7416 = vmatprep.subr.mxu0 0.0
    %7417 = vmatpush1.msra.mxu0 0.0
    %7418 = vmatprep.subr.mxu0 0.0
    %7419 = vmatpush1.msra.mxu0 0.0
    %7420 = vmatprep.subr.mxu0 0.0
    %7421 = vmatpush1.msra.mxu0 0.0
    %7422 = vmatprep.subr.mxu0 0.0
    %7423 = vmatpush1.msra.mxu0 0.0
    %7424 = vmatprep.subr.mxu0 0.0
    %7425 = vmatpush1.msra.mxu0 0.0
    %7426 = vmatprep.subr.mxu0 0.0
    %7427 = vmatpush1.msra.mxu0 0.0
    %7428 = vmatprep.subr.mxu0 0.0
    %7429 = vmatpush1.msra.mxu0 0.0
    %7430 = vmatprep.subr.mxu0 0.0
    %7431 = vmatpush1.msra.mxu0 0.0
    %7432 = vmatprep.subr.mxu0 0.0
    %7433 = vmatpush1.msra.mxu0 0.0
    %7434 = vmatprep.subr.mxu0 0.0
    %7435 = vmatpush1.msra.mxu0 %v3501
    %7436 = vmatprep.subr.mxu0 0.0
    %7437 = vmatpush1.msra.mxu0 %v3500
    %7438 = vmatprep.subr.mxu0 0.0
    %7439 = vmatpush1.msra.mxu0 %v3499
    %7440 = vmatprep.subr.mxu0 0.0
    %7441 = vmatpush1.msra.mxu0 %v3498
    %7442 = vmatprep.subr.mxu0 0.0
    %7443 = vmatpush2.msra.mxu0 0.0
    %7444 = vmatprep.subr.mxu0 0.0
    %7445 = vmatpush2.msra.mxu0 0.0
    %7446 = vmatprep.subr.mxu0 0.0
    %7447 = vmatpush2.msra.mxu0 0.0
    %7448 = vmatprep.subr.mxu0 0.0
    %7449 = vmatpush2.msra.mxu0 0.0
    %7450 = vmatprep.subr.mxu0 0.0
    %7451 = vmatpush2.msra.mxu0 0.0
    %7452 = vmatprep.subr.mxu0 0.0
    %7453 = vmatpush2.msra.mxu0 0.0
    %7454 = vmatprep.subr.mxu0 0.0
    %7455 = vmatpush2.msra.mxu0 0.0
    %7456 = vmatprep.subr.mxu0 0.0
    %7457 = vmatpush2.msra.mxu0 0.0
    %7458 = vmatprep.subr.mxu0 0.0
    %7459 = vmatpush2.msra.mxu0 0.0
    %7460 = vmatprep.subr.mxu0 0.0
    %7461 = vmatpush2.msra.mxu0 0.0
    %7462 = vmatprep.subr.mxu0 0.0
    %7463 = vmatpush2.msra.mxu0 0.0
    %7464 = vmatprep.subr.mxu0 0.0
    %7465 = vmatpush2.msra.mxu0 0.0
    %7466 = vmatprep.subr.mxu0 0.0
    %7467 = vmatpush2.msra.mxu0 0.0
    %7468 = vmatprep.subr.mxu0 0.0
    %7469 = vmatpush2.msra.mxu0 0.0
    %7470 = vmatprep.subr.mxu0 0.0
    %7471 = vmatpush2.msra.mxu0 0.0
    %7472 = vmatprep.subr.mxu0 0.0
    %7473 = vmatpush2.msra.mxu0 0.0
    %7474 = vmatprep.mubr.f32.mxu0 0.0
    %7475 = vmatmul.mubr.f32.gmra.mxu0 %v7268
    %v7476 = vpop.f32.mrf.mxu0
    %v7477 = vadd.f32 %v3664, %v7476
    %v7478 = vpop.f32.mrf.mxu0
    %7479 = vdwg.mxu0
    %v7480 = vadd.f32 %v3097, %v7337
    %v7481 = vxor.u32 %v7480, 2147483648
    %v7482 = vmul.f32 %v7481, 1.442695
    %v7483 = vpow.pop %v7482
    %v7484 = vadd.f32 %v7483, 1.0
    %v7485 = vrcp.pop %v7484
    %v7486 = vmul.f32 1.0, %v7485
    %v7487 = vadd.f32 %v3282, %v7407
    %v7488 = vxor.u32 %v7487, 2147483648
    %v7489 = vmul.f32 %v7488, 1.442695
    %v7490 = vpow.pop %v7489
    %v7491 = vadd.f32 %v7490, 1.0
    %v7492 = vrcp.pop %v7491
    %v7493 = vmul.f32 1.0, %v7492
    %v7494 = vmul.f32 %v7486, %v7477
    %v7495 = vadd.f32 %v3467, %v7494
    %v7496 = vtanh.pop %v7495
    %v7497 = vsub.f32 1.0, %v7493
    %v7498 = vmul.f32 %v7497, %v7496
    %v7499 = vmul.f32 %v7493, %v7266
    %v7500 = vadd.f32 %v7498, %v7499
    %v7502 = vsel %vm187, %v7500, 0
    %7504 = vmatprep.subr.mxu0 0.0
    %7505 = vmatpush1.msra.mxu0 0.0
    %7506 = vmatprep.subr.mxu0 0.0
    %7507 = vmatpush1.msra.mxu0 0.0
    %7508 = vmatprep.subr.mxu0 0.0
    %7509 = vmatpush1.msra.mxu0 0.0
    %7510 = vmatprep.subr.mxu0 0.0
    %7511 = vmatpush1.msra.mxu0 0.0
    %7512 = vmatprep.subr.mxu0 0.0
    %7513 = vmatpush1.msra.mxu0 0.0
    %7514 = vmatprep.subr.mxu0 0.0
    %7515 = vmatpush1.msra.mxu0 0.0
    %7516 = vmatprep.subr.mxu0 0.0
    %7517 = vmatpush1.msra.mxu0 0.0
    %7518 = vmatprep.subr.mxu0 0.0
    %7519 = vmatpush1.msra.mxu0 0.0
    %7520 = vmatprep.subr.mxu0 0.0
    %7521 = vmatpush1.msra.mxu0 0.0
    %7522 = vmatprep.subr.mxu0 0.0
    %7523 = vmatpush1.msra.mxu0 0.0
    %7524 = vmatprep.subr.mxu0 0.0
    %7525 = vmatpush1.msra.mxu0 0.0
    %7526 = vmatprep.subr.mxu0 0.0
    %7527 = vmatpush1.msra.mxu0 0.0
    %7528 = vmatprep.subr.mxu0 0.0
    %7529 = vmatpush1.msra.mxu0 %v3493
    %7530 = vmatprep.subr.mxu0 0.0
    %7531 = vmatpush1.msra.mxu0 %v3492
    %7532 = vmatprep.subr.mxu0 0.0
    %7533 = vmatpush1.msra.mxu0 %v3491
    %7534 = vmatprep.subr.mxu0 0.0
    %7535 = vmatpush1.msra.mxu0 %v3490
    %7536 = vmatprep.subr.mxu0 0.0
    %7537 = vmatpush2.msra.mxu0 0.0
    %7538 = vmatprep.subr.mxu0 0.0
    %7539 = vmatpush2.msra.mxu0 0.0
    %7540 = vmatprep.subr.mxu0 0.0
    %7541 = vmatpush2.msra.mxu0 0.0
    %7542 = vmatprep.subr.mxu0 0.0
    %7543 = vmatpush2.msra.mxu0 0.0
    %7544 = vmatprep.subr.mxu0 0.0
    %7545 = vmatpush2.msra.mxu0 0.0
    %7546 = vmatprep.subr.mxu0 0.0
    %7547 = vmatpush2.msra.mxu0 0.0
    %7548 = vmatprep.subr.mxu0 0.0
    %7549 = vmatpush2.msra.mxu0 0.0
    %7550 = vmatprep.subr.mxu0 0.0
    %7551 = vmatpush2.msra.mxu0 0.0
    %7552 = vmatprep.subr.mxu0 0.0
    %7553 = vmatpush2.msra.mxu0 0.0
    %7554 = vmatprep.subr.mxu0 0.0
    %7555 = vmatpush2.msra.mxu0 0.0
    %7556 = vmatprep.subr.mxu0 0.0
    %7557 = vmatpush2.msra.mxu0 0.0
    %7558 = vmatprep.subr.mxu0 0.0
    %7559 = vmatpush2.msra.mxu0 0.0
    %7560 = vmatprep.subr.mxu0 0.0
    %7561 = vmatpush2.msra.mxu0 0.0
    %7562 = vmatprep.subr.mxu0 0.0
    %7563 = vmatpush2.msra.mxu0 0.0
    %7564 = vmatprep.subr.mxu0 0.0
    %7565 = vmatpush2.msra.mxu0 0.0
    %7566 = vmatprep.subr.mxu0 0.0
    %7567 = vmatpush2.msra.mxu0 0.0
    %7568 = vmatprep.mubr.f32.mxu0 0.0
    %7569 = vmatmul.mubr.f32.gmra.mxu0 %v7502
    %v7570 = vpop.f32.mrf.mxu0
    %v7571 = vadd.f32 %v3509, %v7570
    %v7572 = vpop.f32.mrf.mxu0
    %7573 = vdwg.mxu0
    %7574 = vmatprep.subr.mxu0 0.0
    %7575 = vmatpush1.msra.mxu0 0.0
    %7576 = vmatprep.subr.mxu0 0.0
    %7577 = vmatpush1.msra.mxu0 0.0
    %7578 = vmatprep.subr.mxu0 0.0
    %7579 = vmatpush1.msra.mxu0 0.0
    %7580 = vmatprep.subr.mxu0 0.0
    %7581 = vmatpush1.msra.mxu0 0.0
    %7582 = vmatprep.subr.mxu0 0.0
    %7583 = vmatpush1.msra.mxu0 0.0
    %7584 = vmatprep.subr.mxu0 0.0
    %7585 = vmatpush1.msra.mxu0 0.0
    %7586 = vmatprep.subr.mxu0 0.0
    %7587 = vmatpush1.msra.mxu0 0.0
    %7588 = vmatprep.subr.mxu0 0.0
    %7589 = vmatpush1.msra.mxu0 0.0
    %7590 = vmatprep.subr.mxu0 0.0
    %7591 = vmatpush1.msra.mxu0 0.0
    %7592 = vmatprep.subr.mxu0 0.0
    %7593 = vmatpush1.msra.mxu0 0.0
    %7594 = vmatprep.subr.mxu0 0.0
    %7595 = vmatpush1.msra.mxu0 0.0
    %7596 = vmatprep.subr.mxu0 0.0
    %7597 = vmatpush1.msra.mxu0 0.0
    %7598 = vmatprep.subr.mxu0 0.0
    %7599 = vmatpush1.msra.mxu0 %v3497
    %7600 = vmatprep.subr.mxu0 0.0
    %7601 = vmatpush1.msra.mxu0 %v3496
    %7602 = vmatprep.subr.mxu0 0.0
    %7603 = vmatpush1.msra.mxu0 %v3495
    %7604 = vmatprep.subr.mxu0 0.0
    %7605 = vmatpush1.msra.mxu0 %v3494
    %7606 = vmatprep.subr.mxu0 0.0
    %7607 = vmatpush2.msra.mxu0 0.0
    %7608 = vmatprep.subr.mxu0 0.0
    %7609 = vmatpush2.msra.mxu0 0.0
    %7610 = vmatprep.subr.mxu0 0.0
    %7611 = vmatpush2.msra.mxu0 0.0
    %7612 = vmatprep.subr.mxu0 0.0
    %7613 = vmatpush2.msra.mxu0 0.0
    %7614 = vmatprep.subr.mxu0 0.0
    %7615 = vmatpush2.msra.mxu0 0.0
    %7616 = vmatprep.subr.mxu0 0.0
    %7617 = vmatpush2.msra.mxu0 0.0
    %7618 = vmatprep.subr.mxu0 0.0
    %7619 = vmatpush2.msra.mxu0 0.0
    %7620 = vmatprep.subr.mxu0 0.0
    %7621 = vmatpush2.msra.mxu0 0.0
    %7622 = vmatprep.subr.mxu0 0.0
    %7623 = vmatpush2.msra.mxu0 0.0
    %7624 = vmatprep.subr.mxu0 0.0
    %7625 = vmatpush2.msra.mxu0 0.0
    %7626 = vmatprep.subr.mxu0 0.0
    %7627 = vmatpush2.msra.mxu0 0.0
    %7628 = vmatprep.subr.mxu0 0.0
    %7629 = vmatpush2.msra.mxu0 0.0
    %7630 = vmatprep.subr.mxu0 0.0
    %7631 = vmatpush2.msra.mxu0 0.0
    %7632 = vmatprep.subr.mxu0 0.0
    %7633 = vmatpush2.msra.mxu0 0.0
    %7634 = vmatprep.subr.mxu0 0.0
    %7635 = vmatpush2.msra.mxu0 0.0
    %7636 = vmatprep.subr.mxu0 0.0
    %7637 = vmatpush2.msra.mxu0 0.0
    %7638 = vmatprep.mubr.f32.mxu0 0.0
    %7639 = vmatmul.mubr.f32.gmra.mxu0 %v7502
    %v7640 = vpop.f32.mrf.mxu0
    %v7641 = vadd.f32 %v3588, %v7640
    %v7642 = vpop.f32.mrf.mxu0
    %7643 = vdwg.mxu0
    %7644 = vmatprep.subr.mxu0 0.0
    %7645 = vmatpush1.msra.mxu0 0.0
    %7646 = vmatprep.subr.mxu0 0.0
    %7647 = vmatpush1.msra.mxu0 0.0
    %7648 = vmatprep.subr.mxu0 0.0
    %7649 = vmatpush1.msra.mxu0 0.0
    %7650 = vmatprep.subr.mxu0 0.0
    %7651 = vmatpush1.msra.mxu0 0.0
    %7652 = vmatprep.subr.mxu0 0.0
    %7653 = vmatpush1.msra.mxu0 0.0
    %7654 = vmatprep.subr.mxu0 0.0
    %7655 = vmatpush1.msra.mxu0 0.0
    %7656 = vmatprep.subr.mxu0 0.0
    %7657 = vmatpush1.msra.mxu0 0.0
    %7658 = vmatprep.subr.mxu0 0.0
    %7659 = vmatpush1.msra.mxu0 0.0
    %7660 = vmatprep.subr.mxu0 0.0
    %7661 = vmatpush1.msra.mxu0 0.0
    %7662 = vmatprep.subr.mxu0 0.0
    %7663 = vmatpush1.msra.mxu0 0.0
    %7664 = vmatprep.subr.mxu0 0.0
    %7665 = vmatpush1.msra.mxu0 0.0
    %7666 = vmatprep.subr.mxu0 0.0
    %7667 = vmatpush1.msra.mxu0 0.0
    %7668 = vmatprep.subr.mxu0 0.0
    %7669 = vmatpush1.msra.mxu0 %v3501
    %7670 = vmatprep.subr.mxu0 0.0
    %7671 = vmatpush1.msra.mxu0 %v3500
    %7672 = vmatprep.subr.mxu0 0.0
    %7673 = vmatpush1.msra.mxu0 %v3499
    %7674 = vmatprep.subr.mxu0 0.0
    %7675 = vmatpush1.msra.mxu0 %v3498
    %7676 = vmatprep.subr.mxu0 0.0
    %7677 = vmatpush2.msra.mxu0 0.0
    %7678 = vmatprep.subr.mxu0 0.0
    %7679 = vmatpush2.msra.mxu0 0.0
    %7680 = vmatprep.subr.mxu0 0.0
    %7681 = vmatpush2.msra.mxu0 0.0
    %7682 = vmatprep.subr.mxu0 0.0
    %7683 = vmatpush2.msra.mxu0 0.0
    %7684 = vmatprep.subr.mxu0 0.0
    %7685 = vmatpush2.msra.mxu0 0.0
    %7686 = vmatprep.subr.mxu0 0.0
    %7687 = vmatpush2.msra.mxu0 0.0
    %7688 = vmatprep.subr.mxu0 0.0
    %7689 = vmatpush2.msra.mxu0 0.0
    %7690 = vmatprep.subr.mxu0 0.0
    %7691 = vmatpush2.msra.mxu0 0.0
    %7692 = vmatprep.subr.mxu0 0.0
    %7693 = vmatpush2.msra.mxu0 0.0
    %7694 = vmatprep.subr.mxu0 0.0
    %7695 = vmatpush2.msra.mxu0 0.0
    %7696 = vmatprep.subr.mxu0 0.0
    %7697 = vmatpush2.msra.mxu0 0.0
    %7698 = vmatprep.subr.mxu0 0.0
    %7699 = vmatpush2.msra.mxu0 0.0
    %7700 = vmatprep.subr.mxu0 0.0
    %7701 = vmatpush2.msra.mxu0 0.0
    %7702 = vmatprep.subr.mxu0 0.0
    %7703 = vmatpush2.msra.mxu0 0.0
    %7704 = vmatprep.subr.mxu0 0.0
    %7705 = vmatpush2.msra.mxu0 0.0
    %7706 = vmatprep.subr.mxu0 0.0
    %7707 = vmatpush2.msra.mxu0 0.0
    %7708 = vmatprep.mubr.f32.mxu0 0.0
    %7709 = vmatmul.mubr.f32.gmra.mxu0 %v7502
    %v7710 = vpop.f32.mrf.mxu0
    %v7711 = vadd.f32 %v3664, %v7710
    %v7712 = vpop.f32.mrf.mxu0
    %7713 = vdwg.mxu0
    %v7714 = vadd.f32 %v3102, %v7571
    %v7715 = vxor.u32 %v7714, 2147483648
    %v7716 = vmul.f32 %v7715, 1.442695
    %v7717 = vpow.pop %v7716
    %v7718 = vadd.f32 %v7717, 1.0
    %v7719 = vrcp.pop %v7718
    %v7720 = vmul.f32 1.0, %v7719
    %v7721 = vadd.f32 %v3287, %v7641
    %v7722 = vxor.u32 %v7721, 2147483648
    %v7723 = vmul.f32 %v7722, 1.442695
    %v7724 = vpow.pop %v7723
    %v7725 = vadd.f32 %v7724, 1.0
    %v7726 = vrcp.pop %v7725
    %v7727 = vmul.f32 1.0, %v7726
    %v7728 = vmul.f32 %v7720, %v7711
    %v7729 = vadd.f32 %v3472, %v7728
    %v7730 = vtanh.pop %v7729
    %v7731 = vsub.f32 1.0, %v7727
    %v7732 = vmul.f32 %v7731, %v7730
    %v7733 = vmul.f32 %v7727, %v7500
    %v7734 = vadd.f32 %v7732, %v7733
    %v7736 = vsel %vm187, %v7734, 0
    %7738 = vmatprep.subr.mxu0 0.0
    %7739 = vmatpush1.msra.mxu0 0.0
    %7740 = vmatprep.subr.mxu0 0.0
    %7741 = vmatpush1.msra.mxu0 0.0
    %7742 = vmatprep.subr.mxu0 0.0
    %7743 = vmatpush1.msra.mxu0 0.0
    %7744 = vmatprep.subr.mxu0 0.0
    %7745 = vmatpush1.msra.mxu0 0.0
    %7746 = vmatprep.subr.mxu0 0.0
    %7747 = vmatpush1.msra.mxu0 0.0
    %7748 = vmatprep.subr.mxu0 0.0
    %7749 = vmatpush1.msra.mxu0 0.0
    %7750 = vmatprep.subr.mxu0 0.0
    %7751 = vmatpush1.msra.mxu0 0.0
    %7752 = vmatprep.subr.mxu0 0.0
    %7753 = vmatpush1.msra.mxu0 0.0
    %7754 = vmatprep.subr.mxu0 0.0
    %7755 = vmatpush1.msra.mxu0 0.0
    %7756 = vmatprep.subr.mxu0 0.0
    %7757 = vmatpush1.msra.mxu0 0.0
    %7758 = vmatprep.subr.mxu0 0.0
    %7759 = vmatpush1.msra.mxu0 0.0
    %7760 = vmatprep.subr.mxu0 0.0
    %7761 = vmatpush1.msra.mxu0 0.0
    %7762 = vmatprep.subr.mxu0 0.0
    %7763 = vmatpush1.msra.mxu0 %v3493
    %7764 = vmatprep.subr.mxu0 0.0
    %7765 = vmatpush1.msra.mxu0 %v3492
    %7766 = vmatprep.subr.mxu0 0.0
    %7767 = vmatpush1.msra.mxu0 %v3491
    %7768 = vmatprep.subr.mxu0 0.0
    %7769 = vmatpush1.msra.mxu0 %v3490
    %7770 = vmatprep.subr.mxu0 0.0
    %7771 = vmatpush2.msra.mxu0 0.0
    %7772 = vmatprep.subr.mxu0 0.0
    %7773 = vmatpush2.msra.mxu0 0.0
    %7774 = vmatprep.subr.mxu0 0.0
    %7775 = vmatpush2.msra.mxu0 0.0
    %7776 = vmatprep.subr.mxu0 0.0
    %7777 = vmatpush2.msra.mxu0 0.0
    %7778 = vmatprep.subr.mxu0 0.0
    %7779 = vmatpush2.msra.mxu0 0.0
    %7780 = vmatprep.subr.mxu0 0.0
    %7781 = vmatpush2.msra.mxu0 0.0
    %7782 = vmatprep.subr.mxu0 0.0
    %7783 = vmatpush2.msra.mxu0 0.0
    %7784 = vmatprep.subr.mxu0 0.0
    %7785 = vmatpush2.msra.mxu0 0.0
    %7786 = vmatprep.subr.mxu0 0.0
    %7787 = vmatpush2.msra.mxu0 0.0
    %7788 = vmatprep.subr.mxu0 0.0
    %7789 = vmatpush2.msra.mxu0 0.0
    %7790 = vmatprep.subr.mxu0 0.0
    %7791 = vmatpush2.msra.mxu0 0.0
    %7792 = vmatprep.subr.mxu0 0.0
    %7793 = vmatpush2.msra.mxu0 0.0
    %7794 = vmatprep.subr.mxu0 0.0
    %7795 = vmatpush2.msra.mxu0 0.0
    %7796 = vmatprep.subr.mxu0 0.0
    %7797 = vmatpush2.msra.mxu0 0.0
    %7798 = vmatprep.subr.mxu0 0.0
    %7799 = vmatpush2.msra.mxu0 0.0
    %7800 = vmatprep.subr.mxu0 0.0
    %7801 = vmatpush2.msra.mxu0 0.0
    %7802 = vmatprep.mubr.f32.mxu0 0.0
    %7803 = vmatmul.mubr.f32.gmra.mxu0 %v7736
    %v7804 = vpop.f32.mrf.mxu0
    %v7805 = vadd.f32 %v3509, %v7804
    %v7806 = vpop.f32.mrf.mxu0
    %7807 = vdwg.mxu0
    %7808 = vmatprep.subr.mxu0 0.0
    %7809 = vmatpush1.msra.mxu0 0.0
    %7810 = vmatprep.subr.mxu0 0.0
    %7811 = vmatpush1.msra.mxu0 0.0
    %7812 = vmatprep.subr.mxu0 0.0
    %7813 = vmatpush1.msra.mxu0 0.0
    %7814 = vmatprep.subr.mxu0 0.0
    %7815 = vmatpush1.msra.mxu0 0.0
    %7816 = vmatprep.subr.mxu0 0.0
    %7817 = vmatpush1.msra.mxu0 0.0
    %7818 = vmatprep.subr.mxu0 0.0
    %7819 = vmatpush1.msra.mxu0 0.0
    %7820 = vmatprep.subr.mxu0 0.0
    %7821 = vmatpush1.msra.mxu0 0.0
    %7822 = vmatprep.subr.mxu0 0.0
    %7823 = vmatpush1.msra.mxu0 0.0
    %7824 = vmatprep.subr.mxu0 0.0
    %7825 = vmatpush1.msra.mxu0 0.0
    %7826 = vmatprep.subr.mxu0 0.0
    %7827 = vmatpush1.msra.mxu0 0.0
    %7828 = vmatprep.subr.mxu0 0.0
    %7829 = vmatpush1.msra.mxu0 0.0
    %7830 = vmatprep.subr.mxu0 0.0
    %7831 = vmatpush1.msra.mxu0 0.0
    %7832 = vmatprep.subr.mxu0 0.0
    %7833 = vmatpush1.msra.mxu0 %v3497
    %7834 = vmatprep.subr.mxu0 0.0
    %7835 = vmatpush1.msra.mxu0 %v3496
    %7836 = vmatprep.subr.mxu0 0.0
    %7837 = vmatpush1.msra.mxu0 %v3495
    %7838 = vmatprep.subr.mxu0 0.0
    %7839 = vmatpush1.msra.mxu0 %v3494
    %7840 = vmatprep.subr.mxu0 0.0
    %7841 = vmatpush2.msra.mxu0 0.0
    %7842 = vmatprep.subr.mxu0 0.0
    %7843 = vmatpush2.msra.mxu0 0.0
    %7844 = vmatprep.subr.mxu0 0.0
    %7845 = vmatpush2.msra.mxu0 0.0
    %7846 = vmatprep.subr.mxu0 0.0
    %7847 = vmatpush2.msra.mxu0 0.0
    %7848 = vmatprep.subr.mxu0 0.0
    %7849 = vmatpush2.msra.mxu0 0.0
    %7850 = vmatprep.subr.mxu0 0.0
    %7851 = vmatpush2.msra.mxu0 0.0
    %7852 = vmatprep.subr.mxu0 0.0
    %7853 = vmatpush2.msra.mxu0 0.0
    %7854 = vmatprep.subr.mxu0 0.0
    %7855 = vmatpush2.msra.mxu0 0.0
    %7856 = vmatprep.subr.mxu0 0.0
    %7857 = vmatpush2.msra.mxu0 0.0
    %7858 = vmatprep.subr.mxu0 0.0
    %7859 = vmatpush2.msra.mxu0 0.0
    %7860 = vmatprep.subr.mxu0 0.0
    %7861 = vmatpush2.msra.mxu0 0.0
    %7862 = vmatprep.subr.mxu0 0.0
    %7863 = vmatpush2.msra.mxu0 0.0
    %7864 = vmatprep.subr.mxu0 0.0
    %7865 = vmatpush2.msra.mxu0 0.0
    %7866 = vmatprep.subr.mxu0 0.0
    %7867 = vmatpush2.msra.mxu0 0.0
    %7868 = vmatprep.subr.mxu0 0.0
    %7869 = vmatpush2.msra.mxu0 0.0
    %7870 = vmatprep.subr.mxu0 0.0
    %7871 = vmatpush2.msra.mxu0 0.0
    %7872 = vmatprep.mubr.f32.mxu0 0.0
    %7873 = vmatmul.mubr.f32.gmra.mxu0 %v7736
    %v7874 = vpop.f32.mrf.mxu0
    %v7875 = vadd.f32 %v3588, %v7874
    %v7876 = vpop.f32.mrf.mxu0
    %7877 = vdwg.mxu0
    %7878 = vmatprep.subr.mxu0 0.0
    %7879 = vmatpush1.msra.mxu0 0.0
    %7880 = vmatprep.subr.mxu0 0.0
    %7881 = vmatpush1.msra.mxu0 0.0
    %7882 = vmatprep.subr.mxu0 0.0
    %7883 = vmatpush1.msra.mxu0 0.0
    %7884 = vmatprep.subr.mxu0 0.0
    %7885 = vmatpush1.msra.mxu0 0.0
    %7886 = vmatprep.subr.mxu0 0.0
    %7887 = vmatpush1.msra.mxu0 0.0
    %7888 = vmatprep.subr.mxu0 0.0
    %7889 = vmatpush1.msra.mxu0 0.0
    %7890 = vmatprep.subr.mxu0 0.0
    %7891 = vmatpush1.msra.mxu0 0.0
    %7892 = vmatprep.subr.mxu0 0.0
    %7893 = vmatpush1.msra.mxu0 0.0
    %7894 = vmatprep.subr.mxu0 0.0
    %7895 = vmatpush1.msra.mxu0 0.0
    %7896 = vmatprep.subr.mxu0 0.0
    %7897 = vmatpush1.msra.mxu0 0.0
    %7898 = vmatprep.subr.mxu0 0.0
    %7899 = vmatpush1.msra.mxu0 0.0
    %7900 = vmatprep.subr.mxu0 0.0
    %7901 = vmatpush1.msra.mxu0 0.0
    %7902 = vmatprep.subr.mxu0 0.0
    %7903 = vmatpush1.msra.mxu0 %v3501
    %7904 = vmatprep.subr.mxu0 0.0
    %7905 = vmatpush1.msra.mxu0 %v3500
    %7906 = vmatprep.subr.mxu0 0.0
    %7907 = vmatpush1.msra.mxu0 %v3499
    %7908 = vmatprep.subr.mxu0 0.0
    %7909 = vmatpush1.msra.mxu0 %v3498
    %7910 = vmatprep.subr.mxu0 0.0
    %7911 = vmatpush2.msra.mxu0 0.0
    %7912 = vmatprep.subr.mxu0 0.0
    %7913 = vmatpush2.msra.mxu0 0.0
    %7914 = vmatprep.subr.mxu0 0.0
    %7915 = vmatpush2.msra.mxu0 0.0
    %7916 = vmatprep.subr.mxu0 0.0
    %7917 = vmatpush2.msra.mxu0 0.0
    %7918 = vmatprep.subr.mxu0 0.0
    %7919 = vmatpush2.msra.mxu0 0.0
    %7920 = vmatprep.subr.mxu0 0.0
    %7921 = vmatpush2.msra.mxu0 0.0
    %7922 = vmatprep.subr.mxu0 0.0
    %7923 = vmatpush2.msra.mxu0 0.0
    %7924 = vmatprep.subr.mxu0 0.0
    %7925 = vmatpush2.msra.mxu0 0.0
    %7926 = vmatprep.subr.mxu0 0.0
    %7927 = vmatpush2.msra.mxu0 0.0
    %7928 = vmatprep.subr.mxu0 0.0
    %7929 = vmatpush2.msra.mxu0 0.0
    %7930 = vmatprep.subr.mxu0 0.0
    %7931 = vmatpush2.msra.mxu0 0.0
    %7932 = vmatprep.subr.mxu0 0.0
    %7933 = vmatpush2.msra.mxu0 0.0
    %7934 = vmatprep.subr.mxu0 0.0
    %7935 = vmatpush2.msra.mxu0 0.0
    %7936 = vmatprep.subr.mxu0 0.0
    %7937 = vmatpush2.msra.mxu0 0.0
    %7938 = vmatprep.subr.mxu0 0.0
    %7939 = vmatpush2.msra.mxu0 0.0
    %7940 = vmatprep.subr.mxu0 0.0
    %7941 = vmatpush2.msra.mxu0 0.0
    %7942 = vmatprep.mubr.f32.mxu0 0.0
    %7943 = vmatmul.mubr.f32.gmra.mxu0 %v7736
    %v7944 = vpop.f32.mrf.mxu0
    %v7945 = vadd.f32 %v3664, %v7944
    %v7946 = vpop.f32.mrf.mxu0
    %7947 = vdwg.mxu0
    %v7948 = vadd.f32 %v3107, %v7805
    %v7949 = vxor.u32 %v7948, 2147483648
    %v7950 = vmul.f32 %v7949, 1.442695
    %v7951 = vpow.pop %v7950
    %v7952 = vadd.f32 %v7951, 1.0
    %v7953 = vrcp.pop %v7952
    %v7954 = vmul.f32 1.0, %v7953
    %v7955 = vadd.f32 %v3292, %v7875
    %v7956 = vxor.u32 %v7955, 2147483648
    %v7957 = vmul.f32 %v7956, 1.442695
    %v7958 = vpow.pop %v7957
    %v7959 = vadd.f32 %v7958, 1.0
    %v7960 = vrcp.pop %v7959
    %v7961 = vmul.f32 1.0, %v7960
    %v7962 = vmul.f32 %v7954, %v7945
    %v7963 = vadd.f32 %v3477, %v7962
    %v7964 = vtanh.pop %v7963
    %v7965 = vsub.f32 1.0, %v7961
    %v7966 = vmul.f32 %v7965, %v7964
    %v7967 = vmul.f32 %v7961, %v7734
    %v7968 = vadd.f32 %v7966, %v7967
    %v7970 = vsel %vm187, %v7968, 0
    %7972 = vmatprep.subr.mxu0 0.0
    %7973 = vmatpush1.msra.mxu0 0.0
    %7974 = vmatprep.subr.mxu0 0.0
    %7975 = vmatpush1.msra.mxu0 0.0
    %7976 = vmatprep.subr.mxu0 0.0
    %7977 = vmatpush1.msra.mxu0 0.0
    %7978 = vmatprep.subr.mxu0 0.0
    %7979 = vmatpush1.msra.mxu0 0.0
    %7980 = vmatprep.subr.mxu0 0.0
    %7981 = vmatpush1.msra.mxu0 0.0
    %7982 = vmatprep.subr.mxu0 0.0
    %7983 = vmatpush1.msra.mxu0 0.0
    %7984 = vmatprep.subr.mxu0 0.0
    %7985 = vmatpush1.msra.mxu0 0.0
    %7986 = vmatprep.subr.mxu0 0.0
    %7987 = vmatpush1.msra.mxu0 0.0
    %7988 = vmatprep.subr.mxu0 0.0
    %7989 = vmatpush1.msra.mxu0 0.0
    %7990 = vmatprep.subr.mxu0 0.0
    %7991 = vmatpush1.msra.mxu0 0.0
    %7992 = vmatprep.subr.mxu0 0.0
    %7993 = vmatpush1.msra.mxu0 0.0
    %7994 = vmatprep.subr.mxu0 0.0
    %7995 = vmatpush1.msra.mxu0 0.0
    %7996 = vmatprep.subr.mxu0 0.0
    %7997 = vmatpush1.msra.mxu0 %v3493
    %7998 = vmatprep.subr.mxu0 0.0
    %7999 = vmatpush1.msra.mxu0 %v3492
    %8000 = vmatprep.subr.mxu0 0.0
    %8001 = vmatpush1.msra.mxu0 %v3491
    %8002 = vmatprep.subr.mxu0 0.0
    %8003 = vmatpush1.msra.mxu0 %v3490
    %8004 = vmatprep.subr.mxu0 0.0
    %8005 = vmatpush2.msra.mxu0 0.0
    %8006 = vmatprep.subr.mxu0 0.0
    %8007 = vmatpush2.msra.mxu0 0.0
    %8008 = vmatprep.subr.mxu0 0.0
    %8009 = vmatpush2.msra.mxu0 0.0
    %8010 = vmatprep.subr.mxu0 0.0
    %8011 = vmatpush2.msra.mxu0 0.0
    %8012 = vmatprep.subr.mxu0 0.0
    %8013 = vmatpush2.msra.mxu0 0.0
    %8014 = vmatprep.subr.mxu0 0.0
    %8015 = vmatpush2.msra.mxu0 0.0
    %8016 = vmatprep.subr.mxu0 0.0
    %8017 = vmatpush2.msra.mxu0 0.0
    %8018 = vmatprep.subr.mxu0 0.0
    %8019 = vmatpush2.msra.mxu0 0.0
    %8020 = vmatprep.subr.mxu0 0.0
    %8021 = vmatpush2.msra.mxu0 0.0
    %8022 = vmatprep.subr.mxu0 0.0
    %8023 = vmatpush2.msra.mxu0 0.0
    %8024 = vmatprep.subr.mxu0 0.0
    %8025 = vmatpush2.msra.mxu0 0.0
    %8026 = vmatprep.subr.mxu0 0.0
    %8027 = vmatpush2.msra.mxu0 0.0
    %8028 = vmatprep.subr.mxu0 0.0
    %8029 = vmatpush2.msra.mxu0 0.0
    %8030 = vmatprep.subr.mxu0 0.0
    %8031 = vmatpush2.msra.mxu0 0.0
    %8032 = vmatprep.subr.mxu0 0.0
    %8033 = vmatpush2.msra.mxu0 0.0
    %8034 = vmatprep.subr.mxu0 0.0
    %8035 = vmatpush2.msra.mxu0 0.0
    %8036 = vmatprep.mubr.f32.mxu0 0.0
    %8037 = vmatmul.mubr.f32.gmra.mxu0 %v7970
    %v8038 = vpop.f32.mrf.mxu0
    %v8039 = vadd.f32 %v3509, %v8038
    %v8040 = vpop.f32.mrf.mxu0
    %8041 = vdwg.mxu0
    %8042 = vmatprep.subr.mxu0 0.0
    %8043 = vmatpush1.msra.mxu0 0.0
    %8044 = vmatprep.subr.mxu0 0.0
    %8045 = vmatpush1.msra.mxu0 0.0
    %8046 = vmatprep.subr.mxu0 0.0
    %8047 = vmatpush1.msra.mxu0 0.0
    %8048 = vmatprep.subr.mxu0 0.0
    %8049 = vmatpush1.msra.mxu0 0.0
    %8050 = vmatprep.subr.mxu0 0.0
    %8051 = vmatpush1.msra.mxu0 0.0
    %8052 = vmatprep.subr.mxu0 0.0
    %8053 = vmatpush1.msra.mxu0 0.0
    %8054 = vmatprep.subr.mxu0 0.0
    %8055 = vmatpush1.msra.mxu0 0.0
    %8056 = vmatprep.subr.mxu0 0.0
    %8057 = vmatpush1.msra.mxu0 0.0
    %8058 = vmatprep.subr.mxu0 0.0
    %8059 = vmatpush1.msra.mxu0 0.0
    %8060 = vmatprep.subr.mxu0 0.0
    %8061 = vmatpush1.msra.mxu0 0.0
    %8062 = vmatprep.subr.mxu0 0.0
    %8063 = vmatpush1.msra.mxu0 0.0
    %8064 = vmatprep.subr.mxu0 0.0
    %8065 = vmatpush1.msra.mxu0 0.0
    %8066 = vmatprep.subr.mxu0 0.0
    %8067 = vmatpush1.msra.mxu0 %v3497
    %8068 = vmatprep.subr.mxu0 0.0
    %8069 = vmatpush1.msra.mxu0 %v3496
    %8070 = vmatprep.subr.mxu0 0.0
    %8071 = vmatpush1.msra.mxu0 %v3495
    %8072 = vmatprep.subr.mxu0 0.0
    %8073 = vmatpush1.msra.mxu0 %v3494
    %8074 = vmatprep.subr.mxu0 0.0
    %8075 = vmatpush2.msra.mxu0 0.0
    %8076 = vmatprep.subr.mxu0 0.0
    %8077 = vmatpush2.msra.mxu0 0.0
    %8078 = vmatprep.subr.mxu0 0.0
    %8079 = vmatpush2.msra.mxu0 0.0
    %8080 = vmatprep.subr.mxu0 0.0
    %8081 = vmatpush2.msra.mxu0 0.0
    %8082 = vmatprep.subr.mxu0 0.0
    %8083 = vmatpush2.msra.mxu0 0.0
    %8084 = vmatprep.subr.mxu0 0.0
    %8085 = vmatpush2.msra.mxu0 0.0
    %8086 = vmatprep.subr.mxu0 0.0
    %8087 = vmatpush2.msra.mxu0 0.0
    %8088 = vmatprep.subr.mxu0 0.0
    %8089 = vmatpush2.msra.mxu0 0.0
    %8090 = vmatprep.subr.mxu0 0.0
    %8091 = vmatpush2.msra.mxu0 0.0
    %8092 = vmatprep.subr.mxu0 0.0
    %8093 = vmatpush2.msra.mxu0 0.0
    %8094 = vmatprep.subr.mxu0 0.0
    %8095 = vmatpush2.msra.mxu0 0.0
    %8096 = vmatprep.subr.mxu0 0.0
    %8097 = vmatpush2.msra.mxu0 0.0
    %8098 = vmatprep.subr.mxu0 0.0
    %8099 = vmatpush2.msra.mxu0 0.0
    %8100 = vmatprep.subr.mxu0 0.0
    %8101 = vmatpush2.msra.mxu0 0.0
    %8102 = vmatprep.subr.mxu0 0.0
    %8103 = vmatpush2.msra.mxu0 0.0
    %8104 = vmatprep.subr.mxu0 0.0
    %8105 = vmatpush2.msra.mxu0 0.0
    %8106 = vmatprep.mubr.f32.mxu0 0.0
    %8107 = vmatmul.mubr.f32.gmra.mxu0 %v7970
    %v8108 = vpop.f32.mrf.mxu0
    %v8109 = vadd.f32 %v3588, %v8108
    %v8110 = vpop.f32.mrf.mxu0
    %8111 = vdwg.mxu0
    %8112 = vmatprep.subr.mxu0 0.0
    %8113 = vmatpush1.msra.mxu0 0.0
    %8114 = vmatprep.subr.mxu0 0.0
    %8115 = vmatpush1.msra.mxu0 0.0
    %8116 = vmatprep.subr.mxu0 0.0
    %8117 = vmatpush1.msra.mxu0 0.0
    %8118 = vmatprep.subr.mxu0 0.0
    %8119 = vmatpush1.msra.mxu0 0.0
    %8120 = vmatprep.subr.mxu0 0.0
    %8121 = vmatpush1.msra.mxu0 0.0
    %8122 = vmatprep.subr.mxu0 0.0
    %8123 = vmatpush1.msra.mxu0 0.0
    %8124 = vmatprep.subr.mxu0 0.0
    %8125 = vmatpush1.msra.mxu0 0.0
    %8126 = vmatprep.subr.mxu0 0.0
    %8127 = vmatpush1.msra.mxu0 0.0
    %8128 = vmatprep.subr.mxu0 0.0
    %8129 = vmatpush1.msra.mxu0 0.0
    %8130 = vmatprep.subr.mxu0 0.0
    %8131 = vmatpush1.msra.mxu0 0.0
    %8132 = vmatprep.subr.mxu0 0.0
    %8133 = vmatpush1.msra.mxu0 0.0
    %8134 = vmatprep.subr.mxu0 0.0
    %8135 = vmatpush1.msra.mxu0 0.0
    %8136 = vmatprep.subr.mxu0 0.0
    %8137 = vmatpush1.msra.mxu0 %v3501
    %8138 = vmatprep.subr.mxu0 0.0
    %8139 = vmatpush1.msra.mxu0 %v3500
    %8140 = vmatprep.subr.mxu0 0.0
    %8141 = vmatpush1.msra.mxu0 %v3499
    %8142 = vmatprep.subr.mxu0 0.0
    %8143 = vmatpush1.msra.mxu0 %v3498
    %8144 = vmatprep.subr.mxu0 0.0
    %8145 = vmatpush2.msra.mxu0 0.0
    %8146 = vmatprep.subr.mxu0 0.0
    %8147 = vmatpush2.msra.mxu0 0.0
    %8148 = vmatprep.subr.mxu0 0.0
    %8149 = vmatpush2.msra.mxu0 0.0
    %8150 = vmatprep.subr.mxu0 0.0
    %8151 = vmatpush2.msra.mxu0 0.0
    %8152 = vmatprep.subr.mxu0 0.0
    %8153 = vmatpush2.msra.mxu0 0.0
    %8154 = vmatprep.subr.mxu0 0.0
    %8155 = vmatpush2.msra.mxu0 0.0
    %8156 = vmatprep.subr.mxu0 0.0
    %8157 = vmatpush2.msra.mxu0 0.0
    %8158 = vmatprep.subr.mxu0 0.0
    %8159 = vmatpush2.msra.mxu0 0.0
    %8160 = vmatprep.subr.mxu0 0.0
    %8161 = vmatpush2.msra.mxu0 0.0
    %8162 = vmatprep.subr.mxu0 0.0
    %8163 = vmatpush2.msra.mxu0 0.0
    %8164 = vmatprep.subr.mxu0 0.0
    %8165 = vmatpush2.msra.mxu0 0.0
    %8166 = vmatprep.subr.mxu0 0.0
    %8167 = vmatpush2.msra.mxu0 0.0
    %8168 = vmatprep.subr.mxu0 0.0
    %8169 = vmatpush2.msra.mxu0 0.0
    %8170 = vmatprep.subr.mxu0 0.0
    %8171 = vmatpush2.msra.mxu0 0.0
    %8172 = vmatprep.subr.mxu0 0.0
    %8173 = vmatpush2.msra.mxu0 0.0
    %8174 = vmatprep.subr.mxu0 0.0
    %8175 = vmatpush2.msra.mxu0 0.0
    %8176 = vmatprep.mubr.f32.mxu0 0.0
    %8177 = vmatmul.mubr.f32.gmra.mxu0 %v7970
    %v8178 = vpop.f32.mrf.mxu0
    %v8179 = vadd.f32 %v3664, %v8178
    %v8180 = vpop.f32.mrf.mxu0
    %8181 = vdwg.mxu0
    %v8182 = vadd.f32 %v3112, %v8039
    %v8183 = vxor.u32 %v8182, 2147483648
    %v8184 = vmul.f32 %v8183, 1.442695
    %v8185 = vpow.pop %v8184
    %v8186 = vadd.f32 %v8185, 1.0
    %v8187 = vrcp.pop %v8186
    %v8188 = vmul.f32 1.0, %v8187
    %v8189 = vadd.f32 %v3297, %v8109
    %v8190 = vxor.u32 %v8189, 2147483648
    %v8191 = vmul.f32 %v8190, 1.442695
    %v8192 = vpow.pop %v8191
    %v8193 = vadd.f32 %v8192, 1.0
    %v8194 = vrcp.pop %v8193
    %v8195 = vmul.f32 1.0, %v8194
    %v8196 = vmul.f32 %v8188, %v8179
    %v8197 = vadd.f32 %v3482, %v8196
    %v8198 = vtanh.pop %v8197
    %v8199 = vsub.f32 1.0, %v8195
    %v8200 = vmul.f32 %v8199, %v8198
    %v8201 = vmul.f32 %v8195, %v7968
    %v8202 = vadd.f32 %v8200, %v8201
    %v8204 = vsel %vm187, %v8202, 0
    %8206 = vmatprep.subr.mxu0 0.0
    %8207 = vmatpush1.msra.mxu0 0.0
    %8208 = vmatprep.subr.mxu0 0.0
    %8209 = vmatpush1.msra.mxu0 0.0
    %8210 = vmatprep.subr.mxu0 0.0
    %8211 = vmatpush1.msra.mxu0 0.0
    %8212 = vmatprep.subr.mxu0 0.0
    %8213 = vmatpush1.msra.mxu0 0.0
    %8214 = vmatprep.subr.mxu0 0.0
    %8215 = vmatpush1.msra.mxu0 0.0
    %8216 = vmatprep.subr.mxu0 0.0
    %8217 = vmatpush1.msra.mxu0 0.0
    %8218 = vmatprep.subr.mxu0 0.0
    %8219 = vmatpush1.msra.mxu0 0.0
    %8220 = vmatprep.subr.mxu0 0.0
    %8221 = vmatpush1.msra.mxu0 0.0
    %8222 = vmatprep.subr.mxu0 0.0
    %8223 = vmatpush1.msra.mxu0 0.0
    %8224 = vmatprep.subr.mxu0 0.0
    %8225 = vmatpush1.msra.mxu0 0.0
    %8226 = vmatprep.subr.mxu0 0.0
    %8227 = vmatpush1.msra.mxu0 0.0
    %8228 = vmatprep.subr.mxu0 0.0
    %8229 = vmatpush1.msra.mxu0 0.0
    %8230 = vmatprep.subr.mxu0 0.0
    %8231 = vmatpush1.msra.mxu0 %v3493
    %8232 = vmatprep.subr.mxu0 0.0
    %8233 = vmatpush1.msra.mxu0 %v3492
    %8234 = vmatprep.subr.mxu0 0.0
    %8235 = vmatpush1.msra.mxu0 %v3491
    %8236 = vmatprep.subr.mxu0 0.0
    %8237 = vmatpush1.msra.mxu0 %v3490
    %8238 = vmatprep.subr.mxu0 0.0
    %8239 = vmatpush2.msra.mxu0 0.0
    %8240 = vmatprep.subr.mxu0 0.0
    %8241 = vmatpush2.msra.mxu0 0.0
    %8242 = vmatprep.subr.mxu0 0.0
    %8243 = vmatpush2.msra.mxu0 0.0
    %8244 = vmatprep.subr.mxu0 0.0
    %8245 = vmatpush2.msra.mxu0 0.0
    %8246 = vmatprep.subr.mxu0 0.0
    %8247 = vmatpush2.msra.mxu0 0.0
    %8248 = vmatprep.subr.mxu0 0.0
    %8249 = vmatpush2.msra.mxu0 0.0
    %8250 = vmatprep.subr.mxu0 0.0
    %8251 = vmatpush2.msra.mxu0 0.0
    %8252 = vmatprep.subr.mxu0 0.0
    %8253 = vmatpush2.msra.mxu0 0.0
    %8254 = vmatprep.subr.mxu0 0.0
    %8255 = vmatpush2.msra.mxu0 0.0
    %8256 = vmatprep.subr.mxu0 0.0
    %8257 = vmatpush2.msra.mxu0 0.0
    %8258 = vmatprep.subr.mxu0 0.0
    %8259 = vmatpush2.msra.mxu0 0.0
    %8260 = vmatprep.subr.mxu0 0.0
    %8261 = vmatpush2.msra.mxu0 0.0
    %8262 = vmatprep.subr.mxu0 0.0
    %8263 = vmatpush2.msra.mxu0 0.0
    %8264 = vmatprep.subr.mxu0 0.0
    %8265 = vmatpush2.msra.mxu0 0.0
    %8266 = vmatprep.subr.mxu0 0.0
    %8267 = vmatpush2.msra.mxu0 0.0
    %8268 = vmatprep.subr.mxu0 0.0
    %8269 = vmatpush2.msra.mxu0 0.0
    %8270 = vmatprep.mubr.f32.mxu0 0.0
    %8271 = vmatmul.mubr.f32.gmra.mxu0 %v8204
    %v8272 = vpop.f32.mrf.mxu0
    %v8273 = vadd.f32 %v3509, %v8272
    %v8274 = vpop.f32.mrf.mxu0
    %8275 = vdwg.mxu0
    %8276 = vmatprep.subr.mxu0 0.0
    %8277 = vmatpush1.msra.mxu0 0.0
    %8278 = vmatprep.subr.mxu0 0.0
    %8279 = vmatpush1.msra.mxu0 0.0
    %8280 = vmatprep.subr.mxu0 0.0
    %8281 = vmatpush1.msra.mxu0 0.0
    %8282 = vmatprep.subr.mxu0 0.0
    %8283 = vmatpush1.msra.mxu0 0.0
    %8284 = vmatprep.subr.mxu0 0.0
    %8285 = vmatpush1.msra.mxu0 0.0
    %8286 = vmatprep.subr.mxu0 0.0
    %8287 = vmatpush1.msra.mxu0 0.0
    %8288 = vmatprep.subr.mxu0 0.0
    %8289 = vmatpush1.msra.mxu0 0.0
    %8290 = vmatprep.subr.mxu0 0.0
    %8291 = vmatpush1.msra.mxu0 0.0
    %8292 = vmatprep.subr.mxu0 0.0
    %8293 = vmatpush1.msra.mxu0 0.0
    %8294 = vmatprep.subr.mxu0 0.0
    %8295 = vmatpush1.msra.mxu0 0.0
    %8296 = vmatprep.subr.mxu0 0.0
    %8297 = vmatpush1.msra.mxu0 0.0
    %8298 = vmatprep.subr.mxu0 0.0
    %8299 = vmatpush1.msra.mxu0 0.0
    %8300 = vmatprep.subr.mxu0 0.0
    %8301 = vmatpush1.msra.mxu0 %v3497
    %8302 = vmatprep.subr.mxu0 0.0
    %8303 = vmatpush1.msra.mxu0 %v3496
    %8304 = vmatprep.subr.mxu0 0.0
    %8305 = vmatpush1.msra.mxu0 %v3495
    %8306 = vmatprep.subr.mxu0 0.0
    %8307 = vmatpush1.msra.mxu0 %v3494
    %8308 = vmatprep.subr.mxu0 0.0
    %8309 = vmatpush2.msra.mxu0 0.0
    %8310 = vmatprep.subr.mxu0 0.0
    %8311 = vmatpush2.msra.mxu0 0.0
    %8312 = vmatprep.subr.mxu0 0.0
    %8313 = vmatpush2.msra.mxu0 0.0
    %8314 = vmatprep.subr.mxu0 0.0
    %8315 = vmatpush2.msra.mxu0 0.0
    %8316 = vmatprep.subr.mxu0 0.0
    %8317 = vmatpush2.msra.mxu0 0.0
    %8318 = vmatprep.subr.mxu0 0.0
    %8319 = vmatpush2.msra.mxu0 0.0
    %8320 = vmatprep.subr.mxu0 0.0
    %8321 = vmatpush2.msra.mxu0 0.0
    %8322 = vmatprep.subr.mxu0 0.0
    %8323 = vmatpush2.msra.mxu0 0.0
    %8324 = vmatprep.subr.mxu0 0.0
    %8325 = vmatpush2.msra.mxu0 0.0
    %8326 = vmatprep.subr.mxu0 0.0
    %8327 = vmatpush2.msra.mxu0 0.0
    %8328 = vmatprep.subr.mxu0 0.0
    %8329 = vmatpush2.msra.mxu0 0.0
    %8330 = vmatprep.subr.mxu0 0.0
    %8331 = vmatpush2.msra.mxu0 0.0
    %8332 = vmatprep.subr.mxu0 0.0
    %8333 = vmatpush2.msra.mxu0 0.0
    %8334 = vmatprep.subr.mxu0 0.0
    %8335 = vmatpush2.msra.mxu0 0.0
    %8336 = vmatprep.subr.mxu0 0.0
    %8337 = vmatpush2.msra.mxu0 0.0
    %8338 = vmatprep.subr.mxu0 0.0
    %8339 = vmatpush2.msra.mxu0 0.0
    %8340 = vmatprep.mubr.f32.mxu0 0.0
    %8341 = vmatmul.mubr.f32.gmra.mxu0 %v8204
    %v8342 = vpop.f32.mrf.mxu0
    %v8343 = vadd.f32 %v3588, %v8342
    %v8344 = vpop.f32.mrf.mxu0
    %8345 = vdwg.mxu0
    %8346 = vmatprep.subr.mxu0 0.0
    %8347 = vmatpush1.msra.mxu0 0.0
    %8348 = vmatprep.subr.mxu0 0.0
    %8349 = vmatpush1.msra.mxu0 0.0
    %8350 = vmatprep.subr.mxu0 0.0
    %8351 = vmatpush1.msra.mxu0 0.0
    %8352 = vmatprep.subr.mxu0 0.0
    %8353 = vmatpush1.msra.mxu0 0.0
    %8354 = vmatprep.subr.mxu0 0.0
    %8355 = vmatpush1.msra.mxu0 0.0
    %8356 = vmatprep.subr.mxu0 0.0
    %8357 = vmatpush1.msra.mxu0 0.0
    %8358 = vmatprep.subr.mxu0 0.0
    %8359 = vmatpush1.msra.mxu0 0.0
    %8360 = vmatprep.subr.mxu0 0.0
    %8361 = vmatpush1.msra.mxu0 0.0
    %8362 = vmatprep.subr.mxu0 0.0
    %8363 = vmatpush1.msra.mxu0 0.0
    %8364 = vmatprep.subr.mxu0 0.0
    %8365 = vmatpush1.msra.mxu0 0.0
    %8366 = vmatprep.subr.mxu0 0.0
    %8367 = vmatpush1.msra.mxu0 0.0
    %8368 = vmatprep.subr.mxu0 0.0
    %8369 = vmatpush1.msra.mxu0 0.0
    %8370 = vmatprep.subr.mxu0 0.0
    %8371 = vmatpush1.msra.mxu0 %v3501
    %8372 = vmatprep.subr.mxu0 0.0
    %8373 = vmatpush1.msra.mxu0 %v3500
    %8374 = vmatprep.subr.mxu0 0.0
    %8375 = vmatpush1.msra.mxu0 %v3499
    %8376 = vmatprep.subr.mxu0 0.0
    %8377 = vmatpush1.msra.mxu0 %v3498
    %8378 = vmatprep.subr.mxu0 0.0
    %8379 = vmatpush2.msra.mxu0 0.0
    %8380 = vmatprep.subr.mxu0 0.0
    %8381 = vmatpush2.msra.mxu0 0.0
    %8382 = vmatprep.subr.mxu0 0.0
    %8383 = vmatpush2.msra.mxu0 0.0
    %8384 = vmatprep.subr.mxu0 0.0
    %8385 = vmatpush2.msra.mxu0 0.0
    %8386 = vmatprep.subr.mxu0 0.0
    %8387 = vmatpush2.msra.mxu0 0.0
    %8388 = vmatprep.subr.mxu0 0.0
    %8389 = vmatpush2.msra.mxu0 0.0
    %8390 = vmatprep.subr.mxu0 0.0
    %8391 = vmatpush2.msra.mxu0 0.0
    %8392 = vmatprep.subr.mxu0 0.0
    %8393 = vmatpush2.msra.mxu0 0.0
    %8394 = vmatprep.subr.mxu0 0.0
    %8395 = vmatpush2.msra.mxu0 0.0
    %8396 = vmatprep.subr.mxu0 0.0
    %8397 = vmatpush2.msra.mxu0 0.0
    %8398 = vmatprep.subr.mxu0 0.0
    %8399 = vmatpush2.msra.mxu0 0.0
    %8400 = vmatprep.subr.mxu0 0.0
    %8401 = vmatpush2.msra.mxu0 0.0
    %8402 = vmatprep.subr.mxu0 0.0
    %8403 = vmatpush2.msra.mxu0 0.0
    %8404 = vmatprep.subr.mxu0 0.0
    %8405 = vmatpush2.msra.mxu0 0.0
    %8406 = vmatprep.subr.mxu0 0.0
    %8407 = vmatpush2.msra.mxu0 0.0
    %8408 = vmatprep.subr.mxu0 0.0
    %8409 = vmatpush2.msra.mxu0 0.0
    %8410 = vmatprep.mubr.f32.mxu0 0.0
    %8411 = vmatmul.mubr.f32.gmra.mxu0 %v8204
    %v8412 = vpop.f32.mrf.mxu0
    %v8413 = vadd.f32 %v3664, %v8412
    %v8414 = vpop.f32.mrf.mxu0
    %8415 = vdwg.mxu0
    %v8416 = vadd.f32 %v3117, %v8273
    %v8417 = vxor.u32 %v8416, 2147483648
    %v8418 = vmul.f32 %v8417, 1.442695
    %v8419 = vpow.pop %v8418
    %v8420 = vadd.f32 %v8419, 1.0
    %v8421 = vrcp.pop %v8420
    %v8422 = vmul.f32 1.0, %v8421
    %v8423 = vadd.f32 %v3302, %v8343
    %v8424 = vxor.u32 %v8423, 2147483648
    %v8425 = vmul.f32 %v8424, 1.442695
    %v8426 = vpow.pop %v8425
    %v8427 = vadd.f32 %v8426, 1.0
    %v8428 = vrcp.pop %v8427
    %v8429 = vmul.f32 1.0, %v8428
    %v8430 = vmul.f32 %v8422, %v8413
    %v8431 = vadd.f32 %v3487, %v8430
    %v8432 = vtanh.pop %v8431
    %v8433 = vsub.f32 1.0, %v8429
    %v8434 = vmul.f32 %v8433, %v8432
    %v8435 = vmul.f32 %v8429, %v8202
    %v8436 = vadd.f32 %v8434, %v8435
    %v8437 = vld [vmem:[#allocation2] sm:$0xff]
    %v8438 = vld [vmem:[#allocation2 + $0x8] sm:$0xff]
    %v8439 = vld [vmem:[#allocation2 + $0x10] sm:$0xff]
    %v8440 = vld [vmem:[#allocation2 + $0x18] sm:$0xff]
    %v8441 = vld [vmem:[%s20] sm:$0x1]
    %v8443 = vlaneseq
    %v8444 = vshrl.u32 %v8443, 7
    %v8445 = vsub.s32 0, %v8444
    %v8446 = vrot.slane %v8441, %v8445
    %v8449 = vsel %vm187, %v8436, 0
    %8451 = vmatprep.subr.mxu0 0.0
    %8452 = vmatpush1.msra.mxu0 0.0
    %8453 = vmatprep.subr.mxu0 0.0
    %8454 = vmatpush1.msra.mxu0 0.0
    %8455 = vmatprep.subr.mxu0 0.0
    %8456 = vmatpush1.msra.mxu0 0.0
    %8457 = vmatprep.subr.mxu0 0.0
    %8458 = vmatpush1.msra.mxu0 0.0
    %8459 = vmatprep.subr.mxu0 0.0
    %8460 = vmatpush1.msra.mxu0 0.0
    %8461 = vmatprep.subr.mxu0 0.0
    %8462 = vmatpush1.msra.mxu0 0.0
    %8463 = vmatprep.subr.mxu0 0.0
    %8464 = vmatpush1.msra.mxu0 0.0
    %8465 = vmatprep.subr.mxu0 0.0
    %8466 = vmatpush1.msra.mxu0 0.0
    %8467 = vmatprep.subr.mxu0 0.0
    %8468 = vmatpush1.msra.mxu0 0.0
    %8469 = vmatprep.subr.mxu0 0.0
    %8470 = vmatpush1.msra.mxu0 0.0
    %8471 = vmatprep.subr.mxu0 0.0
    %8472 = vmatpush1.msra.mxu0 0.0
    %8473 = vmatprep.subr.mxu0 0.0
    %8474 = vmatpush1.msra.mxu0 0.0
    %8475 = vmatprep.subr.mxu0 0.0
    %8476 = vmatpush1.msra.mxu0 %v8440
    %8477 = vmatprep.subr.mxu0 0.0
    %8478 = vmatpush1.msra.mxu0 %v8439
    %8479 = vmatprep.subr.mxu0 0.0
    %8480 = vmatpush1.msra.mxu0 %v8438
    %8481 = vmatprep.subr.mxu0 0.0
    %8482 = vmatpush1.msra.mxu0 %v8437
    %8483 = vmatprep.subr.mxu0 0.0
    %8484 = vmatpush2.msra.mxu0 0.0
    %8485 = vmatprep.subr.mxu0 0.0
    %8486 = vmatpush2.msra.mxu0 0.0
    %8487 = vmatprep.subr.mxu0 0.0
    %8488 = vmatpush2.msra.mxu0 0.0
    %8489 = vmatprep.subr.mxu0 0.0
    %8490 = vmatpush2.msra.mxu0 0.0
    %8491 = vmatprep.subr.mxu0 0.0
    %8492 = vmatpush2.msra.mxu0 0.0
    %8493 = vmatprep.subr.mxu0 0.0
    %8494 = vmatpush2.msra.mxu0 0.0
    %8495 = vmatprep.subr.mxu0 0.0
    %8496 = vmatpush2.msra.mxu0 0.0
    %8497 = vmatprep.subr.mxu0 0.0
    %8498 = vmatpush2.msra.mxu0 0.0
    %8499 = vmatprep.subr.mxu0 0.0
    %8500 = vmatpush2.msra.mxu0 0.0
    %8501 = vmatprep.subr.mxu0 0.0
    %8502 = vmatpush2.msra.mxu0 0.0
    %8503 = vmatprep.subr.mxu0 0.0
    %8504 = vmatpush2.msra.mxu0 0.0
    %8505 = vmatprep.subr.mxu0 0.0
    %8506 = vmatpush2.msra.mxu0 0.0
    %8507 = vmatprep.subr.mxu0 0.0
    %8508 = vmatpush2.msra.mxu0 0.0
    %8509 = vmatprep.subr.mxu0 0.0
    %8510 = vmatpush2.msra.mxu0 0.0
    %8511 = vmatprep.subr.mxu0 0.0
    %8512 = vmatpush2.msra.mxu0 0.0
    %8513 = vmatprep.subr.mxu0 0.0
    %8514 = vmatpush2.msra.mxu0 0.0
    %8515 = vmatprep.mubr.f32.mxu0 0.0
    %8516 = vmatmul.mubr.f32.gmra.mxu0 %v3758
    %v8517 = vpop.f32.mrf.mxu0
    %v8518 = vadd.f32 %v8446, %v8517
    %v8519 = vpop.f32.mrf.mxu0
    %8520 = vmatprep.mubr.f32.mxu0 0.0
    %8521 = vmatmul.mubr.f32.gmra.mxu0 %v3992
    %v8522 = vpop.f32.mrf.mxu0
    %v8523 = vadd.f32 %v8446, %v8522
    %v8524 = vpop.f32.mrf.mxu0
    %8525 = vmatprep.mubr.f32.mxu0 0.0
    %8526 = vmatmul.mubr.f32.gmra.mxu0 %v4226
    %v8527 = vpop.f32.mrf.mxu0
    %v8528 = vadd.f32 %v8446, %v8527
    %v8529 = vpop.f32.mrf.mxu0
    %8530 = vmatprep.mubr.f32.mxu0 0.0
    %8531 = vmatmul.mubr.f32.gmra.mxu0 %v4460
    %v8532 = vpop.f32.mrf.mxu0
    %v8533 = vadd.f32 %v8446, %v8532
    %v8534 = vpop.f32.mrf.mxu0
    %8535 = vmatprep.mubr.f32.mxu0 0.0
    %8536 = vmatmul.mubr.f32.gmra.mxu0 %v4694
    %v8537 = vpop.f32.mrf.mxu0
    %v8538 = vadd.f32 %v8446, %v8537
    %v8539 = vpop.f32.mrf.mxu0
    %8540 = vmatprep.mubr.f32.mxu0 0.0
    %8541 = vmatmul.mubr.f32.gmra.mxu0 %v4928
    %v8542 = vpop.f32.mrf.mxu0
    %v8543 = vadd.f32 %v8446, %v8542
    %v8544 = vpop.f32.mrf.mxu0
    %8545 = vmatprep.mubr.f32.mxu0 0.0
    %8546 = vmatmul.mubr.f32.gmra.mxu0 %v5162
    %v8547 = vpop.f32.mrf.mxu0
    %v8548 = vadd.f32 %v8446, %v8547
    %v8549 = vpop.f32.mrf.mxu0
    %8550 = vmatprep.mubr.f32.mxu0 0.0
    %8551 = vmatmul.mubr.f32.gmra.mxu0 %v5396
    %v8552 = vpop.f32.mrf.mxu0
    %v8553 = vadd.f32 %v8446, %v8552
    %v8554 = vpop.f32.mrf.mxu0
    %8555 = vmatprep.mubr.f32.mxu0 0.0
    %8556 = vmatmul.mubr.f32.gmra.mxu0 %v5630
    %v8557 = vpop.f32.mrf.mxu0
    %v8558 = vadd.f32 %v8446, %v8557
    %v8559 = vpop.f32.mrf.mxu0
    %8560 = vmatprep.mubr.f32.mxu0 0.0
    %8561 = vmatmul.mubr.f32.gmra.mxu0 %v5864
    %v8562 = vpop.f32.mrf.mxu0
    %v8563 = vadd.f32 %v8446, %v8562
    %v8564 = vpop.f32.mrf.mxu0
    %8565 = vmatprep.mubr.f32.mxu0 0.0
    %8566 = vmatmul.mubr.f32.gmra.mxu0 %v6098
    %v8567 = vpop.f32.mrf.mxu0
    %v8568 = vadd.f32 %v8446, %v8567
    %v8569 = vpop.f32.mrf.mxu0
    %8570 = vmatprep.mubr.f32.mxu0 0.0
    %8571 = vmatmul.mubr.f32.gmra.mxu0 %v6332
    %v8572 = vpop.f32.mrf.mxu0
    %v8573 = vadd.f32 %v8446, %v8572
    %v8574 = vpop.f32.mrf.mxu0
    %8575 = vmatprep.mubr.f32.mxu0 0.0
    %8576 = vmatmul.mubr.f32.gmra.mxu0 %v6566
    %v8577 = vpop.f32.mrf.mxu0
    %v8578 = vadd.f32 %v8446, %v8577
    %v8579 = vpop.f32.mrf.mxu0
    %8580 = vmatprep.mubr.f32.mxu0 0.0
    %8581 = vmatmul.mubr.f32.gmra.mxu0 %v6800
    %v8582 = vpop.f32.mrf.mxu0
    %v8583 = vadd.f32 %v8446, %v8582
    %v8584 = vpop.f32.mrf.mxu0
    %8585 = vmatprep.mubr.f32.mxu0 0.0
    %8586 = vmatmul.mubr.f32.gmra.mxu0 %v7034
    %v8587 = vpop.f32.mrf.mxu0
    %v8588 = vadd.f32 %v8446, %v8587
    %v8589 = vpop.f32.mrf.mxu0
    %8590 = vmatprep.mubr.f32.mxu0 0.0
    %8591 = vmatmul.mubr.f32.gmra.mxu0 %v7268
    %v8592 = vpop.f32.mrf.mxu0
    %v8593 = vadd.f32 %v8446, %v8592
    %v8594 = vpop.f32.mrf.mxu0
    %8595 = vmatprep.mubr.f32.mxu0 0.0
    %8596 = vmatmul.mubr.f32.gmra.mxu0 %v7502
    %v8597 = vpop.f32.mrf.mxu0
    %v8598 = vadd.f32 %v8446, %v8597
    %v8599 = vpop.f32.mrf.mxu0
    %8600 = vmatprep.mubr.f32.mxu0 0.0
    %8601 = vmatmul.mubr.f32.gmra.mxu0 %v7736
    %v8602 = vpop.f32.mrf.mxu0
    %v8603 = vadd.f32 %v8446, %v8602
    %v8604 = vpop.f32.mrf.mxu0
    %8605 = vmatprep.mubr.f32.mxu0 0.0
    %8606 = vmatmul.mubr.f32.gmra.mxu0 %v7970
    %v8607 = vpop.f32.mrf.mxu0
    %v8608 = vadd.f32 %v8446, %v8607
    %v8609 = vpop.f32.mrf.mxu0
    %8610 = vmatprep.mubr.f32.mxu0 0.0
    %8611 = vmatmul.mubr.f32.gmra.mxu0 %v8204
    %v8612 = vpop.f32.mrf.mxu0
    %v8613 = vadd.f32 %v8446, %v8612
    %v8614 = vpop.f32.mrf.mxu0
    %8615 = vmatprep.mubr.f32.mxu0 0.0
    %8616 = vmatmul.mubr.f32.gmra.mxu0 %v8449
    %v8617 = vpop.f32.mrf.mxu0
    %v8618 = vadd.f32 %v8446, %v8617
    %v8619 = vpop.f32.mrf.mxu0
    %8620 = vdwg.mxu0
    %v8621 = vmax.f32 %v8518, 0.0
    %v8622 = vmax.f32 %v8523, 0.0
    %v8623 = vmax.f32 %v8528, 0.0
    %v8624 = vmax.f32 %v8533, 0.0
    %v8625 = vmax.f32 %v8538, 0.0
    %v8626 = vmax.f32 %v8543, 0.0
    %v8627 = vmax.f32 %v8548, 0.0
    %v8628 = vmax.f32 %v8553, 0.0
    %v8629 = vmax.f32 %v8558, 0.0
    %v8630 = vmax.f32 %v8563, 0.0
    %v8631 = vmax.f32 %v8568, 0.0
    %v8632 = vmax.f32 %v8573, 0.0
    %v8633 = vmax.f32 %v8578, 0.0
    %v8634 = vmax.f32 %v8583, 0.0
    %v8635 = vmax.f32 %v8588, 0.0
    %v8636 = vmax.f32 %v8593, 0.0
    %v8637 = vmax.f32 %v8598, 0.0
    %v8638 = vmax.f32 %v8603, 0.0
    %v8639 = vmax.f32 %v8608, 0.0
    %v8640 = vmax.f32 %v8613, 0.0
    %v8641 = vmax.f32 %v8618, 0.0
    %v8642 = vadd.f32 %v3756, %v8621
    %v8643 = vadd.f32 %v3990, %v8622
    %v8644 = vadd.f32 %v4224, %v8623
    %v8645 = vadd.f32 %v4458, %v8624
    %v8646 = vadd.f32 %v4692, %v8625
    %v8647 = vadd.f32 %v4926, %v8626
    %v8648 = vadd.f32 %v5160, %v8627
    %v8649 = vadd.f32 %v5394, %v8628
    %v8650 = vadd.f32 %v5628, %v8629
    %v8651 = vadd.f32 %v5862, %v8630
    %v8652 = vadd.f32 %v6096, %v8631
    %v8653 = vadd.f32 %v6330, %v8632
    %v8654 = vadd.f32 %v6564, %v8633
    %v8655 = vadd.f32 %v6798, %v8634
    %v8656 = vadd.f32 %v7032, %v8635
    %v8657 = vadd.f32 %v7266, %v8636
    %v8658 = vadd.f32 %v7500, %v8637
    %v8659 = vadd.f32 %v7734, %v8638
    %v8660 = vadd.f32 %v7968, %v8639
    %v8661 = vadd.f32 %v8202, %v8640
    %v8662 = vadd.f32 %v8436, %v8641
    %v8663 = vld [vmem:[#allocation4] sm:$0xff]
    %v8664 = vld [vmem:[#allocation4 + $0x8] sm:$0xff]
    %v8665 = vld [vmem:[#allocation4 + $0x10] sm:$0xff]
    %v8666 = vld [vmem:[#allocation4 + $0x18] sm:$0xff]
    %v8667 = vld [vmem:[%s22] sm:$0x1]
    %v8669 = vlaneseq
    %v8670 = vshrl.u32 %v8669, 7
    %v8671 = vsub.s32 0, %v8670
    %v8672 = vrot.slane %v8667, %v8671
    %v8675 = vsel %vm187, %v8642, 0
    %v8678 = vsel %vm187, %v8643, 0
    %v8681 = vsel %vm187, %v8644, 0
    %v8684 = vsel %vm187, %v8645, 0
    %v8687 = vsel %vm187, %v8646, 0
    %v8690 = vsel %vm187, %v8647, 0
    %v8693 = vsel %vm187, %v8648, 0
    %v8696 = vsel %vm187, %v8649, 0
    %v8699 = vsel %vm187, %v8650, 0
    %v8702 = vsel %vm187, %v8651, 0
    %v8705 = vsel %vm187, %v8652, 0
    %v8708 = vsel %vm187, %v8653, 0
    %v8711 = vsel %vm187, %v8654, 0
    %v8714 = vsel %vm187, %v8655, 0
    %v8717 = vsel %vm187, %v8656, 0
    %v8720 = vsel %vm187, %v8657, 0
    %v8723 = vsel %vm187, %v8658, 0
    %v8726 = vsel %vm187, %v8659, 0
    %v8729 = vsel %vm187, %v8660, 0
    %v8732 = vsel %vm187, %v8661, 0
    %v8735 = vsel %vm187, %v8662, 0
    %8737 = vmatprep.subr.mxu0 0.0
    %8738 = vmatpush1.msra.mxu0 0.0
    %8739 = vmatprep.subr.mxu0 0.0
    %8740 = vmatpush1.msra.mxu0 0.0
    %8741 = vmatprep.subr.mxu0 0.0
    %8742 = vmatpush1.msra.mxu0 0.0
    %8743 = vmatprep.subr.mxu0 0.0
    %8744 = vmatpush1.msra.mxu0 0.0
    %8745 = vmatprep.subr.mxu0 0.0
    %8746 = vmatpush1.msra.mxu0 0.0
    %8747 = vmatprep.subr.mxu0 0.0
    %8748 = vmatpush1.msra.mxu0 0.0
    %8749 = vmatprep.subr.mxu0 0.0
    %8750 = vmatpush1.msra.mxu0 0.0
    %8751 = vmatprep.subr.mxu0 0.0
    %8752 = vmatpush1.msra.mxu0 0.0
    %8753 = vmatprep.subr.mxu0 0.0
    %8754 = vmatpush1.msra.mxu0 0.0
    %8755 = vmatprep.subr.mxu0 0.0
    %8756 = vmatpush1.msra.mxu0 0.0
    %8757 = vmatprep.subr.mxu0 0.0
    %8758 = vmatpush1.msra.mxu0 0.0
    %8759 = vmatprep.subr.mxu0 0.0
    %8760 = vmatpush1.msra.mxu0 0.0
    %8761 = vmatprep.subr.mxu0 0.0
    %8762 = vmatpush1.msra.mxu0 %v8666
    %8763 = vmatprep.subr.mxu0 0.0
    %8764 = vmatpush1.msra.mxu0 %v8665
    %8765 = vmatprep.subr.mxu0 0.0
    %8766 = vmatpush1.msra.mxu0 %v8664
    %8767 = vmatprep.subr.mxu0 0.0
    %8768 = vmatpush1.msra.mxu0 %v8663
    %8769 = vmatprep.subr.mxu0 0.0
    %8770 = vmatpush2.msra.mxu0 0.0
    %8771 = vmatprep.subr.mxu0 0.0
    %8772 = vmatpush2.msra.mxu0 0.0
    %8773 = vmatprep.subr.mxu0 0.0
    %8774 = vmatpush2.msra.mxu0 0.0
    %8775 = vmatprep.subr.mxu0 0.0
    %8776 = vmatpush2.msra.mxu0 0.0
    %8777 = vmatprep.subr.mxu0 0.0
    %8778 = vmatpush2.msra.mxu0 0.0
    %8779 = vmatprep.subr.mxu0 0.0
    %8780 = vmatpush2.msra.mxu0 0.0
    %8781 = vmatprep.subr.mxu0 0.0
    %8782 = vmatpush2.msra.mxu0 0.0
    %8783 = vmatprep.subr.mxu0 0.0
    %8784 = vmatpush2.msra.mxu0 0.0
    %8785 = vmatprep.subr.mxu0 0.0
    %8786 = vmatpush2.msra.mxu0 0.0
    %8787 = vmatprep.subr.mxu0 0.0
    %8788 = vmatpush2.msra.mxu0 0.0
    %8789 = vmatprep.subr.mxu0 0.0
    %8790 = vmatpush2.msra.mxu0 0.0
    %8791 = vmatprep.subr.mxu0 0.0
    %8792 = vmatpush2.msra.mxu0 0.0
    %8793 = vmatprep.subr.mxu0 0.0
    %8794 = vmatpush2.msra.mxu0 0.0
    %8795 = vmatprep.subr.mxu0 0.0
    %8796 = vmatpush2.msra.mxu0 0.0
    %8797 = vmatprep.subr.mxu0 0.0
    %8798 = vmatpush2.msra.mxu0 0.0
    %8799 = vmatprep.subr.mxu0 0.0
    %8800 = vmatpush2.msra.mxu0 0.0
    %8801 = vmatprep.mubr.f32.mxu0 0.0
    %8802 = vmatmul.mubr.f32.gmra.mxu0 %v8675
    %v8803 = vpop.f32.mrf.mxu0
    %v8804 = vadd.f32 %v8672, %v8803
    %v8805 = vpop.f32.mrf.mxu0
    %8806 = vmatprep.mubr.f32.mxu0 0.0
    %8807 = vmatmul.mubr.f32.gmra.mxu0 %v8678
    %v8808 = vpop.f32.mrf.mxu0
    %v8809 = vadd.f32 %v8672, %v8808
    %v8810 = vpop.f32.mrf.mxu0
    %8811 = vmatprep.mubr.f32.mxu0 0.0
    %8812 = vmatmul.mubr.f32.gmra.mxu0 %v8681
    %v8813 = vpop.f32.mrf.mxu0
    %v8814 = vadd.f32 %v8672, %v8813
    %v8815 = vpop.f32.mrf.mxu0
    %8816 = vmatprep.mubr.f32.mxu0 0.0
    %8817 = vmatmul.mubr.f32.gmra.mxu0 %v8684
    %v8818 = vpop.f32.mrf.mxu0
    %v8819 = vadd.f32 %v8672, %v8818
    %v8820 = vpop.f32.mrf.mxu0
    %8821 = vmatprep.mubr.f32.mxu0 0.0
    %8822 = vmatmul.mubr.f32.gmra.mxu0 %v8687
    %v8823 = vpop.f32.mrf.mxu0
    %v8824 = vadd.f32 %v8672, %v8823
    %v8825 = vpop.f32.mrf.mxu0
    %8826 = vmatprep.mubr.f32.mxu0 0.0
    %8827 = vmatmul.mubr.f32.gmra.mxu0 %v8690
    %v8828 = vpop.f32.mrf.mxu0
    %v8829 = vadd.f32 %v8672, %v8828
    %v8830 = vpop.f32.mrf.mxu0
    %8831 = vmatprep.mubr.f32.mxu0 0.0
    %8832 = vmatmul.mubr.f32.gmra.mxu0 %v8693
    %v8833 = vpop.f32.mrf.mxu0
    %v8834 = vadd.f32 %v8672, %v8833
    %v8835 = vpop.f32.mrf.mxu0
    %8836 = vmatprep.mubr.f32.mxu0 0.0
    %8837 = vmatmul.mubr.f32.gmra.mxu0 %v8696
    %v8838 = vpop.f32.mrf.mxu0
    %v8839 = vadd.f32 %v8672, %v8838
    %v8840 = vpop.f32.mrf.mxu0
    %8841 = vmatprep.mubr.f32.mxu0 0.0
    %8842 = vmatmul.mubr.f32.gmra.mxu0 %v8699
    %v8843 = vpop.f32.mrf.mxu0
    %v8844 = vadd.f32 %v8672, %v8843
    %v8845 = vpop.f32.mrf.mxu0
    %8846 = vmatprep.mubr.f32.mxu0 0.0
    %8847 = vmatmul.mubr.f32.gmra.mxu0 %v8702
    %v8848 = vpop.f32.mrf.mxu0
    %v8849 = vadd.f32 %v8672, %v8848
    %v8850 = vpop.f32.mrf.mxu0
    %8851 = vmatprep.mubr.f32.mxu0 0.0
    %8852 = vmatmul.mubr.f32.gmra.mxu0 %v8705
    %v8853 = vpop.f32.mrf.mxu0
    %v8854 = vadd.f32 %v8672, %v8853
    %v8855 = vpop.f32.mrf.mxu0
    %8856 = vmatprep.mubr.f32.mxu0 0.0
    %8857 = vmatmul.mubr.f32.gmra.mxu0 %v8708
    %v8858 = vpop.f32.mrf.mxu0
    %v8859 = vadd.f32 %v8672, %v8858
    %v8860 = vpop.f32.mrf.mxu0
    %8861 = vmatprep.mubr.f32.mxu0 0.0
    %8862 = vmatmul.mubr.f32.gmra.mxu0 %v8711
    %v8863 = vpop.f32.mrf.mxu0
    %v8864 = vadd.f32 %v8672, %v8863
    %v8865 = vpop.f32.mrf.mxu0
    %8866 = vmatprep.mubr.f32.mxu0 0.0
    %8867 = vmatmul.mubr.f32.gmra.mxu0 %v8714
    %v8868 = vpop.f32.mrf.mxu0
    %v8869 = vadd.f32 %v8672, %v8868
    %v8870 = vpop.f32.mrf.mxu0
    %8871 = vmatprep.mubr.f32.mxu0 0.0
    %8872 = vmatmul.mubr.f32.gmra.mxu0 %v8717
    %v8873 = vpop.f32.mrf.mxu0
    %v8874 = vadd.f32 %v8672, %v8873
    %v8875 = vpop.f32.mrf.mxu0
    %8876 = vmatprep.mubr.f32.mxu0 0.0
    %8877 = vmatmul.mubr.f32.gmra.mxu0 %v8720
    %v8878 = vpop.f32.mrf.mxu0
    %v8879 = vadd.f32 %v8672, %v8878
    %v8880 = vpop.f32.mrf.mxu0
    %8881 = vmatprep.mubr.f32.mxu0 0.0
    %8882 = vmatmul.mubr.f32.gmra.mxu0 %v8723
    %v8883 = vpop.f32.mrf.mxu0
    %v8884 = vadd.f32 %v8672, %v8883
    %v8885 = vpop.f32.mrf.mxu0
    %8886 = vmatprep.mubr.f32.mxu0 0.0
    %8887 = vmatmul.mubr.f32.gmra.mxu0 %v8726
    %v8888 = vpop.f32.mrf.mxu0
    %v8889 = vadd.f32 %v8672, %v8888
    %v8890 = vpop.f32.mrf.mxu0
    %8891 = vmatprep.mubr.f32.mxu0 0.0
    %8892 = vmatmul.mubr.f32.gmra.mxu0 %v8729
    %v8893 = vpop.f32.mrf.mxu0
    %v8894 = vadd.f32 %v8672, %v8893
    %v8895 = vpop.f32.mrf.mxu0
    %8896 = vmatprep.mubr.f32.mxu0 0.0
    %8897 = vmatmul.mubr.f32.gmra.mxu0 %v8732
    %v8898 = vpop.f32.mrf.mxu0
    %v8899 = vadd.f32 %v8672, %v8898
    %v8900 = vpop.f32.mrf.mxu0
    %8901 = vmatprep.mubr.f32.mxu0 0.0
    %8902 = vmatmul.mubr.f32.gmra.mxu0 %v8735
    %v8903 = vpop.f32.mrf.mxu0
    %v8904 = vadd.f32 %v8672, %v8903
    %v8905 = vpop.f32.mrf.mxu0
    %8906 = vdwg.mxu0
    %v8907 = vtanh.pop %v8804
    %v8908 = vtanh.pop %v8809
    %v8909 = vtanh.pop %v8814
    %v8910 = vtanh.pop %v8819
    %v8911 = vtanh.pop %v8824
    %v8912 = vtanh.pop %v8829
    %v8913 = vtanh.pop %v8834
    %v8914 = vtanh.pop %v8839
    %v8915 = vtanh.pop %v8844
    %v8916 = vtanh.pop %v8849
    %v8917 = vtanh.pop %v8854
    %v8918 = vtanh.pop %v8859
    %v8919 = vtanh.pop %v8864
    %v8920 = vtanh.pop %v8869
    %v8921 = vtanh.pop %v8874
    %v8922 = vtanh.pop %v8879
    %v8923 = vtanh.pop %v8884
    %v8924 = vtanh.pop %v8889
    %v8925 = vtanh.pop %v8894
    %v8926 = vtanh.pop %v8899
    %v8927 = vtanh.pop %v8904
    %v8928 = vld [vmem:[%s23] sm:$0x1]
    %v8930 = vlaneseq
    %v8931 = vshrl.u32 %v8930, 7
    %v8932 = vsub.s32 0, %v8931
    %v8933 = vrot.slane %v8928, %v8932
    %v8935 = vmul.f32 %v8907, %v8933
    %v8936 = vmul.f32 %v8908, %v8933
    %v8937 = vmul.f32 %v8909, %v8933
    %v8938 = vmul.f32 %v8910, %v8933
    %v8939 = vmul.f32 %v8911, %v8933
    %v8940 = vmul.f32 %v8912, %v8933
    %v8941 = vmul.f32 %v8913, %v8933
    %v8942 = vmul.f32 %v8914, %v8933
    %v8943 = vmul.f32 %v8915, %v8933
    %v8944 = vmul.f32 %v8916, %v8933
    %v8945 = vmul.f32 %v8917, %v8933
    %v8946 = vmul.f32 %v8918, %v8933
    %v8947 = vmul.f32 %v8919, %v8933
    %v8948 = vmul.f32 %v8920, %v8933
    %v8949 = vmul.f32 %v8921, %v8933
    %v8950 = vmul.f32 %v8922, %v8933
    %v8951 = vmul.f32 %v8923, %v8933
    %v8952 = vmul.f32 %v8924, %v8933
    %v8953 = vmul.f32 %v8925, %v8933
    %v8954 = vmul.f32 %v8926, %v8933
    %v8955 = vmul.f32 %v8927, %v8933
    %v8956 = vsel %vm187, %v8935, 0.0
    %8957 = vadd.xlane.f32.xlu0 %v8956
    %v8958 = vpop.xlane.xlu0 %8957
    %v8959 = vsel %vm187, %v8936, 0.0
    %8960 = vadd.xlane.f32.xlu0 %v8959
    %v8961 = vpop.xlane.xlu0 %8960
    %v8962 = vsel %vm187, %v8937, 0.0
    %8963 = vadd.xlane.f32.xlu0 %v8962
    %v8964 = vpop.xlane.xlu0 %8963
    %v8965 = vsel %vm187, %v8938, 0.0
    %8966 = vadd.xlane.f32.xlu0 %v8965
    %v8967 = vpop.xlane.xlu0 %8966
    %v8968 = vsel %vm187, %v8939, 0.0
    %8969 = vadd.xlane.f32.xlu0 %v8968
    %v8970 = vpop.xlane.xlu0 %8969
    %v8971 = vsel %vm187, %v8940, 0.0
    %8972 = vadd.xlane.f32.xlu0 %v8971
    %v8973 = vpop.xlane.xlu0 %8972
    %v8974 = vsel %vm187, %v8941, 0.0
    %8975 = vadd.xlane.f32.xlu0 %v8974
    %v8976 = vpop.xlane.xlu0 %8975
    %v8977 = vsel %vm187, %v8942, 0.0
    %8978 = vadd.xlane.f32.xlu0 %v8977
    %v8979 = vpop.xlane.xlu0 %8978
    %v8980 = vsel %vm187, %v8943, 0.0
    %8981 = vadd.xlane.f32.xlu0 %v8980
    %v8982 = vpop.xlane.xlu0 %8981
    %v8983 = vsel %vm187, %v8944, 0.0
    %8984 = vadd.xlane.f32.xlu0 %v8983
    %v8985 = vpop.xlane.xlu0 %8984
    %v8986 = vsel %vm187, %v8945, 0.0
    %8987 = vadd.xlane.f32.xlu0 %v8986
    %v8988 = vpop.xlane.xlu0 %8987
    %v8989 = vsel %vm187, %v8946, 0.0
    %8990 = vadd.xlane.f32.xlu0 %v8989
    %v8991 = vpop.xlane.xlu0 %8990
    %v8992 = vsel %vm187, %v8947, 0.0
    %8993 = vadd.xlane.f32.xlu0 %v8992
    %v8994 = vpop.xlane.xlu0 %8993
    %v8995 = vsel %vm187, %v8948, 0.0
    %8996 = vadd.xlane.f32.xlu0 %v8995
    %v8997 = vpop.xlane.xlu0 %8996
    %v8998 = vsel %vm187, %v8949, 0.0
    %8999 = vadd.xlane.f32.xlu0 %v8998
    %v9000 = vpop.xlane.xlu0 %8999
    %v9001 = vsel %vm187, %v8950, 0.0
    %9002 = vadd.xlane.f32.xlu0 %v9001
    %v9003 = vpop.xlane.xlu0 %9002
    %v9004 = vsel %vm187, %v8951, 0.0
    %9005 = vadd.xlane.f32.xlu0 %v9004
    %v9006 = vpop.xlane.xlu0 %9005
    %v9007 = vsel %vm187, %v8952, 0.0
    %9008 = vadd.xlane.f32.xlu0 %v9007
    %v9009 = vpop.xlane.xlu0 %9008
    %v9010 = vsel %vm187, %v8953, 0.0
    %9011 = vadd.xlane.f32.xlu0 %v9010
    %v9012 = vpop.xlane.xlu0 %9011
    %v9013 = vsel %vm187, %v8954, 0.0
    %9014 = vadd.xlane.f32.xlu0 %v9013
    %v9015 = vpop.xlane.xlu0 %9014
    %v9016 = vsel %vm187, %v8955, 0.0
    %9017 = vadd.xlane.f32.xlu0 %v9016
    %v9018 = vpop.xlane.xlu0 %9017
    %v9019 = vmax.f32 %v8958, %v8970
    %v9020 = vmax.f32 %v8961, %v8973
    %v9021 = vmax.f32 %v8964, %v8976
    %v9022 = vmax.f32 %v8967, %v8979
    %v9023 = vmax.f32 %v9019, %v8982
    %v9024 = vmax.f32 %v9020, %v8985
    %v9025 = vmax.f32 %v9021, %v8988
    %v9026 = vmax.f32 %v9022, %v8991
    %v9027 = vmax.f32 %v9023, %v8994
    %v9028 = vmax.f32 %v9024, %v8997
    %v9029 = vmax.f32 %v9025, %v9000
    %v9030 = vmax.f32 %v9026, %v9003
    %v9031 = vmax.f32 %v9027, %v9006
    %v9032 = vmax.f32 %v9028, %v9009
    %v9033 = vmax.f32 %v9029, %v9012
    %v9034 = vmax.f32 %v9030, %v9015
    %v9035 = vmax.f32 %v9031, %v9018
    %v9036 = vmax.f32 %v9035, %v9032
    %v9037 = vmax.f32 %v9033, %v9034
    %v9038 = vmax.f32 %v9036, %v9037
    %v9039 = vsub.f32 %v8958, %v9038
    %v9040 = vsub.f32 %v8961, %v9038
    %v9041 = vsub.f32 %v8964, %v9038
    %v9042 = vsub.f32 %v8967, %v9038
    %v9043 = vsub.f32 %v8970, %v9038
    %v9044 = vsub.f32 %v8973, %v9038
    %v9045 = vsub.f32 %v8976, %v9038
    %v9046 = vsub.f32 %v8979, %v9038
    %v9047 = vsub.f32 %v8982, %v9038
    %v9048 = vsub.f32 %v8985, %v9038
    %v9049 = vsub.f32 %v8988, %v9038
    %v9050 = vsub.f32 %v8991, %v9038
    %v9051 = vsub.f32 %v8994, %v9038
    %v9052 = vsub.f32 %v8997, %v9038
    %v9053 = vsub.f32 %v9000, %v9038
    %v9054 = vsub.f32 %v9003, %v9038
    %v9055 = vsub.f32 %v9006, %v9038
    %v9056 = vsub.f32 %v9009, %v9038
    %v9057 = vsub.f32 %v9012, %v9038
    %v9058 = vsub.f32 %v9015, %v9038
    %v9059 = vsub.f32 %v9018, %v9038
    %v9060 = vmul.f32 %v9039, 1.442695
    %v9061 = vpow.pop %v9060
    %v9062 = vmul.f32 %v9040, 1.442695
    %v9063 = vpow.pop %v9062
    %v9064 = vmul.f32 %v9041, 1.442695
    %v9065 = vpow.pop %v9064
    %v9066 = vmul.f32 %v9042, 1.442695
    %v9067 = vpow.pop %v9066
    %v9068 = vmul.f32 %v9043, 1.442695
    %v9069 = vpow.pop %v9068
    %v9070 = vmul.f32 %v9044, 1.442695
    %v9071 = vpow.pop %v9070
    %v9072 = vmul.f32 %v9045, 1.442695
    %v9073 = vpow.pop %v9072
    %v9074 = vmul.f32 %v9046, 1.442695
    %v9075 = vpow.pop %v9074
    %v9076 = vmul.f32 %v9047, 1.442695
    %v9077 = vpow.pop %v9076
    %v9078 = vmul.f32 %v9048, 1.442695
    %v9079 = vpow.pop %v9078
    %v9080 = vmul.f32 %v9049, 1.442695
    %v9081 = vpow.pop %v9080
    %v9082 = vmul.f32 %v9050, 1.442695
    %v9083 = vpow.pop %v9082
    %v9084 = vmul.f32 %v9051, 1.442695
    %v9085 = vpow.pop %v9084
    %v9086 = vmul.f32 %v9052, 1.442695
    %v9087 = vpow.pop %v9086
    %v9088 = vmul.f32 %v9053, 1.442695
    %v9089 = vpow.pop %v9088
    %v9090 = vmul.f32 %v9054, 1.442695
    %v9091 = vpow.pop %v9090
    %v9092 = vmul.f32 %v9055, 1.442695
    %v9093 = vpow.pop %v9092
    %v9094 = vmul.f32 %v9056, 1.442695
    %v9095 = vpow.pop %v9094
    %v9096 = vmul.f32 %v9057, 1.442695
    %v9097 = vpow.pop %v9096
    %v9098 = vmul.f32 %v9058, 1.442695
    %v9099 = vpow.pop %v9098
    %v9100 = vmul.f32 %v9059, 1.442695
    %v9101 = vpow.pop %v9100
    %v9102 = vadd.f32 %v9061, %v9063
    %v9103 = vadd.f32 %v9102, %v9065
    %v9104 = vadd.f32 %v9103, %v9067
    %v9105 = vadd.f32 %v9104, %v9069
    %v9106 = vadd.f32 %v9105, %v9071
    %v9107 = vadd.f32 %v9106, %v9073
    %v9108 = vadd.f32 %v9107, %v9075
    %v9109 = vadd.f32 %v9108, %v9077
    %v9110 = vadd.f32 %v9109, %v9079
    %v9111 = vadd.f32 %v9110, %v9081
    %v9112 = vadd.f32 %v9111, %v9083
    %v9113 = vadd.f32 %v9112, %v9085
    %v9114 = vadd.f32 %v9113, %v9087
    %v9115 = vadd.f32 %v9114, %v9089
    %v9116 = vadd.f32 %v9115, %v9091
    %v9117 = vadd.f32 %v9116, %v9093
    %v9118 = vadd.f32 %v9117, %v9095
    %v9119 = vadd.f32 %v9118, %v9097
    %v9120 = vadd.f32 %v9119, %v9099
    %v9121 = vadd.f32 %v9120, %v9101
    %v9122 = vrcp.pop %v9121
    %v9123 = vmul.f32 %v9061, %v9122
    %v9124 = vmul.f32 %v9063, %v9122
    %v9125 = vmul.f32 %v9065, %v9122
    %v9126 = vmul.f32 %v9067, %v9122
    %v9127 = vmul.f32 %v9069, %v9122
    %v9128 = vmul.f32 %v9071, %v9122
    %v9129 = vmul.f32 %v9073, %v9122
    %v9130 = vmul.f32 %v9075, %v9122
    %v9131 = vmul.f32 %v9077, %v9122
    %v9132 = vmul.f32 %v9079, %v9122
    %v9133 = vmul.f32 %v9081, %v9122
    %v9134 = vmul.f32 %v9083, %v9122
    %v9135 = vmul.f32 %v9085, %v9122
    %v9136 = vmul.f32 %v9087, %v9122
    %v9137 = vmul.f32 %v9089, %v9122
    %v9138 = vmul.f32 %v9091, %v9122
    %v9139 = vmul.f32 %v9093, %v9122
    %v9140 = vmul.f32 %v9095, %v9122
    %v9141 = vmul.f32 %v9097, %v9122
    %v9142 = vmul.f32 %v9099, %v9122
    %v9143 = vmul.f32 %v9101, %v9122
    %v9144 = vmul.f32 %v9123, %v8642
    %v9145 = vmul.f32 %v9124, %v8643
    %v9146 = vmul.f32 %v9125, %v8644
    %v9147 = vmul.f32 %v9126, %v8645
    %v9148 = vmul.f32 %v9127, %v8646
    %v9149 = vmul.f32 %v9128, %v8647
    %v9150 = vmul.f32 %v9129, %v8648
    %v9151 = vmul.f32 %v9130, %v8649
    %v9152 = vmul.f32 %v9131, %v8650
    %v9153 = vmul.f32 %v9132, %v8651
    %v9154 = vmul.f32 %v9133, %v8652
    %v9155 = vmul.f32 %v9134, %v8653
    %v9156 = vmul.f32 %v9135, %v8654
    %v9157 = vmul.f32 %v9136, %v8655
    %v9158 = vmul.f32 %v9137, %v8656
    %v9159 = vmul.f32 %v9138, %v8657
    %v9160 = vmul.f32 %v9139, %v8658
    %v9161 = vmul.f32 %v9140, %v8659
    %v9162 = vmul.f32 %v9141, %v8660
    %v9163 = vmul.f32 %v9142, %v8661
    %v9164 = vmul.f32 %v9143, %v8662
    %v9165 = vsel %vm187, %v9144, 0.0
    %v9166 = vsel %vm187, %v9145, 0.0
    %v9167 = vadd.f32 %v9165, %v9166
    %v9168 = vsel %vm187, %v9146, 0.0
    %v9169 = vadd.f32 %v9167, %v9168
    %v9170 = vsel %vm187, %v9147, 0.0
    %v9171 = vadd.f32 %v9169, %v9170
    %v9172 = vsel %vm187, %v9148, 0.0
    %v9173 = vadd.f32 %v9171, %v9172
    %v9174 = vsel %vm187, %v9149, 0.0
    %v9175 = vadd.f32 %v9173, %v9174
    %v9176 = vsel %vm187, %v9150, 0.0
    %v9177 = vadd.f32 %v9175, %v9176
    %v9178 = vsel %vm187, %v9151, 0.0
    %v9179 = vadd.f32 %v9177, %v9178
    %v9180 = vsel %vm187, %v9152, 0.0
    %v9181 = vadd.f32 %v9179, %v9180
    %v9182 = vsel %vm187, %v9153, 0.0
    %v9183 = vadd.f32 %v9181, %v9182
    %v9184 = vsel %vm187, %v9154, 0.0
    %v9185 = vadd.f32 %v9183, %v9184
    %v9186 = vsel %vm187, %v9155, 0.0
    %v9187 = vadd.f32 %v9185, %v9186
    %v9188 = vsel %vm187, %v9156, 0.0
    %v9189 = vadd.f32 %v9187, %v9188
    %v9190 = vsel %vm187, %v9157, 0.0
    %v9191 = vadd.f32 %v9189, %v9190
    %v9192 = vsel %vm187, %v9158, 0.0
    %v9193 = vadd.f32 %v9191, %v9192
    %v9194 = vsel %vm187, %v9159, 0.0
    %v9195 = vadd.f32 %v9193, %v9194
    %v9196 = vsel %vm187, %v9160, 0.0
    %v9197 = vadd.f32 %v9195, %v9196
    %v9198 = vsel %vm187, %v9161, 0.0
    %v9199 = vadd.f32 %v9197, %v9198
    %v9200 = vsel %vm187, %v9162, 0.0
    %v9201 = vadd.f32 %v9199, %v9200
    %v9202 = vsel %vm187, %v9163, 0.0
    %v9203 = vadd.f32 %v9201, %v9202
    %v9204 = vsel %vm187, %v9164, 0.0
    %v9205 = vadd.f32 %v9203, %v9204
    %v9206 = vld [vmem:[%s24] sm:$0xff]
    %v9207 = vld [vmem:[%s24 + $0x8] sm:$0xff]
    %v9208 = vld [vmem:[%s24 + $0x10] sm:$0xff]
    %v9209 = vld [vmem:[%s24 + $0x18] sm:$0xff]
    %v9210 = vld [vmem:[%s25] sm:$0x1]
    %v9212 = vlaneseq
    %v9213 = vshrl.u32 %v9212, 7
    %v9214 = vsub.s32 0, %v9213
    %v9215 = vrot.slane %v9210, %v9214
    %v9218 = vsel %vm187, %v9205, 0
    %9220 = vmatprep.subr.mxu0 0.0
    %9221 = vmatpush1.msra.mxu0 0.0
    %9222 = vmatprep.subr.mxu0 0.0
    %9223 = vmatpush1.msra.mxu0 0.0
    %9224 = vmatprep.subr.mxu0 0.0
    %9225 = vmatpush1.msra.mxu0 0.0
    %9226 = vmatprep.subr.mxu0 0.0
    %9227 = vmatpush1.msra.mxu0 0.0
    %9228 = vmatprep.subr.mxu0 0.0
    %9229 = vmatpush1.msra.mxu0 0.0
    %9230 = vmatprep.subr.mxu0 0.0
    %9231 = vmatpush1.msra.mxu0 0.0
    %9232 = vmatprep.subr.mxu0 0.0
    %9233 = vmatpush1.msra.mxu0 0.0
    %9234 = vmatprep.subr.mxu0 0.0
    %9235 = vmatpush1.msra.mxu0 0.0
    %9236 = vmatprep.subr.mxu0 0.0
    %9237 = vmatpush1.msra.mxu0 0.0
    %9238 = vmatprep.subr.mxu0 0.0
    %9239 = vmatpush1.msra.mxu0 0.0
    %9240 = vmatprep.subr.mxu0 0.0
    %9241 = vmatpush1.msra.mxu0 0.0
    %9242 = vmatprep.subr.mxu0 0.0
    %9243 = vmatpush1.msra.mxu0 0.0
    %9244 = vmatprep.subr.mxu0 0.0
    %9245 = vmatpush1.msra.mxu0 %v9209
    %9246 = vmatprep.subr.mxu0 0.0
    %9247 = vmatpush1.msra.mxu0 %v9208
    %9248 = vmatprep.subr.mxu0 0.0
    %9249 = vmatpush1.msra.mxu0 %v9207
    %9250 = vmatprep.subr.mxu0 0.0
    %9251 = vmatpush1.msra.mxu0 %v9206
    %9252 = vmatprep.subr.mxu0 0.0
    %9253 = vmatpush2.msra.mxu0 0.0
    %9254 = vmatprep.subr.mxu0 0.0
    %9255 = vmatpush2.msra.mxu0 0.0
    %9256 = vmatprep.subr.mxu0 0.0
    %9257 = vmatpush2.msra.mxu0 0.0
    %9258 = vmatprep.subr.mxu0 0.0
    %9259 = vmatpush2.msra.mxu0 0.0
    %9260 = vmatprep.subr.mxu0 0.0
    %9261 = vmatpush2.msra.mxu0 0.0
    %9262 = vmatprep.subr.mxu0 0.0
    %9263 = vmatpush2.msra.mxu0 0.0
    %9264 = vmatprep.subr.mxu0 0.0
    %9265 = vmatpush2.msra.mxu0 0.0
    %9266 = vmatprep.subr.mxu0 0.0
    %9267 = vmatpush2.msra.mxu0 0.0
    %9268 = vmatprep.subr.mxu0 0.0
    %9269 = vmatpush2.msra.mxu0 0.0
    %9270 = vmatprep.subr.mxu0 0.0
    %9271 = vmatpush2.msra.mxu0 0.0
    %9272 = vmatprep.subr.mxu0 0.0
    %9273 = vmatpush2.msra.mxu0 0.0
    %9274 = vmatprep.subr.mxu0 0.0
    %9275 = vmatpush2.msra.mxu0 0.0
    %9276 = vmatprep.subr.mxu0 0.0
    %9277 = vmatpush2.msra.mxu0 0.0
    %9278 = vmatprep.subr.mxu0 0.0
    %9279 = vmatpush2.msra.mxu0 0.0
    %9280 = vmatprep.subr.mxu0 0.0
    %9281 = vmatpush2.msra.mxu0 0.0
    %9282 = vmatprep.subr.mxu0 0.0
    %9283 = vmatpush2.msra.mxu0 0.0
    %9284 = vmatprep.mubr.f32.mxu0 0.0
    %9285 = vmatmul.mubr.f32.gmra.mxu0 %v9218
    %v9286 = vpop.f32.mrf.mxu0
    %v9287 = vadd.f32 %v9215, %v9286
    %v9288 = vpop.f32.mrf.mxu0
    %9289 = vdwg.mxu0
    %9290 = vst [vmem:[%s26] sm:$0xff] %v9287
    // Predicated region
    $region114: #{phi_fc_recurrent_forward.1} parent=1 // pred_check
      _
    $region115: #{phi_fc_recurrent_forward.1} parent=1 // pred_check_branch
      %9292 = sbr.rel (0) target = $region117
    $region116: #{phi_fc_recurrent_forward.1} parent=1 // pred_region
      _
    $region117: #{phi_fc_recurrent_forward.1} parent=1 // pred_fallthru
      _
    // Predicated region
    $region118: #{phi_fc_recurrent_forward.1} parent=1 // pred_check
      _
    $region119: #{phi_fc_recurrent_forward.1} parent=1 // pred_check_branch
      %9294 = sbr.rel (0) target = $region121
    $region120: #{phi_fc_recurrent_forward.1} parent=1 // pred_region
      _
    $region121: #{phi_fc_recurrent_forward.1} parent=1 // pred_fallthru
      _
    %9295 = vsyncpa [#allocation3], 1
    %9296 = vsyncpa [#allocation5], 1

</llo_original>
